<compile_context>
chip_gen: v7x
topology: tpu7x:2x2x1
jax: 0.10.0
libtpu: 0.0.40
codegen_flags: <defaults>
</compile_context>

<pallas_src>
import functools
import math

import jax
import jax.numpy as jnp
from jax.experimental import pallas as pl
from jax.experimental.pallas import tpu as pltpu

FEATURE_DIM = 768     # ConvNextV2 tiny feature dim
ATTN_HIDDEN = 128
DIM_OBS_EMBED = 512
N_FRAMES = 4
PATCH = 4
LANE = 128
KPAD = 64             # patch_dim (=48) zero-padded to 64 (legal: == full dim)


def _round_up(x, m):
    return ((x + m - 1) // m) * m


# --------------------------------------------------------------------------
# Fused kernel: synthetic encoder + spatial attention + attended spatial sum
#   feats = relu(xp @ enc_w + enc_b)                (per pixel)
#   h     = relu(feats @ w1 + b1)                   (1x1 conv, 768->128)
#   att   = sigmoid(sum_lane(h * w2_row) + b2)      (1x1 conv, 128->1, on VPU)
#   out   = sum_hw(feats * att)                     (per sample)
# Rows inside each block are PIXEL-major: [pix0 x sn samples, pix1 x ...],
# so the per-sample sum is a tree of contiguous sublane-aligned 2-D adds.
# --------------------------------------------------------------------------
def _encode_attn_pool_kernel(xp_ref, ew_ref, eb_ref, w1_ref, b1_ref, w2r_ref,
                             b2_ref, o_ref, *, hw, sn):
    # patch embedding (bf16 MXU inputs, f32 accumulate)
    feats = jnp.dot(xp_ref[...], ew_ref[...], preferred_element_type=jnp.float32)
    feats = jnp.maximum(feats + eb_ref[...], 0.0)                 # (R, D) f32

    # spatial attention hidden layer
    h = jnp.dot(feats.astype(jnp.bfloat16), w1_ref[...],
                preferred_element_type=jnp.float32)
    h = jnp.maximum(h + b1_ref[...], 0.0)                         # (R, 128) f32

    # 128 -> 1 "conv" as a lane reduction (keeps MXU free, lane-dense values)
    score = jnp.sum(h * w2r_ref[...], axis=-1, keepdims=True) + b2_ref[...]
    att = jax.nn.sigmoid(score)                                   # (R, 1) f32

    weighted = feats * att                                        # (R, D) f32

    # per-sample spatial sum: balanced tree of (sn, D) sublane-aligned adds
    parts = [weighted[j * sn:(j + 1) * sn, :] for j in range(hw)]
    while len(parts) > 1:
        merged = [parts[k] + parts[k + 1] for k in range(0, len(parts) - 1, 2)]
        if len(parts) % 2:
            merged.append(parts[-1])
        parts = merged
    o_ref[...] = parts[0].astype(o_ref.dtype)                     # (sn, D)


def _choose_block_samples(n, hw, target_rows=256):
    """Largest divisor of n with sublane-aligned blocks of <= target_rows rows.

    Prefers >= 2 grid steps so both v7x TensorCores stay busy; on single-TC
    chips the extra step costs ~0.35us. Falls back to one full block."""
    cands = [s for s in range(1, n + 1)
             if n % s == 0 and s % 8 == 0 and s * hw <= target_rows]
    multi = [s for s in cands if n // s >= 2]
    if multi:
        return max(multi)
    if cands:
        return max(cands)
    return n   # fallback (small/odd n): single block covering the full array


def encode_attn_pool(xp, params, *, n, hw, sn):
    d = FEATURE_DIM
    h1 = ATTN_HIDDEN
    kernel = functools.partial(_encode_attn_pool_kernel, hw=hw, sn=sn)
    return pl.pallas_call(
        kernel,
        out_shape=jax.ShapeDtypeStruct((n, d), jnp.float32),
        grid=(n // sn,),
        in_specs=[
            pl.BlockSpec((sn * hw, KPAD), lambda i: (i, 0)),
            pl.BlockSpec((KPAD, d), lambda i: (0, 0)),
            pl.BlockSpec((1, d), lambda i: (0, 0)),
            pl.BlockSpec((d, h1), lambda i: (0, 0)),
            pl.BlockSpec((1, h1), lambda i: (0, 0)),
            pl.BlockSpec((1, h1), lambda i: (0, 0)),
            pl.BlockSpec((1, 1), lambda i: (0, 0)),
        ],
        out_specs=pl.BlockSpec((sn, d), lambda i: (i, 0)),
        compiler_params=pltpu.CompilerParams(
            dimension_semantics=("parallel",)),
    )(xp, params["enc_w"], params["enc_b"],
      params["att_w1"], params["att_b1"], params["att_w2"], params["att_b2"])


# --------------------------------------------------------------------------
# Fused "heads" kernel: feature projection + inverse model + forward model.
#   curr = g_curr @ proj_w + proj_b ;  next = g_next @ proj_w + proj_b
#   logits = relu(curr @ Wic + next @ Win + b1) @ W2 + b2      (if inverse)
#   pred   = relu(curr @ Wfo + act  @ Wfa + b1) @ W2 + b2
# One launch: all weight DMAs share a single prologue, curr_emb loaded once.
# --------------------------------------------------------------------------
def _heads_kernel(*refs, with_inverse):
    if with_inverse:
        (gc, gn, act, pw, pb,
         iw1c, iw1n, ib1, iw2, ib2,
         fw1o, fw1a, fb1, fw2, fb2,
         nemb_o, logits_o, pred_o) = refs
    else:
        (gc, gn, act, pw, pb,
         fw1o, fw1a, fb1, fw2, fb2,
         nemb_o, pred_o) = refs

    curr = jnp.dot(gc[...].astype(jnp.bfloat16), pw[...],
                   preferred_element_type=jnp.float32) + pb[...]
    nxt = jnp.dot(gn[...].astype(jnp.bfloat16), pw[...],
                  preferred_element_type=jnp.float32) + pb[...]
    nemb_o[...] = nxt

    curr_bf = curr.astype(jnp.bfloat16)
    nxt_bf = nxt.astype(jnp.bfloat16)

    if with_inverse:
        h = jnp.dot(curr_bf, iw1c[...], preferred_element_type=jnp.float32)
        h = h + jnp.dot(nxt_bf, iw1n[...], preferred_element_type=jnp.float32)
        h = jnp.maximum(h + ib1[...], 0.0)
        logits_o[...] = (jnp.dot(h.astype(jnp.bfloat16), iw2[...],
                                 preferred_element_type=jnp.float32) + ib2[...])

    hf = jnp.dot(curr_bf, fw1o[...], preferred_element_type=jnp.float32)
    hf = hf + jnp.dot(act[...], fw1a[...], preferred_element_type=jnp.float32)
    hf = jnp.maximum(hf + fb1[...], 0.0)
    pred_o[...] = (jnp.dot(hf.astype(jnp.bfloat16), fw2[...],
                           preferred_element_type=jnp.float32) + fb2[...])


def heads(g_curr, g_next, act_pad, params, *, with_inverse):
    b, k_proj = g_curr.shape
    d_emb = params["proj_w"].shape[1]
    h_inv = params["inv_w1_curr"].shape[1]
    a_out = params["inv_w2"].shape[1]
    h_fwd = params["fwd_w1_obs"].shape[1]
    a_in = params["fwd_w1_act"].shape[0]

    def full(shape):
        return pl.BlockSpec(shape, lambda i: (0, 0))

    in_specs = [full((b, k_proj)), full((b, k_proj)), full((b, a_in)),
                full((k_proj, d_emb)), full((1, d_emb))]
    args = [g_curr, g_next, act_pad, params["proj_w"], params["proj_b"]]
    out_shapes = [jax.ShapeDtypeStruct((b, d_emb), jnp.float32)]
    out_specs = [full((b, d_emb))]
    if with_inverse:
        in_specs += [full((d_emb, h_inv)), full((d_emb, h_inv)), full((1, h_inv)),
                     full((h_inv, a_out)), full((1, a_out))]
        args += [params["inv_w1_curr"], params["inv_w1_next"], params["inv_b1"],
                 params["inv_w2"], params["inv_b2"]]
        out_shapes.append(jax.ShapeDtypeStruct((b, a_out), jnp.float32))
        out_specs.append(full((b, a_out)))
    in_specs += [full((d_emb, h_fwd)), full((a_in, h_fwd)), full((1, h_fwd)),
                 full((h_fwd, d_emb)), full((1, d_emb))]
    args += [params["fwd_w1_obs"], params["fwd_w1_act"], params["fwd_b1"],
             params["fwd_w2"], params["fwd_b2"]]
    out_shapes.append(jax.ShapeDtypeStruct((b, d_emb), jnp.float32))
    out_specs.append(full((b, d_emb)))

    kernel = functools.partial(_heads_kernel, with_inverse=with_inverse)
    outs = pl.pallas_call(
        kernel,
        out_shape=tuple(out_shapes),
        grid=(1,),
        in_specs=in_specs,
        out_specs=tuple(out_specs),
    )(*args)

    if with_inverse:
        next_emb, logits, pred = outs
    else:
        next_emb, pred = outs
        logits = None
    return logits, pred, next_emb


# --------------------------------------------------------------------------
# ICM forward
# --------------------------------------------------------------------------
def get_embed_stacked(params, x):
    # x: (B, t, h, w, c) with B = 2*batch (curr and next stacked on axis 0)
    B, t, h, w, c = x.shape
    n = B * t
    hp, wp = h // PATCH, w // PATCH
    hw = hp * wp
    patch_dim = PATCH * PATCH * c
    assert patch_dim <= KPAD
    sn = _choose_block_samples(n, hw)

    # patchify -> (n, hw, patch_dim)
    xp = x.reshape(n, hp, PATCH, wp, PATCH, c)
    xp = xp.transpose(0, 1, 3, 2, 4, 5).reshape(n, hw, patch_dim)
    # pixel-major inside each sn-sample block so the kernel's spatial pool is
    # contiguous sublane-aligned slices (no 3-D reshape / relayout in-kernel)
    xp = xp.reshape(n // sn, sn, hw, patch_dim).transpose(0, 2, 1, 3)
    xp = xp.reshape(n * hw, patch_dim)
    xp = jnp.pad(xp, ((0, 0), (0, KPAD - patch_dim))).astype(jnp.bfloat16)

    pooled = encode_attn_pool(xp, params, n=n, hw=hw, sn=sn)   # (n, D) f32
    return pooled.reshape(B, t * FEATURE_DIM)                  # '(b t) d -> b (t d)'


def icm_forward(params, curr_obs, next_obs, action_one_hot, rollout_mode=False):
    b = curr_obs.shape[0]
    a = action_one_hot.shape[-1]
    a_in_pad = params["fwd_w1_act"].shape[0]

    # single fused encoder pass over curr and next observations
    g = get_embed_stacked(params, jnp.concatenate([curr_obs, next_obs], axis=0))
    g_curr, g_next = g[:b], g[b:]

    act_pad = jnp.pad(action_one_hot,
                      ((0, 0), (0, a_in_pad - a))).astype(jnp.bfloat16)

    logits_pad, pred_next_obs_embed, next_emb = heads(
        g_curr, g_next, act_pad, params, with_inverse=not rollout_mode)
    pred_action_logits = None if logits_pad is None else logits_pad[:, :a]
    return pred_action_logits, pred_next_obs_embed, next_emb


# --------------------------------------------------------------------------
# Deterministic parameter init (shapes follow ICM.__init__); MXU-side weights
# stored pre-cast to bf16, biases/VPU-side kept f32.
# --------------------------------------------------------------------------
def init_params(key, dim_action_space):
    keys = jax.random.split(key, 8)
    patch_dim = PATCH * PATCH * 3
    a_out = _round_up(dim_action_space, LANE)   # lane-dense inverse logits
    a_in = _round_up(dim_action_space, 8)       # padded action contraction
    orth = jax.nn.initializers.orthogonal(math.sqrt(2))
    f32, bf16 = jnp.float32, jnp.bfloat16

    def kaiming(k, shape):
        fan_in = shape[0]
        return jax.random.normal(k, shape, f32) / math.sqrt(fan_in)

    p = {}
    # synthetic encoder patch-embedding; contraction dim zero-padded 48 -> 64
    enc_w = kaiming(keys[0], (patch_dim, FEATURE_DIM))
    p["enc_w"] = jnp.pad(enc_w, ((0, KPAD - patch_dim), (0, 0))).astype(bf16)
    p["enc_b"] = jnp.zeros((1, FEATURE_DIM), f32)
    # spatial_attention: Conv2d(768->128,1x1), Conv2d(128->1,1x1)
    p["att_w1"] = kaiming(keys[1], (FEATURE_DIM, ATTN_HIDDEN)).astype(bf16)
    p["att_b1"] = jnp.zeros((1, ATTN_HIDDEN), f32)
    p["att_w2"] = kaiming(keys[2], (ATTN_HIDDEN, 1)).reshape(1, ATTN_HIDDEN)   # f32, VPU
    p["att_b2"] = jnp.zeros((1, 1), f32)
    # feature_projection: layer_init(Linear(n_frames*768, 512))
    p["proj_w"] = orth(keys[3], (N_FRAMES * FEATURE_DIM, DIM_OBS_EMBED), f32).astype(bf16)
    p["proj_b"] = jnp.zeros((1, DIM_OBS_EMBED), f32)
    # inverse_model: Linear(2*512,512) ReLU Linear(512,A)  (concat folded, A padded)
    inv_w1 = kaiming(keys[4], (2 * DIM_OBS_EMBED, 512))
    p["inv_w1_curr"] = inv_w1[:DIM_OBS_EMBED].astype(bf16)
    p["inv_w1_next"] = inv_w1[DIM_OBS_EMBED:].astype(bf16)
    p["inv_b1"] = jnp.zeros((1, 512), f32)
    inv_w2 = kaiming(keys[5], (512, dim_action_space))
    p["inv_w2"] = jnp.pad(inv_w2, ((0, 0), (0, a_out - dim_action_space))).astype(bf16)
    p["inv_b2"] = jnp.zeros((1, a_out), f32)
    # forward_model: Linear(512+A,512) ReLU Linear(512,512)  (concat folded, A padded)
    fwd_w1 = kaiming(keys[6], (DIM_OBS_EMBED + dim_action_space, 512))
    p["fwd_w1_obs"] = fwd_w1[:DIM_OBS_EMBED].astype(bf16)
    p["fwd_w1_act"] = jnp.pad(fwd_w1[DIM_OBS_EMBED:],
                              ((0, a_in - dim_action_space), (0, 0))).astype(bf16)
    p["fwd_b1"] = jnp.zeros((1, 512), f32)
    p["fwd_w2"] = kaiming(keys[7], (512, DIM_OBS_EMBED)).astype(bf16)
    p["fwd_b2"] = jnp.zeros((1, DIM_OBS_EMBED), f32)
    return p


if __name__ == "__main__":
    key = jax.random.PRNGKey(0)
    b, t, h, w, c = 2, N_FRAMES, 16, 16, 3
    dim_action_space = 6

    kp, k1, k2, k3 = jax.random.split(key, 4)
    params = init_params(kp, dim_action_space)

    curr_obs = jax.random.normal(k1, (b, t, h, w, c), jnp.float32)
    next_obs = jax.random.normal(k2, (b, t, h, w, c), jnp.float32)
    actions = jax.random.randint(k3, (b,), 0, dim_action_space)
    action_one_hot = jax.nn.one_hot(actions, dim_action_space, dtype=jnp.float32)

    fwd = jax.jit(lambda p_, c_, n_, a_: icm_forward(p_, c_, n_, a_))
    logits, pred_next, next_emb = fwd(params, curr_obs, next_obs, action_one_hot)
    (logits, pred_next, next_emb) = jax.block_until_ready((logits, pred_next, next_emb))

    assert logits.shape == (b, dim_action_space)
    assert pred_next.shape == (b, DIM_OBS_EMBED)
    assert next_emb.shape == (b, DIM_OBS_EMBED)
    assert logits.dtype == jnp.float32
    assert bool(jnp.all(jnp.isfinite(logits)))
    assert bool(jnp.all(jnp.isfinite(pred_next)))
    assert bool(jnp.all(jnp.isfinite(next_emb)))

    print("KERNEL_OK")
</pallas_src>

<mosaic_0001>
module attributes {stable_mosaic.version = 11 : i64} {
  func.func @_encode_attn_pool_kernel(%arg0: i32, %arg1: memref<128x64xbf16, #tpu.memory_space<vmem>>, %arg2: memref<64x768xbf16, #tpu.memory_space<vmem>>, %arg3: memref<1x768xf32, #tpu.memory_space<vmem>>, %arg4: memref<768x128xbf16, #tpu.memory_space<vmem>>, %arg5: memref<1x128xf32, #tpu.memory_space<vmem>>, %arg6: memref<1x128xf32, #tpu.memory_space<vmem>>, %arg7: memref<1x1xf32, #tpu.memory_space<vmem>>, %arg8: memref<8x768xf32, #tpu.memory_space<vmem>>) attributes {dimension_semantics = [#tpu.dimension_semantics<parallel>], iteration_bounds = array<i64: 2>, scalar_prefetch = 0 : i64, scratch_operands = 0 : i64, tpu.core_type = #tpu.core_type<tc>, window_params = [{transform_indices = @transform_0, window_bounds = array<i64: 128, 64>}, {pipeline_mode = #tpu.pipeline_mode<synchronous>, transform_indices = @transform_1, window_bounds = array<i64: 64, 768>}, {pipeline_mode = #tpu.pipeline_mode<synchronous>, transform_indices = @transform_2, window_bounds = array<i64: 1, 768>}, {pipeline_mode = #tpu.pipeline_mode<synchronous>, transform_indices = @transform_3, window_bounds = array<i64: 768, 128>}, {pipeline_mode = #tpu.pipeline_mode<synchronous>, transform_indices = @transform_4, window_bounds = array<i64: 1, 128>}, {pipeline_mode = #tpu.pipeline_mode<synchronous>, transform_indices = @transform_5, window_bounds = array<i64: 1, 128>}, {pipeline_mode = #tpu.pipeline_mode<synchronous>, transform_indices = @transform_6, window_bounds = array<i64: 1, 1>}, {transform_indices = @transform_7, window_bounds = array<i64: 8, 768>}]} {
    %c0 = arith.constant 0 : index
    %c0_0 = arith.constant 0 : index
    %0 = vector.load %arg1[%c0, %c0_0] : memref<128x64xbf16, #tpu.memory_space<vmem>>, vector<128x64xbf16>
    %c0_1 = arith.constant 0 : index
    %c0_2 = arith.constant 0 : index
    %1 = vector.load %arg2[%c0_1, %c0_2] : memref<64x768xbf16, #tpu.memory_space<vmem>>, vector<64x768xbf16>
    %cst = arith.constant dense<0.000000e+00> : vector<128x768xf32>
    %2 = tpu.matmul %0, %1, %cst {dimension_numbers = #tpu.dot_dimension_numbers<[1], [0], [0], [1], [0, 0, 1, 1], [], []>} : vector<128x64xbf16>, vector<64x768xbf16>, vector<128x768xf32> -> vector<128x768xf32>
    %c0_3 = arith.constant 0 : index
    %c0_4 = arith.constant 0 : index
    %3 = vector.load %arg3[%c0_3, %c0_4] : memref<1x768xf32, #tpu.memory_space<vmem>>, vector<1x768xf32>
    %4 = vector.broadcast %3 : vector<1x768xf32> to vector<128x768xf32>
    %5 = arith.addf %2, %4 : vector<128x768xf32>
    %cst_5 = arith.constant 0.000000e+00 : f32
    %6 = vector.broadcast %cst_5 : f32 to vector<128x768xf32>
    %7 = arith.maximumf %5, %6 : vector<128x768xf32>
    %8 = arith.truncf %7 : vector<128x768xf32> to vector<128x768xbf16>
    %c0_6 = arith.constant 0 : index
    %c0_7 = arith.constant 0 : index
    %9 = vector.load %arg4[%c0_6, %c0_7] : memref<768x128xbf16, #tpu.memory_space<vmem>>, vector<768x128xbf16>
    %cst_8 = arith.constant dense<0.000000e+00> : vector<128x128xf32>
    %10 = tpu.matmul %8, %9, %cst_8 {dimension_numbers = #tpu.dot_dimension_numbers<[1], [0], [0], [1], [0, 0, 1, 1], [], []>} : vector<128x768xbf16>, vector<768x128xbf16>, vector<128x128xf32> -> vector<128x128xf32>
    %c0_9 = arith.constant 0 : index
    %c0_10 = arith.constant 0 : index
    %11 = vector.load %arg5[%c0_9, %c0_10] : memref<1x128xf32, #tpu.memory_space<vmem>>, vector<1x128xf32>
    %12 = vector.broadcast %11 : vector<1x128xf32> to vector<128x128xf32>
    %13 = arith.addf %10, %12 : vector<128x128xf32>
    %cst_11 = arith.constant 0.000000e+00 : f32
    %14 = vector.broadcast %cst_11 : f32 to vector<128x128xf32>
    %15 = arith.maximumf %13, %14 : vector<128x128xf32>
    %c0_12 = arith.constant 0 : index
    %c0_13 = arith.constant 0 : index
    %16 = vector.load %arg6[%c0_12, %c0_13] : memref<1x128xf32, #tpu.memory_space<vmem>>, vector<1x128xf32>
    %17 = vector.broadcast %16 : vector<1x128xf32> to vector<128x128xf32>
    %18 = arith.mulf %15, %17 : vector<128x128xf32>
    %cst_14 = arith.constant dense<0.000000e+00> : vector<128xf32>
    %19 = vector.multi_reduction <add>, %18, %cst_14 [1] : vector<128x128xf32> to vector<128xf32>
    %20 = vector.shape_cast %19 : vector<128xf32> to vector<128x1xf32>
    %c0_15 = arith.constant 0 : index
    %c0_16 = arith.constant 0 : index
    %21 = vector.load %arg7[%c0_15, %c0_16] : memref<1x1xf32, #tpu.memory_space<vmem>>, vector<1x1xf32>
    %22 = vector.broadcast %21 : vector<1x1xf32> to vector<128x1xf32>
    %23 = arith.addf %20, %22 : vector<128x1xf32>
    %24 = arith.negf %23 : vector<128x1xf32>
    %25 = math.exp %24 : vector<128x1xf32>
    %cst_17 = arith.constant 1.000000e+00 : f32
    %26 = vector.broadcast %cst_17 : f32 to vector<128x1xf32>
    %27 = arith.addf %26, %25 : vector<128x1xf32>
    %28 = arith.divf %26, %27 : vector<128x1xf32>
    %29 = vector.broadcast %28 : vector<128x1xf32> to vector<128x768xf32>
    %30 = arith.mulf %7, %29 : vector<128x768xf32>
    %31 = vector.extract_strided_slice %30 {offsets = [0, 0], sizes = [8, 768], strides = [1, 1]} : vector<128x768xf32> to vector<8x768xf32>
    %32 = vector.extract_strided_slice %30 {offsets = [8, 0], sizes = [8, 768], strides = [1, 1]} : vector<128x768xf32> to vector<8x768xf32>
    %33 = vector.extract_strided_slice %30 {offsets = [16, 0], sizes = [8, 768], strides = [1, 1]} : vector<128x768xf32> to vector<8x768xf32>
    %34 = vector.extract_strided_slice %30 {offsets = [24, 0], sizes = [8, 768], strides = [1, 1]} : vector<128x768xf32> to vector<8x768xf32>
    %35 = vector.extract_strided_slice %30 {offsets = [32, 0], sizes = [8, 768], strides = [1, 1]} : vector<128x768xf32> to vector<8x768xf32>
    %36 = vector.extract_strided_slice %30 {offsets = [40, 0], sizes = [8, 768], strides = [1, 1]} : vector<128x768xf32> to vector<8x768xf32>
    %37 = vector.extract_strided_slice %30 {offsets = [48, 0], sizes = [8, 768], strides = [1, 1]} : vector<128x768xf32> to vector<8x768xf32>
    %38 = vector.extract_strided_slice %30 {offsets = [56, 0], sizes = [8, 768], strides = [1, 1]} : vector<128x768xf32> to vector<8x768xf32>
    %39 = vector.extract_strided_slice %30 {offsets = [64, 0], sizes = [8, 768], strides = [1, 1]} : vector<128x768xf32> to vector<8x768xf32>
    %40 = vector.extract_strided_slice %30 {offsets = [72, 0], sizes = [8, 768], strides = [1, 1]} : vector<128x768xf32> to vector<8x768xf32>
    %41 = vector.extract_strided_slice %30 {offsets = [80, 0], sizes = [8, 768], strides = [1, 1]} : vector<128x768xf32> to vector<8x768xf32>
    %42 = vector.extract_strided_slice %30 {offsets = [88, 0], sizes = [8, 768], strides = [1, 1]} : vector<128x768xf32> to vector<8x768xf32>
    %43 = vector.extract_strided_slice %30 {offsets = [96, 0], sizes = [8, 768], strides = [1, 1]} : vector<128x768xf32> to vector<8x768xf32>
    %44 = vector.extract_strided_slice %30 {offsets = [104, 0], sizes = [8, 768], strides = [1, 1]} : vector<128x768xf32> to vector<8x768xf32>
    %45 = vector.extract_strided_slice %30 {offsets = [112, 0], sizes = [8, 768], strides = [1, 1]} : vector<128x768xf32> to vector<8x768xf32>
    %46 = vector.extract_strided_slice %30 {offsets = [120, 0], sizes = [8, 768], strides = [1, 1]} : vector<128x768xf32> to vector<8x768xf32>
    %47 = arith.addf %31, %32 : vector<8x768xf32>
    %48 = arith.addf %33, %34 : vector<8x768xf32>
    %49 = arith.addf %35, %36 : vector<8x768xf32>
    %50 = arith.addf %37, %38 : vector<8x768xf32>
    %51 = arith.addf %39, %40 : vector<8x768xf32>
    %52 = arith.addf %41, %42 : vector<8x768xf32>
    %53 = arith.addf %43, %44 : vector<8x768xf32>
    %54 = arith.addf %45, %46 : vector<8x768xf32>
    %55 = arith.addf %47, %48 : vector<8x768xf32>
    %56 = arith.addf %49, %50 : vector<8x768xf32>
    %57 = arith.addf %51, %52 : vector<8x768xf32>
    %58 = arith.addf %53, %54 : vector<8x768xf32>
    %59 = arith.addf %55, %56 : vector<8x768xf32>
    %60 = arith.addf %57, %58 : vector<8x768xf32>
    %61 = arith.addf %59, %60 : vector<8x768xf32>
    %c0_18 = arith.constant 0 : index
    %c0_19 = arith.constant 0 : index
    %62 = vector.load %arg8[%c0_18, %c0_19] : memref<8x768xf32, #tpu.memory_space<vmem>>, vector<8x768xf32>
    tpu.vector_store %arg8[%c0_18, %c0_19], %61 {strides = array<i32>} : memref<8x768xf32, #tpu.memory_space<vmem>>, vector<8x768xf32>,
    return
  }
  func.func @transform_0(%arg0: i32) -> (i32, i32) {
    %c0_i32 = arith.constant 0 : i32
    %c0_i32_0 = arith.constant 0 : i32
    return %arg0, %c0_i32 : i32, i32
  }
  func.func @transform_1(%arg0: i32) -> (i32, i32) {
    %c0_i32 = arith.constant 0 : i32
    %c0_i32_0 = arith.constant 0 : i32
    %c0_i32_1 = arith.constant 0 : i32
    return %c0_i32, %c0_i32_0 : i32, i32
  }
  func.func @transform_2(%arg0: i32) -> (i32, i32) {
    %c0_i32 = arith.constant 0 : i32
    %c0_i32_0 = arith.constant 0 : i32
    %c0_i32_1 = arith.constant 0 : i32
    return %c0_i32, %c0_i32_0 : i32, i32
  }
  func.func @transform_3(%arg0: i32) -> (i32, i32) {
    %c0_i32 = arith.constant 0 : i32
    %c0_i32_0 = arith.constant 0 : i32
    %c0_i32_1 = arith.constant 0 : i32
    return %c0_i32, %c0_i32_0 : i32, i32
  }
  func.func @transform_4(%arg0: i32) -> (i32, i32) {
    %c0_i32 = arith.constant 0 : i32
    %c0_i32_0 = arith.constant 0 : i32
    %c0_i32_1 = arith.constant 0 : i32
    return %c0_i32, %c0_i32_0 : i32, i32
  }
  func.func @transform_5(%arg0: i32) -> (i32, i32) {
    %c0_i32 = arith.constant 0 : i32
    %c0_i32_0 = arith.constant 0 : i32
    %c0_i32_1 = arith.constant 0 : i32
    return %c0_i32, %c0_i32_0 : i32, i32
  }
  func.func @transform_6(%arg0: i32) -> (i32, i32) {
    %c0_i32 = arith.constant 0 : i32
    %c0_i32_0 = arith.constant 0 : i32
    %c0_i32_1 = arith.constant 0 : i32
    return %c0_i32, %c0_i32_0 : i32, i32
  }
  func.func @transform_7(%arg0: i32) -> (i32, i32) {
    %c0_i32 = arith.constant 0 : i32
    %c0_i32_0 = arith.constant 0 : i32
    return %arg0, %c0_i32 : i32, i32
  }
}

module attributes {stable_mosaic.version = 11 : i64} {
  func.func @_heads_kernel(%arg0: i32, %arg1: memref<2x3072xf32, #tpu.memory_space<vmem>>, %arg2: memref<2x3072xf32, #tpu.memory_space<vmem>>, %arg3: memref<2x8xbf16, #tpu.memory_space<vmem>>, %arg4: memref<3072x512xbf16, #tpu.memory_space<vmem>>, %arg5: memref<1x512xf32, #tpu.memory_space<vmem>>, %arg6: memref<512x512xbf16, #tpu.memory_space<vmem>>, %arg7: memref<512x512xbf16, #tpu.memory_space<vmem>>, %arg8: memref<1x512xf32, #tpu.memory_space<vmem>>, %arg9: memref<512x128xbf16, #tpu.memory_space<vmem>>, %arg10: memref<1x128xf32, #tpu.memory_space<vmem>>, %arg11: memref<512x512xbf16, #tpu.memory_space<vmem>>, %arg12: memref<8x512xbf16, #tpu.memory_space<vmem>>, %arg13: memref<1x512xf32, #tpu.memory_space<vmem>>, %arg14: memref<512x512xbf16, #tpu.memory_space<vmem>>, %arg15: memref<1x512xf32, #tpu.memory_space<vmem>>, %arg16: memref<2x512xf32, #tpu.memory_space<vmem>>, %arg17: memref<2x128xf32, #tpu.memory_space<vmem>>, %arg18: memref<2x512xf32, #tpu.memory_space<vmem>>) attributes {dimension_semantics = [#tpu.dimension_semantics<arbitrary>], iteration_bounds = array<i64: 1>, scalar_prefetch = 0 : i64, scratch_operands = 0 : i64, tpu.core_type = #tpu.core_type<tc>, window_params = [{pipeline_mode = #tpu.pipeline_mode<synchronous>, transform_indices = @transform_0, window_bounds = array<i64: 2, 3072>}, {pipeline_mode = #tpu.pipeline_mode<synchronous>, transform_indices = @transform_1, window_bounds = array<i64: 2, 3072>}, {pipeline_mode = #tpu.pipeline_mode<synchronous>, transform_indices = @transform_2, window_bounds = array<i64: 2, 8>}, {pipeline_mode = #tpu.pipeline_mode<synchronous>, transform_indices = @transform_3, window_bounds = array<i64: 3072, 512>}, {pipeline_mode = #tpu.pipeline_mode<synchronous>, transform_indices = @transform_4, window_bounds = array<i64: 1, 512>}, {pipeline_mode = #tpu.pipeline_mode<synchronous>, transform_indices = @transform_5, window_bounds = array<i64: 512, 512>}, {pipeline_mode = #tpu.pipeline_mode<synchronous>, transform_indices = @transform_6, window_bounds = array<i64: 512, 512>}, {pipeline_mode = #tpu.pipeline_mode<synchronous>, transform_indices = @transform_7, window_bounds = array<i64: 1, 512>}, {pipeline_mode = #tpu.pipeline_mode<synchronous>, transform_indices = @transform_8, window_bounds = array<i64: 512, 128>}, {pipeline_mode = #tpu.pipeline_mode<synchronous>, transform_indices = @transform_9, window_bounds = array<i64: 1, 128>}, {pipeline_mode = #tpu.pipeline_mode<synchronous>, transform_indices = @transform_10, window_bounds = array<i64: 512, 512>}, {pipeline_mode = #tpu.pipeline_mode<synchronous>, transform_indices = @transform_11, window_bounds = array<i64: 8, 512>}, {pipeline_mode = #tpu.pipeline_mode<synchronous>, transform_indices = @transform_12, window_bounds = array<i64: 1, 512>}, {pipeline_mode = #tpu.pipeline_mode<synchronous>, transform_indices = @transform_13, window_bounds = array<i64: 512, 512>}, {pipeline_mode = #tpu.pipeline_mode<synchronous>, transform_indices = @transform_14, window_bounds = array<i64: 1, 512>}, {pipeline_mode = #tpu.pipeline_mode<synchronous>, transform_indices = @transform_15, window_bounds = array<i64: 2, 512>}, {pipeline_mode = #tpu.pipeline_mode<synchronous>, transform_indices = @transform_16, window_bounds = array<i64: 2, 128>}, {pipeline_mode = #tpu.pipeline_mode<synchronous>, transform_indices = @transform_17, window_bounds = array<i64: 2, 512>}]} {
    %c0 = arith.constant 0 : index
    %c0_0 = arith.constant 0 : index
    %0 = vector.load %arg1[%c0, %c0_0] : memref<2x3072xf32, #tpu.memory_space<vmem>>, vector<2x3072xf32>
    %1 = arith.truncf %0 : vector<2x3072xf32> to vector<2x3072xbf16>
    %c0_1 = arith.constant 0 : index
    %c0_2 = arith.constant 0 : index
    %2 = vector.load %arg4[%c0_1, %c0_2] : memref<3072x512xbf16, #tpu.memory_space<vmem>>, vector<3072x512xbf16>
    %cst = arith.constant dense<0.000000e+00> : vector<2x512xf32>
    %3 = tpu.matmul %1, %2, %cst {dimension_numbers = #tpu.dot_dimension_numbers<[1], [0], [0], [1], [0, 0, 1, 1], [], []>} : vector<2x3072xbf16>, vector<3072x512xbf16>, vector<2x512xf32> -> vector<2x512xf32>
    %c0_3 = arith.constant 0 : index
    %c0_4 = arith.constant 0 : index
    %4 = vector.load %arg5[%c0_3, %c0_4] : memref<1x512xf32, #tpu.memory_space<vmem>>, vector<1x512xf32>
    %5 = vector.broadcast %4 : vector<1x512xf32> to vector<2x512xf32>
    %6 = arith.addf %3, %5 : vector<2x512xf32>
    %c0_5 = arith.constant 0 : index
    %c0_6 = arith.constant 0 : index
    %7 = vector.load %arg2[%c0_5, %c0_6] : memref<2x3072xf32, #tpu.memory_space<vmem>>, vector<2x3072xf32>
    %8 = arith.truncf %7 : vector<2x3072xf32> to vector<2x3072xbf16>
    %c0_7 = arith.constant 0 : index
    %c0_8 = arith.constant 0 : index
    %9 = vector.load %arg4[%c0_7, %c0_8] : memref<3072x512xbf16, #tpu.memory_space<vmem>>, vector<3072x512xbf16>
    %cst_9 = arith.constant dense<0.000000e+00> : vector<2x512xf32>
    %10 = tpu.matmul %8, %9, %cst_9 {dimension_numbers = #tpu.dot_dimension_numbers<[1], [0], [0], [1], [0, 0, 1, 1], [], []>} : vector<2x3072xbf16>, vector<3072x512xbf16>, vector<2x512xf32> -> vector<2x512xf32>
    %c0_10 = arith.constant 0 : index
    %c0_11 = arith.constant 0 : index
    %11 = vector.load %arg5[%c0_10, %c0_11] : memref<1x512xf32, #tpu.memory_space<vmem>>, vector<1x512xf32>
    %12 = vector.broadcast %11 : vector<1x512xf32> to vector<2x512xf32>
    %13 = arith.addf %10, %12 : vector<2x512xf32>
    %c0_12 = arith.constant 0 : index
    %c0_13 = arith.constant 0 : index
    %14 = vector.load %arg16[%c0_12, %c0_13] : memref<2x512xf32, #tpu.memory_space<vmem>>, vector<2x512xf32>
    tpu.vector_store %arg16[%c0_12, %c0_13], %13 {strides = array<i32>} : memref<2x512xf32, #tpu.memory_space<vmem>>, vector<2x512xf32>,
    %15 = arith.truncf %6 : vector<2x512xf32> to vector<2x512xbf16>
    %16 = arith.truncf %13 : vector<2x512xf32> to vector<2x512xbf16>
    %c0_14 = arith.constant 0 : index
    %c0_15 = arith.constant 0 : index
    %17 = vector.load %arg6[%c0_14, %c0_15] : memref<512x512xbf16, #tpu.memory_space<vmem>>, vector<512x512xbf16>
    %cst_16 = arith.constant dense<0.000000e+00> : vector<2x512xf32>
    %18 = tpu.matmul %15, %17, %cst_16 {dimension_numbers = #tpu.dot_dimension_numbers<[1], [0], [0], [1], [0, 0, 1, 1], [], []>} : vector<2x512xbf16>, vector<512x512xbf16>, vector<2x512xf32> -> vector<2x512xf32>
    %c0_17 = arith.constant 0 : index
    %c0_18 = arith.constant 0 : index
    %19 = vector.load %arg7[%c0_17, %c0_18] : memref<512x512xbf16, #tpu.memory_space<vmem>>, vector<512x512xbf16>
    %cst_19 = arith.constant dense<0.000000e+00> : vector<2x512xf32>
    %20 = tpu.matmul %16, %19, %cst_19 {dimension_numbers = #tpu.dot_dimension_numbers<[1], [0], [0], [1], [0, 0, 1, 1], [], []>} : vector<2x512xbf16>, vector<512x512xbf16>, vector<2x512xf32> -> vector<2x512xf32>
    %21 = arith.addf %18, %20 : vector<2x512xf32>
    %c0_20 = arith.constant 0 : index
    %c0_21 = arith.constant 0 : index
    %22 = vector.load %arg8[%c0_20, %c0_21] : memref<1x512xf32, #tpu.memory_space<vmem>>, vector<1x512xf32>
    %23 = vector.broadcast %22 : vector<1x512xf32> to vector<2x512xf32>
    %24 = arith.addf %21, %23 : vector<2x512xf32>
    %cst_22 = arith.constant 0.000000e+00 : f32
    %25 = vector.broadcast %cst_22 : f32 to vector<2x512xf32>
    %26 = arith.maximumf %24, %25 : vector<2x512xf32>
    %27 = arith.truncf %26 : vector<2x512xf32> to vector<2x512xbf16>
    %c0_23 = arith.constant 0 : index
    %c0_24 = arith.constant 0 : index
    %28 = vector.load %arg9[%c0_23, %c0_24] : memref<512x128xbf16, #tpu.memory_space<vmem>>, vector<512x128xbf16>
    %cst_25 = arith.constant dense<0.000000e+00> : vector<2x128xf32>
    %29 = tpu.matmul %27, %28, %cst_25 {dimension_numbers = #tpu.dot_dimension_numbers<[1], [0], [0], [1], [0, 0, 1, 1], [], []>} : vector<2x512xbf16>, vector<512x128xbf16>, vector<2x128xf32> -> vector<2x128xf32>
    %c0_26 = arith.constant 0 : index
    %c0_27 = arith.constant 0 : index
    %30 = vector.load %arg10[%c0_26, %c0_27] : memref<1x128xf32, #tpu.memory_space<vmem>>, vector<1x128xf32>
    %31 = vector.broadcast %30 : vector<1x128xf32> to vector<2x128xf32>
    %32 = arith.addf %29, %31 : vector<2x128xf32>
    %c0_28 = arith.constant 0 : index
    %c0_29 = arith.constant 0 : index
    %33 = vector.load %arg17[%c0_28, %c0_29] : memref<2x128xf32, #tpu.memory_space<vmem>>, vector<2x128xf32>
    tpu.vector_store %arg17[%c0_28, %c0_29], %32 {strides = array<i32>} : memref<2x128xf32, #tpu.memory_space<vmem>>, vector<2x128xf32>,
    %c0_30 = arith.constant 0 : index
    %c0_31 = arith.constant 0 : index
    %34 = vector.load %arg11[%c0_30, %c0_31] : memref<512x512xbf16, #tpu.memory_space<vmem>>, vector<512x512xbf16>
    %cst_32 = arith.constant dense<0.000000e+00> : vector<2x512xf32>
    %35 = tpu.matmul %15, %34, %cst_32 {dimension_numbers = #tpu.dot_dimension_numbers<[1], [0], [0], [1], [0, 0, 1, 1], [], []>} : vector<2x512xbf16>, vector<512x512xbf16>, vector<2x512xf32> -> vector<2x512xf32>
    %c0_33 = arith.constant 0 : index
    %c0_34 = arith.constant 0 : index
    %36 = vector.load %arg3[%c0_33, %c0_34] : memref<2x8xbf16, #tpu.memory_space<vmem>>, vector<2x8xbf16>
    %c0_35 = arith.constant 0 : index
    %c0_36 = arith.constant 0 : index
    %37 = vector.load %arg12[%c0_35, %c0_36] : memref<8x512xbf16, #tpu.memory_space<vmem>>, vector<8x512xbf16>
    %cst_37 = arith.constant dense<0.000000e+00> : vector<2x512xf32>
    %38 = tpu.matmul %36, %37, %cst_37 {dimension_numbers = #tpu.dot_dimension_numbers<[1], [0], [0], [1], [0, 0, 1, 1], [], []>} : vector<2x8xbf16>, vector<8x512xbf16>, vector<2x512xf32> -> vector<2x512xf32>
    %39 = arith.addf %35, %38 : vector<2x512xf32>
    %c0_38 = arith.constant 0 : index
    %c0_39 = arith.constant 0 : index
    %40 = vector.load %arg13[%c0_38, %c0_39] : memref<1x512xf32, #tpu.memory_space<vmem>>, vector<1x512xf32>
    %41 = vector.broadcast %40 : vector<1x512xf32> to vector<2x512xf32>
    %42 = arith.addf %39, %41 : vector<2x512xf32>
    %cst_40 = arith.constant 0.000000e+00 : f32
    %43 = vector.broadcast %cst_40 : f32 to vector<2x512xf32>
    %44 = arith.maximumf %42, %43 : vector<2x512xf32>
    %45 = arith.truncf %44 : vector<2x512xf32> to vector<2x512xbf16>
    %c0_41 = arith.constant 0 : index
    %c0_42 = arith.constant 0 : index
    %46 = vector.load %arg14[%c0_41, %c0_42] : memref<512x512xbf16, #tpu.memory_space<vmem>>, vector<512x512xbf16>
    %cst_43 = arith.constant dense<0.000000e+00> : vector<2x512xf32>
    %47 = tpu.matmul %45, %46, %cst_43 {dimension_numbers = #tpu.dot_dimension_numbers<[1], [0], [0], [1], [0, 0, 1, 1], [], []>} : vector<2x512xbf16>, vector<512x512xbf16>, vector<2x512xf32> -> vector<2x512xf32>
    %c0_44 = arith.constant 0 : index
    %c0_45 = arith.constant 0 : index
    %48 = vector.load %arg15[%c0_44, %c0_45] : memref<1x512xf32, #tpu.memory_space<vmem>>, vector<1x512xf32>
    %49 = vector.broadcast %48 : vector<1x512xf32> to vector<2x512xf32>
    %50 = arith.addf %47, %49 : vector<2x512xf32>
    %c0_46 = arith.constant 0 : index
    %c0_47 = arith.constant 0 : index
    %51 = vector.load %arg18[%c0_46, %c0_47] : memref<2x512xf32, #tpu.memory_space<vmem>>, vector<2x512xf32>
    tpu.vector_store %arg18[%c0_46, %c0_47], %50 {strides = array<i32>} : memref<2x512xf32, #tpu.memory_space<vmem>>, vector<2x512xf32>,
    return
  }
  func.func @transform_0(%arg0: i32) -> (i32, i32) {
    %c0_i32 = arith.constant 0 : i32
    %c0_i32_0 = arith.constant 0 : i32
    %c0_i32_1 = arith.constant 0 : i32
    return %c0_i32, %c0_i32_0 : i32, i32
  }
  func.func @transform_1(%arg0: i32) -> (i32, i32) {
    %c0_i32 = arith.constant 0 : i32
    %c0_i32_0 = arith.constant 0 : i32
    %c0_i32_1 = arith.constant 0 : i32
    return %c0_i32, %c0_i32_0 : i32, i32
  }
  func.func @transform_2(%arg0: i32) -> (i32, i32) {
    %c0_i32 = arith.constant 0 : i32
    %c0_i32_0 = arith.constant 0 : i32
    %c0_i32_1 = arith.constant 0 : i32
    return %c0_i32, %c0_i32_0 : i32, i32
  }
  func.func @transform_3(%arg0: i32) -> (i32, i32) {
    %c0_i32 = arith.constant 0 : i32
    %c0_i32_0 = arith.constant 0 : i32
    %c0_i32_1 = arith.constant 0 : i32
    return %c0_i32, %c0_i32_0 : i32, i32
  }
  func.func @transform_4(%arg0: i32) -> (i32, i32) {
    %c0_i32 = arith.constant 0 : i32
    %c0_i32_0 = arith.constant 0 : i32
    %c0_i32_1 = arith.constant 0 : i32
    return %c0_i32, %c0_i32_0 : i32, i32
  }
  func.func @transform_5(%arg0: i32) -> (i32, i32) {
    %c0_i32 = arith.constant 0 : i32
    %c0_i32_0 = arith.constant 0 : i32
    %c0_i32_1 = arith.constant 0 : i32
    return %c0_i32, %c0_i32_0 : i32, i32
  }
  func.func @transform_6(%arg0: i32) -> (i32, i32) {
    %c0_i32 = arith.constant 0 : i32
    %c0_i32_0 = arith.constant 0 : i32
    %c0_i32_1 = arith.constant 0 : i32
    return %c0_i32, %c0_i32_0 : i32, i32
  }
  func.func @transform_7(%arg0: i32) -> (i32, i32) {
    %c0_i32 = arith.constant 0 : i32
    %c0_i32_0 = arith.constant 0 : i32
    %c0_i32_1 = arith.constant 0 : i32
    return %c0_i32, %c0_i32_0 : i32, i32
  }
  func.func @transform_8(%arg0: i32) -> (i32, i32) {
    %c0_i32 = arith.constant 0 : i32
    %c0_i32_0 = arith.constant 0 : i32
    %c0_i32_1 = arith.constant 0 : i32
    return %c0_i32, %c0_i32_0 : i32, i32
  }
  func.func @transform_9(%arg0: i32) -> (i32, i32) {
    %c0_i32 = arith.constant 0 : i32
    %c0_i32_0 = arith.constant 0 : i32
    %c0_i32_1 = arith.constant 0 : i32
    return %c0_i32, %c0_i32_0 : i32, i32
  }
  func.func @transform_10(%arg0: i32) -> (i32, i32) {
    %c0_i32 = arith.constant 0 : i32
    %c0_i32_0 = arith.constant 0 : i32
    %c0_i32_1 = arith.constant 0 : i32
    return %c0_i32, %c0_i32_0 : i32, i32
  }
  func.func @transform_11(%arg0: i32) -> (i32, i32) {
    %c0_i32 = arith.constant 0 : i32
    %c0_i32_0 = arith.constant 0 : i32
    %c0_i32_1 = arith.constant 0 : i32
    return %c0_i32, %c0_i32_0 : i32, i32
  }
  func.func @transform_12(%arg0: i32) -> (i32, i32) {
    %c0_i32 = arith.constant 0 : i32
    %c0_i32_0 = arith.constant 0 : i32
    %c0_i32_1 = arith.constant 0 : i32
    return %c0_i32, %c0_i32_0 : i32, i32
  }
  func.func @transform_13(%arg0: i32) -> (i32, i32) {
    %c0_i32 = arith.constant 0 : i32
    %c0_i32_0 = arith.constant 0 : i32
    %c0_i32_1 = arith.constant 0 : i32
    return %c0_i32, %c0_i32_0 : i32, i32
  }
  func.func @transform_14(%arg0: i32) -> (i32, i32) {
    %c0_i32 = arith.constant 0 : i32
    %c0_i32_0 = arith.constant 0 : i32
    %c0_i32_1 = arith.constant 0 : i32
    return %c0_i32, %c0_i32_0 : i32, i32
  }
  func.func @transform_15(%arg0: i32) -> (i32, i32) {
    %c0_i32 = arith.constant 0 : i32
    %c0_i32_0 = arith.constant 0 : i32
    %c0_i32_1 = arith.constant 0 : i32
    return %c0_i32, %c0_i32_0 : i32, i32
  }
  func.func @transform_16(%arg0: i32) -> (i32, i32) {
    %c0_i32 = arith.constant 0 : i32
    %c0_i32_0 = arith.constant 0 : i32
    %c0_i32_1 = arith.constant 0 : i32
    return %c0_i32, %c0_i32_0 : i32, i32
  }
  func.func @transform_17(%arg0: i32) -> (i32, i32) {
    %c0_i32 = arith.constant 0 : i32
    %c0_i32_0 = arith.constant 0 : i32
    %c0_i32_1 = arith.constant 0 : i32
    return %c0_i32, %c0_i32_0 : i32, i32
  }
}

</mosaic_0001>

<llo_original>
// kernel: _lambda_.2
$region0: #{_lambda_.2}
  #allocation0 [shape = 'u32[]', space=smem, size = 0x4, offset = 0x4, fixed_abs, tag = 'smem constant byte address 0x4 - core index']
  #allocation1 [shape = 'u32[144,128]{1,0:T(1,128)}', space=vmem, size = 0x12000, scoped, tag = 'internal scratch']
  #allocation2 [shape = 'f32[1,1]{1,0:T(1,128)S(1)}', space=vmem, size = 0x200, scoped, tag = 'scoped memory for _lambda_.2']
  %s0 = inlined_call_operand.vmem [shape: bf16[256,64], index: 0, kind: input, shape index: {}]
  %s1 = inlined_call_operand.vmem [shape: bf16[64,768], index: 1, kind: input, shape index: {}]
  %s2 = inlined_call_operand.hbm [shape: f32[1,768], index: 2, kind: input, shape index: {}]
  %s3 = inlined_call_operand.hbm [shape: bf16[768,128], index: 3, kind: input, shape index: {}]
  %s4 = inlined_call_operand.vmem [shape: f32[1,128], index: 4, kind: input, shape index: {}]
  %s5 = inlined_call_operand.vmem [shape: f32[1,128], index: 5, kind: input, shape index: {}]
  %s6 = inlined_call_operand.<no memory space> [shape: f32[1,1], index: 6, kind: input, shape index: {}]
  %s7 = inlined_call_operand.vmem [shape: f32[16,768], index: 7, kind: output, shape index: {}]
  %s8 = sld [smem:[#allocation0]]
  $region69: #{_lambda_.2} parent=0
    _
  %s10 = ssub.s32 1, %s8
  %s11 = scalar_select 0, %s10, %s8
  %v12 = vstv %s6
  %13 = vst [vmem:[#allocation2] sm:$0x1] %v12
  $region1: #{_lambda_.2} parent=0
    #allocation3 [shape = 'u8[3072]{0}', space=vmem, size = 0xc00, scoped, tag = 'input window, operand 2, single buffered']
    #allocation4 [shape = 's32[2]{0}', space=sflag, size = 0x8, scoped, tag = 'scoped memory for _lambda_.2']
    #allocation5 [shape = 'u8[196608]{0}', space=vmem, size = 0x30000, scoped, tag = 'input window, operand 3, single buffered']
    #allocation6 [shape = 's32[1]{0}', space=sflag, size = 0x4, scoped, tag = 'scoped memory for _lambda_.2']
    %14 = vsyncpa [#allocation4], 0
    %15 = vsyncpa [#allocation6], 0
    loop: start=0, step=1, limit=4
    $region2: #{_lambda_.2} parent=1 // loop_pre_header
      _
    $region3: #{_lambda_.2} parent=1 // loop_header
      %s17 = sphi 0, %s21
      %p18 = scmp.ge.s32.totalorder %s17, 4
      %s27 = sphi 0, %s29
      %s30 = sphi 0, %s27
      %s31 = sphi 0, %s30
      %s47 = sphi 0, %s31
      %s51 = sphi 0, %s51
      %s53 = sphi 0, %s51
      %s54 = sphi 0, %s53
      %s68 = sphi 0, %s54
      %s72 = sphi 0, %s72
      %s74 = sphi 0, %s72
      %s75 = sphi 0, %s74
      %s89 = sphi 0, %s75
      %s93 = sphi 0, %s93
      %s95 = sphi 0, %s93
      %s96 = sphi 0, %s95
      %s110 = sphi 0, %s96
      %s114 = sphi 0, %s114
      %s116 = sphi 0, %s114
      %s117 = sphi 0, %s116
      %s131 = sphi 0, %s117
      %s135 = sphi 0, %s135
      %s137 = sphi 0, %s135
      %s138 = sphi 0, %s137
      %s152 = sphi 0, %s138
      %s156 = sphi 0, %s156
      %s158 = sphi 0, %s156
      %s159 = sphi 0, %s158
      %s173 = sphi 0, %s159
      %s179 = sphi 0, %s181
      %s182 = sphi 0, %s179
      %s183 = sphi 0, %s182
      %s199 = sphi 0, %s183
    $region4: #{_lambda_.2} parent=1 // loop_header_branch
      %20 = sbr.rel (%p18) target = $region8
    $region5: #{_lambda_.2} parent=1 // loop_body
      %s22 = ssub.s32 %s17, 1
      %s23 = ssub.s32 %s17, 2
      %s24 = sadd.s32 %s17, 1
      %s25 = ssub.s32 %s17, %s24
      %p26 = scmp.eq.s32.totalorder %s25, 0
      %s28 = sadd.s32 %s27, 1
      %s29 = scalar_select %p26, %s27, %s28
      %p32 = pneg %p26
      %p33 = scmp.eq.s32.totalorder %s17, 1
      %p34 = por %p32, %p33
      %p35 = scmp.ne.s32.totalorder %s27, %s30
      %p36 = scmp.eq.s32.totalorder %s17, 0
      %p37 = por %p35, %p36
      %p38 = scmp.ne.s32.totalorder %s27, %s30
      %p39 = scmp.eq.s32.totalorder %s22, 1
      %p40 = por %p38, %p39
      %p41 = scmp.ne.s32.totalorder %s30, %s31
      %p42 = scmp.eq.s32.totalorder %s22, 0
      %p43 = por %p41, %p42
      %p44 = scmp.ne.s32.totalorder %s30, %s31
      %p45 = scmp.eq.s32.totalorder %s23, 1
      %p46 = por %p44, %p45
      %p48 = scmp.ne.s32.totalorder %s31, %s47
      %p49 = scmp.eq.s32.totalorder %s23, 0
      %p50 = por %p48, %p49
      %s52 = sadd.s32 %s51, 1
      %p55 = scmp.eq.s32.totalorder %s17, 1
      %p56 = scmp.ne.s32.totalorder %s51, %s53
      %p57 = scmp.eq.s32.totalorder %s17, 0
      %p58 = por %p56, %p57
      %p59 = scmp.ne.s32.totalorder %s51, %s53
      %p60 = scmp.eq.s32.totalorder %s22, 1
      %p61 = por %p59, %p60
      %p62 = scmp.ne.s32.totalorder %s53, %s54
      %p63 = scmp.eq.s32.totalorder %s22, 0
      %p64 = por %p62, %p63
      %p65 = scmp.ne.s32.totalorder %s53, %s54
      %p66 = scmp.eq.s32.totalorder %s23, 1
      %p67 = por %p65, %p66
      %p69 = scmp.ne.s32.totalorder %s54, %s68
      %p70 = scmp.eq.s32.totalorder %s23, 0
      %p71 = por %p69, %p70
      %s73 = sadd.s32 %s72, 1
      %p76 = scmp.eq.s32.totalorder %s17, 1
      %p77 = scmp.ne.s32.totalorder %s72, %s74
      %p78 = scmp.eq.s32.totalorder %s17, 0
      %p79 = por %p77, %p78
      %p80 = scmp.ne.s32.totalorder %s72, %s74
      %p81 = scmp.eq.s32.totalorder %s22, 1
      %p82 = por %p80, %p81
      %p83 = scmp.ne.s32.totalorder %s74, %s75
      %p84 = scmp.eq.s32.totalorder %s22, 0
      %p85 = por %p83, %p84
      %p86 = scmp.ne.s32.totalorder %s74, %s75
      %p87 = scmp.eq.s32.totalorder %s23, 1
      %p88 = por %p86, %p87
      %p90 = scmp.ne.s32.totalorder %s75, %s89
      %p91 = scmp.eq.s32.totalorder %s23, 0
      %p92 = por %p90, %p91
      %s94 = sadd.s32 %s93, 1
      %p97 = scmp.eq.s32.totalorder %s17, 1
      %p98 = scmp.ne.s32.totalorder %s93, %s95
      %p99 = scmp.eq.s32.totalorder %s17, 0
      %p100 = por %p98, %p99
      %p101 = scmp.ne.s32.totalorder %s93, %s95
      %p102 = scmp.eq.s32.totalorder %s22, 1
      %p103 = por %p101, %p102
      %p104 = scmp.ne.s32.totalorder %s95, %s96
      %p105 = scmp.eq.s32.totalorder %s22, 0
      %p106 = por %p104, %p105
      %p107 = scmp.ne.s32.totalorder %s95, %s96
      %p108 = scmp.eq.s32.totalorder %s23, 1
      %p109 = por %p107, %p108
      %p111 = scmp.ne.s32.totalorder %s96, %s110
      %p112 = scmp.eq.s32.totalorder %s23, 0
      %p113 = por %p111, %p112
      %s115 = sadd.s32 %s114, 1
      %p118 = scmp.eq.s32.totalorder %s17, 1
      %p119 = scmp.ne.s32.totalorder %s114, %s116
      %p120 = scmp.eq.s32.totalorder %s17, 0
      %p121 = por %p119, %p120
      %p122 = scmp.ne.s32.totalorder %s114, %s116
      %p123 = scmp.eq.s32.totalorder %s22, 1
      %p124 = por %p122, %p123
      %p125 = scmp.ne.s32.totalorder %s116, %s117
      %p126 = scmp.eq.s32.totalorder %s22, 0
      %p127 = por %p125, %p126
      %p128 = scmp.ne.s32.totalorder %s116, %s117
      %p129 = scmp.eq.s32.totalorder %s23, 1
      %p130 = por %p128, %p129
      %p132 = scmp.ne.s32.totalorder %s117, %s131
      %p133 = scmp.eq.s32.totalorder %s23, 0
      %p134 = por %p132, %p133
      %s136 = sadd.s32 %s135, 1
      %p139 = scmp.eq.s32.totalorder %s17, 1
      %p140 = scmp.ne.s32.totalorder %s135, %s137
      %p141 = scmp.eq.s32.totalorder %s17, 0
      %p142 = por %p140, %p141
      %p143 = scmp.ne.s32.totalorder %s135, %s137
      %p144 = scmp.eq.s32.totalorder %s22, 1
      %p145 = por %p143, %p144
      %p146 = scmp.ne.s32.totalorder %s137, %s138
      %p147 = scmp.eq.s32.totalorder %s22, 0
      %p148 = por %p146, %p147
      %p149 = scmp.ne.s32.totalorder %s137, %s138
      %p150 = scmp.eq.s32.totalorder %s23, 1
      %p151 = por %p149, %p150
      %p153 = scmp.ne.s32.totalorder %s138, %s152
      %p154 = scmp.eq.s32.totalorder %s23, 0
      %p155 = por %p153, %p154
      %s157 = sadd.s32 %s156, 1
      %p160 = scmp.eq.s32.totalorder %s17, 1
      %p161 = scmp.ne.s32.totalorder %s156, %s158
      %p162 = scmp.eq.s32.totalorder %s17, 0
      %p163 = por %p161, %p162
      %p164 = scmp.ne.s32.totalorder %s156, %s158
      %p165 = scmp.eq.s32.totalorder %s22, 1
      %p166 = por %p164, %p165
      %p167 = scmp.ne.s32.totalorder %s158, %s159
      %p168 = scmp.eq.s32.totalorder %s22, 0
      %p169 = por %p167, %p168
      %p170 = scmp.ne.s32.totalorder %s158, %s159
      %p171 = scmp.eq.s32.totalorder %s23, 1
      %p172 = por %p170, %p171
      %p174 = scmp.ne.s32.totalorder %s159, %s173
      %p175 = scmp.eq.s32.totalorder %s23, 0
      %p176 = por %p174, %p175
      %s177 = ssub.s32 %s17, %s24
      %p178 = scmp.eq.s32.totalorder %s177, 0
      %s180 = sadd.s32 %s179, 1
      %s181 = scalar_select %p178, %s179, %s180
      %p184 = pneg %p178
      %p185 = scmp.eq.s32.totalorder %s17, 1
      %p186 = por %p184, %p185
      %p187 = scmp.ne.s32.totalorder %s179, %s182
      %p188 = scmp.eq.s32.totalorder %s17, 0
      %p189 = por %p187, %p188
      %p190 = scmp.ne.s32.totalorder %s179, %s182
      %p191 = scmp.eq.s32.totalorder %s22, 1
      %p192 = por %p190, %p191
      %p193 = scmp.ne.s32.totalorder %s182, %s183
      %p194 = scmp.eq.s32.totalorder %s22, 0
      %p195 = por %p193, %p194
      %p196 = scmp.ne.s32.totalorder %s182, %s183
      %p197 = scmp.eq.s32.totalorder %s23, 1
      %p198 = por %p196, %p197
      %p200 = scmp.ne.s32.totalorder %s183, %s199
      %p201 = scmp.eq.s32.totalorder %s23, 0
      %p202 = por %p200, %p201
      %p203 = scmp.le.s32.totalorder 1, %s17
      %p204 = scmp.lt.s32.totalorder %s17, 3
      %p205 = pnand %p203, %p204
      %p206 = pneg %p205
      // Predicated region
      $region9: #{_lambda_.2} parent=5 // pred_check
        _
      $region10: #{_lambda_.2} parent=5 // pred_check_branch
        %208 = sbr.rel (%p205) target = $region12
      $region11: #{_lambda_.2} parent=5 // pred_region
        %s209 = ssub.s32 %s17, 1
        // Predicated region
        $region13: #{_lambda_.2} parent=11 // pred_check
          %p210 = pneg %p64
        $region14: #{_lambda_.2} parent=11 // pred_check_branch
          %212 = sbr.rel (%p210) target = $region16
        $region15: #{_lambda_.2} parent=11 // pred_region
          _
        $region16: #{_lambda_.2} parent=11 // pred_fallthru
          _
        // Predicated region
        $region17: #{_lambda_.2} parent=11 // pred_check
          %p213 = pneg %p85
        $region18: #{_lambda_.2} parent=11 // pred_check_branch
          %215 = sbr.rel (%p213) target = $region20
        $region19: #{_lambda_.2} parent=11 // pred_region
          %s217 = ssub.s32 96, 96
          %218 = vsyncadd [#allocation4], %s217
          %s220 = sshll.u32 [#allocation3], 4
          %s221 = int_to_ptr.vmem [resolvable:$true] %s220
          %223 = dma.hbm_to_vmem [thread:$0]  %s2, 96, %s221, [#allocation4]
        $region20: #{_lambda_.2} parent=11 // pred_fallthru
          _
        // Predicated region
        $region21: #{_lambda_.2} parent=11 // pred_check
          %p224 = pneg %p106
        $region22: #{_lambda_.2} parent=11 // pred_check_branch
          %226 = sbr.rel (%p224) target = $region24
        $region23: #{_lambda_.2} parent=11 // pred_region
          %s228 = ssub.s32 6144, 6144
          %229 = vsyncadd [#allocation6], %s228
          %s230 = sshll.u32 [#allocation5], 4
          %s231 = int_to_ptr.vmem [resolvable:$true] %s230
          %236 = dma.hbm_to_vmem [thread:$0]  %s3, 6144, %s231, [#allocation6], 64, 64, 4
        $region24: #{_lambda_.2} parent=11 // pred_fallthru
          _
        // Predicated region
        $region25: #{_lambda_.2} parent=11 // pred_check
          %p237 = pneg %p127
        $region26: #{_lambda_.2} parent=11 // pred_check_branch
          %239 = sbr.rel (%p237) target = $region28
        $region27: #{_lambda_.2} parent=11 // pred_region
          _
        $region28: #{_lambda_.2} parent=11 // pred_fallthru
          _
        // Predicated region
        $region29: #{_lambda_.2} parent=11 // pred_check
          %p240 = pneg %p148
        $region30: #{_lambda_.2} parent=11 // pred_check_branch
          %242 = sbr.rel (%p240) target = $region32
        $region31: #{_lambda_.2} parent=11 // pred_region
          _
        $region32: #{_lambda_.2} parent=11 // pred_fallthru
          _
        // Predicated region
        $region33: #{_lambda_.2} parent=11 // pred_check
          %p243 = pneg %p169
        $region34: #{_lambda_.2} parent=11 // pred_check_branch
          %245 = sbr.rel (%p243) target = $region36
        $region35: #{_lambda_.2} parent=11 // pred_region
          _
        $region36: #{_lambda_.2} parent=11 // pred_fallthru
          _
      $region12: #{_lambda_.2} parent=5 // pred_fallthru
        _
      %p246 = scmp.lt.s32.totalorder %s17, 2
      // Predicated region
      $region37: #{_lambda_.2} parent=5 // pred_check
        %p247 = pneg %p246
      $region38: #{_lambda_.2} parent=5 // pred_check_branch
        %249 = sbr.rel (%p247) target = $region40
      $region39: #{_lambda_.2} parent=5 // pred_region
        // Predicated region
        $region41: #{_lambda_.2} parent=39 // pred_check
          %p250 = pneg %p37
        $region42: #{_lambda_.2} parent=39 // pred_check_branch
          %252 = sbr.rel (%p250) target = $region44
        $region43: #{_lambda_.2} parent=39 // pred_region
          %s253 = smul.u32 16, %s17
          %p254 = scmp.lt.s32.totalorder %s253, 31
          %s255 = scalar_select %p254, %s253, 31
          %s256 = smul.addr %s255, 4
          %s257 = scalar_lea.vmem %s0, %s256
          %s258 = smul.u32 16, %s17
        $region44: #{_lambda_.2} parent=39 // pred_fallthru
          _
      $region40: #{_lambda_.2} parent=5 // pred_fallthru
        _
      %p259 = scmp.le.s32.totalorder 1, %s17
      %p260 = scmp.lt.s32.totalorder %s17, 3
      %p261 = pnand %p259, %p260
      %p262 = pneg %p261
      // Predicated region
      $region45: #{_lambda_.2} parent=5 // pred_check
        _
      $region46: #{_lambda_.2} parent=5 // pred_check_branch
        %264 = sbr.rel (%p261) target = $region48
      $region47: #{_lambda_.2} parent=5 // pred_region
        %s265 = ssub.s32 %s17, 1
        // Predicated region
        $region49: #{_lambda_.2} parent=47 // pred_check
          %p266 = pneg %p85
        $region50: #{_lambda_.2} parent=47 // pred_check_branch
          %268 = sbr.rel (%p266) target = $region52
        $region51: #{_lambda_.2} parent=47 // pred_region
          %269 = dma.done [#allocation4], 96
        $region52: #{_lambda_.2} parent=47 // pred_fallthru
          _
        // Predicated region
        $region53: #{_lambda_.2} parent=47 // pred_check
          %p270 = pneg %p106
        $region54: #{_lambda_.2} parent=47 // pred_check_branch
          %272 = sbr.rel (%p270) target = $region56
        $region55: #{_lambda_.2} parent=47 // pred_region
          %273 = dma.done [#allocation6], 6144
        $region56: #{_lambda_.2} parent=47 // pred_fallthru
          _
        %s274 = smul.u32 16, %s22
        %p275 = scmp.lt.s32.totalorder %s274, 31
        %s276 = scalar_select %p275, %s274, 31
        %s277 = smul.addr %s276, 4
        %s278 = scalar_lea.vmem %s0, %s277
        %p279 = pneg %p43
        %p280 = pneg %p40
        %p281 = pneg %p64
        %p282 = pneg %p61
        %p283 = pneg %p85
        %p284 = pneg %p82
        %p285 = pneg %p106
        %p286 = pneg %p103
        %p287 = pneg %p127
        %p288 = pneg %p124
        %p289 = pneg %p148
        %p290 = pneg %p145
        %p291 = pneg %p169
        %p292 = pneg %p166
        %p293 = pneg %p195
        %p294 = pneg %p192
        %p295 = scmp.lt.s32.totalorder %s22, 1
        %s296 = scalar_select %p295, %s22, 1
        %s297 = smul.addr %s296, 6
        %s298 = smul.addr %s297, 8
        %s299 = scalar_lea.vmem %s7, %s298
        %s300 = smul.u32 16, %s22
        %p301 = scmp.lt.s32.totalorder %s300, 31
        %s302 = scalar_select %p301, %s300, 31
        %s303 = smul.addr %s302, 4
        %s304 = scalar_lea.vmem %s0, %s303
        %s305 = smul.u32 16, %s22
        %p306 = scmp.lt.s32.totalorder %s22, 1
        %s307 = scalar_select %p306, %s22, 1
        %s308 = smul.addr %s307, 6
        %s309 = smul.addr %s308, 8
        %s310 = scalar_lea.vmem %s7, %s309
        %v312 = vld [vmem:[%s304] sm:$0xf]
        %v313 = vld [vmem:[%s304 + $0x4] sm:$0xf]
        %v314 = vld [vmem:[%s304 + $0x8] sm:$0xf]
        %v315 = vld [vmem:[%s304 + $0xc] sm:$0xf]
        %v316 = vld [vmem:[%s304 + $0x10] sm:$0xf]
        %v317 = vld [vmem:[%s304 + $0x14] sm:$0xf]
        %v318 = vld [vmem:[%s304 + $0x18] sm:$0xf]
        %v319 = vld [vmem:[%s304 + $0x1c] sm:$0xf]
        %v320 = vld [vmem:[%s304 + $0x20] sm:$0xf]
        %v321 = vld [vmem:[%s304 + $0x24] sm:$0xf]
        %v322 = vld [vmem:[%s304 + $0x28] sm:$0xf]
        %v323 = vld [vmem:[%s304 + $0x2c] sm:$0xf]
        %v324 = vld [vmem:[%s304 + $0x30] sm:$0xf]
        %v325 = vld [vmem:[%s304 + $0x34] sm:$0xf]
        %v326 = vld [vmem:[%s304 + $0x38] sm:$0xf]
        %v327 = vld [vmem:[%s304 + $0x3c] sm:$0xf]
        %v328 = vld [vmem:[%s1] sm:$0xff]
        %v329 = vld [vmem:[%s1 + $0x8] sm:$0xff]
        %v330 = vld [vmem:[%s1 + $0x10] sm:$0xff]
        %v331 = vld [vmem:[%s1 + $0x18] sm:$0xff]
        %v332 = vld [vmem:[%s1 + $0x20] sm:$0xff]
        %v333 = vld [vmem:[%s1 + $0x28] sm:$0xff]
        %v334 = vld [vmem:[%s1 + $0x30] sm:$0xff]
        %v335 = vld [vmem:[%s1 + $0x38] sm:$0xff]
        %v336 = vld [vmem:[%s1 + $0x40] sm:$0xff]
        %v337 = vld [vmem:[%s1 + $0x48] sm:$0xff]
        %v338 = vld [vmem:[%s1 + $0x50] sm:$0xff]
        %v339 = vld [vmem:[%s1 + $0x58] sm:$0xff]
        %v340 = vld [vmem:[%s1 + $0x60] sm:$0xff]
        %v341 = vld [vmem:[%s1 + $0x68] sm:$0xff]
        %v342 = vld [vmem:[%s1 + $0x70] sm:$0xff]
        %v343 = vld [vmem:[%s1 + $0x78] sm:$0xff]
        %v344 = vld [vmem:[%s1 + $0x80] sm:$0xff]
        %v345 = vld [vmem:[%s1 + $0x88] sm:$0xff]
        %v346 = vld [vmem:[%s1 + $0x90] sm:$0xff]
        %v347 = vld [vmem:[%s1 + $0x98] sm:$0xff]
        %v348 = vld [vmem:[%s1 + $0xa0] sm:$0xff]
        %v349 = vld [vmem:[%s1 + $0xa8] sm:$0xff]
        %v350 = vld [vmem:[%s1 + $0xb0] sm:$0xff]
        %v351 = vld [vmem:[%s1 + $0xb8] sm:$0xff]
        %v352 = vld [vmem:[#allocation3] sm:$0x3f]
        %v354 = vlaneseq
        %v355 = vshrl.u32 %v354, 7
        %v356 = vsub.s32 0, %v355
        %v357 = vrot.slane %v352, %v356
        %v358 = vlaneseq
        %v359 = vshrl.u32 %v358, 7
        %v360 = vsub.s32 1, %v359
        %v361 = vrot.slane %v352, %v360
        %v362 = vlaneseq
        %v363 = vshrl.u32 %v362, 7
        %v364 = vsub.s32 2, %v363
        %v365 = vrot.slane %v352, %v364
        %v366 = vlaneseq
        %v367 = vshrl.u32 %v366, 7
        %v368 = vsub.s32 3, %v367
        %v369 = vrot.slane %v352, %v368
        %v370 = vlaneseq
        %v371 = vshrl.u32 %v370, 7
        %v372 = vsub.s32 4, %v371
        %v373 = vrot.slane %v352, %v372
        %v374 = vlaneseq
        %v375 = vshrl.u32 %v374, 7
        %v376 = vsub.s32 5, %v375
        %v377 = vrot.slane %v352, %v376
        %v400 = vunpack.c.l.b16 %v312
        %v401 = vunpack.c.l.b16 %v313
        %v402 = vunpack.c.l.b16 %v314
        %v403 = vunpack.c.l.b16 %v315
        %v404 = vunpack.c.l.b16 %v316
        %v405 = vunpack.c.l.b16 %v317
        %v406 = vunpack.c.l.b16 %v318
        %v407 = vunpack.c.l.b16 %v319
        %v408 = vunpack.c.l.b16 %v320
        %v409 = vunpack.c.l.b16 %v321
        %v410 = vunpack.c.l.b16 %v322
        %v411 = vunpack.c.l.b16 %v323
        %v412 = vunpack.c.l.b16 %v324
        %v413 = vunpack.c.l.b16 %v325
        %v414 = vunpack.c.l.b16 %v326
        %v415 = vunpack.c.l.b16 %v327
        %v416 = vpack.c.b16 %v401, %v400
        %v417 = vpack.c.b16 %v403, %v402
        %v418 = vpack.c.b16 %v405, %v404
        %v419 = vpack.c.b16 %v407, %v406
        %v420 = vpack.c.b16 %v409, %v408
        %v421 = vpack.c.b16 %v411, %v410
        %v422 = vpack.c.b16 %v413, %v412
        %v423 = vpack.c.b16 %v415, %v414
        %v448 = vunpack.c.l.b16 %v328
        %v449 = vunpack.c.h.b16 %v328
        %v450 = vunpack.c.l.b16 %v329
        %v451 = vunpack.c.h.b16 %v329
        %v452 = vunpack.c.l.b16 %v330
        %v453 = vunpack.c.h.b16 %v330
        %v454 = vunpack.c.l.b16 %v331
        %v455 = vunpack.c.h.b16 %v331
        %v456 = vunpack.c.l.b16 %v332
        %v457 = vunpack.c.h.b16 %v332
        %v458 = vunpack.c.l.b16 %v333
        %v459 = vunpack.c.h.b16 %v333
        %v460 = vunpack.c.l.b16 %v334
        %v461 = vunpack.c.h.b16 %v334
        %v462 = vunpack.c.l.b16 %v335
        %v463 = vunpack.c.h.b16 %v335
        %v464 = vunpack.c.l.b16 %v336
        %v465 = vunpack.c.h.b16 %v336
        %v466 = vunpack.c.l.b16 %v337
        %v467 = vunpack.c.h.b16 %v337
        %v468 = vunpack.c.l.b16 %v338
        %v469 = vunpack.c.h.b16 %v338
        %v470 = vunpack.c.l.b16 %v339
        %v471 = vunpack.c.h.b16 %v339
        %v472 = vunpack.c.l.b16 %v340
        %v473 = vunpack.c.h.b16 %v340
        %v474 = vunpack.c.l.b16 %v341
        %v475 = vunpack.c.h.b16 %v341
        %v476 = vunpack.c.l.b16 %v342
        %v477 = vunpack.c.h.b16 %v342
        %v478 = vunpack.c.l.b16 %v343
        %v479 = vunpack.c.h.b16 %v343
        %v480 = vunpack.c.l.b16 %v344
        %v481 = vunpack.c.h.b16 %v344
        %v482 = vunpack.c.l.b16 %v345
        %v483 = vunpack.c.h.b16 %v345
        %v484 = vunpack.c.l.b16 %v346
        %v485 = vunpack.c.h.b16 %v346
        %v486 = vunpack.c.l.b16 %v347
        %v487 = vunpack.c.h.b16 %v347
        %v488 = vunpack.c.l.b16 %v348
        %v489 = vunpack.c.h.b16 %v348
        %v490 = vunpack.c.l.b16 %v349
        %v491 = vunpack.c.h.b16 %v349
        %v492 = vunpack.c.l.b16 %v350
        %v493 = vunpack.c.h.b16 %v350
        %v494 = vunpack.c.l.b16 %v351
        %v495 = vunpack.c.h.b16 %v351
        %v496 = vpack.c.b16 %v454, %v448
        %v497 = vpack.c.b16 %v455, %v449
        %v498 = vpack.c.b16 %v456, %v450
        %v499 = vpack.c.b16 %v457, %v451
        %v500 = vpack.c.b16 %v458, %v452
        %v501 = vpack.c.b16 %v459, %v453
        %v502 = vpack.c.b16 %v466, %v460
        %v503 = vpack.c.b16 %v467, %v461
        %v504 = vpack.c.b16 %v468, %v462
        %v505 = vpack.c.b16 %v469, %v463
        %v506 = vpack.c.b16 %v470, %v464
        %v507 = vpack.c.b16 %v471, %v465
        %v508 = vpack.c.b16 %v478, %v472
        %v509 = vpack.c.b16 %v479, %v473
        %v510 = vpack.c.b16 %v480, %v474
        %v511 = vpack.c.b16 %v481, %v475
        %v512 = vpack.c.b16 %v482, %v476
        %v513 = vpack.c.b16 %v483, %v477
        %v514 = vpack.c.b16 %v490, %v484
        %v515 = vpack.c.b16 %v491, %v485
        %v516 = vpack.c.b16 %v492, %v486
        %v517 = vpack.c.b16 %v493, %v487
        %v518 = vpack.c.b16 %v494, %v488
        %v519 = vpack.c.b16 %v495, %v489
        %vm544 = vcmask 523264
        %v546 = vsel %vm544, %v416, 0
        %v549 = vsel %vm544, %v417, 0
        %v552 = vsel %vm544, %v418, 0
        %v555 = vsel %vm544, %v419, 0
        %v558 = vsel %vm544, %v420, 0
        %v561 = vsel %vm544, %v421, 0
        %v564 = vsel %vm544, %v422, 0
        %v567 = vsel %vm544, %v423, 0
        %569 = vmatprep.subr.bf16.mxu0 %v497
        %570 = vmatpush1.bf16.msra.mxu0 %v496
        %571 = vmatprep.subr.bf16.mxu0 %v503
        %572 = vmatpush1.bf16.msra.mxu0 %v502
        %573 = vmatprep.subr.bf16.mxu0 %v509
        %574 = vmatpush1.bf16.msra.mxu0 %v508
        %575 = vmatprep.subr.bf16.mxu0 %v515
        %576 = vmatpush1.bf16.msra.mxu0 %v514
        %577 = vmatprep.subr.bf16.mxu0 0
        %578 = vmatpush1.bf16.msra.mxu0 0
        %579 = vmatprep.subr.bf16.mxu0 0
        %580 = vmatpush1.bf16.msra.mxu0 0
        %581 = vmatprep.subr.bf16.mxu0 0
        %582 = vmatpush1.bf16.msra.mxu0 0
        %583 = vmatprep.subr.bf16.mxu0 0
        %584 = vmatpush1.bf16.msra.mxu0 0
        %585 = vmatprep.subr.bf16.mxu0 0
        %586 = vmatpush1.bf16.msra.mxu0 0
        %587 = vmatprep.subr.bf16.mxu0 0
        %588 = vmatpush1.bf16.msra.mxu0 0
        %589 = vmatprep.subr.bf16.mxu0 0
        %590 = vmatpush1.bf16.msra.mxu0 0
        %591 = vmatprep.subr.bf16.mxu0 0
        %592 = vmatpush1.bf16.msra.mxu0 0
        %593 = vmatprep.subr.bf16.mxu0 0
        %594 = vmatpush1.bf16.msra.mxu0 0
        %595 = vmatprep.subr.bf16.mxu0 0
        %596 = vmatpush1.bf16.msra.mxu0 0
        %597 = vmatprep.subr.bf16.mxu0 0
        %598 = vmatpush1.bf16.msra.mxu0 0
        %599 = vmatprep.subr.bf16.mxu0 0
        %600 = vmatpush1.bf16.msra.mxu0 0
        %601 = vmatprep.mubr.bf16.mxu0 0
        %602 = vmatmul.mubr.bf16.gmra.mrb[0].mxu0 %v546
        %v603 = vpop.f32.mrb[0].mxu0
        %v604 = vadd.f32 %v357, %v603
        %v605 = vpop.f32.mrb[0].mxu0
        %v606 = vadd.f32 %v361, %v605
        %v607 = vpop.f32.mrb[0].mxu0
        %v608 = vadd.f32 %v357, %v607
        %v609 = vpop.f32.mrb[0].mxu0
        %v610 = vadd.f32 %v361, %v609
        %611 = vmatprep.mubr.bf16.mxu0 0
        %612 = vmatmul.mubr.bf16.gmra.mrb[0].mxu0 %v549
        %v613 = vpop.f32.mrb[0].mxu0
        %v614 = vadd.f32 %v357, %v613
        %v615 = vpop.f32.mrb[0].mxu0
        %v616 = vadd.f32 %v361, %v615
        %v617 = vpop.f32.mrb[0].mxu0
        %v618 = vadd.f32 %v357, %v617
        %v619 = vpop.f32.mrb[0].mxu0
        %v620 = vadd.f32 %v361, %v619
        %621 = vmatprep.mubr.bf16.mxu0 0
        %622 = vmatmul.mubr.bf16.gmra.mrb[0].mxu0 %v552
        %v623 = vpop.f32.mrb[0].mxu0
        %v624 = vadd.f32 %v357, %v623
        %v625 = vpop.f32.mrb[0].mxu0
        %v626 = vadd.f32 %v361, %v625
        %v627 = vpop.f32.mrb[0].mxu0
        %v628 = vadd.f32 %v357, %v627
        %v629 = vpop.f32.mrb[0].mxu0
        %v630 = vadd.f32 %v361, %v629
        %631 = vmatprep.mubr.bf16.mxu0 0
        %632 = vmatmul.mubr.bf16.gmra.mrb[0].mxu0 %v555
        %v633 = vpop.f32.mrb[0].mxu0
        %v634 = vadd.f32 %v357, %v633
        %v635 = vpop.f32.mrb[0].mxu0
        %v636 = vadd.f32 %v361, %v635
        %v637 = vpop.f32.mrb[0].mxu0
        %v638 = vadd.f32 %v357, %v637
        %v639 = vpop.f32.mrb[0].mxu0
        %v640 = vadd.f32 %v361, %v639
        %641 = vmatprep.mubr.bf16.mxu0 0
        %642 = vmatmul.mubr.bf16.gmra.mrb[0].mxu0 %v558
        %v643 = vpop.f32.mrb[0].mxu0
        %v644 = vadd.f32 %v357, %v643
        %v645 = vpop.f32.mrb[0].mxu0
        %v646 = vadd.f32 %v361, %v645
        %v647 = vpop.f32.mrb[0].mxu0
        %v648 = vadd.f32 %v357, %v647
        %v649 = vpop.f32.mrb[0].mxu0
        %v650 = vadd.f32 %v361, %v649
        %651 = vmatprep.mubr.bf16.mxu0 0
        %652 = vmatmul.mubr.bf16.gmra.mrb[0].mxu0 %v561
        %v653 = vpop.f32.mrb[0].mxu0
        %v654 = vadd.f32 %v357, %v653
        %v655 = vpop.f32.mrb[0].mxu0
        %v656 = vadd.f32 %v361, %v655
        %v657 = vpop.f32.mrb[0].mxu0
        %v658 = vadd.f32 %v357, %v657
        %v659 = vpop.f32.mrb[0].mxu0
        %v660 = vadd.f32 %v361, %v659
        %661 = vmatprep.mubr.bf16.mxu0 0
        %662 = vmatmul.mubr.bf16.gmra.mrb[0].mxu0 %v564
        %v663 = vpop.f32.mrb[0].mxu0
        %v664 = vadd.f32 %v357, %v663
        %v665 = vpop.f32.mrb[0].mxu0
        %v666 = vadd.f32 %v361, %v665
        %v667 = vpop.f32.mrb[0].mxu0
        %v668 = vadd.f32 %v357, %v667
        %v669 = vpop.f32.mrb[0].mxu0
        %v670 = vadd.f32 %v361, %v669
        %671 = vmatprep.mubr.bf16.mxu0 0
        %672 = vmatmul.mubr.bf16.gmra.mrb[0].mxu0 %v567
        %v673 = vpop.f32.mrb[0].mxu0
        %v674 = vadd.f32 %v357, %v673
        %v675 = vpop.f32.mrb[0].mxu0
        %v676 = vadd.f32 %v361, %v675
        %v677 = vpop.f32.mrb[0].mxu0
        %v678 = vadd.f32 %v357, %v677
        %v679 = vpop.f32.mrb[0].mxu0
        %v680 = vadd.f32 %v361, %v679
        %681 = vdwg.mxu0
        %682 = vmatprep.subr.bf16.mxu0 %v499
        %683 = vmatpush1.bf16.msra.mxu0 %v498
        %684 = vmatprep.subr.bf16.mxu0 %v505
        %685 = vmatpush1.bf16.msra.mxu0 %v504
        %686 = vmatprep.subr.bf16.mxu0 %v511
        %687 = vmatpush1.bf16.msra.mxu0 %v510
        %688 = vmatprep.subr.bf16.mxu0 %v517
        %689 = vmatpush1.bf16.msra.mxu0 %v516
        %690 = vmatprep.subr.bf16.mxu0 0
        %691 = vmatpush1.bf16.msra.mxu0 0
        %692 = vmatprep.subr.bf16.mxu0 0
        %693 = vmatpush1.bf16.msra.mxu0 0
        %694 = vmatprep.subr.bf16.mxu0 0
        %695 = vmatpush1.bf16.msra.mxu0 0
        %696 = vmatprep.subr.bf16.mxu0 0
        %697 = vmatpush1.bf16.msra.mxu0 0
        %698 = vmatprep.subr.bf16.mxu0 0
        %699 = vmatpush1.bf16.msra.mxu0 0
        %700 = vmatprep.subr.bf16.mxu0 0
        %701 = vmatpush1.bf16.msra.mxu0 0
        %702 = vmatprep.subr.bf16.mxu0 0
        %703 = vmatpush1.bf16.msra.mxu0 0
        %704 = vmatprep.subr.bf16.mxu0 0
        %705 = vmatpush1.bf16.msra.mxu0 0
        %706 = vmatprep.subr.bf16.mxu0 0
        %707 = vmatpush1.bf16.msra.mxu0 0
        %708 = vmatprep.subr.bf16.mxu0 0
        %709 = vmatpush1.bf16.msra.mxu0 0
        %710 = vmatprep.subr.bf16.mxu0 0
        %711 = vmatpush1.bf16.msra.mxu0 0
        %712 = vmatprep.subr.bf16.mxu0 0
        %713 = vmatpush1.bf16.msra.mxu0 0
        %714 = vmatprep.mubr.bf16.mxu0 0
        %715 = vmatmul.mubr.bf16.gmra.mrb[0].mxu0 %v546
        %v716 = vpop.f32.mrb[0].mxu0
        %v717 = vadd.f32 %v365, %v716
        %v718 = vpop.f32.mrb[0].mxu0
        %v719 = vadd.f32 %v369, %v718
        %v720 = vpop.f32.mrb[0].mxu0
        %v721 = vadd.f32 %v365, %v720
        %v722 = vpop.f32.mrb[0].mxu0
        %v723 = vadd.f32 %v369, %v722
        %724 = vmatprep.mubr.bf16.mxu0 0
        %725 = vmatmul.mubr.bf16.gmra.mrb[0].mxu0 %v549
        %v726 = vpop.f32.mrb[0].mxu0
        %v727 = vadd.f32 %v365, %v726
        %v728 = vpop.f32.mrb[0].mxu0
        %v729 = vadd.f32 %v369, %v728
        %v730 = vpop.f32.mrb[0].mxu0
        %v731 = vadd.f32 %v365, %v730
        %v732 = vpop.f32.mrb[0].mxu0
        %v733 = vadd.f32 %v369, %v732
        %734 = vmatprep.mubr.bf16.mxu0 0
        %735 = vmatmul.mubr.bf16.gmra.mrb[0].mxu0 %v552
        %v736 = vpop.f32.mrb[0].mxu0
        %v737 = vadd.f32 %v365, %v736
        %v738 = vpop.f32.mrb[0].mxu0
        %v739 = vadd.f32 %v369, %v738
        %v740 = vpop.f32.mrb[0].mxu0
        %v741 = vadd.f32 %v365, %v740
        %v742 = vpop.f32.mrb[0].mxu0
        %v743 = vadd.f32 %v369, %v742
        %744 = vmatprep.mubr.bf16.mxu0 0
        %745 = vmatmul.mubr.bf16.gmra.mrb[0].mxu0 %v555
        %v746 = vpop.f32.mrb[0].mxu0
        %v747 = vadd.f32 %v365, %v746
        %v748 = vpop.f32.mrb[0].mxu0
        %v749 = vadd.f32 %v369, %v748
        %v750 = vpop.f32.mrb[0].mxu0
        %v751 = vadd.f32 %v365, %v750
        %v752 = vpop.f32.mrb[0].mxu0
        %v753 = vadd.f32 %v369, %v752
        %754 = vmatprep.mubr.bf16.mxu0 0
        %755 = vmatmul.mubr.bf16.gmra.mrb[0].mxu0 %v558
        %v756 = vpop.f32.mrb[0].mxu0
        %v757 = vadd.f32 %v365, %v756
        %v758 = vpop.f32.mrb[0].mxu0
        %v759 = vadd.f32 %v369, %v758
        %v760 = vpop.f32.mrb[0].mxu0
        %v761 = vadd.f32 %v365, %v760
        %v762 = vpop.f32.mrb[0].mxu0
        %v763 = vadd.f32 %v369, %v762
        %764 = vmatprep.mubr.bf16.mxu0 0
        %765 = vmatmul.mubr.bf16.gmra.mrb[0].mxu0 %v561
        %v766 = vpop.f32.mrb[0].mxu0
        %v767 = vadd.f32 %v365, %v766
        %v768 = vpop.f32.mrb[0].mxu0
        %v769 = vadd.f32 %v369, %v768
        %v770 = vpop.f32.mrb[0].mxu0
        %v771 = vadd.f32 %v365, %v770
        %v772 = vpop.f32.mrb[0].mxu0
        %v773 = vadd.f32 %v369, %v772
        %774 = vmatprep.mubr.bf16.mxu0 0
        %775 = vmatmul.mubr.bf16.gmra.mrb[0].mxu0 %v564
        %v776 = vpop.f32.mrb[0].mxu0
        %v777 = vadd.f32 %v365, %v776
        %v778 = vpop.f32.mrb[0].mxu0
        %v779 = vadd.f32 %v369, %v778
        %v780 = vpop.f32.mrb[0].mxu0
        %v781 = vadd.f32 %v365, %v780
        %v782 = vpop.f32.mrb[0].mxu0
        %v783 = vadd.f32 %v369, %v782
        %784 = vmatprep.mubr.bf16.mxu0 0
        %785 = vmatmul.mubr.bf16.gmra.mrb[0].mxu0 %v567
        %v786 = vpop.f32.mrb[0].mxu0
        %v787 = vadd.f32 %v365, %v786
        %v788 = vpop.f32.mrb[0].mxu0
        %v789 = vadd.f32 %v369, %v788
        %v790 = vpop.f32.mrb[0].mxu0
        %v791 = vadd.f32 %v365, %v790
        %v792 = vpop.f32.mrb[0].mxu0
        %v793 = vadd.f32 %v369, %v792
        %794 = vdwg.mxu0
        %795 = vmatprep.subr.bf16.mxu0 %v501
        %796 = vmatpush1.bf16.msra.mxu0 %v500
        %797 = vmatprep.subr.bf16.mxu0 %v507
        %798 = vmatpush1.bf16.msra.mxu0 %v506
        %799 = vmatprep.subr.bf16.mxu0 %v513
        %800 = vmatpush1.bf16.msra.mxu0 %v512
        %801 = vmatprep.subr.bf16.mxu0 %v519
        %802 = vmatpush1.bf16.msra.mxu0 %v518
        %803 = vmatprep.subr.bf16.mxu0 0
        %804 = vmatpush1.bf16.msra.mxu0 0
        %805 = vmatprep.subr.bf16.mxu0 0
        %806 = vmatpush1.bf16.msra.mxu0 0
        %807 = vmatprep.subr.bf16.mxu0 0
        %808 = vmatpush1.bf16.msra.mxu0 0
        %809 = vmatprep.subr.bf16.mxu0 0
        %810 = vmatpush1.bf16.msra.mxu0 0
        %811 = vmatprep.subr.bf16.mxu0 0
        %812 = vmatpush1.bf16.msra.mxu0 0
        %813 = vmatprep.subr.bf16.mxu0 0
        %814 = vmatpush1.bf16.msra.mxu0 0
        %815 = vmatprep.subr.bf16.mxu0 0
        %816 = vmatpush1.bf16.msra.mxu0 0
        %817 = vmatprep.subr.bf16.mxu0 0
        %818 = vmatpush1.bf16.msra.mxu0 0
        %819 = vmatprep.subr.bf16.mxu0 0
        %820 = vmatpush1.bf16.msra.mxu0 0
        %821 = vmatprep.subr.bf16.mxu0 0
        %822 = vmatpush1.bf16.msra.mxu0 0
        %823 = vmatprep.subr.bf16.mxu0 0
        %824 = vmatpush1.bf16.msra.mxu0 0
        %825 = vmatprep.subr.bf16.mxu0 0
        %826 = vmatpush1.bf16.msra.mxu0 0
        %827 = vmatprep.mubr.bf16.mxu0 0
        %828 = vmatmul.mubr.bf16.gmra.mrb[0].mxu0 %v546
        %v829 = vpop.f32.mrb[0].mxu0
        %v830 = vadd.f32 %v373, %v829
        %v831 = vpop.f32.mrb[0].mxu0
        %v832 = vadd.f32 %v377, %v831
        %v833 = vpop.f32.mrb[0].mxu0
        %v834 = vadd.f32 %v373, %v833
        %v835 = vpop.f32.mrb[0].mxu0
        %v836 = vadd.f32 %v377, %v835
        %837 = vmatprep.mubr.bf16.mxu0 0
        %838 = vmatmul.mubr.bf16.gmra.mrb[0].mxu0 %v549
        %v839 = vpop.f32.mrb[0].mxu0
        %v840 = vadd.f32 %v373, %v839
        %v841 = vpop.f32.mrb[0].mxu0
        %v842 = vadd.f32 %v377, %v841
        %v843 = vpop.f32.mrb[0].mxu0
        %v844 = vadd.f32 %v373, %v843
        %v845 = vpop.f32.mrb[0].mxu0
        %v846 = vadd.f32 %v377, %v845
        %847 = vmatprep.mubr.bf16.mxu0 0
        %848 = vmatmul.mubr.bf16.gmra.mrb[0].mxu0 %v552
        %v849 = vpop.f32.mrb[0].mxu0
        %v850 = vadd.f32 %v373, %v849
        %v851 = vpop.f32.mrb[0].mxu0
        %v852 = vadd.f32 %v377, %v851
        %v853 = vpop.f32.mrb[0].mxu0
        %v854 = vadd.f32 %v373, %v853
        %v855 = vpop.f32.mrb[0].mxu0
        %v856 = vadd.f32 %v377, %v855
        %857 = vmatprep.mubr.bf16.mxu0 0
        %858 = vmatmul.mubr.bf16.gmra.mrb[0].mxu0 %v555
        %v859 = vpop.f32.mrb[0].mxu0
        %v860 = vadd.f32 %v373, %v859
        %v861 = vpop.f32.mrb[0].mxu0
        %v862 = vadd.f32 %v377, %v861
        %v863 = vpop.f32.mrb[0].mxu0
        %v864 = vadd.f32 %v373, %v863
        %v865 = vpop.f32.mrb[0].mxu0
        %v866 = vadd.f32 %v377, %v865
        %867 = vmatprep.mubr.bf16.mxu0 0
        %868 = vmatmul.mubr.bf16.gmra.mrb[0].mxu0 %v558
        %v869 = vpop.f32.mrb[0].mxu0
        %v870 = vadd.f32 %v373, %v869
        %v871 = vpop.f32.mrb[0].mxu0
        %v872 = vadd.f32 %v377, %v871
        %v873 = vpop.f32.mrb[0].mxu0
        %v874 = vadd.f32 %v373, %v873
        %v875 = vpop.f32.mrb[0].mxu0
        %v876 = vadd.f32 %v377, %v875
        %877 = vmatprep.mubr.bf16.mxu0 0
        %878 = vmatmul.mubr.bf16.gmra.mrb[0].mxu0 %v561
        %v879 = vpop.f32.mrb[0].mxu0
        %v880 = vadd.f32 %v373, %v879
        %v881 = vpop.f32.mrb[0].mxu0
        %v882 = vadd.f32 %v377, %v881
        %v883 = vpop.f32.mrb[0].mxu0
        %v884 = vadd.f32 %v373, %v883
        %v885 = vpop.f32.mrb[0].mxu0
        %v886 = vadd.f32 %v377, %v885
        %887 = vmatprep.mubr.bf16.mxu0 0
        %888 = vmatmul.mubr.bf16.gmra.mrb[0].mxu0 %v564
        %v889 = vpop.f32.mrb[0].mxu0
        %v890 = vadd.f32 %v373, %v889
        %v891 = vpop.f32.mrb[0].mxu0
        %v892 = vadd.f32 %v377, %v891
        %v893 = vpop.f32.mrb[0].mxu0
        %v894 = vadd.f32 %v373, %v893
        %v895 = vpop.f32.mrb[0].mxu0
        %v896 = vadd.f32 %v377, %v895
        %897 = vmatprep.mubr.bf16.mxu0 0
        %898 = vmatmul.mubr.bf16.gmra.mrb[0].mxu0 %v567
        %v899 = vpop.f32.mrb[0].mxu0
        %v900 = vadd.f32 %v373, %v899
        %v901 = vpop.f32.mrb[0].mxu0
        %v902 = vadd.f32 %v377, %v901
        %v903 = vpop.f32.mrb[0].mxu0
        %v904 = vadd.f32 %v373, %v903
        %v905 = vpop.f32.mrb[0].mxu0
        %v906 = vadd.f32 %v377, %v905
        %907 = vdwg.mxu0
        %v908 = vmax.f32 %v604, 0.0
        %v909 = vmax.f32 %v606, 0.0
        %v910 = vmax.f32 %v717, 0.0
        %v911 = vmax.f32 %v719, 0.0
        %v912 = vmax.f32 %v830, 0.0
        %v913 = vmax.f32 %v832, 0.0
        %v914 = vmax.f32 %v608, 0.0
        %v915 = vmax.f32 %v610, 0.0
        %v916 = vmax.f32 %v721, 0.0
        %v917 = vmax.f32 %v723, 0.0
        %v918 = vmax.f32 %v834, 0.0
        %v919 = vmax.f32 %v836, 0.0
        %v920 = vmax.f32 %v614, 0.0
        %v921 = vmax.f32 %v616, 0.0
        %v922 = vmax.f32 %v727, 0.0
        %v923 = vmax.f32 %v729, 0.0
        %v924 = vmax.f32 %v840, 0.0
        %v925 = vmax.f32 %v842, 0.0
        %v926 = vmax.f32 %v618, 0.0
        %v927 = vmax.f32 %v620, 0.0
        %v928 = vmax.f32 %v731, 0.0
        %v929 = vmax.f32 %v733, 0.0
        %v930 = vmax.f32 %v844, 0.0
        %v931 = vmax.f32 %v846, 0.0
        %v932 = vmax.f32 %v624, 0.0
        %v933 = vmax.f32 %v626, 0.0
        %v934 = vmax.f32 %v737, 0.0
        %v935 = vmax.f32 %v739, 0.0
        %v936 = vmax.f32 %v850, 0.0
        %v937 = vmax.f32 %v852, 0.0
        %v938 = vmax.f32 %v628, 0.0
        %v939 = vmax.f32 %v630, 0.0
        %v940 = vmax.f32 %v741, 0.0
        %v941 = vmax.f32 %v743, 0.0
        %v942 = vmax.f32 %v854, 0.0
        %v943 = vmax.f32 %v856, 0.0
        %v944 = vmax.f32 %v634, 0.0
        %v945 = vmax.f32 %v636, 0.0
        %v946 = vmax.f32 %v747, 0.0
        %v947 = vmax.f32 %v749, 0.0
        %v948 = vmax.f32 %v860, 0.0
        %v949 = vmax.f32 %v862, 0.0
        %v950 = vmax.f32 %v638, 0.0
        %v951 = vmax.f32 %v640, 0.0
        %v952 = vmax.f32 %v751, 0.0
        %v953 = vmax.f32 %v753, 0.0
        %v954 = vmax.f32 %v864, 0.0
        %v955 = vmax.f32 %v866, 0.0
        %v956 = vmax.f32 %v644, 0.0
        %v957 = vmax.f32 %v646, 0.0
        %v958 = vmax.f32 %v757, 0.0
        %v959 = vmax.f32 %v759, 0.0
        %v960 = vmax.f32 %v870, 0.0
        %v961 = vmax.f32 %v872, 0.0
        %v962 = vmax.f32 %v648, 0.0
        %v963 = vmax.f32 %v650, 0.0
        %v964 = vmax.f32 %v761, 0.0
        %v965 = vmax.f32 %v763, 0.0
        %v966 = vmax.f32 %v874, 0.0
        %v967 = vmax.f32 %v876, 0.0
        %v968 = vmax.f32 %v654, 0.0
        %v969 = vmax.f32 %v656, 0.0
        %v970 = vmax.f32 %v767, 0.0
        %v971 = vmax.f32 %v769, 0.0
        %v972 = vmax.f32 %v880, 0.0
        %v973 = vmax.f32 %v882, 0.0
        %v974 = vmax.f32 %v658, 0.0
        %v975 = vmax.f32 %v660, 0.0
        %v976 = vmax.f32 %v771, 0.0
        %v977 = vmax.f32 %v773, 0.0
        %v978 = vmax.f32 %v884, 0.0
        %v979 = vmax.f32 %v886, 0.0
        %v980 = vmax.f32 %v664, 0.0
        %v981 = vmax.f32 %v666, 0.0
        %v982 = vmax.f32 %v777, 0.0
        %v983 = vmax.f32 %v779, 0.0
        %v984 = vmax.f32 %v890, 0.0
        %v985 = vmax.f32 %v892, 0.0
        %v986 = vmax.f32 %v668, 0.0
        %v987 = vmax.f32 %v670, 0.0
        %v988 = vmax.f32 %v781, 0.0
        %v989 = vmax.f32 %v783, 0.0
        %v990 = vmax.f32 %v894, 0.0
        %v991 = vmax.f32 %v896, 0.0
        %v992 = vmax.f32 %v674, 0.0
        %v993 = vmax.f32 %v676, 0.0
        %v994 = vmax.f32 %v787, 0.0
        %v995 = vmax.f32 %v789, 0.0
        %v996 = vmax.f32 %v900, 0.0
        %v997 = vmax.f32 %v902, 0.0
        %v998 = vmax.f32 %v678, 0.0
        %v999 = vmax.f32 %v680, 0.0
        %v1000 = vmax.f32 %v791, 0.0
        %v1001 = vmax.f32 %v793, 0.0
        %v1002 = vmax.f32 %v904, 0.0
        %v1003 = vmax.f32 %v906, 0.0
        %v1004 = vpack.c.bf16 %v914, %v908
        %v1005 = vpack.c.bf16 %v915, %v909
        %v1006 = vpack.c.bf16 %v916, %v910
        %v1007 = vpack.c.bf16 %v917, %v911
        %v1008 = vpack.c.bf16 %v918, %v912
        %v1009 = vpack.c.bf16 %v919, %v913
        %v1010 = vpack.c.bf16 %v926, %v920
        %v1011 = vpack.c.bf16 %v927, %v921
        %v1012 = vpack.c.bf16 %v928, %v922
        %v1013 = vpack.c.bf16 %v929, %v923
        %v1014 = vpack.c.bf16 %v930, %v924
        %v1015 = vpack.c.bf16 %v931, %v925
        %v1016 = vpack.c.bf16 %v938, %v932
        %v1017 = vpack.c.bf16 %v939, %v933
        %v1018 = vpack.c.bf16 %v940, %v934
        %v1019 = vpack.c.bf16 %v941, %v935
        %v1020 = vpack.c.bf16 %v942, %v936
        %v1021 = vpack.c.bf16 %v943, %v937
        %v1022 = vpack.c.bf16 %v950, %v944
        %v1023 = vpack.c.bf16 %v951, %v945
        %v1024 = vpack.c.bf16 %v952, %v946
        %v1025 = vpack.c.bf16 %v953, %v947
        %v1026 = vpack.c.bf16 %v954, %v948
        %v1027 = vpack.c.bf16 %v955, %v949
        %v1028 = vpack.c.bf16 %v962, %v956
        %v1029 = vpack.c.bf16 %v963, %v957
        %v1030 = vpack.c.bf16 %v964, %v958
        %v1031 = vpack.c.bf16 %v965, %v959
        %v1032 = vpack.c.bf16 %v966, %v960
        %v1033 = vpack.c.bf16 %v967, %v961
        %v1034 = vpack.c.bf16 %v974, %v968
        %v1035 = vpack.c.bf16 %v975, %v969
        %v1036 = vpack.c.bf16 %v976, %v970
        %v1037 = vpack.c.bf16 %v977, %v971
        %v1038 = vpack.c.bf16 %v978, %v972
        %v1039 = vpack.c.bf16 %v979, %v973
        %v1040 = vpack.c.bf16 %v986, %v980
        %v1041 = vpack.c.bf16 %v987, %v981
        %v1042 = vpack.c.bf16 %v988, %v982
        %v1043 = vpack.c.bf16 %v989, %v983
        %v1044 = vpack.c.bf16 %v990, %v984
        %v1045 = vpack.c.bf16 %v991, %v985
        %v1046 = vpack.c.bf16 %v998, %v992
        %v1047 = vpack.c.bf16 %v999, %v993
        %v1048 = vpack.c.bf16 %v1000, %v994
        %v1049 = vpack.c.bf16 %v1001, %v995
        %v1050 = vpack.c.bf16 %v1002, %v996
        %v1051 = vpack.c.bf16 %v1003, %v997
        %v1052 = vld [vmem:[#allocation5] sm:$0xf]
        %v1053 = vld [vmem:[#allocation5 + $0x4] sm:$0xf]
        %v1054 = vld [vmem:[#allocation5 + $0x8] sm:$0xf]
        %v1055 = vld [vmem:[#allocation5 + $0xc] sm:$0xf]
        %v1056 = vld [vmem:[#allocation5 + $0x10] sm:$0xf]
        %v1057 = vld [vmem:[#allocation5 + $0x14] sm:$0xf]
        %v1058 = vld [vmem:[#allocation5 + $0x18] sm:$0xf]
        %v1059 = vld [vmem:[#allocation5 + $0x1c] sm:$0xf]
        %v1060 = vld [vmem:[#allocation5 + $0x20] sm:$0xf]
        %v1061 = vld [vmem:[#allocation5 + $0x24] sm:$0xf]
        %v1062 = vld [vmem:[#allocation5 + $0x28] sm:$0xf]
        %v1063 = vld [vmem:[#allocation5 + $0x2c] sm:$0xf]
        %v1064 = vld [vmem:[#allocation5 + $0x30] sm:$0xf]
        %v1065 = vld [vmem:[#allocation5 + $0x34] sm:$0xf]
        %v1066 = vld [vmem:[#allocation5 + $0x38] sm:$0xf]
        %v1067 = vld [vmem:[#allocation5 + $0x3c] sm:$0xf]
        %v1068 = vld [vmem:[#allocation5 + $0x40] sm:$0xf]
        %v1069 = vld [vmem:[#allocation5 + $0x44] sm:$0xf]
        %v1070 = vld [vmem:[#allocation5 + $0x48] sm:$0xf]
        %v1071 = vld [vmem:[#allocation5 + $0x4c] sm:$0xf]
        %v1072 = vld [vmem:[#allocation5 + $0x50] sm:$0xf]
        %v1073 = vld [vmem:[#allocation5 + $0x54] sm:$0xf]
        %v1074 = vld [vmem:[#allocation5 + $0x58] sm:$0xf]
        %v1075 = vld [vmem:[#allocation5 + $0x5c] sm:$0xf]
        %v1076 = vld [vmem:[#allocation5 + $0x60] sm:$0xf]
        %v1077 = vld [vmem:[#allocation5 + $0x64] sm:$0xf]
        %v1078 = vld [vmem:[#allocation5 + $0x68] sm:$0xf]
        %v1079 = vld [vmem:[#allocation5 + $0x6c] sm:$0xf]
        %v1080 = vld [vmem:[#allocation5 + $0x70] sm:$0xf]
        %v1081 = vld [vmem:[#allocation5 + $0x74] sm:$0xf]
        %v1082 = vld [vmem:[#allocation5 + $0x78] sm:$0xf]
        %v1083 = vld [vmem:[#allocation5 + $0x7c] sm:$0xf]
        %v1084 = vld [vmem:[#allocation5 + $0x80] sm:$0xf]
        %v1085 = vld [vmem:[#allocation5 + $0x84] sm:$0xf]
        %v1086 = vld [vmem:[#allocation5 + $0x88] sm:$0xf]
        %v1087 = vld [vmem:[#allocation5 + $0x8c] sm:$0xf]
        %v1088 = vld [vmem:[#allocation5 + $0x90] sm:$0xf]
        %v1089 = vld [vmem:[#allocation5 + $0x94] sm:$0xf]
        %v1090 = vld [vmem:[#allocation5 + $0x98] sm:$0xf]
        %v1091 = vld [vmem:[#allocation5 + $0x9c] sm:$0xf]
        %v1092 = vld [vmem:[#allocation5 + $0xa0] sm:$0xf]
        %v1093 = vld [vmem:[#allocation5 + $0xa4] sm:$0xf]
        %v1094 = vld [vmem:[#allocation5 + $0xa8] sm:$0xf]
        %v1095 = vld [vmem:[#allocation5 + $0xac] sm:$0xf]
        %v1096 = vld [vmem:[#allocation5 + $0xb0] sm:$0xf]
        %v1097 = vld [vmem:[#allocation5 + $0xb4] sm:$0xf]
        %v1098 = vld [vmem:[#allocation5 + $0xb8] sm:$0xf]
        %v1099 = vld [vmem:[#allocation5 + $0xbc] sm:$0xf]
        %v1100 = vld [vmem:[#allocation5 + $0xc0] sm:$0xf]
        %v1101 = vld [vmem:[#allocation5 + $0xc4] sm:$0xf]
        %v1102 = vld [vmem:[#allocation5 + $0xc8] sm:$0xf]
        %v1103 = vld [vmem:[#allocation5 + $0xcc] sm:$0xf]
        %v1104 = vld [vmem:[#allocation5 + $0xd0] sm:$0xf]
        %v1105 = vld [vmem:[#allocation5 + $0xd4] sm:$0xf]
        %v1106 = vld [vmem:[#allocation5 + $0xd8] sm:$0xf]
        %v1107 = vld [vmem:[#allocation5 + $0xdc] sm:$0xf]
        %v1108 = vld [vmem:[#allocation5 + $0xe0] sm:$0xf]
        %v1109 = vld [vmem:[#allocation5 + $0xe4] sm:$0xf]
        %v1110 = vld [vmem:[#allocation5 + $0xe8] sm:$0xf]
        %v1111 = vld [vmem:[#allocation5 + $0xec] sm:$0xf]
        %v1112 = vld [vmem:[#allocation5 + $0xf0] sm:$0xf]
        %v1113 = vld [vmem:[#allocation5 + $0xf4] sm:$0xf]
        %v1114 = vld [vmem:[#allocation5 + $0xf8] sm:$0xf]
        %v1115 = vld [vmem:[#allocation5 + $0xfc] sm:$0xf]
        %v1116 = vld [vmem:[#allocation5 + $0x100] sm:$0xf]
        %v1117 = vld [vmem:[#allocation5 + $0x104] sm:$0xf]
        %v1118 = vld [vmem:[#allocation5 + $0x108] sm:$0xf]
        %v1119 = vld [vmem:[#allocation5 + $0x10c] sm:$0xf]
        %v1120 = vld [vmem:[#allocation5 + $0x110] sm:$0xf]
        %v1121 = vld [vmem:[#allocation5 + $0x114] sm:$0xf]
        %v1122 = vld [vmem:[#allocation5 + $0x118] sm:$0xf]
        %v1123 = vld [vmem:[#allocation5 + $0x11c] sm:$0xf]
        %v1124 = vld [vmem:[#allocation5 + $0x120] sm:$0xf]
        %v1125 = vld [vmem:[#allocation5 + $0x124] sm:$0xf]
        %v1126 = vld [vmem:[#allocation5 + $0x128] sm:$0xf]
        %v1127 = vld [vmem:[#allocation5 + $0x12c] sm:$0xf]
        %v1128 = vld [vmem:[#allocation5 + $0x130] sm:$0xf]
        %v1129 = vld [vmem:[#allocation5 + $0x134] sm:$0xf]
        %v1130 = vld [vmem:[#allocation5 + $0x138] sm:$0xf]
        %v1131 = vld [vmem:[#allocation5 + $0x13c] sm:$0xf]
        %v1132 = vld [vmem:[#allocation5 + $0x140] sm:$0xf]
        %v1133 = vld [vmem:[#allocation5 + $0x144] sm:$0xf]
        %v1134 = vld [vmem:[#allocation5 + $0x148] sm:$0xf]
        %v1135 = vld [vmem:[#allocation5 + $0x14c] sm:$0xf]
        %v1136 = vld [vmem:[#allocation5 + $0x150] sm:$0xf]
        %v1137 = vld [vmem:[#allocation5 + $0x154] sm:$0xf]
        %v1138 = vld [vmem:[#allocation5 + $0x158] sm:$0xf]
        %v1139 = vld [vmem:[#allocation5 + $0x15c] sm:$0xf]
        %v1140 = vld [vmem:[#allocation5 + $0x160] sm:$0xf]
        %v1141 = vld [vmem:[#allocation5 + $0x164] sm:$0xf]
        %v1142 = vld [vmem:[#allocation5 + $0x168] sm:$0xf]
        %v1143 = vld [vmem:[#allocation5 + $0x16c] sm:$0xf]
        %v1144 = vld [vmem:[#allocation5 + $0x170] sm:$0xf]
        %v1145 = vld [vmem:[#allocation5 + $0x174] sm:$0xf]
        %v1146 = vld [vmem:[#allocation5 + $0x178] sm:$0xf]
        %v1147 = vld [vmem:[#allocation5 + $0x17c] sm:$0xf]
        %v1148 = vld [vmem:[%s4] sm:$0x1]
        %v1150 = vlaneseq
        %v1151 = vshrl.u32 %v1150, 7
        %v1152 = vsub.s32 0, %v1151
        %v1153 = vrot.slane %v1148, %v1152
        %v1251 = vunpack.c.l.b16 %v1052
        %v1252 = vunpack.c.l.b16 %v1053
        %v1253 = vunpack.c.l.b16 %v1054
        %v1254 = vunpack.c.l.b16 %v1055
        %v1255 = vunpack.c.l.b16 %v1056
        %v1256 = vunpack.c.l.b16 %v1057
        %v1257 = vunpack.c.l.b16 %v1058
        %v1258 = vunpack.c.l.b16 %v1059
        %v1259 = vunpack.c.l.b16 %v1060
        %v1260 = vunpack.c.l.b16 %v1061
        %v1261 = vunpack.c.l.b16 %v1062
        %v1262 = vunpack.c.l.b16 %v1063
        %v1263 = vunpack.c.l.b16 %v1064
        %v1264 = vunpack.c.l.b16 %v1065
        %v1265 = vunpack.c.l.b16 %v1066
        %v1266 = vunpack.c.l.b16 %v1067
        %v1267 = vunpack.c.l.b16 %v1068
        %v1268 = vunpack.c.l.b16 %v1069
        %v1269 = vunpack.c.l.b16 %v1070
        %v1270 = vunpack.c.l.b16 %v1071
        %v1271 = vunpack.c.l.b16 %v1072
        %v1272 = vunpack.c.l.b16 %v1073
        %v1273 = vunpack.c.l.b16 %v1074
        %v1274 = vunpack.c.l.b16 %v1075
        %v1275 = vunpack.c.l.b16 %v1076
        %v1276 = vunpack.c.l.b16 %v1077
        %v1277 = vunpack.c.l.b16 %v1078
        %v1278 = vunpack.c.l.b16 %v1079
        %v1279 = vunpack.c.l.b16 %v1080
        %v1280 = vunpack.c.l.b16 %v1081
        %v1281 = vunpack.c.l.b16 %v1082
        %v1282 = vunpack.c.l.b16 %v1083
        %v1283 = vunpack.c.l.b16 %v1084
        %v1284 = vunpack.c.l.b16 %v1085
        %v1285 = vunpack.c.l.b16 %v1086
        %v1286 = vunpack.c.l.b16 %v1087
        %v1287 = vunpack.c.l.b16 %v1088
        %v1288 = vunpack.c.l.b16 %v1089
        %v1289 = vunpack.c.l.b16 %v1090
        %v1290 = vunpack.c.l.b16 %v1091
        %v1291 = vunpack.c.l.b16 %v1092
        %v1292 = vunpack.c.l.b16 %v1093
        %v1293 = vunpack.c.l.b16 %v1094
        %v1294 = vunpack.c.l.b16 %v1095
        %v1295 = vunpack.c.l.b16 %v1096
        %v1296 = vunpack.c.l.b16 %v1097
        %v1297 = vunpack.c.l.b16 %v1098
        %v1298 = vunpack.c.l.b16 %v1099
        %v1299 = vunpack.c.l.b16 %v1100
        %v1300 = vunpack.c.l.b16 %v1101
        %v1301 = vunpack.c.l.b16 %v1102
        %v1302 = vunpack.c.l.b16 %v1103
        %v1303 = vunpack.c.l.b16 %v1104
        %v1304 = vunpack.c.l.b16 %v1105
        %v1305 = vunpack.c.l.b16 %v1106
        %v1306 = vunpack.c.l.b16 %v1107
        %v1307 = vunpack.c.l.b16 %v1108
        %v1308 = vunpack.c.l.b16 %v1109
        %v1309 = vunpack.c.l.b16 %v1110
        %v1310 = vunpack.c.l.b16 %v1111
        %v1311 = vunpack.c.l.b16 %v1112
        %v1312 = vunpack.c.l.b16 %v1113
        %v1313 = vunpack.c.l.b16 %v1114
        %v1314 = vunpack.c.l.b16 %v1115
        %v1315 = vunpack.c.l.b16 %v1116
        %v1316 = vunpack.c.l.b16 %v1117
        %v1317 = vunpack.c.l.b16 %v1118
        %v1318 = vunpack.c.l.b16 %v1119
        %v1319 = vunpack.c.l.b16 %v1120
        %v1320 = vunpack.c.l.b16 %v1121
        %v1321 = vunpack.c.l.b16 %v1122
        %v1322 = vunpack.c.l.b16 %v1123
        %v1323 = vunpack.c.l.b16 %v1124
        %v1324 = vunpack.c.l.b16 %v1125
        %v1325 = vunpack.c.l.b16 %v1126
        %v1326 = vunpack.c.l.b16 %v1127
        %v1327 = vunpack.c.l.b16 %v1128
        %v1328 = vunpack.c.l.b16 %v1129
        %v1329 = vunpack.c.l.b16 %v1130
        %v1330 = vunpack.c.l.b16 %v1131
        %v1331 = vunpack.c.l.b16 %v1132
        %v1332 = vunpack.c.l.b16 %v1133
        %v1333 = vunpack.c.l.b16 %v1134
        %v1334 = vunpack.c.l.b16 %v1135
        %v1335 = vunpack.c.l.b16 %v1136
        %v1336 = vunpack.c.l.b16 %v1137
        %v1337 = vunpack.c.l.b16 %v1138
        %v1338 = vunpack.c.l.b16 %v1139
        %v1339 = vunpack.c.l.b16 %v1140
        %v1340 = vunpack.c.l.b16 %v1141
        %v1341 = vunpack.c.l.b16 %v1142
        %v1342 = vunpack.c.l.b16 %v1143
        %v1343 = vunpack.c.l.b16 %v1144
        %v1344 = vunpack.c.l.b16 %v1145
        %v1345 = vunpack.c.l.b16 %v1146
        %v1346 = vunpack.c.l.b16 %v1147
        %v1347 = vpack.c.b16 %v1252, %v1251
        %v1348 = vpack.c.b16 %v1254, %v1253
        %v1349 = vpack.c.b16 %v1256, %v1255
        %v1350 = vpack.c.b16 %v1258, %v1257
        %v1351 = vpack.c.b16 %v1260, %v1259
        %v1352 = vpack.c.b16 %v1262, %v1261
        %v1353 = vpack.c.b16 %v1264, %v1263
        %v1354 = vpack.c.b16 %v1266, %v1265
        %v1355 = vpack.c.b16 %v1268, %v1267
        %v1356 = vpack.c.b16 %v1270, %v1269
        %v1357 = vpack.c.b16 %v1272, %v1271
        %v1358 = vpack.c.b16 %v1274, %v1273
        %v1359 = vpack.c.b16 %v1276, %v1275
        %v1360 = vpack.c.b16 %v1278, %v1277
        %v1361 = vpack.c.b16 %v1280, %v1279
        %v1362 = vpack.c.b16 %v1282, %v1281
        %v1363 = vpack.c.b16 %v1284, %v1283
        %v1364 = vpack.c.b16 %v1286, %v1285
        %v1365 = vpack.c.b16 %v1288, %v1287
        %v1366 = vpack.c.b16 %v1290, %v1289
        %v1367 = vpack.c.b16 %v1292, %v1291
        %v1368 = vpack.c.b16 %v1294, %v1293
        %v1369 = vpack.c.b16 %v1296, %v1295
        %v1370 = vpack.c.b16 %v1298, %v1297
        %v1371 = vpack.c.b16 %v1300, %v1299
        %v1372 = vpack.c.b16 %v1302, %v1301
        %v1373 = vpack.c.b16 %v1304, %v1303
        %v1374 = vpack.c.b16 %v1306, %v1305
        %v1375 = vpack.c.b16 %v1308, %v1307
        %v1376 = vpack.c.b16 %v1310, %v1309
        %v1377 = vpack.c.b16 %v1312, %v1311
        %v1378 = vpack.c.b16 %v1314, %v1313
        %v1379 = vpack.c.b16 %v1316, %v1315
        %v1380 = vpack.c.b16 %v1318, %v1317
        %v1381 = vpack.c.b16 %v1320, %v1319
        %v1382 = vpack.c.b16 %v1322, %v1321
        %v1383 = vpack.c.b16 %v1324, %v1323
        %v1384 = vpack.c.b16 %v1326, %v1325
        %v1385 = vpack.c.b16 %v1328, %v1327
        %v1386 = vpack.c.b16 %v1330, %v1329
        %v1387 = vpack.c.b16 %v1332, %v1331
        %v1388 = vpack.c.b16 %v1334, %v1333
        %v1389 = vpack.c.b16 %v1336, %v1335
        %v1390 = vpack.c.b16 %v1338, %v1337
        %v1391 = vpack.c.b16 %v1340, %v1339
        %v1392 = vpack.c.b16 %v1342, %v1341
        %v1393 = vpack.c.b16 %v1344, %v1343
        %v1394 = vpack.c.b16 %v1346, %v1345
        %1443 = vmatprep.subr.bf16.mxu0 0
        %1444 = vmatpush1.bf16.msra.mxu0 %v1347
        %1445 = vmatprep.subr.bf16.mxu0 0
        %1446 = vmatpush1.bf16.msra.mxu0 %v1348
        %1447 = vmatprep.subr.bf16.mxu0 0
        %1448 = vmatpush1.bf16.msra.mxu0 %v1349
        %1449 = vmatprep.subr.bf16.mxu0 0
        %1450 = vmatpush1.bf16.msra.mxu0 %v1350
        %1451 = vmatprep.subr.bf16.mxu0 0
        %1452 = vmatpush1.bf16.msra.mxu0 %v1351
        %1453 = vmatprep.subr.bf16.mxu0 0
        %1454 = vmatpush1.bf16.msra.mxu0 %v1352
        %1455 = vmatprep.subr.bf16.mxu0 0
        %1456 = vmatpush1.bf16.msra.mxu0 %v1353
        %1457 = vmatprep.subr.bf16.mxu0 0
        %1458 = vmatpush1.bf16.msra.mxu0 %v1354
        %1459 = vmatprep.subr.bf16.mxu0 0
        %1460 = vmatpush1.bf16.msra.mxu0 %v1355
        %1461 = vmatprep.subr.bf16.mxu0 0
        %1462 = vmatpush1.bf16.msra.mxu0 %v1356
        %1463 = vmatprep.subr.bf16.mxu0 0
        %1464 = vmatpush1.bf16.msra.mxu0 %v1357
        %1465 = vmatprep.subr.bf16.mxu0 0
        %1466 = vmatpush1.bf16.msra.mxu0 %v1358
        %1467 = vmatprep.subr.bf16.mxu0 0
        %1468 = vmatpush1.bf16.msra.mxu0 %v1359
        %1469 = vmatprep.subr.bf16.mxu0 0
        %1470 = vmatpush1.bf16.msra.mxu0 %v1360
        %1471 = vmatprep.subr.bf16.mxu0 0
        %1472 = vmatpush1.bf16.msra.mxu0 %v1361
        %1473 = vmatprep.subr.bf16.mxu0 0
        %1474 = vmatpush1.bf16.msra.mxu0 %v1362
        %1475 = vmatprep.mubr.bf16.mxu0 %v1005
        %1476 = vmatmul.mubr.bf16.gmra.mrb[0].mxu0 %v1004
        %v1477 = vpop.f32.mrb[0].mxu0
        %v1478 = vadd.f32 %v1153, %v1477
        %v1479 = vpop.f32.mrb[0].mxu0
        %v1480 = vpop.f32.mrb[0].mxu0
        %v1481 = vadd.f32 %v1153, %v1480
        %v1482 = vpop.f32.mrb[0].mxu0
        %1483 = vmatprep.mubr.bf16.mxu0 %v1011
        %1484 = vmatmul.mubr.bf16.gmra.mrb[0].mxu0 %v1010
        %v1485 = vpop.f32.mrb[0].mxu0
        %v1486 = vadd.f32 %v1153, %v1485
        %v1487 = vpop.f32.mrb[0].mxu0
        %v1488 = vpop.f32.mrb[0].mxu0
        %v1489 = vadd.f32 %v1153, %v1488
        %v1490 = vpop.f32.mrb[0].mxu0
        %1491 = vmatprep.mubr.bf16.mxu0 %v1017
        %1492 = vmatmul.mubr.bf16.gmra.mrb[0].mxu0 %v1016
        %v1493 = vpop.f32.mrb[0].mxu0
        %v1494 = vadd.f32 %v1153, %v1493
        %v1495 = vpop.f32.mrb[0].mxu0
        %v1496 = vpop.f32.mrb[0].mxu0
        %v1497 = vadd.f32 %v1153, %v1496
        %v1498 = vpop.f32.mrb[0].mxu0
        %1499 = vmatprep.mubr.bf16.mxu0 %v1023
        %1500 = vmatmul.mubr.bf16.gmra.mrb[0].mxu0 %v1022
        %v1501 = vpop.f32.mrb[0].mxu0
        %v1502 = vadd.f32 %v1153, %v1501
        %v1503 = vpop.f32.mrb[0].mxu0
        %v1504 = vpop.f32.mrb[0].mxu0
        %v1505 = vadd.f32 %v1153, %v1504
        %v1506 = vpop.f32.mrb[0].mxu0
        %1507 = vmatprep.mubr.bf16.mxu0 %v1029
        %1508 = vmatmul.mubr.bf16.gmra.mrb[0].mxu0 %v1028
        %v1509 = vpop.f32.mrb[0].mxu0
        %v1510 = vadd.f32 %v1153, %v1509
        %v1511 = vpop.f32.mrb[0].mxu0
        %v1512 = vpop.f32.mrb[0].mxu0
        %v1513 = vadd.f32 %v1153, %v1512
        %v1514 = vpop.f32.mrb[0].mxu0
        %1515 = vmatprep.mubr.bf16.mxu0 %v1035
        %1516 = vmatmul.mubr.bf16.gmra.mrb[0].mxu0 %v1034
        %v1517 = vpop.f32.mrb[0].mxu0
        %v1518 = vadd.f32 %v1153, %v1517
        %v1519 = vpop.f32.mrb[0].mxu0
        %v1520 = vpop.f32.mrb[0].mxu0
        %v1521 = vadd.f32 %v1153, %v1520
        %v1522 = vpop.f32.mrb[0].mxu0
        %1523 = vmatprep.mubr.bf16.mxu0 %v1041
        %1524 = vmatmul.mubr.bf16.gmra.mrb[0].mxu0 %v1040
        %v1525 = vpop.f32.mrb[0].mxu0
        %v1526 = vadd.f32 %v1153, %v1525
        %v1527 = vpop.f32.mrb[0].mxu0
        %v1528 = vpop.f32.mrb[0].mxu0
        %v1529 = vadd.f32 %v1153, %v1528
        %v1530 = vpop.f32.mrb[0].mxu0
        %1531 = vmatprep.mubr.bf16.mxu0 %v1047
        %1532 = vmatmul.mubr.bf16.gmra.mrb[0].mxu0 %v1046
        %v1533 = vpop.f32.mrb[0].mxu0
        %v1534 = vadd.f32 %v1153, %v1533
        %v1535 = vpop.f32.mrb[0].mxu0
        %v1536 = vpop.f32.mrb[0].mxu0
        %v1537 = vadd.f32 %v1153, %v1536
        %v1538 = vpop.f32.mrb[0].mxu0
        %1539 = vdwg.mxu0
        %1540 = vmatprep.subr.bf16.mxu0 0
        %1541 = vmatpush1.bf16.msra.mxu0 %v1363
        %1542 = vmatprep.subr.bf16.mxu0 0
        %1543 = vmatpush1.bf16.msra.mxu0 %v1364
        %1544 = vmatprep.subr.bf16.mxu0 0
        %1545 = vmatpush1.bf16.msra.mxu0 %v1365
        %1546 = vmatprep.subr.bf16.mxu0 0
        %1547 = vmatpush1.bf16.msra.mxu0 %v1366
        %1548 = vmatprep.subr.bf16.mxu0 0
        %1549 = vmatpush1.bf16.msra.mxu0 %v1367
        %1550 = vmatprep.subr.bf16.mxu0 0
        %1551 = vmatpush1.bf16.msra.mxu0 %v1368
        %1552 = vmatprep.subr.bf16.mxu0 0
        %1553 = vmatpush1.bf16.msra.mxu0 %v1369
        %1554 = vmatprep.subr.bf16.mxu0 0
        %1555 = vmatpush1.bf16.msra.mxu0 %v1370
        %1556 = vmatprep.subr.bf16.mxu0 0
        %1557 = vmatpush1.bf16.msra.mxu0 %v1371
        %1558 = vmatprep.subr.bf16.mxu0 0
        %1559 = vmatpush1.bf16.msra.mxu0 %v1372
        %1560 = vmatprep.subr.bf16.mxu0 0
        %1561 = vmatpush1.bf16.msra.mxu0 %v1373
        %1562 = vmatprep.subr.bf16.mxu0 0
        %1563 = vmatpush1.bf16.msra.mxu0 %v1374
        %1564 = vmatprep.subr.bf16.mxu0 0
        %1565 = vmatpush1.bf16.msra.mxu0 %v1375
        %1566 = vmatprep.subr.bf16.mxu0 0
        %1567 = vmatpush1.bf16.msra.mxu0 %v1376
        %1568 = vmatprep.subr.bf16.mxu0 0
        %1569 = vmatpush1.bf16.msra.mxu0 %v1377
        %1570 = vmatprep.subr.bf16.mxu0 0
        %1571 = vmatpush1.bf16.msra.mxu0 %v1378
        %1572 = vmatprep.mubr.bf16.mxu0 %v1007
        %1573 = vmatmul.mubr.bf16.gmra.mrb[0].mxu0 %v1006
        %v1574 = vpop.f32.mrb[0].mxu0
        %v1575 = vadd.f32 %v1478, %v1574
        %v1576 = vpop.f32.mrb[0].mxu0
        %v1577 = vpop.f32.mrb[0].mxu0
        %v1578 = vadd.f32 %v1481, %v1577
        %v1579 = vpop.f32.mrb[0].mxu0
        %1580 = vmatprep.mubr.bf16.mxu0 %v1013
        %1581 = vmatmul.mubr.bf16.gmra.mrb[0].mxu0 %v1012
        %v1582 = vpop.f32.mrb[0].mxu0
        %v1583 = vadd.f32 %v1486, %v1582
        %v1584 = vpop.f32.mrb[0].mxu0
        %v1585 = vpop.f32.mrb[0].mxu0
        %v1586 = vadd.f32 %v1489, %v1585
        %v1587 = vpop.f32.mrb[0].mxu0
        %1588 = vmatprep.mubr.bf16.mxu0 %v1019
        %1589 = vmatmul.mubr.bf16.gmra.mrb[0].mxu0 %v1018
        %v1590 = vpop.f32.mrb[0].mxu0
        %v1591 = vadd.f32 %v1494, %v1590
        %v1592 = vpop.f32.mrb[0].mxu0
        %v1593 = vpop.f32.mrb[0].mxu0
        %v1594 = vadd.f32 %v1497, %v1593
        %v1595 = vpop.f32.mrb[0].mxu0
        %1596 = vmatprep.mubr.bf16.mxu0 %v1025
        %1597 = vmatmul.mubr.bf16.gmra.mrb[0].mxu0 %v1024
        %v1598 = vpop.f32.mrb[0].mxu0
        %v1599 = vadd.f32 %v1502, %v1598
        %v1600 = vpop.f32.mrb[0].mxu0
        %v1601 = vpop.f32.mrb[0].mxu0
        %v1602 = vadd.f32 %v1505, %v1601
        %v1603 = vpop.f32.mrb[0].mxu0
        %1604 = vmatprep.mubr.bf16.mxu0 %v1031
        %1605 = vmatmul.mubr.bf16.gmra.mrb[0].mxu0 %v1030
        %v1606 = vpop.f32.mrb[0].mxu0
        %v1607 = vadd.f32 %v1510, %v1606
        %v1608 = vpop.f32.mrb[0].mxu0
        %v1609 = vpop.f32.mrb[0].mxu0
        %v1610 = vadd.f32 %v1513, %v1609
        %v1611 = vpop.f32.mrb[0].mxu0
        %1612 = vmatprep.mubr.bf16.mxu0 %v1037
        %1613 = vmatmul.mubr.bf16.gmra.mrb[0].mxu0 %v1036
        %v1614 = vpop.f32.mrb[0].mxu0
        %v1615 = vadd.f32 %v1518, %v1614
        %v1616 = vpop.f32.mrb[0].mxu0
        %v1617 = vpop.f32.mrb[0].mxu0
        %v1618 = vadd.f32 %v1521, %v1617
        %v1619 = vpop.f32.mrb[0].mxu0
        %1620 = vmatprep.mubr.bf16.mxu0 %v1043
        %1621 = vmatmul.mubr.bf16.gmra.mrb[0].mxu0 %v1042
        %v1622 = vpop.f32.mrb[0].mxu0
        %v1623 = vadd.f32 %v1526, %v1622
        %v1624 = vpop.f32.mrb[0].mxu0
        %v1625 = vpop.f32.mrb[0].mxu0
        %v1626 = vadd.f32 %v1529, %v1625
        %v1627 = vpop.f32.mrb[0].mxu0
        %1628 = vmatprep.mubr.bf16.mxu0 %v1049
        %1629 = vmatmul.mubr.bf16.gmra.mrb[0].mxu0 %v1048
        %v1630 = vpop.f32.mrb[0].mxu0
        %v1631 = vadd.f32 %v1534, %v1630
        %v1632 = vpop.f32.mrb[0].mxu0
        %v1633 = vpop.f32.mrb[0].mxu0
        %v1634 = vadd.f32 %v1537, %v1633
        %v1635 = vpop.f32.mrb[0].mxu0
        %1636 = vdwg.mxu0
        %1637 = vmatprep.subr.bf16.mxu0 0
        %1638 = vmatpush1.bf16.msra.mxu0 %v1379
        %1639 = vmatprep.subr.bf16.mxu0 0
        %1640 = vmatpush1.bf16.msra.mxu0 %v1380
        %1641 = vmatprep.subr.bf16.mxu0 0
        %1642 = vmatpush1.bf16.msra.mxu0 %v1381
        %1643 = vmatprep.subr.bf16.mxu0 0
        %1644 = vmatpush1.bf16.msra.mxu0 %v1382
        %1645 = vmatprep.subr.bf16.mxu0 0
        %1646 = vmatpush1.bf16.msra.mxu0 %v1383
        %1647 = vmatprep.subr.bf16.mxu0 0
        %1648 = vmatpush1.bf16.msra.mxu0 %v1384
        %1649 = vmatprep.subr.bf16.mxu0 0
        %1650 = vmatpush1.bf16.msra.mxu0 %v1385
        %1651 = vmatprep.subr.bf16.mxu0 0
        %1652 = vmatpush1.bf16.msra.mxu0 %v1386
        %1653 = vmatprep.subr.bf16.mxu0 0
        %1654 = vmatpush1.bf16.msra.mxu0 %v1387
        %1655 = vmatprep.subr.bf16.mxu0 0
        %1656 = vmatpush1.bf16.msra.mxu0 %v1388
        %1657 = vmatprep.subr.bf16.mxu0 0
        %1658 = vmatpush1.bf16.msra.mxu0 %v1389
        %1659 = vmatprep.subr.bf16.mxu0 0
        %1660 = vmatpush1.bf16.msra.mxu0 %v1390
        %1661 = vmatprep.subr.bf16.mxu0 0
        %1662 = vmatpush1.bf16.msra.mxu0 %v1391
        %1663 = vmatprep.subr.bf16.mxu0 0
        %1664 = vmatpush1.bf16.msra.mxu0 %v1392
        %1665 = vmatprep.subr.bf16.mxu0 0
        %1666 = vmatpush1.bf16.msra.mxu0 %v1393
        %1667 = vmatprep.subr.bf16.mxu0 0
        %1668 = vmatpush1.bf16.msra.mxu0 %v1394
        %1669 = vmatprep.mubr.bf16.mxu0 %v1009
        %1670 = vmatmul.mubr.bf16.gmra.mrb[0].mxu0 %v1008
        %v1671 = vpop.f32.mrb[0].mxu0
        %v1672 = vadd.f32 %v1575, %v1671
        %v1673 = vpop.f32.mrb[0].mxu0
        %v1674 = vpop.f32.mrb[0].mxu0
        %v1675 = vadd.f32 %v1578, %v1674
        %v1676 = vpop.f32.mrb[0].mxu0
        %1677 = vmatprep.mubr.bf16.mxu0 %v1015
        %1678 = vmatmul.mubr.bf16.gmra.mrb[0].mxu0 %v1014
        %v1679 = vpop.f32.mrb[0].mxu0
        %v1680 = vadd.f32 %v1583, %v1679
        %v1681 = vpop.f32.mrb[0].mxu0
        %v1682 = vpop.f32.mrb[0].mxu0
        %v1683 = vadd.f32 %v1586, %v1682
        %v1684 = vpop.f32.mrb[0].mxu0
        %1685 = vmatprep.mubr.bf16.mxu0 %v1021
        %1686 = vmatmul.mubr.bf16.gmra.mrb[0].mxu0 %v1020
        %v1687 = vpop.f32.mrb[0].mxu0
        %v1688 = vadd.f32 %v1591, %v1687
        %v1689 = vpop.f32.mrb[0].mxu0
        %v1690 = vpop.f32.mrb[0].mxu0
        %v1691 = vadd.f32 %v1594, %v1690
        %v1692 = vpop.f32.mrb[0].mxu0
        %1693 = vmatprep.mubr.bf16.mxu0 %v1027
        %1694 = vmatmul.mubr.bf16.gmra.mrb[0].mxu0 %v1026
        %v1695 = vpop.f32.mrb[0].mxu0
        %v1696 = vadd.f32 %v1599, %v1695
        %v1697 = vpop.f32.mrb[0].mxu0
        %v1698 = vpop.f32.mrb[0].mxu0
        %v1699 = vadd.f32 %v1602, %v1698
        %v1700 = vpop.f32.mrb[0].mxu0
        %1701 = vmatprep.mubr.bf16.mxu0 %v1033
        %1702 = vmatmul.mubr.bf16.gmra.mrb[0].mxu0 %v1032
        %v1703 = vpop.f32.mrb[0].mxu0
        %v1704 = vadd.f32 %v1607, %v1703
        %v1705 = vpop.f32.mrb[0].mxu0
        %v1706 = vpop.f32.mrb[0].mxu0
        %v1707 = vadd.f32 %v1610, %v1706
        %v1708 = vpop.f32.mrb[0].mxu0
        %1709 = vmatprep.mubr.bf16.mxu0 %v1039
        %1710 = vmatmul.mubr.bf16.gmra.mrb[0].mxu0 %v1038
        %v1711 = vpop.f32.mrb[0].mxu0
        %v1712 = vadd.f32 %v1615, %v1711
        %v1713 = vpop.f32.mrb[0].mxu0
        %v1714 = vpop.f32.mrb[0].mxu0
        %v1715 = vadd.f32 %v1618, %v1714
        %v1716 = vpop.f32.mrb[0].mxu0
        %1717 = vmatprep.mubr.bf16.mxu0 %v1045
        %1718 = vmatmul.mubr.bf16.gmra.mrb[0].mxu0 %v1044
        %v1719 = vpop.f32.mrb[0].mxu0
        %v1720 = vadd.f32 %v1623, %v1719
        %v1721 = vpop.f32.mrb[0].mxu0
        %v1722 = vpop.f32.mrb[0].mxu0
        %v1723 = vadd.f32 %v1626, %v1722
        %v1724 = vpop.f32.mrb[0].mxu0
        %1725 = vmatprep.mubr.bf16.mxu0 %v1051
        %1726 = vmatmul.mubr.bf16.gmra.mrb[0].mxu0 %v1050
        %v1727 = vpop.f32.mrb[0].mxu0
        %v1728 = vadd.f32 %v1631, %v1727
        %v1729 = vpop.f32.mrb[0].mxu0
        %v1730 = vpop.f32.mrb[0].mxu0
        %v1731 = vadd.f32 %v1634, %v1730
        %v1732 = vpop.f32.mrb[0].mxu0
        %1733 = vdwg.mxu0
        %v1734 = vmax.f32 %v1672, 0.0
        %v1735 = vmax.f32 %v1675, 0.0
        %v1736 = vmax.f32 %v1680, 0.0
        %v1737 = vmax.f32 %v1683, 0.0
        %v1738 = vmax.f32 %v1688, 0.0
        %v1739 = vmax.f32 %v1691, 0.0
        %v1740 = vmax.f32 %v1696, 0.0
        %v1741 = vmax.f32 %v1699, 0.0
        %v1742 = vmax.f32 %v1704, 0.0
        %v1743 = vmax.f32 %v1707, 0.0
        %v1744 = vmax.f32 %v1712, 0.0
        %v1745 = vmax.f32 %v1715, 0.0
        %v1746 = vmax.f32 %v1720, 0.0
        %v1747 = vmax.f32 %v1723, 0.0
        %v1748 = vmax.f32 %v1728, 0.0
        %v1749 = vmax.f32 %v1731, 0.0
        %v1750 = vld [vmem:[%s5] sm:$0x1]
        %v1752 = vlaneseq
        %v1753 = vshrl.u32 %v1752, 7
        %v1754 = vsub.s32 0, %v1753
        %v1755 = vrot.slane %v1750, %v1754
        %v1757 = vmul.f32 %v1734, %v1755
        %v1758 = vmul.f32 %v1735, %v1755
        %v1759 = vmul.f32 %v1736, %v1755
        %v1760 = vmul.f32 %v1737, %v1755
        %v1761 = vmul.f32 %v1738, %v1755
        %v1762 = vmul.f32 %v1739, %v1755
        %v1763 = vmul.f32 %v1740, %v1755
        %v1764 = vmul.f32 %v1741, %v1755
        %v1765 = vmul.f32 %v1742, %v1755
        %v1766 = vmul.f32 %v1743, %v1755
        %v1767 = vmul.f32 %v1744, %v1755
        %v1768 = vmul.f32 %v1745, %v1755
        %v1769 = vmul.f32 %v1746, %v1755
        %v1770 = vmul.f32 %v1747, %v1755
        %v1771 = vmul.f32 %v1748, %v1755
        %v1772 = vmul.f32 %v1749, %v1755
        %1773 = vadd.xlane.f32.xlu0 %v1757
        %v1774 = vpop.xlane.xlu0 %1773
        %1775 = vadd.xlane.f32.xlu0 %v1758
        %v1776 = vpop.xlane.xlu0 %1775
        %1777 = vadd.xlane.f32.xlu0 %v1759
        %v1778 = vpop.xlane.xlu0 %1777
        %1779 = vadd.xlane.f32.xlu0 %v1760
        %v1780 = vpop.xlane.xlu0 %1779
        %1781 = vadd.xlane.f32.xlu0 %v1761
        %v1782 = vpop.xlane.xlu0 %1781
        %1783 = vadd.xlane.f32.xlu0 %v1762
        %v1784 = vpop.xlane.xlu0 %1783
        %1785 = vadd.xlane.f32.xlu0 %v1763
        %v1786 = vpop.xlane.xlu0 %1785
        %1787 = vadd.xlane.f32.xlu0 %v1764
        %v1788 = vpop.xlane.xlu0 %1787
        %1789 = vadd.xlane.f32.xlu0 %v1765
        %v1790 = vpop.xlane.xlu0 %1789
        %1791 = vadd.xlane.f32.xlu0 %v1766
        %v1792 = vpop.xlane.xlu0 %1791
        %1793 = vadd.xlane.f32.xlu0 %v1767
        %v1794 = vpop.xlane.xlu0 %1793
        %1795 = vadd.xlane.f32.xlu0 %v1768
        %v1796 = vpop.xlane.xlu0 %1795
        %1797 = vadd.xlane.f32.xlu0 %v1769
        %v1798 = vpop.xlane.xlu0 %1797
        %1799 = vadd.xlane.f32.xlu0 %v1770
        %v1800 = vpop.xlane.xlu0 %1799
        %1801 = vadd.xlane.f32.xlu0 %v1771
        %v1802 = vpop.xlane.xlu0 %1801
        %1803 = vadd.xlane.f32.xlu0 %v1772
        %v1804 = vpop.xlane.xlu0 %1803
        %v1805 = vld [vmem:[#allocation2] sm:$0x1]
        %v1807 = vlaneseq
        %v1808 = vshrl.u32 %v1807, 7
        %v1809 = vsub.s32 0, %v1808
        %v1810 = vrot.slane %v1805, %v1809
        %v1812 = vadd.f32 %v1774, %v1810
        %v1813 = vadd.f32 %v1776, %v1810
        %v1814 = vadd.f32 %v1778, %v1810
        %v1815 = vadd.f32 %v1780, %v1810
        %v1816 = vadd.f32 %v1782, %v1810
        %v1817 = vadd.f32 %v1784, %v1810
        %v1818 = vadd.f32 %v1786, %v1810
        %v1819 = vadd.f32 %v1788, %v1810
        %v1820 = vadd.f32 %v1790, %v1810
        %v1821 = vadd.f32 %v1792, %v1810
        %v1822 = vadd.f32 %v1794, %v1810
        %v1823 = vadd.f32 %v1796, %v1810
        %v1824 = vadd.f32 %v1798, %v1810
        %v1825 = vadd.f32 %v1800, %v1810
        %v1826 = vadd.f32 %v1802, %v1810
        %v1827 = vadd.f32 %v1804, %v1810
        %v1828 = vxor.u32 %v1812, 2147483648
        %v1829 = vxor.u32 %v1813, 2147483648
        %v1830 = vxor.u32 %v1814, 2147483648
        %v1831 = vxor.u32 %v1815, 2147483648
        %v1832 = vxor.u32 %v1816, 2147483648
        %v1833 = vxor.u32 %v1817, 2147483648
        %v1834 = vxor.u32 %v1818, 2147483648
        %v1835 = vxor.u32 %v1819, 2147483648
        %v1836 = vxor.u32 %v1820, 2147483648
        %v1837 = vxor.u32 %v1821, 2147483648
        %v1838 = vxor.u32 %v1822, 2147483648
        %v1839 = vxor.u32 %v1823, 2147483648
        %v1840 = vxor.u32 %v1824, 2147483648
        %v1841 = vxor.u32 %v1825, 2147483648
        %v1842 = vxor.u32 %v1826, 2147483648
        %v1843 = vxor.u32 %v1827, 2147483648
        %v1844 = vmul.f32 %v1828, 1.442695
        %v1845 = vpow.pop %v1844
        %v1846 = vmul.f32 %v1829, 1.442695
        %v1847 = vpow.pop %v1846
        %v1848 = vmul.f32 %v1830, 1.442695
        %v1849 = vpow.pop %v1848
        %v1850 = vmul.f32 %v1831, 1.442695
        %v1851 = vpow.pop %v1850
        %v1852 = vmul.f32 %v1832, 1.442695
        %v1853 = vpow.pop %v1852
        %v1854 = vmul.f32 %v1833, 1.442695
        %v1855 = vpow.pop %v1854
        %v1856 = vmul.f32 %v1834, 1.442695
        %v1857 = vpow.pop %v1856
        %v1858 = vmul.f32 %v1835, 1.442695
        %v1859 = vpow.pop %v1858
        %v1860 = vmul.f32 %v1836, 1.442695
        %v1861 = vpow.pop %v1860
        %v1862 = vmul.f32 %v1837, 1.442695
        %v1863 = vpow.pop %v1862
        %v1864 = vmul.f32 %v1838, 1.442695
        %v1865 = vpow.pop %v1864
        %v1866 = vmul.f32 %v1839, 1.442695
        %v1867 = vpow.pop %v1866
        %v1868 = vmul.f32 %v1840, 1.442695
        %v1869 = vpow.pop %v1868
        %v1870 = vmul.f32 %v1841, 1.442695
        %v1871 = vpow.pop %v1870
        %v1872 = vmul.f32 %v1842, 1.442695
        %v1873 = vpow.pop %v1872
        %v1874 = vmul.f32 %v1843, 1.442695
        %v1875 = vpow.pop %v1874
        %v1876 = vadd.f32 %v1845, 1.0
        %v1877 = vadd.f32 %v1847, 1.0
        %v1878 = vadd.f32 %v1849, 1.0
        %v1879 = vadd.f32 %v1851, 1.0
        %v1880 = vadd.f32 %v1853, 1.0
        %v1881 = vadd.f32 %v1855, 1.0
        %v1882 = vadd.f32 %v1857, 1.0
        %v1883 = vadd.f32 %v1859, 1.0
        %v1884 = vadd.f32 %v1861, 1.0
        %v1885 = vadd.f32 %v1863, 1.0
        %v1886 = vadd.f32 %v1865, 1.0
        %v1887 = vadd.f32 %v1867, 1.0
        %v1888 = vadd.f32 %v1869, 1.0
        %v1889 = vadd.f32 %v1871, 1.0
        %v1890 = vadd.f32 %v1873, 1.0
        %v1891 = vadd.f32 %v1875, 1.0
        %v1892 = vrcp.pop %v1876
        %v1893 = vmul.f32 1.0, %v1892
        %v1894 = vrcp.pop %v1877
        %v1895 = vmul.f32 1.0, %v1894
        %v1896 = vrcp.pop %v1878
        %v1897 = vmul.f32 1.0, %v1896
        %v1898 = vrcp.pop %v1879
        %v1899 = vmul.f32 1.0, %v1898
        %v1900 = vrcp.pop %v1880
        %v1901 = vmul.f32 1.0, %v1900
        %v1902 = vrcp.pop %v1881
        %v1903 = vmul.f32 1.0, %v1902
        %v1904 = vrcp.pop %v1882
        %v1905 = vmul.f32 1.0, %v1904
        %v1906 = vrcp.pop %v1883
        %v1907 = vmul.f32 1.0, %v1906
        %v1908 = vrcp.pop %v1884
        %v1909 = vmul.f32 1.0, %v1908
        %v1910 = vrcp.pop %v1885
        %v1911 = vmul.f32 1.0, %v1910
        %v1912 = vrcp.pop %v1886
        %v1913 = vmul.f32 1.0, %v1912
        %v1914 = vrcp.pop %v1887
        %v1915 = vmul.f32 1.0, %v1914
        %v1916 = vrcp.pop %v1888
        %v1917 = vmul.f32 1.0, %v1916
        %v1918 = vrcp.pop %v1889
        %v1919 = vmul.f32 1.0, %v1918
        %v1920 = vrcp.pop %v1890
        %v1921 = vmul.f32 1.0, %v1920
        %v1922 = vrcp.pop %v1891
        %v1923 = vmul.f32 1.0, %v1922
        %1925 = vset.pattern.permute.xlu0 0
        %1926 = vperm.xlu0 %1925, %v1893
        %v1927 = vpop.permute.xlu0 %1926
        %1930 = vset.pattern.permute.xlu0 0
        %1931 = vperm.xlu0 %1930, %v1895
        %v1932 = vpop.permute.xlu0 %1931
        %1935 = vset.pattern.permute.xlu0 0
        %1936 = vperm.xlu0 %1935, %v1897
        %v1937 = vpop.permute.xlu0 %1936
        %1940 = vset.pattern.permute.xlu0 0
        %1941 = vperm.xlu0 %1940, %v1899
        %v1942 = vpop.permute.xlu0 %1941
        %1945 = vset.pattern.permute.xlu0 0
        %1946 = vperm.xlu0 %1945, %v1901
        %v1947 = vpop.permute.xlu0 %1946
        %1950 = vset.pattern.permute.xlu0 0
        %1951 = vperm.xlu0 %1950, %v1903
        %v1952 = vpop.permute.xlu0 %1951
        %1955 = vset.pattern.permute.xlu0 0
        %1956 = vperm.xlu0 %1955, %v1905
        %v1957 = vpop.permute.xlu0 %1956
        %1960 = vset.pattern.permute.xlu0 0
        %1961 = vperm.xlu0 %1960, %v1907
        %v1962 = vpop.permute.xlu0 %1961
        %1965 = vset.pattern.permute.xlu0 0
        %1966 = vperm.xlu0 %1965, %v1909
        %v1967 = vpop.permute.xlu0 %1966
        %1970 = vset.pattern.permute.xlu0 0
        %1971 = vperm.xlu0 %1970, %v1911
        %v1972 = vpop.permute.xlu0 %1971
        %1975 = vset.pattern.permute.xlu0 0
        %1976 = vperm.xlu0 %1975, %v1913
        %v1977 = vpop.permute.xlu0 %1976
        %1980 = vset.pattern.permute.xlu0 0
        %1981 = vperm.xlu0 %1980, %v1915
        %v1982 = vpop.permute.xlu0 %1981
        %1985 = vset.pattern.permute.xlu0 0
        %1986 = vperm.xlu0 %1985, %v1917
        %v1987 = vpop.permute.xlu0 %1986
        %1990 = vset.pattern.permute.xlu0 0
        %1991 = vperm.xlu0 %1990, %v1919
        %v1992 = vpop.permute.xlu0 %1991
        %1995 = vset.pattern.permute.xlu0 0
        %1996 = vperm.xlu0 %1995, %v1921
        %v1997 = vpop.permute.xlu0 %1996
        %2000 = vset.pattern.permute.xlu0 0
        %2001 = vperm.xlu0 %2000, %v1923
        %v2002 = vpop.permute.xlu0 %2001
        %v2004 = vmul.f32 %v908, %v1927
        %v2005 = vmul.f32 %v909, %v1927
        %v2006 = vmul.f32 %v910, %v1927
        %v2007 = vmul.f32 %v911, %v1927
        %v2008 = vmul.f32 %v912, %v1927
        %v2009 = vmul.f32 %v913, %v1927
        %v2010 = vmul.f32 %v914, %v1932
        %v2011 = vmul.f32 %v915, %v1932
        %v2012 = vmul.f32 %v916, %v1932
        %v2013 = vmul.f32 %v917, %v1932
        %v2014 = vmul.f32 %v918, %v1932
        %v2015 = vmul.f32 %v919, %v1932
        %v2016 = vmul.f32 %v920, %v1937
        %v2017 = vmul.f32 %v921, %v1937
        %v2018 = vmul.f32 %v922, %v1937
        %v2019 = vmul.f32 %v923, %v1937
        %v2020 = vmul.f32 %v924, %v1937
        %v2021 = vmul.f32 %v925, %v1937
        %v2022 = vmul.f32 %v926, %v1942
        %v2023 = vmul.f32 %v927, %v1942
        %v2024 = vmul.f32 %v928, %v1942
        %v2025 = vmul.f32 %v929, %v1942
        %v2026 = vmul.f32 %v930, %v1942
        %v2027 = vmul.f32 %v931, %v1942
        %v2028 = vmul.f32 %v932, %v1947
        %v2029 = vmul.f32 %v933, %v1947
        %v2030 = vmul.f32 %v934, %v1947
        %v2031 = vmul.f32 %v935, %v1947
        %v2032 = vmul.f32 %v936, %v1947
        %v2033 = vmul.f32 %v937, %v1947
        %v2034 = vmul.f32 %v938, %v1952
        %v2035 = vmul.f32 %v939, %v1952
        %v2036 = vmul.f32 %v940, %v1952
        %v2037 = vmul.f32 %v941, %v1952
        %v2038 = vmul.f32 %v942, %v1952
        %v2039 = vmul.f32 %v943, %v1952
        %v2040 = vmul.f32 %v944, %v1957
        %v2041 = vmul.f32 %v945, %v1957
        %v2042 = vmul.f32 %v946, %v1957
        %v2043 = vmul.f32 %v947, %v1957
        %v2044 = vmul.f32 %v948, %v1957
        %v2045 = vmul.f32 %v949, %v1957
        %v2046 = vmul.f32 %v950, %v1962
        %v2047 = vmul.f32 %v951, %v1962
        %v2048 = vmul.f32 %v952, %v1962
        %v2049 = vmul.f32 %v953, %v1962
        %v2050 = vmul.f32 %v954, %v1962
        %v2051 = vmul.f32 %v955, %v1962
        %v2052 = vmul.f32 %v956, %v1967
        %v2053 = vmul.f32 %v957, %v1967
        %v2054 = vmul.f32 %v958, %v1967
        %v2055 = vmul.f32 %v959, %v1967
        %v2056 = vmul.f32 %v960, %v1967
        %v2057 = vmul.f32 %v961, %v1967
        %v2058 = vmul.f32 %v962, %v1972
        %v2059 = vmul.f32 %v963, %v1972
        %v2060 = vmul.f32 %v964, %v1972
        %v2061 = vmul.f32 %v965, %v1972
        %v2062 = vmul.f32 %v966, %v1972
        %v2063 = vmul.f32 %v967, %v1972
        %v2064 = vmul.f32 %v968, %v1977
        %v2065 = vmul.f32 %v969, %v1977
        %v2066 = vmul.f32 %v970, %v1977
        %v2067 = vmul.f32 %v971, %v1977
        %v2068 = vmul.f32 %v972, %v1977
        %v2069 = vmul.f32 %v973, %v1977
        %v2070 = vmul.f32 %v974, %v1982
        %v2071 = vmul.f32 %v975, %v1982
        %v2072 = vmul.f32 %v976, %v1982
        %v2073 = vmul.f32 %v977, %v1982
        %v2074 = vmul.f32 %v978, %v1982
        %v2075 = vmul.f32 %v979, %v1982
        %v2076 = vmul.f32 %v980, %v1987
        %v2077 = vmul.f32 %v981, %v1987
        %v2078 = vmul.f32 %v982, %v1987
        %v2079 = vmul.f32 %v983, %v1987
        %v2080 = vmul.f32 %v984, %v1987
        %v2081 = vmul.f32 %v985, %v1987
        %v2082 = vmul.f32 %v986, %v1992
        %v2083 = vmul.f32 %v987, %v1992
        %v2084 = vmul.f32 %v988, %v1992
        %v2085 = vmul.f32 %v989, %v1992
        %v2086 = vmul.f32 %v990, %v1992
        %v2087 = vmul.f32 %v991, %v1992
        %v2088 = vmul.f32 %v992, %v1997
        %v2089 = vmul.f32 %v993, %v1997
        %v2090 = vmul.f32 %v994, %v1997
        %v2091 = vmul.f32 %v995, %v1997
        %v2092 = vmul.f32 %v996, %v1997
        %v2093 = vmul.f32 %v997, %v1997
        %v2094 = vmul.f32 %v998, %v2002
        %v2095 = vmul.f32 %v999, %v2002
        %v2096 = vmul.f32 %v1000, %v2002
        %v2097 = vmul.f32 %v1001, %v2002
        %v2098 = vmul.f32 %v1002, %v2002
        %v2099 = vmul.f32 %v1003, %v2002
        %v2100 = vadd.f32 %v2004, %v2010
        %v2101 = vadd.f32 %v2005, %v2011
        %v2102 = vadd.f32 %v2006, %v2012
        %v2103 = vadd.f32 %v2007, %v2013
        %v2104 = vadd.f32 %v2008, %v2014
        %v2105 = vadd.f32 %v2009, %v2015
        %v2106 = vadd.f32 %v2016, %v2022
        %v2107 = vadd.f32 %v2017, %v2023
        %v2108 = vadd.f32 %v2018, %v2024
        %v2109 = vadd.f32 %v2019, %v2025
        %v2110 = vadd.f32 %v2020, %v2026
        %v2111 = vadd.f32 %v2021, %v2027
        %v2112 = vadd.f32 %v2028, %v2034
        %v2113 = vadd.f32 %v2029, %v2035
        %v2114 = vadd.f32 %v2030, %v2036
        %v2115 = vadd.f32 %v2031, %v2037
        %v2116 = vadd.f32 %v2032, %v2038
        %v2117 = vadd.f32 %v2033, %v2039
        %v2118 = vadd.f32 %v2040, %v2046
        %v2119 = vadd.f32 %v2041, %v2047
        %v2120 = vadd.f32 %v2042, %v2048
        %v2121 = vadd.f32 %v2043, %v2049
        %v2122 = vadd.f32 %v2044, %v2050
        %v2123 = vadd.f32 %v2045, %v2051
        %v2124 = vadd.f32 %v2052, %v2058
        %v2125 = vadd.f32 %v2053, %v2059
        %v2126 = vadd.f32 %v2054, %v2060
        %v2127 = vadd.f32 %v2055, %v2061
        %v2128 = vadd.f32 %v2056, %v2062
        %v2129 = vadd.f32 %v2057, %v2063
        %v2130 = vadd.f32 %v2064, %v2070
        %v2131 = vadd.f32 %v2065, %v2071
        %v2132 = vadd.f32 %v2066, %v2072
        %v2133 = vadd.f32 %v2067, %v2073
        %v2134 = vadd.f32 %v2068, %v2074
        %v2135 = vadd.f32 %v2069, %v2075
        %v2136 = vadd.f32 %v2076, %v2082
        %v2137 = vadd.f32 %v2077, %v2083
        %v2138 = vadd.f32 %v2078, %v2084
        %v2139 = vadd.f32 %v2079, %v2085
        %v2140 = vadd.f32 %v2080, %v2086
        %v2141 = vadd.f32 %v2081, %v2087
        %v2142 = vadd.f32 %v2088, %v2094
        %v2143 = vadd.f32 %v2089, %v2095
        %v2144 = vadd.f32 %v2090, %v2096
        %v2145 = vadd.f32 %v2091, %v2097
        %v2146 = vadd.f32 %v2092, %v2098
        %v2147 = vadd.f32 %v2093, %v2099
        %v2148 = vadd.f32 %v2100, %v2106
        %v2149 = vadd.f32 %v2101, %v2107
        %v2150 = vadd.f32 %v2102, %v2108
        %v2151 = vadd.f32 %v2103, %v2109
        %v2152 = vadd.f32 %v2104, %v2110
        %v2153 = vadd.f32 %v2105, %v2111
        %v2154 = vadd.f32 %v2112, %v2118
        %v2155 = vadd.f32 %v2113, %v2119
        %v2156 = vadd.f32 %v2114, %v2120
        %v2157 = vadd.f32 %v2115, %v2121
        %v2158 = vadd.f32 %v2116, %v2122
        %v2159 = vadd.f32 %v2117, %v2123
        %v2160 = vadd.f32 %v2124, %v2130
        %v2161 = vadd.f32 %v2125, %v2131
        %v2162 = vadd.f32 %v2126, %v2132
        %v2163 = vadd.f32 %v2127, %v2133
        %v2164 = vadd.f32 %v2128, %v2134
        %v2165 = vadd.f32 %v2129, %v2135
        %v2166 = vadd.f32 %v2136, %v2142
        %v2167 = vadd.f32 %v2137, %v2143
        %v2168 = vadd.f32 %v2138, %v2144
        %v2169 = vadd.f32 %v2139, %v2145
        %v2170 = vadd.f32 %v2140, %v2146
        %v2171 = vadd.f32 %v2141, %v2147
        %v2172 = vadd.f32 %v2148, %v2154
        %v2173 = vadd.f32 %v2149, %v2155
        %v2174 = vadd.f32 %v2150, %v2156
        %v2175 = vadd.f32 %v2151, %v2157
        %v2176 = vadd.f32 %v2152, %v2158
        %v2177 = vadd.f32 %v2153, %v2159
        %v2178 = vadd.f32 %v2160, %v2166
        %v2179 = vadd.f32 %v2161, %v2167
        %v2180 = vadd.f32 %v2162, %v2168
        %v2181 = vadd.f32 %v2163, %v2169
        %v2182 = vadd.f32 %v2164, %v2170
        %v2183 = vadd.f32 %v2165, %v2171
        %v2184 = vadd.f32 %v2172, %v2178
        %v2185 = vadd.f32 %v2173, %v2179
        %v2186 = vadd.f32 %v2174, %v2180
        %v2187 = vadd.f32 %v2175, %v2181
        %v2188 = vadd.f32 %v2176, %v2182
        %v2189 = vadd.f32 %v2177, %v2183
        %2190 = vst [vmem:[%s310] sm:$0xff] %v2184
        %2191 = vst [vmem:[%s310 + $0x8] sm:$0xff] %v2185
        %2192 = vst [vmem:[%s310 + $0x10] sm:$0xff] %v2186
        %2193 = vst [vmem:[%s310 + $0x18] sm:$0xff] %v2187
        %2194 = vst [vmem:[%s310 + $0x20] sm:$0xff] %v2188
        %2195 = vst [vmem:[%s310 + $0x28] sm:$0xff] %v2189
        %p2196 = scmp.lt.s32.totalorder %s22, 1
        %s2197 = scalar_select %p2196, %s22, 1
        %s2198 = smul.addr %s2197, 6
        %s2199 = smul.addr %s2198, 8
        %s2200 = scalar_lea.vmem %s7, %s2199
        // Predicated region
        $region57: #{_lambda_.2} parent=47 // pred_check
          %p2201 = pneg %p192
        $region58: #{_lambda_.2} parent=47 // pred_check_branch
          %2203 = sbr.rel (%p2201) target = $region60
        $region59: #{_lambda_.2} parent=47 // pred_region
          _
        $region60: #{_lambda_.2} parent=47 // pred_fallthru
          _
      $region48: #{_lambda_.2} parent=5 // pred_fallthru
        _
      %p2204 = scmp.le.s32.totalorder 2, %s17
      // Predicated region
      $region61: #{_lambda_.2} parent=5 // pred_check
        %p2205 = pneg %p2204
      $region62: #{_lambda_.2} parent=5 // pred_check_branch
        %2207 = sbr.rel (%p2205) target = $region64
      $region63: #{_lambda_.2} parent=5 // pred_region
        %s2208 = ssub.s32 %s17, 2
        // Predicated region
        $region65: #{_lambda_.2} parent=63 // pred_check
          %p2209 = pneg %p198
        $region66: #{_lambda_.2} parent=63 // pred_check_branch
          %2211 = sbr.rel (%p2209) target = $region68
        $region67: #{_lambda_.2} parent=63 // pred_region
          %p2212 = scmp.lt.s32.totalorder %s23, 1
          %s2213 = scalar_select %p2212, %s23, 1
          %s2214 = smul.addr %s2213, 6
          %s2215 = smul.addr %s2214, 8
          %s2216 = scalar_lea.vmem %s7, %s2215
        $region68: #{_lambda_.2} parent=63 // pred_fallthru
          _
      $region64: #{_lambda_.2} parent=5 // pred_fallthru
        _
    $region6: #{_lambda_.2} parent=1 // loop_footer
      %s21 = sadd.s32 1, %s17
    $region7: #{_lambda_.2} parent=1 // loop_footer_branch
      %16 = sbr.rel target = $region3
    $region8: #{_lambda_.2} parent=1 // loop_exit
      _
    %2217 = vsyncpa [#allocation4], 1
    %s2218 = scalar_lea.sflag [#allocation4], 1
    %2219 = vsyncpa %s2218, 1
    %2220 = vsyncpa [#allocation6], 1

// kernel: _lambda_.3
$region0: #{_lambda_.3}
  #allocation0 [shape = 'u32[]', space=smem, size = 0x4, offset = 0x4, fixed_abs, tag = 'smem constant byte address 0x4 - core index']
  #allocation1 [shape = 'u32[144,128]{1,0:T(1,128)}', space=vmem, size = 0x12000, scoped, tag = 'internal scratch']
  %s0 = inlined_call_operand.vmem [shape: f32[2,3072], index: 0, kind: input, shape index: {}]
  %s1 = inlined_call_operand.vmem [shape: f32[2,3072], index: 1, kind: input, shape index: {}]
  %s2 = inlined_call_operand.vmem [shape: bf16[2,8], index: 2, kind: input, shape index: {}]
  %s3 = inlined_call_operand.vmem [shape: bf16[3072,512], index: 3, kind: input, shape index: {}]
  %s4 = inlined_call_operand.hbm [shape: f32[1,512], index: 4, kind: input, shape index: {}]
  %s5 = inlined_call_operand.vmem [shape: bf16[512,512], index: 5, kind: input, shape index: {}]
  %s6 = inlined_call_operand.vmem [shape: bf16[512,512], index: 6, kind: input, shape index: {}]
  %s7 = inlined_call_operand.hbm [shape: f32[1,512], index: 7, kind: input, shape index: {}]
  %s8 = inlined_call_operand.hbm [shape: bf16[512,128], index: 8, kind: input, shape index: {}]
  %s9 = inlined_call_operand.vmem [shape: f32[1,128], index: 9, kind: input, shape index: {}]
  %s10 = inlined_call_operand.vmem [shape: bf16[512,512], index: 10, kind: input, shape index: {}]
  %s11 = inlined_call_operand.vmem [shape: bf16[8,512], index: 11, kind: input, shape index: {}]
  %s12 = inlined_call_operand.hbm [shape: f32[1,512], index: 12, kind: input, shape index: {}]
  %s13 = inlined_call_operand.hbm [shape: bf16[512,512], index: 13, kind: input, shape index: {}]
  %s14 = inlined_call_operand.hbm [shape: f32[1,512], index: 14, kind: input, shape index: {}]
  %s15 = inlined_call_operand.hbm [shape: f32[2,512], index: 15, kind: output, shape index: {0}]
  %s16 = inlined_call_operand.hbm [shape: f32[2,128], index: 16, kind: output, shape index: {1}]
  %s17 = inlined_call_operand.hbm [shape: f32[2,512], index: 17, kind: output, shape index: {2}]
  %18 = xla_tuple %s15, %s16, %s17
  %s19 = sld [smem:[#allocation0]]
  $region110: #{_lambda_.3} parent=0
    _
  %s21 = ssub.s32 1, %s19
  %s22 = scalar_select 0, %s21, %s19
  $region1: #{_lambda_.3} parent=0
    #allocation2 [shape = 'u8[2048]{0}', space=vmem, size = 0x800, scoped, tag = 'input window, operand 4, single buffered']
    #allocation3 [shape = 's32[1]{0}', space=sflag, size = 0x4, scoped, tag = 'scoped memory for _lambda_.3']
    #allocation4 [shape = 's32[1]{0}', space=sflag, size = 0x4, scoped, tag = 'scoped memory for _lambda_.3']
    #allocation5 [shape = 'u8[2048]{0}', space=vmem, size = 0x800, scoped, tag = 'input window, operand 7, single buffered']
    #allocation6 [shape = 's32[1]{0}', space=sflag, size = 0x4, scoped, tag = 'scoped memory for _lambda_.3']
    #allocation7 [shape = 'u8[131072]{0}', space=vmem, size = 0x20000, scoped, tag = 'input window, operand 8, single buffered']
    #allocation8 [shape = 'u8[2048]{0}', space=vmem, size = 0x800, scoped, tag = 'input window, operand 12, single buffered']
    #allocation9 [shape = 's32[1]{0}', space=sflag, size = 0x4, scoped, tag = 'scoped memory for _lambda_.3']
    #allocation10 [shape = 'u8[524288]{0}', space=vmem, size = 0x80000, scoped, tag = 'input window, operand 13, single buffered']
    #allocation11 [shape = 'u8[2048]{0}', space=vmem, size = 0x800, scoped, tag = 'input window, operand 14, single buffered']
    #allocation12 [shape = 's32[1]{0}', space=sflag, size = 0x4, scoped, tag = 'scoped memory for _lambda_.3']
    #allocation13 [shape = 'u8[4096]{0}', space=vmem, size = 0x1000, scoped, tag = 'output window, operand 0, single buffered']
    #allocation14 [shape = 'u8[1024]{0}', space=vmem, size = 0x400, scoped, tag = 'output window, operand 1, single buffered']
    #allocation15 [shape = 's32[1]{0}', space=sflag, size = 0x4, scoped, tag = 'scoped memory for _lambda_.3']
    #allocation16 [shape = 'u8[4096]{0}', space=vmem, size = 0x1000, scoped, tag = 'output window, operand 2, single buffered']
    %23 = vsyncpa [#allocation3], 0
    %24 = vsyncpa [#allocation6], 0
    %25 = vsyncpa [#allocation9], 0
    %26 = vsyncpa [#allocation12], 0
    %27 = vsyncpa [#allocation4], 0
    %28 = vsyncpa [#allocation15], 0
    // Predicated region
    $region2: #{_lambda_.3} parent=1 // pred_check
      _
    $region3: #{_lambda_.3} parent=1 // pred_check_branch
      %30 = sbr.rel (0) target = $region5
    $region4: #{_lambda_.3} parent=1 // pred_region
      _
    $region5: #{_lambda_.3} parent=1 // pred_fallthru
      _
    // Predicated region
    $region6: #{_lambda_.3} parent=1 // pred_check
      _
    $region7: #{_lambda_.3} parent=1 // pred_check_branch
      %32 = sbr.rel (0) target = $region9
    $region8: #{_lambda_.3} parent=1 // pred_region
      _
    $region9: #{_lambda_.3} parent=1 // pred_fallthru
      _
    // Predicated region
    $region10: #{_lambda_.3} parent=1 // pred_check
      _
    $region11: #{_lambda_.3} parent=1 // pred_check_branch
      %34 = sbr.rel (0) target = $region13
    $region12: #{_lambda_.3} parent=1 // pred_region
      _
    $region13: #{_lambda_.3} parent=1 // pred_fallthru
      _
    // Predicated region
    $region14: #{_lambda_.3} parent=1 // pred_check
      _
    $region15: #{_lambda_.3} parent=1 // pred_check_branch
      %36 = sbr.rel (0) target = $region17
    $region16: #{_lambda_.3} parent=1 // pred_region
      _
    $region17: #{_lambda_.3} parent=1 // pred_fallthru
      _
    // Predicated region
    $region18: #{_lambda_.3} parent=1 // pred_check
      _
    $region19: #{_lambda_.3} parent=1 // pred_check_branch
      %38 = sbr.rel (0) target = $region21
    $region20: #{_lambda_.3} parent=1 // pred_region
      %s40 = ssub.s32 64, 64
      %41 = vsyncadd [#allocation3], %s40
      %s43 = sshll.u32 [#allocation2], 4
      %s44 = int_to_ptr.vmem [resolvable:$true] %s43
      %46 = dma.hbm_to_vmem [thread:$0]  %s4, 64, %s44, [#allocation3]
    $region21: #{_lambda_.3} parent=1 // pred_fallthru
      _
    // Predicated region
    $region22: #{_lambda_.3} parent=1 // pred_check
      _
    $region23: #{_lambda_.3} parent=1 // pred_check_branch
      %48 = sbr.rel (0) target = $region25
    $region24: #{_lambda_.3} parent=1 // pred_region
      _
    $region25: #{_lambda_.3} parent=1 // pred_fallthru
      _
    // Predicated region
    $region26: #{_lambda_.3} parent=1 // pred_check
      _
    $region27: #{_lambda_.3} parent=1 // pred_check_branch
      %50 = sbr.rel (0) target = $region29
    $region28: #{_lambda_.3} parent=1 // pred_region
      _
    $region29: #{_lambda_.3} parent=1 // pred_fallthru
      _
    // Predicated region
    $region30: #{_lambda_.3} parent=1 // pred_check
      _
    $region31: #{_lambda_.3} parent=1 // pred_check_branch
      %52 = sbr.rel (0) target = $region33
    $region32: #{_lambda_.3} parent=1 // pred_region
      %s54 = ssub.s32 64, 64
      %55 = vsyncadd [#allocation6], %s54
      %s57 = sshll.u32 [#allocation5], 4
      %s58 = int_to_ptr.vmem [resolvable:$true] %s57
      %60 = dma.hbm_to_vmem [thread:$0]  %s7, 64, %s58, [#allocation6]
    $region33: #{_lambda_.3} parent=1 // pred_fallthru
      _
    // Predicated region
    $region34: #{_lambda_.3} parent=1 // pred_check
      _
    $region35: #{_lambda_.3} parent=1 // pred_check_branch
      %62 = sbr.rel (0) target = $region37
    $region36: #{_lambda_.3} parent=1 // pred_region
      %s64 = ssub.s32 4096, 4096
      %65 = vsyncadd [#allocation6], %s64
      %s66 = sshll.u32 [#allocation7], 4
      %s67 = int_to_ptr.vmem [resolvable:$true] %s66
      %72 = dma.hbm_to_vmem [thread:$0]  %s8, 4096, %s67, [#allocation6], 64, 64, 4
    $region37: #{_lambda_.3} parent=1 // pred_fallthru
      _
    // Predicated region
    $region38: #{_lambda_.3} parent=1 // pred_check
      _
    $region39: #{_lambda_.3} parent=1 // pred_check_branch
      %74 = sbr.rel (0) target = $region41
    $region40: #{_lambda_.3} parent=1 // pred_region
      _
    $region41: #{_lambda_.3} parent=1 // pred_fallthru
      _
    // Predicated region
    $region42: #{_lambda_.3} parent=1 // pred_check
      _
    $region43: #{_lambda_.3} parent=1 // pred_check_branch
      %76 = sbr.rel (0) target = $region45
    $region44: #{_lambda_.3} parent=1 // pred_region
      _
    $region45: #{_lambda_.3} parent=1 // pred_fallthru
      _
    // Predicated region
    $region46: #{_lambda_.3} parent=1 // pred_check
      _
    $region47: #{_lambda_.3} parent=1 // pred_check_branch
      %78 = sbr.rel (0) target = $region49
    $region48: #{_lambda_.3} parent=1 // pred_region
      _
    $region49: #{_lambda_.3} parent=1 // pred_fallthru
      _
    // Predicated region
    $region50: #{_lambda_.3} parent=1 // pred_check
      _
    $region51: #{_lambda_.3} parent=1 // pred_check_branch
      %80 = sbr.rel (0) target = $region53
    $region52: #{_lambda_.3} parent=1 // pred_region
      %s82 = ssub.s32 64, 64
      %83 = vsyncadd [#allocation9], %s82
      %s85 = sshll.u32 [#allocation8], 4
      %s86 = int_to_ptr.vmem [resolvable:$true] %s85
      %88 = dma.hbm_to_vmem [thread:$0]  %s12, 64, %s86, [#allocation9]
    $region53: #{_lambda_.3} parent=1 // pred_fallthru
      _
    // Predicated region
    $region54: #{_lambda_.3} parent=1 // pred_check
      _
    $region55: #{_lambda_.3} parent=1 // pred_check_branch
      %90 = sbr.rel (0) target = $region57
    $region56: #{_lambda_.3} parent=1 // pred_region
      %s92 = ssub.s32 16384, 16384
      %93 = vsyncadd [#allocation9], %s92
      %s94 = sshll.u32 [#allocation10], 4
      %s95 = int_to_ptr.vmem [resolvable:$true] %s94
      %100 = dma.hbm_to_vmem [thread:$0]  %s13, 16384, %s95, [#allocation9], 256, 256, 16
    $region57: #{_lambda_.3} parent=1 // pred_fallthru
      _
    // Predicated region
    $region58: #{_lambda_.3} parent=1 // pred_check
      _
    $region59: #{_lambda_.3} parent=1 // pred_check_branch
      %102 = sbr.rel (0) target = $region61
    $region60: #{_lambda_.3} parent=1 // pred_region
      %s104 = ssub.s32 64, 64
      %105 = vsyncadd [#allocation12], %s104
      %s107 = sshll.u32 [#allocation11], 4
      %s108 = int_to_ptr.vmem [resolvable:$true] %s107
      %110 = dma.hbm_to_vmem [thread:$0]  %s14, 64, %s108, [#allocation12]
    $region61: #{_lambda_.3} parent=1 // pred_fallthru
      _
    // Predicated region
    $region62: #{_lambda_.3} parent=1 // pred_check
      _
    $region63: #{_lambda_.3} parent=1 // pred_check_branch
      %112 = sbr.rel (0) target = $region65
    $region64: #{_lambda_.3} parent=1 // pred_region
      %113 = dma.done [#allocation3], 64
    $region65: #{_lambda_.3} parent=1 // pred_fallthru
      _
    // Predicated region
    $region66: #{_lambda_.3} parent=1 // pred_check
      _
    $region67: #{_lambda_.3} parent=1 // pred_check_branch
      %115 = sbr.rel (0) target = $region69
    $region68: #{_lambda_.3} parent=1 // pred_region
      %116 = dma.done [#allocation6], 64
    $region69: #{_lambda_.3} parent=1 // pred_fallthru
      _
    // Predicated region
    $region70: #{_lambda_.3} parent=1 // pred_check
      _
    $region71: #{_lambda_.3} parent=1 // pred_check_branch
      %118 = sbr.rel (0) target = $region73
    $region72: #{_lambda_.3} parent=1 // pred_region
      %119 = dma.done [#allocation6], 4096
    $region73: #{_lambda_.3} parent=1 // pred_fallthru
      _
    // Predicated region
    $region74: #{_lambda_.3} parent=1 // pred_check
      _
    $region75: #{_lambda_.3} parent=1 // pred_check_branch
      %121 = sbr.rel (0) target = $region77
    $region76: #{_lambda_.3} parent=1 // pred_region
      %122 = dma.done [#allocation9], 64
    $region77: #{_lambda_.3} parent=1 // pred_fallthru
      _
    // Predicated region
    $region78: #{_lambda_.3} parent=1 // pred_check
      _
    $region79: #{_lambda_.3} parent=1 // pred_check_branch
      %124 = sbr.rel (0) target = $region81
    $region80: #{_lambda_.3} parent=1 // pred_region
      %125 = dma.done [#allocation9], 16384
    $region81: #{_lambda_.3} parent=1 // pred_fallthru
      _
    // Predicated region
    $region82: #{_lambda_.3} parent=1 // pred_check
      _
    $region83: #{_lambda_.3} parent=1 // pred_check_branch
      %127 = sbr.rel (0) target = $region85
    $region84: #{_lambda_.3} parent=1 // pred_region
      %128 = dma.done [#allocation12], 64
    $region85: #{_lambda_.3} parent=1 // pred_fallthru
      _
    %v130 = vld [vmem:[%s0] sm:$0xff]
    %v131 = vld [vmem:[%s0 + $0x8] sm:$0xff]
    %v132 = vld [vmem:[%s0 + $0x10] sm:$0xff]
    %v133 = vld [vmem:[%s0 + $0x18] sm:$0xff]
    %v134 = vld [vmem:[%s0 + $0x20] sm:$0xff]
    %v135 = vld [vmem:[%s0 + $0x28] sm:$0xff]
    %v142 = vcombine.high %v130, %v130
    %v144 = vunpack.c.l.s4 1983009808
    %v145 = vunpack.c.0.s8 %v144
    %v146 = vlaneseq
    %v147 = vshrl.u32 %v146, 7
    %v148 = vsub.s32 %v145, %v147
    %v149 = vrot.slane %v130, %v148
    %v151 = vunpack.c.l.s4 1983009808
    %v152 = vunpack.c.0.s8 %v151
    %v153 = vlaneseq
    %v154 = vshrl.u32 %v153, 7
    %v155 = vsub.s32 %v152, %v154
    %v156 = vrot.slane %v142, %v155
    %v157 = vcombine.high %v149, %v149
    %v158 = vcombine.high %v156, %v156
    %v159 = vcombine.high %v131, %v131
    %v161 = vunpack.c.l.s4 1983009808
    %v162 = vunpack.c.0.s8 %v161
    %v163 = vlaneseq
    %v164 = vshrl.u32 %v163, 7
    %v165 = vsub.s32 %v162, %v164
    %v166 = vrot.slane %v131, %v165
    %v168 = vunpack.c.l.s4 1983009808
    %v169 = vunpack.c.0.s8 %v168
    %v170 = vlaneseq
    %v171 = vshrl.u32 %v170, 7
    %v172 = vsub.s32 %v169, %v171
    %v173 = vrot.slane %v159, %v172
    %v174 = vcombine.high %v166, %v166
    %v175 = vcombine.high %v173, %v173
    %v176 = vcombine.high %v132, %v132
    %v178 = vunpack.c.l.s4 1983009808
    %v179 = vunpack.c.0.s8 %v178
    %v180 = vlaneseq
    %v181 = vshrl.u32 %v180, 7
    %v182 = vsub.s32 %v179, %v181
    %v183 = vrot.slane %v132, %v182
    %v185 = vunpack.c.l.s4 1983009808
    %v186 = vunpack.c.0.s8 %v185
    %v187 = vlaneseq
    %v188 = vshrl.u32 %v187, 7
    %v189 = vsub.s32 %v186, %v188
    %v190 = vrot.slane %v176, %v189
    %v191 = vcombine.high %v183, %v183
    %v192 = vcombine.high %v190, %v190
    %v193 = vcombine.high %v133, %v133
    %v195 = vunpack.c.l.s4 1983009808
    %v196 = vunpack.c.0.s8 %v195
    %v197 = vlaneseq
    %v198 = vshrl.u32 %v197, 7
    %v199 = vsub.s32 %v196, %v198
    %v200 = vrot.slane %v133, %v199
    %v202 = vunpack.c.l.s4 1983009808
    %v203 = vunpack.c.0.s8 %v202
    %v204 = vlaneseq
    %v205 = vshrl.u32 %v204, 7
    %v206 = vsub.s32 %v203, %v205
    %v207 = vrot.slane %v193, %v206
    %v208 = vcombine.high %v200, %v200
    %v209 = vcombine.high %v207, %v207
    %v210 = vcombine.high %v134, %v134
    %v212 = vunpack.c.l.s4 1983009808
    %v213 = vunpack.c.0.s8 %v212
    %v214 = vlaneseq
    %v215 = vshrl.u32 %v214, 7
    %v216 = vsub.s32 %v213, %v215
    %v217 = vrot.slane %v134, %v216
    %v219 = vunpack.c.l.s4 1983009808
    %v220 = vunpack.c.0.s8 %v219
    %v221 = vlaneseq
    %v222 = vshrl.u32 %v221, 7
    %v223 = vsub.s32 %v220, %v222
    %v224 = vrot.slane %v210, %v223
    %v225 = vcombine.high %v217, %v217
    %v226 = vcombine.high %v224, %v224
    %v227 = vcombine.high %v135, %v135
    %v229 = vunpack.c.l.s4 1983009808
    %v230 = vunpack.c.0.s8 %v229
    %v231 = vlaneseq
    %v232 = vshrl.u32 %v231, 7
    %v233 = vsub.s32 %v230, %v232
    %v234 = vrot.slane %v135, %v233
    %v236 = vunpack.c.l.s4 1983009808
    %v237 = vunpack.c.0.s8 %v236
    %v238 = vlaneseq
    %v239 = vshrl.u32 %v238, 7
    %v240 = vsub.s32 %v237, %v239
    %v241 = vrot.slane %v227, %v240
    %v242 = vcombine.high %v234, %v234
    %v243 = vcombine.high %v241, %v241
    %v268 = vpack.c.bf16 %v149, %v149
    %v269 = vpack.c.bf16 %v157, %v157
    %v270 = vpack.c.bf16 %v156, %v156
    %v271 = vpack.c.bf16 %v158, %v158
    %v272 = vpack.c.bf16 %v166, %v166
    %v273 = vpack.c.bf16 %v174, %v174
    %v274 = vpack.c.bf16 %v173, %v173
    %v275 = vpack.c.bf16 %v175, %v175
    %v276 = vpack.c.bf16 %v183, %v183
    %v277 = vpack.c.bf16 %v191, %v191
    %v278 = vpack.c.bf16 %v190, %v190
    %v279 = vpack.c.bf16 %v192, %v192
    %v280 = vpack.c.bf16 %v200, %v200
    %v281 = vpack.c.bf16 %v208, %v208
    %v282 = vpack.c.bf16 %v207, %v207
    %v283 = vpack.c.bf16 %v209, %v209
    %v284 = vpack.c.bf16 %v217, %v217
    %v285 = vpack.c.bf16 %v225, %v225
    %v286 = vpack.c.bf16 %v224, %v224
    %v287 = vpack.c.bf16 %v226, %v226
    %v288 = vpack.c.bf16 %v234, %v234
    %v289 = vpack.c.bf16 %v242, %v242
    %v290 = vpack.c.bf16 %v241, %v241
    %v291 = vpack.c.bf16 %v243, %v243
    %v292 = vld [vmem:[%s3] sm:$0xff]
    %v293 = vld [vmem:[%s3 + $0x8] sm:$0xff]
    %v294 = vld [vmem:[%s3 + $0x10] sm:$0xff]
    %v295 = vld [vmem:[%s3 + $0x18] sm:$0xff]
    %v296 = vld [vmem:[%s3 + $0x20] sm:$0xff]
    %v297 = vld [vmem:[%s3 + $0x28] sm:$0xff]
    %v298 = vld [vmem:[%s3 + $0x30] sm:$0xff]
    %v299 = vld [vmem:[%s3 + $0x38] sm:$0xff]
    %v300 = vld [vmem:[%s3 + $0x40] sm:$0xff]
    %v301 = vld [vmem:[%s3 + $0x48] sm:$0xff]
    %v302 = vld [vmem:[%s3 + $0x50] sm:$0xff]
    %v303 = vld [vmem:[%s3 + $0x58] sm:$0xff]
    %v304 = vld [vmem:[%s3 + $0x60] sm:$0xff]
    %v305 = vld [vmem:[%s3 + $0x68] sm:$0xff]
    %v306 = vld [vmem:[%s3 + $0x70] sm:$0xff]
    %v307 = vld [vmem:[%s3 + $0x78] sm:$0xff]
    %v308 = vld [vmem:[%s3 + $0x80] sm:$0xff]
    %v309 = vld [vmem:[%s3 + $0x88] sm:$0xff]
    %v310 = vld [vmem:[%s3 + $0x90] sm:$0xff]
    %v311 = vld [vmem:[%s3 + $0x98] sm:$0xff]
    %v312 = vld [vmem:[%s3 + $0xa0] sm:$0xff]
    %v313 = vld [vmem:[%s3 + $0xa8] sm:$0xff]
    %v314 = vld [vmem:[%s3 + $0xb0] sm:$0xff]
    %v315 = vld [vmem:[%s3 + $0xb8] sm:$0xff]
    %v316 = vld [vmem:[%s3 + $0xc0] sm:$0xff]
    %v317 = vld [vmem:[%s3 + $0xc8] sm:$0xff]
    %v318 = vld [vmem:[%s3 + $0xd0] sm:$0xff]
    %v319 = vld [vmem:[%s3 + $0xd8] sm:$0xff]
    %v320 = vld [vmem:[%s3 + $0xe0] sm:$0xff]
    %v321 = vld [vmem:[%s3 + $0xe8] sm:$0xff]
    %v322 = vld [vmem:[%s3 + $0xf0] sm:$0xff]
    %v323 = vld [vmem:[%s3 + $0xf8] sm:$0xff]
    %v324 = vld [vmem:[%s3 + $0x100] sm:$0xff]
    %v325 = vld [vmem:[%s3 + $0x108] sm:$0xff]
    %v326 = vld [vmem:[%s3 + $0x110] sm:$0xff]
    %v327 = vld [vmem:[%s3 + $0x118] sm:$0xff]
    %v328 = vld [vmem:[%s3 + $0x120] sm:$0xff]
    %v329 = vld [vmem:[%s3 + $0x128] sm:$0xff]
    %v330 = vld [vmem:[%s3 + $0x130] sm:$0xff]
    %v331 = vld [vmem:[%s3 + $0x138] sm:$0xff]
    %v332 = vld [vmem:[%s3 + $0x140] sm:$0xff]
    %v333 = vld [vmem:[%s3 + $0x148] sm:$0xff]
    %v334 = vld [vmem:[%s3 + $0x150] sm:$0xff]
    %v335 = vld [vmem:[%s3 + $0x158] sm:$0xff]
    %v336 = vld [vmem:[%s3 + $0x160] sm:$0xff]
    %v337 = vld [vmem:[%s3 + $0x168] sm:$0xff]
    %v338 = vld [vmem:[%s3 + $0x170] sm:$0xff]
    %v339 = vld [vmem:[%s3 + $0x178] sm:$0xff]
    %v340 = vld [vmem:[%s3 + $0x180] sm:$0xff]
    %v341 = vld [vmem:[%s3 + $0x188] sm:$0xff]
    %v342 = vld [vmem:[%s3 + $0x190] sm:$0xff]
    %v343 = vld [vmem:[%s3 + $0x198] sm:$0xff]
    %v344 = vld [vmem:[%s3 + $0x1a0] sm:$0xff]
    %v345 = vld [vmem:[%s3 + $0x1a8] sm:$0xff]
    %v346 = vld [vmem:[%s3 + $0x1b0] sm:$0xff]
    %v347 = vld [vmem:[%s3 + $0x1b8] sm:$0xff]
    %v348 = vld [vmem:[%s3 + $0x1c0] sm:$0xff]
    %v349 = vld [vmem:[%s3 + $0x1c8] sm:$0xff]
    %v350 = vld [vmem:[%s3 + $0x1d0] sm:$0xff]
    %v351 = vld [vmem:[%s3 + $0x1d8] sm:$0xff]
    %v352 = vld [vmem:[%s3 + $0x1e0] sm:$0xff]
    %v353 = vld [vmem:[%s3 + $0x1e8] sm:$0xff]
    %v354 = vld [vmem:[%s3 + $0x1f0] sm:$0xff]
    %v355 = vld [vmem:[%s3 + $0x1f8] sm:$0xff]
    %v356 = vld [vmem:[%s3 + $0x200] sm:$0xff]
    %v357 = vld [vmem:[%s3 + $0x208] sm:$0xff]
    %v358 = vld [vmem:[%s3 + $0x210] sm:$0xff]
    %v359 = vld [vmem:[%s3 + $0x218] sm:$0xff]
    %v360 = vld [vmem:[%s3 + $0x220] sm:$0xff]
    %v361 = vld [vmem:[%s3 + $0x228] sm:$0xff]
    %v362 = vld [vmem:[%s3 + $0x230] sm:$0xff]
    %v363 = vld [vmem:[%s3 + $0x238] sm:$0xff]
    %v364 = vld [vmem:[%s3 + $0x240] sm:$0xff]
    %v365 = vld [vmem:[%s3 + $0x248] sm:$0xff]
    %v366 = vld [vmem:[%s3 + $0x250] sm:$0xff]
    %v367 = vld [vmem:[%s3 + $0x258] sm:$0xff]
    %v368 = vld [vmem:[%s3 + $0x260] sm:$0xff]
    %v369 = vld [vmem:[%s3 + $0x268] sm:$0xff]
    %v370 = vld [vmem:[%s3 + $0x270] sm:$0xff]
    %v371 = vld [vmem:[%s3 + $0x278] sm:$0xff]
    %v372 = vld [vmem:[%s3 + $0x280] sm:$0xff]
    %v373 = vld [vmem:[%s3 + $0x288] sm:$0xff]
    %v374 = vld [vmem:[%s3 + $0x290] sm:$0xff]
    %v375 = vld [vmem:[%s3 + $0x298] sm:$0xff]
    %v376 = vld [vmem:[%s3 + $0x2a0] sm:$0xff]
    %v377 = vld [vmem:[%s3 + $0x2a8] sm:$0xff]
    %v378 = vld [vmem:[%s3 + $0x2b0] sm:$0xff]
    %v379 = vld [vmem:[%s3 + $0x2b8] sm:$0xff]
    %v380 = vld [vmem:[%s3 + $0x2c0] sm:$0xff]
    %v381 = vld [vmem:[%s3 + $0x2c8] sm:$0xff]
    %v382 = vld [vmem:[%s3 + $0x2d0] sm:$0xff]
    %v383 = vld [vmem:[%s3 + $0x2d8] sm:$0xff]
    %v384 = vld [vmem:[%s3 + $0x2e0] sm:$0xff]
    %v385 = vld [vmem:[%s3 + $0x2e8] sm:$0xff]
    %v386 = vld [vmem:[%s3 + $0x2f0] sm:$0xff]
    %v387 = vld [vmem:[%s3 + $0x2f8] sm:$0xff]
    %v388 = vld [vmem:[%s3 + $0x300] sm:$0xff]
    %v389 = vld [vmem:[%s3 + $0x308] sm:$0xff]
    %v390 = vld [vmem:[%s3 + $0x310] sm:$0xff]
    %v391 = vld [vmem:[%s3 + $0x318] sm:$0xff]
    %v392 = vld [vmem:[%s3 + $0x320] sm:$0xff]
    %v393 = vld [vmem:[%s3 + $0x328] sm:$0xff]
    %v394 = vld [vmem:[%s3 + $0x330] sm:$0xff]
    %v395 = vld [vmem:[%s3 + $0x338] sm:$0xff]
    %v396 = vld [vmem:[%s3 + $0x340] sm:$0xff]
    %v397 = vld [vmem:[%s3 + $0x348] sm:$0xff]
    %v398 = vld [vmem:[%s3 + $0x350] sm:$0xff]
    %v399 = vld [vmem:[%s3 + $0x358] sm:$0xff]
    %v400 = vld [vmem:[%s3 + $0x360] sm:$0xff]
    %v401 = vld [vmem:[%s3 + $0x368] sm:$0xff]
    %v402 = vld [vmem:[%s3 + $0x370] sm:$0xff]
    %v403 = vld [vmem:[%s3 + $0x378] sm:$0xff]
    %v404 = vld [vmem:[%s3 + $0x380] sm:$0xff]
    %v405 = vld [vmem:[%s3 + $0x388] sm:$0xff]
    %v406 = vld [vmem:[%s3 + $0x390] sm:$0xff]
    %v407 = vld [vmem:[%s3 + $0x398] sm:$0xff]
    %v408 = vld [vmem:[%s3 + $0x3a0] sm:$0xff]
    %v409 = vld [vmem:[%s3 + $0x3a8] sm:$0xff]
    %v410 = vld [vmem:[%s3 + $0x3b0] sm:$0xff]
    %v411 = vld [vmem:[%s3 + $0x3b8] sm:$0xff]
    %v412 = vld [vmem:[%s3 + $0x3c0] sm:$0xff]
    %v413 = vld [vmem:[%s3 + $0x3c8] sm:$0xff]
    %v414 = vld [vmem:[%s3 + $0x3d0] sm:$0xff]
    %v415 = vld [vmem:[%s3 + $0x3d8] sm:$0xff]
    %v416 = vld [vmem:[%s3 + $0x3e0] sm:$0xff]
    %v417 = vld [vmem:[%s3 + $0x3e8] sm:$0xff]
    %v418 = vld [vmem:[%s3 + $0x3f0] sm:$0xff]
    %v419 = vld [vmem:[%s3 + $0x3f8] sm:$0xff]
    %v420 = vld [vmem:[%s3 + $0x400] sm:$0xff]
    %v421 = vld [vmem:[%s3 + $0x408] sm:$0xff]
    %v422 = vld [vmem:[%s3 + $0x410] sm:$0xff]
    %v423 = vld [vmem:[%s3 + $0x418] sm:$0xff]
    %v424 = vld [vmem:[%s3 + $0x420] sm:$0xff]
    %v425 = vld [vmem:[%s3 + $0x428] sm:$0xff]
    %v426 = vld [vmem:[%s3 + $0x430] sm:$0xff]
    %v427 = vld [vmem:[%s3 + $0x438] sm:$0xff]
    %v428 = vld [vmem:[%s3 + $0x440] sm:$0xff]
    %v429 = vld [vmem:[%s3 + $0x448] sm:$0xff]
    %v430 = vld [vmem:[%s3 + $0x450] sm:$0xff]
    %v431 = vld [vmem:[%s3 + $0x458] sm:$0xff]
    %v432 = vld [vmem:[%s3 + $0x460] sm:$0xff]
    %v433 = vld [vmem:[%s3 + $0x468] sm:$0xff]
    %v434 = vld [vmem:[%s3 + $0x470] sm:$0xff]
    %v435 = vld [vmem:[%s3 + $0x478] sm:$0xff]
    %v436 = vld [vmem:[%s3 + $0x480] sm:$0xff]
    %v437 = vld [vmem:[%s3 + $0x488] sm:$0xff]
    %v438 = vld [vmem:[%s3 + $0x490] sm:$0xff]
    %v439 = vld [vmem:[%s3 + $0x498] sm:$0xff]
    %v440 = vld [vmem:[%s3 + $0x4a0] sm:$0xff]
    %v441 = vld [vmem:[%s3 + $0x4a8] sm:$0xff]
    %v442 = vld [vmem:[%s3 + $0x4b0] sm:$0xff]
    %v443 = vld [vmem:[%s3 + $0x4b8] sm:$0xff]
    %v444 = vld [vmem:[%s3 + $0x4c0] sm:$0xff]
    %v445 = vld [vmem:[%s3 + $0x4c8] sm:$0xff]
    %v446 = vld [vmem:[%s3 + $0x4d0] sm:$0xff]
    %v447 = vld [vmem:[%s3 + $0x4d8] sm:$0xff]
    %v448 = vld [vmem:[%s3 + $0x4e0] sm:$0xff]
    %v449 = vld [vmem:[%s3 + $0x4e8] sm:$0xff]
    %v450 = vld [vmem:[%s3 + $0x4f0] sm:$0xff]
    %v451 = vld [vmem:[%s3 + $0x4f8] sm:$0xff]
    %v452 = vld [vmem:[%s3 + $0x500] sm:$0xff]
    %v453 = vld [vmem:[%s3 + $0x508] sm:$0xff]
    %v454 = vld [vmem:[%s3 + $0x510] sm:$0xff]
    %v455 = vld [vmem:[%s3 + $0x518] sm:$0xff]
    %v456 = vld [vmem:[%s3 + $0x520] sm:$0xff]
    %v457 = vld [vmem:[%s3 + $0x528] sm:$0xff]
    %v458 = vld [vmem:[%s3 + $0x530] sm:$0xff]
    %v459 = vld [vmem:[%s3 + $0x538] sm:$0xff]
    %v460 = vld [vmem:[%s3 + $0x540] sm:$0xff]
    %v461 = vld [vmem:[%s3 + $0x548] sm:$0xff]
    %v462 = vld [vmem:[%s3 + $0x550] sm:$0xff]
    %v463 = vld [vmem:[%s3 + $0x558] sm:$0xff]
    %v464 = vld [vmem:[%s3 + $0x560] sm:$0xff]
    %v465 = vld [vmem:[%s3 + $0x568] sm:$0xff]
    %v466 = vld [vmem:[%s3 + $0x570] sm:$0xff]
    %v467 = vld [vmem:[%s3 + $0x578] sm:$0xff]
    %v468 = vld [vmem:[%s3 + $0x580] sm:$0xff]
    %v469 = vld [vmem:[%s3 + $0x588] sm:$0xff]
    %v470 = vld [vmem:[%s3 + $0x590] sm:$0xff]
    %v471 = vld [vmem:[%s3 + $0x598] sm:$0xff]
    %v472 = vld [vmem:[%s3 + $0x5a0] sm:$0xff]
    %v473 = vld [vmem:[%s3 + $0x5a8] sm:$0xff]
    %v474 = vld [vmem:[%s3 + $0x5b0] sm:$0xff]
    %v475 = vld [vmem:[%s3 + $0x5b8] sm:$0xff]
    %v476 = vld [vmem:[%s3 + $0x5c0] sm:$0xff]
    %v477 = vld [vmem:[%s3 + $0x5c8] sm:$0xff]
    %v478 = vld [vmem:[%s3 + $0x5d0] sm:$0xff]
    %v479 = vld [vmem:[%s3 + $0x5d8] sm:$0xff]
    %v480 = vld [vmem:[%s3 + $0x5e0] sm:$0xff]
    %v481 = vld [vmem:[%s3 + $0x5e8] sm:$0xff]
    %v482 = vld [vmem:[%s3 + $0x5f0] sm:$0xff]
    %v483 = vld [vmem:[%s3 + $0x5f8] sm:$0xff]
    %v484 = vld [vmem:[%s3 + $0x600] sm:$0xff]
    %v485 = vld [vmem:[%s3 + $0x608] sm:$0xff]
    %v486 = vld [vmem:[%s3 + $0x610] sm:$0xff]
    %v487 = vld [vmem:[%s3 + $0x618] sm:$0xff]
    %v488 = vld [vmem:[%s3 + $0x620] sm:$0xff]
    %v489 = vld [vmem:[%s3 + $0x628] sm:$0xff]
    %v490 = vld [vmem:[%s3 + $0x630] sm:$0xff]
    %v491 = vld [vmem:[%s3 + $0x638] sm:$0xff]
    %v492 = vld [vmem:[%s3 + $0x640] sm:$0xff]
    %v493 = vld [vmem:[%s3 + $0x648] sm:$0xff]
    %v494 = vld [vmem:[%s3 + $0x650] sm:$0xff]
    %v495 = vld [vmem:[%s3 + $0x658] sm:$0xff]
    %v496 = vld [vmem:[%s3 + $0x660] sm:$0xff]
    %v497 = vld [vmem:[%s3 + $0x668] sm:$0xff]
    %v498 = vld [vmem:[%s3 + $0x670] sm:$0xff]
    %v499 = vld [vmem:[%s3 + $0x678] sm:$0xff]
    %v500 = vld [vmem:[%s3 + $0x680] sm:$0xff]
    %v501 = vld [vmem:[%s3 + $0x688] sm:$0xff]
    %v502 = vld [vmem:[%s3 + $0x690] sm:$0xff]
    %v503 = vld [vmem:[%s3 + $0x698] sm:$0xff]
    %v504 = vld [vmem:[%s3 + $0x6a0] sm:$0xff]
    %v505 = vld [vmem:[%s3 + $0x6a8] sm:$0xff]
    %v506 = vld [vmem:[%s3 + $0x6b0] sm:$0xff]
    %v507 = vld [vmem:[%s3 + $0x6b8] sm:$0xff]
    %v508 = vld [vmem:[%s3 + $0x6c0] sm:$0xff]
    %v509 = vld [vmem:[%s3 + $0x6c8] sm:$0xff]
    %v510 = vld [vmem:[%s3 + $0x6d0] sm:$0xff]
    %v511 = vld [vmem:[%s3 + $0x6d8] sm:$0xff]
    %v512 = vld [vmem:[%s3 + $0x6e0] sm:$0xff]
    %v513 = vld [vmem:[%s3 + $0x6e8] sm:$0xff]
    %v514 = vld [vmem:[%s3 + $0x6f0] sm:$0xff]
    %v515 = vld [vmem:[%s3 + $0x6f8] sm:$0xff]
    %v516 = vld [vmem:[%s3 + $0x700] sm:$0xff]
    %v517 = vld [vmem:[%s3 + $0x708] sm:$0xff]
    %v518 = vld [vmem:[%s3 + $0x710] sm:$0xff]
    %v519 = vld [vmem:[%s3 + $0x718] sm:$0xff]
    %v520 = vld [vmem:[%s3 + $0x720] sm:$0xff]
    %v521 = vld [vmem:[%s3 + $0x728] sm:$0xff]
    %v522 = vld [vmem:[%s3 + $0x730] sm:$0xff]
    %v523 = vld [vmem:[%s3 + $0x738] sm:$0xff]
    %v524 = vld [vmem:[%s3 + $0x740] sm:$0xff]
    %v525 = vld [vmem:[%s3 + $0x748] sm:$0xff]
    %v526 = vld [vmem:[%s3 + $0x750] sm:$0xff]
    %v527 = vld [vmem:[%s3 + $0x758] sm:$0xff]
    %v528 = vld [vmem:[%s3 + $0x760] sm:$0xff]
    %v529 = vld [vmem:[%s3 + $0x768] sm:$0xff]
    %v530 = vld [vmem:[%s3 + $0x770] sm:$0xff]
    %v531 = vld [vmem:[%s3 + $0x778] sm:$0xff]
    %v532 = vld [vmem:[%s3 + $0x780] sm:$0xff]
    %v533 = vld [vmem:[%s3 + $0x788] sm:$0xff]
    %v534 = vld [vmem:[%s3 + $0x790] sm:$0xff]
    %v535 = vld [vmem:[%s3 + $0x798] sm:$0xff]
    %v536 = vld [vmem:[%s3 + $0x7a0] sm:$0xff]
    %v537 = vld [vmem:[%s3 + $0x7a8] sm:$0xff]
    %v538 = vld [vmem:[%s3 + $0x7b0] sm:$0xff]
    %v539 = vld [vmem:[%s3 + $0x7b8] sm:$0xff]
    %v540 = vld [vmem:[%s3 + $0x7c0] sm:$0xff]
    %v541 = vld [vmem:[%s3 + $0x7c8] sm:$0xff]
    %v542 = vld [vmem:[%s3 + $0x7d0] sm:$0xff]
    %v543 = vld [vmem:[%s3 + $0x7d8] sm:$0xff]
    %v544 = vld [vmem:[%s3 + $0x7e0] sm:$0xff]
    %v545 = vld [vmem:[%s3 + $0x7e8] sm:$0xff]
    %v546 = vld [vmem:[%s3 + $0x7f0] sm:$0xff]
    %v547 = vld [vmem:[%s3 + $0x7f8] sm:$0xff]
    %v548 = vld [vmem:[%s3 + $0x800] sm:$0xff]
    %v549 = vld [vmem:[%s3 + $0x808] sm:$0xff]
    %v550 = vld [vmem:[%s3 + $0x810] sm:$0xff]
    %v551 = vld [vmem:[%s3 + $0x818] sm:$0xff]
    %v552 = vld [vmem:[%s3 + $0x820] sm:$0xff]
    %v553 = vld [vmem:[%s3 + $0x828] sm:$0xff]
    %v554 = vld [vmem:[%s3 + $0x830] sm:$0xff]
    %v555 = vld [vmem:[%s3 + $0x838] sm:$0xff]
    %v556 = vld [vmem:[%s3 + $0x840] sm:$0xff]
    %v557 = vld [vmem:[%s3 + $0x848] sm:$0xff]
    %v558 = vld [vmem:[%s3 + $0x850] sm:$0xff]
    %v559 = vld [vmem:[%s3 + $0x858] sm:$0xff]
    %v560 = vld [vmem:[%s3 + $0x860] sm:$0xff]
    %v561 = vld [vmem:[%s3 + $0x868] sm:$0xff]
    %v562 = vld [vmem:[%s3 + $0x870] sm:$0xff]
    %v563 = vld [vmem:[%s3 + $0x878] sm:$0xff]
    %v564 = vld [vmem:[%s3 + $0x880] sm:$0xff]
    %v565 = vld [vmem:[%s3 + $0x888] sm:$0xff]
    %v566 = vld [vmem:[%s3 + $0x890] sm:$0xff]
    %v567 = vld [vmem:[%s3 + $0x898] sm:$0xff]
    %v568 = vld [vmem:[%s3 + $0x8a0] sm:$0xff]
    %v569 = vld [vmem:[%s3 + $0x8a8] sm:$0xff]
    %v570 = vld [vmem:[%s3 + $0x8b0] sm:$0xff]
    %v571 = vld [vmem:[%s3 + $0x8b8] sm:$0xff]
    %v572 = vld [vmem:[%s3 + $0x8c0] sm:$0xff]
    %v573 = vld [vmem:[%s3 + $0x8c8] sm:$0xff]
    %v574 = vld [vmem:[%s3 + $0x8d0] sm:$0xff]
    %v575 = vld [vmem:[%s3 + $0x8d8] sm:$0xff]
    %v576 = vld [vmem:[%s3 + $0x8e0] sm:$0xff]
    %v577 = vld [vmem:[%s3 + $0x8e8] sm:$0xff]
    %v578 = vld [vmem:[%s3 + $0x8f0] sm:$0xff]
    %v579 = vld [vmem:[%s3 + $0x8f8] sm:$0xff]
    %v580 = vld [vmem:[%s3 + $0x900] sm:$0xff]
    %v581 = vld [vmem:[%s3 + $0x908] sm:$0xff]
    %v582 = vld [vmem:[%s3 + $0x910] sm:$0xff]
    %v583 = vld [vmem:[%s3 + $0x918] sm:$0xff]
    %v584 = vld [vmem:[%s3 + $0x920] sm:$0xff]
    %v585 = vld [vmem:[%s3 + $0x928] sm:$0xff]
    %v586 = vld [vmem:[%s3 + $0x930] sm:$0xff]
    %v587 = vld [vmem:[%s3 + $0x938] sm:$0xff]
    %v588 = vld [vmem:[%s3 + $0x940] sm:$0xff]
    %v589 = vld [vmem:[%s3 + $0x948] sm:$0xff]
    %v590 = vld [vmem:[%s3 + $0x950] sm:$0xff]
    %v591 = vld [vmem:[%s3 + $0x958] sm:$0xff]
    %v592 = vld [vmem:[%s3 + $0x960] sm:$0xff]
    %v593 = vld [vmem:[%s3 + $0x968] sm:$0xff]
    %v594 = vld [vmem:[%s3 + $0x970] sm:$0xff]
    %v595 = vld [vmem:[%s3 + $0x978] sm:$0xff]
    %v596 = vld [vmem:[%s3 + $0x980] sm:$0xff]
    %v597 = vld [vmem:[%s3 + $0x988] sm:$0xff]
    %v598 = vld [vmem:[%s3 + $0x990] sm:$0xff]
    %v599 = vld [vmem:[%s3 + $0x998] sm:$0xff]
    %v600 = vld [vmem:[%s3 + $0x9a0] sm:$0xff]
    %v601 = vld [vmem:[%s3 + $0x9a8] sm:$0xff]
    %v602 = vld [vmem:[%s3 + $0x9b0] sm:$0xff]
    %v603 = vld [vmem:[%s3 + $0x9b8] sm:$0xff]
    %v604 = vld [vmem:[%s3 + $0x9c0] sm:$0xff]
    %v605 = vld [vmem:[%s3 + $0x9c8] sm:$0xff]
    %v606 = vld [vmem:[%s3 + $0x9d0] sm:$0xff]
    %v607 = vld [vmem:[%s3 + $0x9d8] sm:$0xff]
    %v608 = vld [vmem:[%s3 + $0x9e0] sm:$0xff]
    %v609 = vld [vmem:[%s3 + $0x9e8] sm:$0xff]
    %v610 = vld [vmem:[%s3 + $0x9f0] sm:$0xff]
    %v611 = vld [vmem:[%s3 + $0x9f8] sm:$0xff]
    %v612 = vld [vmem:[%s3 + $0xa00] sm:$0xff]
    %v613 = vld [vmem:[%s3 + $0xa08] sm:$0xff]
    %v614 = vld [vmem:[%s3 + $0xa10] sm:$0xff]
    %v615 = vld [vmem:[%s3 + $0xa18] sm:$0xff]
    %v616 = vld [vmem:[%s3 + $0xa20] sm:$0xff]
    %v617 = vld [vmem:[%s3 + $0xa28] sm:$0xff]
    %v618 = vld [vmem:[%s3 + $0xa30] sm:$0xff]
    %v619 = vld [vmem:[%s3 + $0xa38] sm:$0xff]
    %v620 = vld [vmem:[%s3 + $0xa40] sm:$0xff]
    %v621 = vld [vmem:[%s3 + $0xa48] sm:$0xff]
    %v622 = vld [vmem:[%s3 + $0xa50] sm:$0xff]
    %v623 = vld [vmem:[%s3 + $0xa58] sm:$0xff]
    %v624 = vld [vmem:[%s3 + $0xa60] sm:$0xff]
    %v625 = vld [vmem:[%s3 + $0xa68] sm:$0xff]
    %v626 = vld [vmem:[%s3 + $0xa70] sm:$0xff]
    %v627 = vld [vmem:[%s3 + $0xa78] sm:$0xff]
    %v628 = vld [vmem:[%s3 + $0xa80] sm:$0xff]
    %v629 = vld [vmem:[%s3 + $0xa88] sm:$0xff]
    %v630 = vld [vmem:[%s3 + $0xa90] sm:$0xff]
    %v631 = vld [vmem:[%s3 + $0xa98] sm:$0xff]
    %v632 = vld [vmem:[%s3 + $0xaa0] sm:$0xff]
    %v633 = vld [vmem:[%s3 + $0xaa8] sm:$0xff]
    %v634 = vld [vmem:[%s3 + $0xab0] sm:$0xff]
    %v635 = vld [vmem:[%s3 + $0xab8] sm:$0xff]
    %v636 = vld [vmem:[%s3 + $0xac0] sm:$0xff]
    %v637 = vld [vmem:[%s3 + $0xac8] sm:$0xff]
    %v638 = vld [vmem:[%s3 + $0xad0] sm:$0xff]
    %v639 = vld [vmem:[%s3 + $0xad8] sm:$0xff]
    %v640 = vld [vmem:[%s3 + $0xae0] sm:$0xff]
    %v641 = vld [vmem:[%s3 + $0xae8] sm:$0xff]
    %v642 = vld [vmem:[%s3 + $0xaf0] sm:$0xff]
    %v643 = vld [vmem:[%s3 + $0xaf8] sm:$0xff]
    %v644 = vld [vmem:[%s3 + $0xb00] sm:$0xff]
    %v645 = vld [vmem:[%s3 + $0xb08] sm:$0xff]
    %v646 = vld [vmem:[%s3 + $0xb10] sm:$0xff]
    %v647 = vld [vmem:[%s3 + $0xb18] sm:$0xff]
    %v648 = vld [vmem:[%s3 + $0xb20] sm:$0xff]
    %v649 = vld [vmem:[%s3 + $0xb28] sm:$0xff]
    %v650 = vld [vmem:[%s3 + $0xb30] sm:$0xff]
    %v651 = vld [vmem:[%s3 + $0xb38] sm:$0xff]
    %v652 = vld [vmem:[%s3 + $0xb40] sm:$0xff]
    %v653 = vld [vmem:[%s3 + $0xb48] sm:$0xff]
    %v654 = vld [vmem:[%s3 + $0xb50] sm:$0xff]
    %v655 = vld [vmem:[%s3 + $0xb58] sm:$0xff]
    %v656 = vld [vmem:[%s3 + $0xb60] sm:$0xff]
    %v657 = vld [vmem:[%s3 + $0xb68] sm:$0xff]
    %v658 = vld [vmem:[%s3 + $0xb70] sm:$0xff]
    %v659 = vld [vmem:[%s3 + $0xb78] sm:$0xff]
    %v660 = vld [vmem:[%s3 + $0xb80] sm:$0xff]
    %v661 = vld [vmem:[%s3 + $0xb88] sm:$0xff]
    %v662 = vld [vmem:[%s3 + $0xb90] sm:$0xff]
    %v663 = vld [vmem:[%s3 + $0xb98] sm:$0xff]
    %v664 = vld [vmem:[%s3 + $0xba0] sm:$0xff]
    %v665 = vld [vmem:[%s3 + $0xba8] sm:$0xff]
    %v666 = vld [vmem:[%s3 + $0xbb0] sm:$0xff]
    %v667 = vld [vmem:[%s3 + $0xbb8] sm:$0xff]
    %v668 = vld [vmem:[%s3 + $0xbc0] sm:$0xff]
    %v669 = vld [vmem:[%s3 + $0xbc8] sm:$0xff]
    %v670 = vld [vmem:[%s3 + $0xbd0] sm:$0xff]
    %v671 = vld [vmem:[%s3 + $0xbd8] sm:$0xff]
    %v672 = vld [vmem:[%s3 + $0xbe0] sm:$0xff]
    %v673 = vld [vmem:[%s3 + $0xbe8] sm:$0xff]
    %v674 = vld [vmem:[%s3 + $0xbf0] sm:$0xff]
    %v675 = vld [vmem:[%s3 + $0xbf8] sm:$0xff]
    %v676 = vld [vmem:[%s3 + $0xc00] sm:$0xff]
    %v677 = vld [vmem:[%s3 + $0xc08] sm:$0xff]
    %v678 = vld [vmem:[%s3 + $0xc10] sm:$0xff]
    %v679 = vld [vmem:[%s3 + $0xc18] sm:$0xff]
    %v680 = vld [vmem:[%s3 + $0xc20] sm:$0xff]
    %v681 = vld [vmem:[%s3 + $0xc28] sm:$0xff]
    %v682 = vld [vmem:[%s3 + $0xc30] sm:$0xff]
    %v683 = vld [vmem:[%s3 + $0xc38] sm:$0xff]
    %v684 = vld [vmem:[%s3 + $0xc40] sm:$0xff]
    %v685 = vld [vmem:[%s3 + $0xc48] sm:$0xff]
    %v686 = vld [vmem:[%s3 + $0xc50] sm:$0xff]
    %v687 = vld [vmem:[%s3 + $0xc58] sm:$0xff]
    %v688 = vld [vmem:[%s3 + $0xc60] sm:$0xff]
    %v689 = vld [vmem:[%s3 + $0xc68] sm:$0xff]
    %v690 = vld [vmem:[%s3 + $0xc70] sm:$0xff]
    %v691 = vld [vmem:[%s3 + $0xc78] sm:$0xff]
    %v692 = vld [vmem:[%s3 + $0xc80] sm:$0xff]
    %v693 = vld [vmem:[%s3 + $0xc88] sm:$0xff]
    %v694 = vld [vmem:[%s3 + $0xc90] sm:$0xff]
    %v695 = vld [vmem:[%s3 + $0xc98] sm:$0xff]
    %v696 = vld [vmem:[%s3 + $0xca0] sm:$0xff]
    %v697 = vld [vmem:[%s3 + $0xca8] sm:$0xff]
    %v698 = vld [vmem:[%s3 + $0xcb0] sm:$0xff]
    %v699 = vld [vmem:[%s3 + $0xcb8] sm:$0xff]
    %v700 = vld [vmem:[%s3 + $0xcc0] sm:$0xff]
    %v701 = vld [vmem:[%s3 + $0xcc8] sm:$0xff]
    %v702 = vld [vmem:[%s3 + $0xcd0] sm:$0xff]
    %v703 = vld [vmem:[%s3 + $0xcd8] sm:$0xff]
    %v704 = vld [vmem:[%s3 + $0xce0] sm:$0xff]
    %v705 = vld [vmem:[%s3 + $0xce8] sm:$0xff]
    %v706 = vld [vmem:[%s3 + $0xcf0] sm:$0xff]
    %v707 = vld [vmem:[%s3 + $0xcf8] sm:$0xff]
    %v708 = vld [vmem:[%s3 + $0xd00] sm:$0xff]
    %v709 = vld [vmem:[%s3 + $0xd08] sm:$0xff]
    %v710 = vld [vmem:[%s3 + $0xd10] sm:$0xff]
    %v711 = vld [vmem:[%s3 + $0xd18] sm:$0xff]
    %v712 = vld [vmem:[%s3 + $0xd20] sm:$0xff]
    %v713 = vld [vmem:[%s3 + $0xd28] sm:$0xff]
    %v714 = vld [vmem:[%s3 + $0xd30] sm:$0xff]
    %v715 = vld [vmem:[%s3 + $0xd38] sm:$0xff]
    %v716 = vld [vmem:[%s3 + $0xd40] sm:$0xff]
    %v717 = vld [vmem:[%s3 + $0xd48] sm:$0xff]
    %v718 = vld [vmem:[%s3 + $0xd50] sm:$0xff]
    %v719 = vld [vmem:[%s3 + $0xd58] sm:$0xff]
    %v720 = vld [vmem:[%s3 + $0xd60] sm:$0xff]
    %v721 = vld [vmem:[%s3 + $0xd68] sm:$0xff]
    %v722 = vld [vmem:[%s3 + $0xd70] sm:$0xff]
    %v723 = vld [vmem:[%s3 + $0xd78] sm:$0xff]
    %v724 = vld [vmem:[%s3 + $0xd80] sm:$0xff]
    %v725 = vld [vmem:[%s3 + $0xd88] sm:$0xff]
    %v726 = vld [vmem:[%s3 + $0xd90] sm:$0xff]
    %v727 = vld [vmem:[%s3 + $0xd98] sm:$0xff]
    %v728 = vld [vmem:[%s3 + $0xda0] sm:$0xff]
    %v729 = vld [vmem:[%s3 + $0xda8] sm:$0xff]
    %v730 = vld [vmem:[%s3 + $0xdb0] sm:$0xff]
    %v731 = vld [vmem:[%s3 + $0xdb8] sm:$0xff]
    %v732 = vld [vmem:[%s3 + $0xdc0] sm:$0xff]
    %v733 = vld [vmem:[%s3 + $0xdc8] sm:$0xff]
    %v734 = vld [vmem:[%s3 + $0xdd0] sm:$0xff]
    %v735 = vld [vmem:[%s3 + $0xdd8] sm:$0xff]
    %v736 = vld [vmem:[%s3 + $0xde0] sm:$0xff]
    %v737 = vld [vmem:[%s3 + $0xde8] sm:$0xff]
    %v738 = vld [vmem:[%s3 + $0xdf0] sm:$0xff]
    %v739 = vld [vmem:[%s3 + $0xdf8] sm:$0xff]
    %v740 = vld [vmem:[%s3 + $0xe00] sm:$0xff]
    %v741 = vld [vmem:[%s3 + $0xe08] sm:$0xff]
    %v742 = vld [vmem:[%s3 + $0xe10] sm:$0xff]
    %v743 = vld [vmem:[%s3 + $0xe18] sm:$0xff]
    %v744 = vld [vmem:[%s3 + $0xe20] sm:$0xff]
    %v745 = vld [vmem:[%s3 + $0xe28] sm:$0xff]
    %v746 = vld [vmem:[%s3 + $0xe30] sm:$0xff]
    %v747 = vld [vmem:[%s3 + $0xe38] sm:$0xff]
    %v748 = vld [vmem:[%s3 + $0xe40] sm:$0xff]
    %v749 = vld [vmem:[%s3 + $0xe48] sm:$0xff]
    %v750 = vld [vmem:[%s3 + $0xe50] sm:$0xff]
    %v751 = vld [vmem:[%s3 + $0xe58] sm:$0xff]
    %v752 = vld [vmem:[%s3 + $0xe60] sm:$0xff]
    %v753 = vld [vmem:[%s3 + $0xe68] sm:$0xff]
    %v754 = vld [vmem:[%s3 + $0xe70] sm:$0xff]
    %v755 = vld [vmem:[%s3 + $0xe78] sm:$0xff]
    %v756 = vld [vmem:[%s3 + $0xe80] sm:$0xff]
    %v757 = vld [vmem:[%s3 + $0xe88] sm:$0xff]
    %v758 = vld [vmem:[%s3 + $0xe90] sm:$0xff]
    %v759 = vld [vmem:[%s3 + $0xe98] sm:$0xff]
    %v760 = vld [vmem:[%s3 + $0xea0] sm:$0xff]
    %v761 = vld [vmem:[%s3 + $0xea8] sm:$0xff]
    %v762 = vld [vmem:[%s3 + $0xeb0] sm:$0xff]
    %v763 = vld [vmem:[%s3 + $0xeb8] sm:$0xff]
    %v764 = vld [vmem:[%s3 + $0xec0] sm:$0xff]
    %v765 = vld [vmem:[%s3 + $0xec8] sm:$0xff]
    %v766 = vld [vmem:[%s3 + $0xed0] sm:$0xff]
    %v767 = vld [vmem:[%s3 + $0xed8] sm:$0xff]
    %v768 = vld [vmem:[%s3 + $0xee0] sm:$0xff]
    %v769 = vld [vmem:[%s3 + $0xee8] sm:$0xff]
    %v770 = vld [vmem:[%s3 + $0xef0] sm:$0xff]
    %v771 = vld [vmem:[%s3 + $0xef8] sm:$0xff]
    %v772 = vld [vmem:[%s3 + $0xf00] sm:$0xff]
    %v773 = vld [vmem:[%s3 + $0xf08] sm:$0xff]
    %v774 = vld [vmem:[%s3 + $0xf10] sm:$0xff]
    %v775 = vld [vmem:[%s3 + $0xf18] sm:$0xff]
    %v776 = vld [vmem:[%s3 + $0xf20] sm:$0xff]
    %v777 = vld [vmem:[%s3 + $0xf28] sm:$0xff]
    %v778 = vld [vmem:[%s3 + $0xf30] sm:$0xff]
    %v779 = vld [vmem:[%s3 + $0xf38] sm:$0xff]
    %v780 = vld [vmem:[%s3 + $0xf40] sm:$0xff]
    %v781 = vld [vmem:[%s3 + $0xf48] sm:$0xff]
    %v782 = vld [vmem:[%s3 + $0xf50] sm:$0xff]
    %v783 = vld [vmem:[%s3 + $0xf58] sm:$0xff]
    %v784 = vld [vmem:[%s3 + $0xf60] sm:$0xff]
    %v785 = vld [vmem:[%s3 + $0xf68] sm:$0xff]
    %v786 = vld [vmem:[%s3 + $0xf70] sm:$0xff]
    %v787 = vld [vmem:[%s3 + $0xf78] sm:$0xff]
    %v788 = vld [vmem:[%s3 + $0xf80] sm:$0xff]
    %v789 = vld [vmem:[%s3 + $0xf88] sm:$0xff]
    %v790 = vld [vmem:[%s3 + $0xf90] sm:$0xff]
    %v791 = vld [vmem:[%s3 + $0xf98] sm:$0xff]
    %v792 = vld [vmem:[%s3 + $0xfa0] sm:$0xff]
    %v793 = vld [vmem:[%s3 + $0xfa8] sm:$0xff]
    %v794 = vld [vmem:[%s3 + $0xfb0] sm:$0xff]
    %v795 = vld [vmem:[%s3 + $0xfb8] sm:$0xff]
    %v796 = vld [vmem:[%s3 + $0xfc0] sm:$0xff]
    %v797 = vld [vmem:[%s3 + $0xfc8] sm:$0xff]
    %v798 = vld [vmem:[%s3 + $0xfd0] sm:$0xff]
    %v799 = vld [vmem:[%s3 + $0xfd8] sm:$0xff]
    %v800 = vld [vmem:[%s3 + $0xfe0] sm:$0xff]
    %v801 = vld [vmem:[%s3 + $0xfe8] sm:$0xff]
    %v802 = vld [vmem:[%s3 + $0xff0] sm:$0xff]
    %v803 = vld [vmem:[%s3 + $0xff8] sm:$0xff]
    %v804 = vld [vmem:[%s3 + $0x1000] sm:$0xff]
    %v805 = vld [vmem:[%s3 + $0x1008] sm:$0xff]
    %v806 = vld [vmem:[%s3 + $0x1010] sm:$0xff]
    %v807 = vld [vmem:[%s3 + $0x1018] sm:$0xff]
    %v808 = vld [vmem:[%s3 + $0x1020] sm:$0xff]
    %v809 = vld [vmem:[%s3 + $0x1028] sm:$0xff]
    %v810 = vld [vmem:[%s3 + $0x1030] sm:$0xff]
    %v811 = vld [vmem:[%s3 + $0x1038] sm:$0xff]
    %v812 = vld [vmem:[%s3 + $0x1040] sm:$0xff]
    %v813 = vld [vmem:[%s3 + $0x1048] sm:$0xff]
    %v814 = vld [vmem:[%s3 + $0x1050] sm:$0xff]
    %v815 = vld [vmem:[%s3 + $0x1058] sm:$0xff]
    %v816 = vld [vmem:[%s3 + $0x1060] sm:$0xff]
    %v817 = vld [vmem:[%s3 + $0x1068] sm:$0xff]
    %v818 = vld [vmem:[%s3 + $0x1070] sm:$0xff]
    %v819 = vld [vmem:[%s3 + $0x1078] sm:$0xff]
    %v820 = vld [vmem:[%s3 + $0x1080] sm:$0xff]
    %v821 = vld [vmem:[%s3 + $0x1088] sm:$0xff]
    %v822 = vld [vmem:[%s3 + $0x1090] sm:$0xff]
    %v823 = vld [vmem:[%s3 + $0x1098] sm:$0xff]
    %v824 = vld [vmem:[%s3 + $0x10a0] sm:$0xff]
    %v825 = vld [vmem:[%s3 + $0x10a8] sm:$0xff]
    %v826 = vld [vmem:[%s3 + $0x10b0] sm:$0xff]
    %v827 = vld [vmem:[%s3 + $0x10b8] sm:$0xff]
    %v828 = vld [vmem:[%s3 + $0x10c0] sm:$0xff]
    %v829 = vld [vmem:[%s3 + $0x10c8] sm:$0xff]
    %v830 = vld [vmem:[%s3 + $0x10d0] sm:$0xff]
    %v831 = vld [vmem:[%s3 + $0x10d8] sm:$0xff]
    %v832 = vld [vmem:[%s3 + $0x10e0] sm:$0xff]
    %v833 = vld [vmem:[%s3 + $0x10e8] sm:$0xff]
    %v834 = vld [vmem:[%s3 + $0x10f0] sm:$0xff]
    %v835 = vld [vmem:[%s3 + $0x10f8] sm:$0xff]
    %v836 = vld [vmem:[%s3 + $0x1100] sm:$0xff]
    %v837 = vld [vmem:[%s3 + $0x1108] sm:$0xff]
    %v838 = vld [vmem:[%s3 + $0x1110] sm:$0xff]
    %v839 = vld [vmem:[%s3 + $0x1118] sm:$0xff]
    %v840 = vld [vmem:[%s3 + $0x1120] sm:$0xff]
    %v841 = vld [vmem:[%s3 + $0x1128] sm:$0xff]
    %v842 = vld [vmem:[%s3 + $0x1130] sm:$0xff]
    %v843 = vld [vmem:[%s3 + $0x1138] sm:$0xff]
    %v844 = vld [vmem:[%s3 + $0x1140] sm:$0xff]
    %v845 = vld [vmem:[%s3 + $0x1148] sm:$0xff]
    %v846 = vld [vmem:[%s3 + $0x1150] sm:$0xff]
    %v847 = vld [vmem:[%s3 + $0x1158] sm:$0xff]
    %v848 = vld [vmem:[%s3 + $0x1160] sm:$0xff]
    %v849 = vld [vmem:[%s3 + $0x1168] sm:$0xff]
    %v850 = vld [vmem:[%s3 + $0x1170] sm:$0xff]
    %v851 = vld [vmem:[%s3 + $0x1178] sm:$0xff]
    %v852 = vld [vmem:[%s3 + $0x1180] sm:$0xff]
    %v853 = vld [vmem:[%s3 + $0x1188] sm:$0xff]
    %v854 = vld [vmem:[%s3 + $0x1190] sm:$0xff]
    %v855 = vld [vmem:[%s3 + $0x1198] sm:$0xff]
    %v856 = vld [vmem:[%s3 + $0x11a0] sm:$0xff]
    %v857 = vld [vmem:[%s3 + $0x11a8] sm:$0xff]
    %v858 = vld [vmem:[%s3 + $0x11b0] sm:$0xff]
    %v859 = vld [vmem:[%s3 + $0x11b8] sm:$0xff]
    %v860 = vld [vmem:[%s3 + $0x11c0] sm:$0xff]
    %v861 = vld [vmem:[%s3 + $0x11c8] sm:$0xff]
    %v862 = vld [vmem:[%s3 + $0x11d0] sm:$0xff]
    %v863 = vld [vmem:[%s3 + $0x11d8] sm:$0xff]
    %v864 = vld [vmem:[%s3 + $0x11e0] sm:$0xff]
    %v865 = vld [vmem:[%s3 + $0x11e8] sm:$0xff]
    %v866 = vld [vmem:[%s3 + $0x11f0] sm:$0xff]
    %v867 = vld [vmem:[%s3 + $0x11f8] sm:$0xff]
    %v868 = vld [vmem:[%s3 + $0x1200] sm:$0xff]
    %v869 = vld [vmem:[%s3 + $0x1208] sm:$0xff]
    %v870 = vld [vmem:[%s3 + $0x1210] sm:$0xff]
    %v871 = vld [vmem:[%s3 + $0x1218] sm:$0xff]
    %v872 = vld [vmem:[%s3 + $0x1220] sm:$0xff]
    %v873 = vld [vmem:[%s3 + $0x1228] sm:$0xff]
    %v874 = vld [vmem:[%s3 + $0x1230] sm:$0xff]
    %v875 = vld [vmem:[%s3 + $0x1238] sm:$0xff]
    %v876 = vld [vmem:[%s3 + $0x1240] sm:$0xff]
    %v877 = vld [vmem:[%s3 + $0x1248] sm:$0xff]
    %v878 = vld [vmem:[%s3 + $0x1250] sm:$0xff]
    %v879 = vld [vmem:[%s3 + $0x1258] sm:$0xff]
    %v880 = vld [vmem:[%s3 + $0x1260] sm:$0xff]
    %v881 = vld [vmem:[%s3 + $0x1268] sm:$0xff]
    %v882 = vld [vmem:[%s3 + $0x1270] sm:$0xff]
    %v883 = vld [vmem:[%s3 + $0x1278] sm:$0xff]
    %v884 = vld [vmem:[%s3 + $0x1280] sm:$0xff]
    %v885 = vld [vmem:[%s3 + $0x1288] sm:$0xff]
    %v886 = vld [vmem:[%s3 + $0x1290] sm:$0xff]
    %v887 = vld [vmem:[%s3 + $0x1298] sm:$0xff]
    %v888 = vld [vmem:[%s3 + $0x12a0] sm:$0xff]
    %v889 = vld [vmem:[%s3 + $0x12a8] sm:$0xff]
    %v890 = vld [vmem:[%s3 + $0x12b0] sm:$0xff]
    %v891 = vld [vmem:[%s3 + $0x12b8] sm:$0xff]
    %v892 = vld [vmem:[%s3 + $0x12c0] sm:$0xff]
    %v893 = vld [vmem:[%s3 + $0x12c8] sm:$0xff]
    %v894 = vld [vmem:[%s3 + $0x12d0] sm:$0xff]
    %v895 = vld [vmem:[%s3 + $0x12d8] sm:$0xff]
    %v896 = vld [vmem:[%s3 + $0x12e0] sm:$0xff]
    %v897 = vld [vmem:[%s3 + $0x12e8] sm:$0xff]
    %v898 = vld [vmem:[%s3 + $0x12f0] sm:$0xff]
    %v899 = vld [vmem:[%s3 + $0x12f8] sm:$0xff]
    %v900 = vld [vmem:[%s3 + $0x1300] sm:$0xff]
    %v901 = vld [vmem:[%s3 + $0x1308] sm:$0xff]
    %v902 = vld [vmem:[%s3 + $0x1310] sm:$0xff]
    %v903 = vld [vmem:[%s3 + $0x1318] sm:$0xff]
    %v904 = vld [vmem:[%s3 + $0x1320] sm:$0xff]
    %v905 = vld [vmem:[%s3 + $0x1328] sm:$0xff]
    %v906 = vld [vmem:[%s3 + $0x1330] sm:$0xff]
    %v907 = vld [vmem:[%s3 + $0x1338] sm:$0xff]
    %v908 = vld [vmem:[%s3 + $0x1340] sm:$0xff]
    %v909 = vld [vmem:[%s3 + $0x1348] sm:$0xff]
    %v910 = vld [vmem:[%s3 + $0x1350] sm:$0xff]
    %v911 = vld [vmem:[%s3 + $0x1358] sm:$0xff]
    %v912 = vld [vmem:[%s3 + $0x1360] sm:$0xff]
    %v913 = vld [vmem:[%s3 + $0x1368] sm:$0xff]
    %v914 = vld [vmem:[%s3 + $0x1370] sm:$0xff]
    %v915 = vld [vmem:[%s3 + $0x1378] sm:$0xff]
    %v916 = vld [vmem:[%s3 + $0x1380] sm:$0xff]
    %v917 = vld [vmem:[%s3 + $0x1388] sm:$0xff]
    %v918 = vld [vmem:[%s3 + $0x1390] sm:$0xff]
    %v919 = vld [vmem:[%s3 + $0x1398] sm:$0xff]
    %v920 = vld [vmem:[%s3 + $0x13a0] sm:$0xff]
    %v921 = vld [vmem:[%s3 + $0x13a8] sm:$0xff]
    %v922 = vld [vmem:[%s3 + $0x13b0] sm:$0xff]
    %v923 = vld [vmem:[%s3 + $0x13b8] sm:$0xff]
    %v924 = vld [vmem:[%s3 + $0x13c0] sm:$0xff]
    %v925 = vld [vmem:[%s3 + $0x13c8] sm:$0xff]
    %v926 = vld [vmem:[%s3 + $0x13d0] sm:$0xff]
    %v927 = vld [vmem:[%s3 + $0x13d8] sm:$0xff]
    %v928 = vld [vmem:[%s3 + $0x13e0] sm:$0xff]
    %v929 = vld [vmem:[%s3 + $0x13e8] sm:$0xff]
    %v930 = vld [vmem:[%s3 + $0x13f0] sm:$0xff]
    %v931 = vld [vmem:[%s3 + $0x13f8] sm:$0xff]
    %v932 = vld [vmem:[%s3 + $0x1400] sm:$0xff]
    %v933 = vld [vmem:[%s3 + $0x1408] sm:$0xff]
    %v934 = vld [vmem:[%s3 + $0x1410] sm:$0xff]
    %v935 = vld [vmem:[%s3 + $0x1418] sm:$0xff]
    %v936 = vld [vmem:[%s3 + $0x1420] sm:$0xff]
    %v937 = vld [vmem:[%s3 + $0x1428] sm:$0xff]
    %v938 = vld [vmem:[%s3 + $0x1430] sm:$0xff]
    %v939 = vld [vmem:[%s3 + $0x1438] sm:$0xff]
    %v940 = vld [vmem:[%s3 + $0x1440] sm:$0xff]
    %v941 = vld [vmem:[%s3 + $0x1448] sm:$0xff]
    %v942 = vld [vmem:[%s3 + $0x1450] sm:$0xff]
    %v943 = vld [vmem:[%s3 + $0x1458] sm:$0xff]
    %v944 = vld [vmem:[%s3 + $0x1460] sm:$0xff]
    %v945 = vld [vmem:[%s3 + $0x1468] sm:$0xff]
    %v946 = vld [vmem:[%s3 + $0x1470] sm:$0xff]
    %v947 = vld [vmem:[%s3 + $0x1478] sm:$0xff]
    %v948 = vld [vmem:[%s3 + $0x1480] sm:$0xff]
    %v949 = vld [vmem:[%s3 + $0x1488] sm:$0xff]
    %v950 = vld [vmem:[%s3 + $0x1490] sm:$0xff]
    %v951 = vld [vmem:[%s3 + $0x1498] sm:$0xff]
    %v952 = vld [vmem:[%s3 + $0x14a0] sm:$0xff]
    %v953 = vld [vmem:[%s3 + $0x14a8] sm:$0xff]
    %v954 = vld [vmem:[%s3 + $0x14b0] sm:$0xff]
    %v955 = vld [vmem:[%s3 + $0x14b8] sm:$0xff]
    %v956 = vld [vmem:[%s3 + $0x14c0] sm:$0xff]
    %v957 = vld [vmem:[%s3 + $0x14c8] sm:$0xff]
    %v958 = vld [vmem:[%s3 + $0x14d0] sm:$0xff]
    %v959 = vld [vmem:[%s3 + $0x14d8] sm:$0xff]
    %v960 = vld [vmem:[%s3 + $0x14e0] sm:$0xff]
    %v961 = vld [vmem:[%s3 + $0x14e8] sm:$0xff]
    %v962 = vld [vmem:[%s3 + $0x14f0] sm:$0xff]
    %v963 = vld [vmem:[%s3 + $0x14f8] sm:$0xff]
    %v964 = vld [vmem:[%s3 + $0x1500] sm:$0xff]
    %v965 = vld [vmem:[%s3 + $0x1508] sm:$0xff]
    %v966 = vld [vmem:[%s3 + $0x1510] sm:$0xff]
    %v967 = vld [vmem:[%s3 + $0x1518] sm:$0xff]
    %v968 = vld [vmem:[%s3 + $0x1520] sm:$0xff]
    %v969 = vld [vmem:[%s3 + $0x1528] sm:$0xff]
    %v970 = vld [vmem:[%s3 + $0x1530] sm:$0xff]
    %v971 = vld [vmem:[%s3 + $0x1538] sm:$0xff]
    %v972 = vld [vmem:[%s3 + $0x1540] sm:$0xff]
    %v973 = vld [vmem:[%s3 + $0x1548] sm:$0xff]
    %v974 = vld [vmem:[%s3 + $0x1550] sm:$0xff]
    %v975 = vld [vmem:[%s3 + $0x1558] sm:$0xff]
    %v976 = vld [vmem:[%s3 + $0x1560] sm:$0xff]
    %v977 = vld [vmem:[%s3 + $0x1568] sm:$0xff]
    %v978 = vld [vmem:[%s3 + $0x1570] sm:$0xff]
    %v979 = vld [vmem:[%s3 + $0x1578] sm:$0xff]
    %v980 = vld [vmem:[%s3 + $0x1580] sm:$0xff]
    %v981 = vld [vmem:[%s3 + $0x1588] sm:$0xff]
    %v982 = vld [vmem:[%s3 + $0x1590] sm:$0xff]
    %v983 = vld [vmem:[%s3 + $0x1598] sm:$0xff]
    %v984 = vld [vmem:[%s3 + $0x15a0] sm:$0xff]
    %v985 = vld [vmem:[%s3 + $0x15a8] sm:$0xff]
    %v986 = vld [vmem:[%s3 + $0x15b0] sm:$0xff]
    %v987 = vld [vmem:[%s3 + $0x15b8] sm:$0xff]
    %v988 = vld [vmem:[%s3 + $0x15c0] sm:$0xff]
    %v989 = vld [vmem:[%s3 + $0x15c8] sm:$0xff]
    %v990 = vld [vmem:[%s3 + $0x15d0] sm:$0xff]
    %v991 = vld [vmem:[%s3 + $0x15d8] sm:$0xff]
    %v992 = vld [vmem:[%s3 + $0x15e0] sm:$0xff]
    %v993 = vld [vmem:[%s3 + $0x15e8] sm:$0xff]
    %v994 = vld [vmem:[%s3 + $0x15f0] sm:$0xff]
    %v995 = vld [vmem:[%s3 + $0x15f8] sm:$0xff]
    %v996 = vld [vmem:[%s3 + $0x1600] sm:$0xff]
    %v997 = vld [vmem:[%s3 + $0x1608] sm:$0xff]
    %v998 = vld [vmem:[%s3 + $0x1610] sm:$0xff]
    %v999 = vld [vmem:[%s3 + $0x1618] sm:$0xff]
    %v1000 = vld [vmem:[%s3 + $0x1620] sm:$0xff]
    %v1001 = vld [vmem:[%s3 + $0x1628] sm:$0xff]
    %v1002 = vld [vmem:[%s3 + $0x1630] sm:$0xff]
    %v1003 = vld [vmem:[%s3 + $0x1638] sm:$0xff]
    %v1004 = vld [vmem:[%s3 + $0x1640] sm:$0xff]
    %v1005 = vld [vmem:[%s3 + $0x1648] sm:$0xff]
    %v1006 = vld [vmem:[%s3 + $0x1650] sm:$0xff]
    %v1007 = vld [vmem:[%s3 + $0x1658] sm:$0xff]
    %v1008 = vld [vmem:[%s3 + $0x1660] sm:$0xff]
    %v1009 = vld [vmem:[%s3 + $0x1668] sm:$0xff]
    %v1010 = vld [vmem:[%s3 + $0x1670] sm:$0xff]
    %v1011 = vld [vmem:[%s3 + $0x1678] sm:$0xff]
    %v1012 = vld [vmem:[%s3 + $0x1680] sm:$0xff]
    %v1013 = vld [vmem:[%s3 + $0x1688] sm:$0xff]
    %v1014 = vld [vmem:[%s3 + $0x1690] sm:$0xff]
    %v1015 = vld [vmem:[%s3 + $0x1698] sm:$0xff]
    %v1016 = vld [vmem:[%s3 + $0x16a0] sm:$0xff]
    %v1017 = vld [vmem:[%s3 + $0x16a8] sm:$0xff]
    %v1018 = vld [vmem:[%s3 + $0x16b0] sm:$0xff]
    %v1019 = vld [vmem:[%s3 + $0x16b8] sm:$0xff]
    %v1020 = vld [vmem:[%s3 + $0x16c0] sm:$0xff]
    %v1021 = vld [vmem:[%s3 + $0x16c8] sm:$0xff]
    %v1022 = vld [vmem:[%s3 + $0x16d0] sm:$0xff]
    %v1023 = vld [vmem:[%s3 + $0x16d8] sm:$0xff]
    %v1024 = vld [vmem:[%s3 + $0x16e0] sm:$0xff]
    %v1025 = vld [vmem:[%s3 + $0x16e8] sm:$0xff]
    %v1026 = vld [vmem:[%s3 + $0x16f0] sm:$0xff]
    %v1027 = vld [vmem:[%s3 + $0x16f8] sm:$0xff]
    %v1028 = vld [vmem:[%s3 + $0x1700] sm:$0xff]
    %v1029 = vld [vmem:[%s3 + $0x1708] sm:$0xff]
    %v1030 = vld [vmem:[%s3 + $0x1710] sm:$0xff]
    %v1031 = vld [vmem:[%s3 + $0x1718] sm:$0xff]
    %v1032 = vld [vmem:[%s3 + $0x1720] sm:$0xff]
    %v1033 = vld [vmem:[%s3 + $0x1728] sm:$0xff]
    %v1034 = vld [vmem:[%s3 + $0x1730] sm:$0xff]
    %v1035 = vld [vmem:[%s3 + $0x1738] sm:$0xff]
    %v1036 = vld [vmem:[%s3 + $0x1740] sm:$0xff]
    %v1037 = vld [vmem:[%s3 + $0x1748] sm:$0xff]
    %v1038 = vld [vmem:[%s3 + $0x1750] sm:$0xff]
    %v1039 = vld [vmem:[%s3 + $0x1758] sm:$0xff]
    %v1040 = vld [vmem:[%s3 + $0x1760] sm:$0xff]
    %v1041 = vld [vmem:[%s3 + $0x1768] sm:$0xff]
    %v1042 = vld [vmem:[%s3 + $0x1770] sm:$0xff]
    %v1043 = vld [vmem:[%s3 + $0x1778] sm:$0xff]
    %v1044 = vld [vmem:[%s3 + $0x1780] sm:$0xff]
    %v1045 = vld [vmem:[%s3 + $0x1788] sm:$0xff]
    %v1046 = vld [vmem:[%s3 + $0x1790] sm:$0xff]
    %v1047 = vld [vmem:[%s3 + $0x1798] sm:$0xff]
    %v1048 = vld [vmem:[%s3 + $0x17a0] sm:$0xff]
    %v1049 = vld [vmem:[%s3 + $0x17a8] sm:$0xff]
    %v1050 = vld [vmem:[%s3 + $0x17b0] sm:$0xff]
    %v1051 = vld [vmem:[%s3 + $0x17b8] sm:$0xff]
    %v1052 = vld [vmem:[%s3 + $0x17c0] sm:$0xff]
    %v1053 = vld [vmem:[%s3 + $0x17c8] sm:$0xff]
    %v1054 = vld [vmem:[%s3 + $0x17d0] sm:$0xff]
    %v1055 = vld [vmem:[%s3 + $0x17d8] sm:$0xff]
    %v1056 = vld [vmem:[%s3 + $0x17e0] sm:$0xff]
    %v1057 = vld [vmem:[%s3 + $0x17e8] sm:$0xff]
    %v1058 = vld [vmem:[%s3 + $0x17f0] sm:$0xff]
    %v1059 = vld [vmem:[%s3 + $0x17f8] sm:$0xff]
    %v1060 = vld [vmem:[#allocation2] sm:$0xf]
    %v1062 = vlaneseq
    %v1063 = vshrl.u32 %v1062, 7
    %v1064 = vsub.s32 0, %v1063
    %v1065 = vrot.slane %v1060, %v1064
    %v1066 = vlaneseq
    %v1067 = vshrl.u32 %v1066, 7
    %v1068 = vsub.s32 1, %v1067
    %v1069 = vrot.slane %v1060, %v1068
    %v1070 = vlaneseq
    %v1071 = vshrl.u32 %v1070, 7
    %v1072 = vsub.s32 2, %v1071
    %v1073 = vrot.slane %v1060, %v1072
    %v1074 = vlaneseq
    %v1075 = vshrl.u32 %v1074, 7
    %v1076 = vsub.s32 3, %v1075
    %v1077 = vrot.slane %v1060, %v1076
    %v1850 = vunpack.c.l.b16 %v292
    %v1851 = vunpack.c.h.b16 %v292
    %v1852 = vunpack.c.l.b16 %v293
    %v1853 = vunpack.c.h.b16 %v293
    %v1854 = vunpack.c.l.b16 %v294
    %v1855 = vunpack.c.h.b16 %v294
    %v1856 = vunpack.c.l.b16 %v295
    %v1857 = vunpack.c.h.b16 %v295
    %v1858 = vunpack.c.l.b16 %v296
    %v1859 = vunpack.c.h.b16 %v296
    %v1860 = vunpack.c.l.b16 %v297
    %v1861 = vunpack.c.h.b16 %v297
    %v1862 = vunpack.c.l.b16 %v298
    %v1863 = vunpack.c.h.b16 %v298
    %v1864 = vunpack.c.l.b16 %v299
    %v1865 = vunpack.c.h.b16 %v299
    %v1866 = vunpack.c.l.b16 %v300
    %v1867 = vunpack.c.h.b16 %v300
    %v1868 = vunpack.c.l.b16 %v301
    %v1869 = vunpack.c.h.b16 %v301
    %v1870 = vunpack.c.l.b16 %v302
    %v1871 = vunpack.c.h.b16 %v302
    %v1872 = vunpack.c.l.b16 %v303
    %v1873 = vunpack.c.h.b16 %v303
    %v1874 = vunpack.c.l.b16 %v304
    %v1875 = vunpack.c.h.b16 %v304
    %v1876 = vunpack.c.l.b16 %v305
    %v1877 = vunpack.c.h.b16 %v305
    %v1878 = vunpack.c.l.b16 %v306
    %v1879 = vunpack.c.h.b16 %v306
    %v1880 = vunpack.c.l.b16 %v307
    %v1881 = vunpack.c.h.b16 %v307
    %v1882 = vunpack.c.l.b16 %v308
    %v1883 = vunpack.c.h.b16 %v308
    %v1884 = vunpack.c.l.b16 %v309
    %v1885 = vunpack.c.h.b16 %v309
    %v1886 = vunpack.c.l.b16 %v310
    %v1887 = vunpack.c.h.b16 %v310
    %v1888 = vunpack.c.l.b16 %v311
    %v1889 = vunpack.c.h.b16 %v311
    %v1890 = vunpack.c.l.b16 %v312
    %v1891 = vunpack.c.h.b16 %v312
    %v1892 = vunpack.c.l.b16 %v313
    %v1893 = vunpack.c.h.b16 %v313
    %v1894 = vunpack.c.l.b16 %v314
    %v1895 = vunpack.c.h.b16 %v314
    %v1896 = vunpack.c.l.b16 %v315
    %v1897 = vunpack.c.h.b16 %v315
    %v1898 = vunpack.c.l.b16 %v316
    %v1899 = vunpack.c.h.b16 %v316
    %v1900 = vunpack.c.l.b16 %v317
    %v1901 = vunpack.c.h.b16 %v317
    %v1902 = vunpack.c.l.b16 %v318
    %v1903 = vunpack.c.h.b16 %v318
    %v1904 = vunpack.c.l.b16 %v319
    %v1905 = vunpack.c.h.b16 %v319
    %v1906 = vunpack.c.l.b16 %v320
    %v1907 = vunpack.c.h.b16 %v320
    %v1908 = vunpack.c.l.b16 %v321
    %v1909 = vunpack.c.h.b16 %v321
    %v1910 = vunpack.c.l.b16 %v322
    %v1911 = vunpack.c.h.b16 %v322
    %v1912 = vunpack.c.l.b16 %v323
    %v1913 = vunpack.c.h.b16 %v323
    %v1914 = vunpack.c.l.b16 %v324
    %v1915 = vunpack.c.h.b16 %v324
    %v1916 = vunpack.c.l.b16 %v325
    %v1917 = vunpack.c.h.b16 %v325
    %v1918 = vunpack.c.l.b16 %v326
    %v1919 = vunpack.c.h.b16 %v326
    %v1920 = vunpack.c.l.b16 %v327
    %v1921 = vunpack.c.h.b16 %v327
    %v1922 = vunpack.c.l.b16 %v328
    %v1923 = vunpack.c.h.b16 %v328
    %v1924 = vunpack.c.l.b16 %v329
    %v1925 = vunpack.c.h.b16 %v329
    %v1926 = vunpack.c.l.b16 %v330
    %v1927 = vunpack.c.h.b16 %v330
    %v1928 = vunpack.c.l.b16 %v331
    %v1929 = vunpack.c.h.b16 %v331
    %v1930 = vunpack.c.l.b16 %v332
    %v1931 = vunpack.c.h.b16 %v332
    %v1932 = vunpack.c.l.b16 %v333
    %v1933 = vunpack.c.h.b16 %v333
    %v1934 = vunpack.c.l.b16 %v334
    %v1935 = vunpack.c.h.b16 %v334
    %v1936 = vunpack.c.l.b16 %v335
    %v1937 = vunpack.c.h.b16 %v335
    %v1938 = vunpack.c.l.b16 %v336
    %v1939 = vunpack.c.h.b16 %v336
    %v1940 = vunpack.c.l.b16 %v337
    %v1941 = vunpack.c.h.b16 %v337
    %v1942 = vunpack.c.l.b16 %v338
    %v1943 = vunpack.c.h.b16 %v338
    %v1944 = vunpack.c.l.b16 %v339
    %v1945 = vunpack.c.h.b16 %v339
    %v1946 = vunpack.c.l.b16 %v340
    %v1947 = vunpack.c.h.b16 %v340
    %v1948 = vunpack.c.l.b16 %v341
    %v1949 = vunpack.c.h.b16 %v341
    %v1950 = vunpack.c.l.b16 %v342
    %v1951 = vunpack.c.h.b16 %v342
    %v1952 = vunpack.c.l.b16 %v343
    %v1953 = vunpack.c.h.b16 %v343
    %v1954 = vunpack.c.l.b16 %v344
    %v1955 = vunpack.c.h.b16 %v344
    %v1956 = vunpack.c.l.b16 %v345
    %v1957 = vunpack.c.h.b16 %v345
    %v1958 = vunpack.c.l.b16 %v346
    %v1959 = vunpack.c.h.b16 %v346
    %v1960 = vunpack.c.l.b16 %v347
    %v1961 = vunpack.c.h.b16 %v347
    %v1962 = vunpack.c.l.b16 %v348
    %v1963 = vunpack.c.h.b16 %v348
    %v1964 = vunpack.c.l.b16 %v349
    %v1965 = vunpack.c.h.b16 %v349
    %v1966 = vunpack.c.l.b16 %v350
    %v1967 = vunpack.c.h.b16 %v350
    %v1968 = vunpack.c.l.b16 %v351
    %v1969 = vunpack.c.h.b16 %v351
    %v1970 = vunpack.c.l.b16 %v352
    %v1971 = vunpack.c.h.b16 %v352
    %v1972 = vunpack.c.l.b16 %v353
    %v1973 = vunpack.c.h.b16 %v353
    %v1974 = vunpack.c.l.b16 %v354
    %v1975 = vunpack.c.h.b16 %v354
    %v1976 = vunpack.c.l.b16 %v355
    %v1977 = vunpack.c.h.b16 %v355
    %v1978 = vunpack.c.l.b16 %v356
    %v1979 = vunpack.c.h.b16 %v356
    %v1980 = vunpack.c.l.b16 %v357
    %v1981 = vunpack.c.h.b16 %v357
    %v1982 = vunpack.c.l.b16 %v358
    %v1983 = vunpack.c.h.b16 %v358
    %v1984 = vunpack.c.l.b16 %v359
    %v1985 = vunpack.c.h.b16 %v359
    %v1986 = vunpack.c.l.b16 %v360
    %v1987 = vunpack.c.h.b16 %v360
    %v1988 = vunpack.c.l.b16 %v361
    %v1989 = vunpack.c.h.b16 %v361
    %v1990 = vunpack.c.l.b16 %v362
    %v1991 = vunpack.c.h.b16 %v362
    %v1992 = vunpack.c.l.b16 %v363
    %v1993 = vunpack.c.h.b16 %v363
    %v1994 = vunpack.c.l.b16 %v364
    %v1995 = vunpack.c.h.b16 %v364
    %v1996 = vunpack.c.l.b16 %v365
    %v1997 = vunpack.c.h.b16 %v365
    %v1998 = vunpack.c.l.b16 %v366
    %v1999 = vunpack.c.h.b16 %v366
    %v2000 = vunpack.c.l.b16 %v367
    %v2001 = vunpack.c.h.b16 %v367
    %v2002 = vunpack.c.l.b16 %v368
    %v2003 = vunpack.c.h.b16 %v368
    %v2004 = vunpack.c.l.b16 %v369
    %v2005 = vunpack.c.h.b16 %v369
    %v2006 = vunpack.c.l.b16 %v370
    %v2007 = vunpack.c.h.b16 %v370
    %v2008 = vunpack.c.l.b16 %v371
    %v2009 = vunpack.c.h.b16 %v371
    %v2010 = vunpack.c.l.b16 %v372
    %v2011 = vunpack.c.h.b16 %v372
    %v2012 = vunpack.c.l.b16 %v373
    %v2013 = vunpack.c.h.b16 %v373
    %v2014 = vunpack.c.l.b16 %v374
    %v2015 = vunpack.c.h.b16 %v374
    %v2016 = vunpack.c.l.b16 %v375
    %v2017 = vunpack.c.h.b16 %v375
    %v2018 = vunpack.c.l.b16 %v376
    %v2019 = vunpack.c.h.b16 %v376
    %v2020 = vunpack.c.l.b16 %v377
    %v2021 = vunpack.c.h.b16 %v377
    %v2022 = vunpack.c.l.b16 %v378
    %v2023 = vunpack.c.h.b16 %v378
    %v2024 = vunpack.c.l.b16 %v379
    %v2025 = vunpack.c.h.b16 %v379
    %v2026 = vunpack.c.l.b16 %v380
    %v2027 = vunpack.c.h.b16 %v380
    %v2028 = vunpack.c.l.b16 %v381
    %v2029 = vunpack.c.h.b16 %v381
    %v2030 = vunpack.c.l.b16 %v382
    %v2031 = vunpack.c.h.b16 %v382
    %v2032 = vunpack.c.l.b16 %v383
    %v2033 = vunpack.c.h.b16 %v383
    %v2034 = vunpack.c.l.b16 %v384
    %v2035 = vunpack.c.h.b16 %v384
    %v2036 = vunpack.c.l.b16 %v385
    %v2037 = vunpack.c.h.b16 %v385
    %v2038 = vunpack.c.l.b16 %v386
    %v2039 = vunpack.c.h.b16 %v386
    %v2040 = vunpack.c.l.b16 %v387
    %v2041 = vunpack.c.h.b16 %v387
    %v2042 = vunpack.c.l.b16 %v388
    %v2043 = vunpack.c.h.b16 %v388
    %v2044 = vunpack.c.l.b16 %v389
    %v2045 = vunpack.c.h.b16 %v389
    %v2046 = vunpack.c.l.b16 %v390
    %v2047 = vunpack.c.h.b16 %v390
    %v2048 = vunpack.c.l.b16 %v391
    %v2049 = vunpack.c.h.b16 %v391
    %v2050 = vunpack.c.l.b16 %v392
    %v2051 = vunpack.c.h.b16 %v392
    %v2052 = vunpack.c.l.b16 %v393
    %v2053 = vunpack.c.h.b16 %v393
    %v2054 = vunpack.c.l.b16 %v394
    %v2055 = vunpack.c.h.b16 %v394
    %v2056 = vunpack.c.l.b16 %v395
    %v2057 = vunpack.c.h.b16 %v395
    %v2058 = vunpack.c.l.b16 %v396
    %v2059 = vunpack.c.h.b16 %v396
    %v2060 = vunpack.c.l.b16 %v397
    %v2061 = vunpack.c.h.b16 %v397
    %v2062 = vunpack.c.l.b16 %v398
    %v2063 = vunpack.c.h.b16 %v398
    %v2064 = vunpack.c.l.b16 %v399
    %v2065 = vunpack.c.h.b16 %v399
    %v2066 = vunpack.c.l.b16 %v400
    %v2067 = vunpack.c.h.b16 %v400
    %v2068 = vunpack.c.l.b16 %v401
    %v2069 = vunpack.c.h.b16 %v401
    %v2070 = vunpack.c.l.b16 %v402
    %v2071 = vunpack.c.h.b16 %v402
    %v2072 = vunpack.c.l.b16 %v403
    %v2073 = vunpack.c.h.b16 %v403
    %v2074 = vunpack.c.l.b16 %v404
    %v2075 = vunpack.c.h.b16 %v404
    %v2076 = vunpack.c.l.b16 %v405
    %v2077 = vunpack.c.h.b16 %v405
    %v2078 = vunpack.c.l.b16 %v406
    %v2079 = vunpack.c.h.b16 %v406
    %v2080 = vunpack.c.l.b16 %v407
    %v2081 = vunpack.c.h.b16 %v407
    %v2082 = vunpack.c.l.b16 %v408
    %v2083 = vunpack.c.h.b16 %v408
    %v2084 = vunpack.c.l.b16 %v409
    %v2085 = vunpack.c.h.b16 %v409
    %v2086 = vunpack.c.l.b16 %v410
    %v2087 = vunpack.c.h.b16 %v410
    %v2088 = vunpack.c.l.b16 %v411
    %v2089 = vunpack.c.h.b16 %v411
    %v2090 = vunpack.c.l.b16 %v412
    %v2091 = vunpack.c.h.b16 %v412
    %v2092 = vunpack.c.l.b16 %v413
    %v2093 = vunpack.c.h.b16 %v413
    %v2094 = vunpack.c.l.b16 %v414
    %v2095 = vunpack.c.h.b16 %v414
    %v2096 = vunpack.c.l.b16 %v415
    %v2097 = vunpack.c.h.b16 %v415
    %v2098 = vunpack.c.l.b16 %v416
    %v2099 = vunpack.c.h.b16 %v416
    %v2100 = vunpack.c.l.b16 %v417
    %v2101 = vunpack.c.h.b16 %v417
    %v2102 = vunpack.c.l.b16 %v418
    %v2103 = vunpack.c.h.b16 %v418
    %v2104 = vunpack.c.l.b16 %v419
    %v2105 = vunpack.c.h.b16 %v419
    %v2106 = vunpack.c.l.b16 %v420
    %v2107 = vunpack.c.h.b16 %v420
    %v2108 = vunpack.c.l.b16 %v421
    %v2109 = vunpack.c.h.b16 %v421
    %v2110 = vunpack.c.l.b16 %v422
    %v2111 = vunpack.c.h.b16 %v422
    %v2112 = vunpack.c.l.b16 %v423
    %v2113 = vunpack.c.h.b16 %v423
    %v2114 = vunpack.c.l.b16 %v424
    %v2115 = vunpack.c.h.b16 %v424
    %v2116 = vunpack.c.l.b16 %v425
    %v2117 = vunpack.c.h.b16 %v425
    %v2118 = vunpack.c.l.b16 %v426
    %v2119 = vunpack.c.h.b16 %v426
    %v2120 = vunpack.c.l.b16 %v427
    %v2121 = vunpack.c.h.b16 %v427
    %v2122 = vunpack.c.l.b16 %v428
    %v2123 = vunpack.c.h.b16 %v428
    %v2124 = vunpack.c.l.b16 %v429
    %v2125 = vunpack.c.h.b16 %v429
    %v2126 = vunpack.c.l.b16 %v430
    %v2127 = vunpack.c.h.b16 %v430
    %v2128 = vunpack.c.l.b16 %v431
    %v2129 = vunpack.c.h.b16 %v431
    %v2130 = vunpack.c.l.b16 %v432
    %v2131 = vunpack.c.h.b16 %v432
    %v2132 = vunpack.c.l.b16 %v433
    %v2133 = vunpack.c.h.b16 %v433
    %v2134 = vunpack.c.l.b16 %v434
    %v2135 = vunpack.c.h.b16 %v434
    %v2136 = vunpack.c.l.b16 %v435
    %v2137 = vunpack.c.h.b16 %v435
    %v2138 = vunpack.c.l.b16 %v436
    %v2139 = vunpack.c.h.b16 %v436
    %v2140 = vunpack.c.l.b16 %v437
    %v2141 = vunpack.c.h.b16 %v437
    %v2142 = vunpack.c.l.b16 %v438
    %v2143 = vunpack.c.h.b16 %v438
    %v2144 = vunpack.c.l.b16 %v439
    %v2145 = vunpack.c.h.b16 %v439
    %v2146 = vunpack.c.l.b16 %v440
    %v2147 = vunpack.c.h.b16 %v440
    %v2148 = vunpack.c.l.b16 %v441
    %v2149 = vunpack.c.h.b16 %v441
    %v2150 = vunpack.c.l.b16 %v442
    %v2151 = vunpack.c.h.b16 %v442
    %v2152 = vunpack.c.l.b16 %v443
    %v2153 = vunpack.c.h.b16 %v443
    %v2154 = vunpack.c.l.b16 %v444
    %v2155 = vunpack.c.h.b16 %v444
    %v2156 = vunpack.c.l.b16 %v445
    %v2157 = vunpack.c.h.b16 %v445
    %v2158 = vunpack.c.l.b16 %v446
    %v2159 = vunpack.c.h.b16 %v446
    %v2160 = vunpack.c.l.b16 %v447
    %v2161 = vunpack.c.h.b16 %v447
    %v2162 = vunpack.c.l.b16 %v448
    %v2163 = vunpack.c.h.b16 %v448
    %v2164 = vunpack.c.l.b16 %v449
    %v2165 = vunpack.c.h.b16 %v449
    %v2166 = vunpack.c.l.b16 %v450
    %v2167 = vunpack.c.h.b16 %v450
    %v2168 = vunpack.c.l.b16 %v451
    %v2169 = vunpack.c.h.b16 %v451
    %v2170 = vunpack.c.l.b16 %v452
    %v2171 = vunpack.c.h.b16 %v452
    %v2172 = vunpack.c.l.b16 %v453
    %v2173 = vunpack.c.h.b16 %v453
    %v2174 = vunpack.c.l.b16 %v454
    %v2175 = vunpack.c.h.b16 %v454
    %v2176 = vunpack.c.l.b16 %v455
    %v2177 = vunpack.c.h.b16 %v455
    %v2178 = vunpack.c.l.b16 %v456
    %v2179 = vunpack.c.h.b16 %v456
    %v2180 = vunpack.c.l.b16 %v457
    %v2181 = vunpack.c.h.b16 %v457
    %v2182 = vunpack.c.l.b16 %v458
    %v2183 = vunpack.c.h.b16 %v458
    %v2184 = vunpack.c.l.b16 %v459
    %v2185 = vunpack.c.h.b16 %v459
    %v2186 = vunpack.c.l.b16 %v460
    %v2187 = vunpack.c.h.b16 %v460
    %v2188 = vunpack.c.l.b16 %v461
    %v2189 = vunpack.c.h.b16 %v461
    %v2190 = vunpack.c.l.b16 %v462
    %v2191 = vunpack.c.h.b16 %v462
    %v2192 = vunpack.c.l.b16 %v463
    %v2193 = vunpack.c.h.b16 %v463
    %v2194 = vunpack.c.l.b16 %v464
    %v2195 = vunpack.c.h.b16 %v464
    %v2196 = vunpack.c.l.b16 %v465
    %v2197 = vunpack.c.h.b16 %v465
    %v2198 = vunpack.c.l.b16 %v466
    %v2199 = vunpack.c.h.b16 %v466
    %v2200 = vunpack.c.l.b16 %v467
    %v2201 = vunpack.c.h.b16 %v467
    %v2202 = vunpack.c.l.b16 %v468
    %v2203 = vunpack.c.h.b16 %v468
    %v2204 = vunpack.c.l.b16 %v469
    %v2205 = vunpack.c.h.b16 %v469
    %v2206 = vunpack.c.l.b16 %v470
    %v2207 = vunpack.c.h.b16 %v470
    %v2208 = vunpack.c.l.b16 %v471
    %v2209 = vunpack.c.h.b16 %v471
    %v2210 = vunpack.c.l.b16 %v472
    %v2211 = vunpack.c.h.b16 %v472
    %v2212 = vunpack.c.l.b16 %v473
    %v2213 = vunpack.c.h.b16 %v473
    %v2214 = vunpack.c.l.b16 %v474
    %v2215 = vunpack.c.h.b16 %v474
    %v2216 = vunpack.c.l.b16 %v475
    %v2217 = vunpack.c.h.b16 %v475
    %v2218 = vunpack.c.l.b16 %v476
    %v2219 = vunpack.c.h.b16 %v476
    %v2220 = vunpack.c.l.b16 %v477
    %v2221 = vunpack.c.h.b16 %v477
    %v2222 = vunpack.c.l.b16 %v478
    %v2223 = vunpack.c.h.b16 %v478
    %v2224 = vunpack.c.l.b16 %v479
    %v2225 = vunpack.c.h.b16 %v479
    %v2226 = vunpack.c.l.b16 %v480
    %v2227 = vunpack.c.h.b16 %v480
    %v2228 = vunpack.c.l.b16 %v481
    %v2229 = vunpack.c.h.b16 %v481
    %v2230 = vunpack.c.l.b16 %v482
    %v2231 = vunpack.c.h.b16 %v482
    %v2232 = vunpack.c.l.b16 %v483
    %v2233 = vunpack.c.h.b16 %v483
    %v2234 = vunpack.c.l.b16 %v484
    %v2235 = vunpack.c.h.b16 %v484
    %v2236 = vunpack.c.l.b16 %v485
    %v2237 = vunpack.c.h.b16 %v485
    %v2238 = vunpack.c.l.b16 %v486
    %v2239 = vunpack.c.h.b16 %v486
    %v2240 = vunpack.c.l.b16 %v487
    %v2241 = vunpack.c.h.b16 %v487
    %v2242 = vunpack.c.l.b16 %v488
    %v2243 = vunpack.c.h.b16 %v488
    %v2244 = vunpack.c.l.b16 %v489
    %v2245 = vunpack.c.h.b16 %v489
    %v2246 = vunpack.c.l.b16 %v490
    %v2247 = vunpack.c.h.b16 %v490
    %v2248 = vunpack.c.l.b16 %v491
    %v2249 = vunpack.c.h.b16 %v491
    %v2250 = vunpack.c.l.b16 %v492
    %v2251 = vunpack.c.h.b16 %v492
    %v2252 = vunpack.c.l.b16 %v493
    %v2253 = vunpack.c.h.b16 %v493
    %v2254 = vunpack.c.l.b16 %v494
    %v2255 = vunpack.c.h.b16 %v494
    %v2256 = vunpack.c.l.b16 %v495
    %v2257 = vunpack.c.h.b16 %v495
    %v2258 = vunpack.c.l.b16 %v496
    %v2259 = vunpack.c.h.b16 %v496
    %v2260 = vunpack.c.l.b16 %v497
    %v2261 = vunpack.c.h.b16 %v497
    %v2262 = vunpack.c.l.b16 %v498
    %v2263 = vunpack.c.h.b16 %v498
    %v2264 = vunpack.c.l.b16 %v499
    %v2265 = vunpack.c.h.b16 %v499
    %v2266 = vunpack.c.l.b16 %v500
    %v2267 = vunpack.c.h.b16 %v500
    %v2268 = vunpack.c.l.b16 %v501
    %v2269 = vunpack.c.h.b16 %v501
    %v2270 = vunpack.c.l.b16 %v502
    %v2271 = vunpack.c.h.b16 %v502
    %v2272 = vunpack.c.l.b16 %v503
    %v2273 = vunpack.c.h.b16 %v503
    %v2274 = vunpack.c.l.b16 %v504
    %v2275 = vunpack.c.h.b16 %v504
    %v2276 = vunpack.c.l.b16 %v505
    %v2277 = vunpack.c.h.b16 %v505
    %v2278 = vunpack.c.l.b16 %v506
    %v2279 = vunpack.c.h.b16 %v506
    %v2280 = vunpack.c.l.b16 %v507
    %v2281 = vunpack.c.h.b16 %v507
    %v2282 = vunpack.c.l.b16 %v508
    %v2283 = vunpack.c.h.b16 %v508
    %v2284 = vunpack.c.l.b16 %v509
    %v2285 = vunpack.c.h.b16 %v509
    %v2286 = vunpack.c.l.b16 %v510
    %v2287 = vunpack.c.h.b16 %v510
    %v2288 = vunpack.c.l.b16 %v511
    %v2289 = vunpack.c.h.b16 %v511
    %v2290 = vunpack.c.l.b16 %v512
    %v2291 = vunpack.c.h.b16 %v512
    %v2292 = vunpack.c.l.b16 %v513
    %v2293 = vunpack.c.h.b16 %v513
    %v2294 = vunpack.c.l.b16 %v514
    %v2295 = vunpack.c.h.b16 %v514
    %v2296 = vunpack.c.l.b16 %v515
    %v2297 = vunpack.c.h.b16 %v515
    %v2298 = vunpack.c.l.b16 %v516
    %v2299 = vunpack.c.h.b16 %v516
    %v2300 = vunpack.c.l.b16 %v517
    %v2301 = vunpack.c.h.b16 %v517
    %v2302 = vunpack.c.l.b16 %v518
    %v2303 = vunpack.c.h.b16 %v518
    %v2304 = vunpack.c.l.b16 %v519
    %v2305 = vunpack.c.h.b16 %v519
    %v2306 = vunpack.c.l.b16 %v520
    %v2307 = vunpack.c.h.b16 %v520
    %v2308 = vunpack.c.l.b16 %v521
    %v2309 = vunpack.c.h.b16 %v521
    %v2310 = vunpack.c.l.b16 %v522
    %v2311 = vunpack.c.h.b16 %v522
    %v2312 = vunpack.c.l.b16 %v523
    %v2313 = vunpack.c.h.b16 %v523
    %v2314 = vunpack.c.l.b16 %v524
    %v2315 = vunpack.c.h.b16 %v524
    %v2316 = vunpack.c.l.b16 %v525
    %v2317 = vunpack.c.h.b16 %v525
    %v2318 = vunpack.c.l.b16 %v526
    %v2319 = vunpack.c.h.b16 %v526
    %v2320 = vunpack.c.l.b16 %v527
    %v2321 = vunpack.c.h.b16 %v527
    %v2322 = vunpack.c.l.b16 %v528
    %v2323 = vunpack.c.h.b16 %v528
    %v2324 = vunpack.c.l.b16 %v529
    %v2325 = vunpack.c.h.b16 %v529
    %v2326 = vunpack.c.l.b16 %v530
    %v2327 = vunpack.c.h.b16 %v530
    %v2328 = vunpack.c.l.b16 %v531
    %v2329 = vunpack.c.h.b16 %v531
    %v2330 = vunpack.c.l.b16 %v532
    %v2331 = vunpack.c.h.b16 %v532
    %v2332 = vunpack.c.l.b16 %v533
    %v2333 = vunpack.c.h.b16 %v533
    %v2334 = vunpack.c.l.b16 %v534
    %v2335 = vunpack.c.h.b16 %v534
    %v2336 = vunpack.c.l.b16 %v535
    %v2337 = vunpack.c.h.b16 %v535
    %v2338 = vunpack.c.l.b16 %v536
    %v2339 = vunpack.c.h.b16 %v536
    %v2340 = vunpack.c.l.b16 %v537
    %v2341 = vunpack.c.h.b16 %v537
    %v2342 = vunpack.c.l.b16 %v538
    %v2343 = vunpack.c.h.b16 %v538
    %v2344 = vunpack.c.l.b16 %v539
    %v2345 = vunpack.c.h.b16 %v539
    %v2346 = vunpack.c.l.b16 %v540
    %v2347 = vunpack.c.h.b16 %v540
    %v2348 = vunpack.c.l.b16 %v541
    %v2349 = vunpack.c.h.b16 %v541
    %v2350 = vunpack.c.l.b16 %v542
    %v2351 = vunpack.c.h.b16 %v542
    %v2352 = vunpack.c.l.b16 %v543
    %v2353 = vunpack.c.h.b16 %v543
    %v2354 = vunpack.c.l.b16 %v544
    %v2355 = vunpack.c.h.b16 %v544
    %v2356 = vunpack.c.l.b16 %v545
    %v2357 = vunpack.c.h.b16 %v545
    %v2358 = vunpack.c.l.b16 %v546
    %v2359 = vunpack.c.h.b16 %v546
    %v2360 = vunpack.c.l.b16 %v547
    %v2361 = vunpack.c.h.b16 %v547
    %v2362 = vunpack.c.l.b16 %v548
    %v2363 = vunpack.c.h.b16 %v548
    %v2364 = vunpack.c.l.b16 %v549
    %v2365 = vunpack.c.h.b16 %v549
    %v2366 = vunpack.c.l.b16 %v550
    %v2367 = vunpack.c.h.b16 %v550
    %v2368 = vunpack.c.l.b16 %v551
    %v2369 = vunpack.c.h.b16 %v551
    %v2370 = vunpack.c.l.b16 %v552
    %v2371 = vunpack.c.h.b16 %v552
    %v2372 = vunpack.c.l.b16 %v553
    %v2373 = vunpack.c.h.b16 %v553
    %v2374 = vunpack.c.l.b16 %v554
    %v2375 = vunpack.c.h.b16 %v554
    %v2376 = vunpack.c.l.b16 %v555
    %v2377 = vunpack.c.h.b16 %v555
    %v2378 = vunpack.c.l.b16 %v556
    %v2379 = vunpack.c.h.b16 %v556
    %v2380 = vunpack.c.l.b16 %v557
    %v2381 = vunpack.c.h.b16 %v557
    %v2382 = vunpack.c.l.b16 %v558
    %v2383 = vunpack.c.h.b16 %v558
    %v2384 = vunpack.c.l.b16 %v559
    %v2385 = vunpack.c.h.b16 %v559
    %v2386 = vunpack.c.l.b16 %v560
    %v2387 = vunpack.c.h.b16 %v560
    %v2388 = vunpack.c.l.b16 %v561
    %v2389 = vunpack.c.h.b16 %v561
    %v2390 = vunpack.c.l.b16 %v562
    %v2391 = vunpack.c.h.b16 %v562
    %v2392 = vunpack.c.l.b16 %v563
    %v2393 = vunpack.c.h.b16 %v563
    %v2394 = vunpack.c.l.b16 %v564
    %v2395 = vunpack.c.h.b16 %v564
    %v2396 = vunpack.c.l.b16 %v565
    %v2397 = vunpack.c.h.b16 %v565
    %v2398 = vunpack.c.l.b16 %v566
    %v2399 = vunpack.c.h.b16 %v566
    %v2400 = vunpack.c.l.b16 %v567
    %v2401 = vunpack.c.h.b16 %v567
    %v2402 = vunpack.c.l.b16 %v568
    %v2403 = vunpack.c.h.b16 %v568
    %v2404 = vunpack.c.l.b16 %v569
    %v2405 = vunpack.c.h.b16 %v569
    %v2406 = vunpack.c.l.b16 %v570
    %v2407 = vunpack.c.h.b16 %v570
    %v2408 = vunpack.c.l.b16 %v571
    %v2409 = vunpack.c.h.b16 %v571
    %v2410 = vunpack.c.l.b16 %v572
    %v2411 = vunpack.c.h.b16 %v572
    %v2412 = vunpack.c.l.b16 %v573
    %v2413 = vunpack.c.h.b16 %v573
    %v2414 = vunpack.c.l.b16 %v574
    %v2415 = vunpack.c.h.b16 %v574
    %v2416 = vunpack.c.l.b16 %v575
    %v2417 = vunpack.c.h.b16 %v575
    %v2418 = vunpack.c.l.b16 %v576
    %v2419 = vunpack.c.h.b16 %v576
    %v2420 = vunpack.c.l.b16 %v577
    %v2421 = vunpack.c.h.b16 %v577
    %v2422 = vunpack.c.l.b16 %v578
    %v2423 = vunpack.c.h.b16 %v578
    %v2424 = vunpack.c.l.b16 %v579
    %v2425 = vunpack.c.h.b16 %v579
    %v2426 = vunpack.c.l.b16 %v580
    %v2427 = vunpack.c.h.b16 %v580
    %v2428 = vunpack.c.l.b16 %v581
    %v2429 = vunpack.c.h.b16 %v581
    %v2430 = vunpack.c.l.b16 %v582
    %v2431 = vunpack.c.h.b16 %v582
    %v2432 = vunpack.c.l.b16 %v583
    %v2433 = vunpack.c.h.b16 %v583
    %v2434 = vunpack.c.l.b16 %v584
    %v2435 = vunpack.c.h.b16 %v584
    %v2436 = vunpack.c.l.b16 %v585
    %v2437 = vunpack.c.h.b16 %v585
    %v2438 = vunpack.c.l.b16 %v586
    %v2439 = vunpack.c.h.b16 %v586
    %v2440 = vunpack.c.l.b16 %v587
    %v2441 = vunpack.c.h.b16 %v587
    %v2442 = vunpack.c.l.b16 %v588
    %v2443 = vunpack.c.h.b16 %v588
    %v2444 = vunpack.c.l.b16 %v589
    %v2445 = vunpack.c.h.b16 %v589
    %v2446 = vunpack.c.l.b16 %v590
    %v2447 = vunpack.c.h.b16 %v590
    %v2448 = vunpack.c.l.b16 %v591
    %v2449 = vunpack.c.h.b16 %v591
    %v2450 = vunpack.c.l.b16 %v592
    %v2451 = vunpack.c.h.b16 %v592
    %v2452 = vunpack.c.l.b16 %v593
    %v2453 = vunpack.c.h.b16 %v593
    %v2454 = vunpack.c.l.b16 %v594
    %v2455 = vunpack.c.h.b16 %v594
    %v2456 = vunpack.c.l.b16 %v595
    %v2457 = vunpack.c.h.b16 %v595
    %v2458 = vunpack.c.l.b16 %v596
    %v2459 = vunpack.c.h.b16 %v596
    %v2460 = vunpack.c.l.b16 %v597
    %v2461 = vunpack.c.h.b16 %v597
    %v2462 = vunpack.c.l.b16 %v598
    %v2463 = vunpack.c.h.b16 %v598
    %v2464 = vunpack.c.l.b16 %v599
    %v2465 = vunpack.c.h.b16 %v599
    %v2466 = vunpack.c.l.b16 %v600
    %v2467 = vunpack.c.h.b16 %v600
    %v2468 = vunpack.c.l.b16 %v601
    %v2469 = vunpack.c.h.b16 %v601
    %v2470 = vunpack.c.l.b16 %v602
    %v2471 = vunpack.c.h.b16 %v602
    %v2472 = vunpack.c.l.b16 %v603
    %v2473 = vunpack.c.h.b16 %v603
    %v2474 = vunpack.c.l.b16 %v604
    %v2475 = vunpack.c.h.b16 %v604
    %v2476 = vunpack.c.l.b16 %v605
    %v2477 = vunpack.c.h.b16 %v605
    %v2478 = vunpack.c.l.b16 %v606
    %v2479 = vunpack.c.h.b16 %v606
    %v2480 = vunpack.c.l.b16 %v607
    %v2481 = vunpack.c.h.b16 %v607
    %v2482 = vunpack.c.l.b16 %v608
    %v2483 = vunpack.c.h.b16 %v608
    %v2484 = vunpack.c.l.b16 %v609
    %v2485 = vunpack.c.h.b16 %v609
    %v2486 = vunpack.c.l.b16 %v610
    %v2487 = vunpack.c.h.b16 %v610
    %v2488 = vunpack.c.l.b16 %v611
    %v2489 = vunpack.c.h.b16 %v611
    %v2490 = vunpack.c.l.b16 %v612
    %v2491 = vunpack.c.h.b16 %v612
    %v2492 = vunpack.c.l.b16 %v613
    %v2493 = vunpack.c.h.b16 %v613
    %v2494 = vunpack.c.l.b16 %v614
    %v2495 = vunpack.c.h.b16 %v614
    %v2496 = vunpack.c.l.b16 %v615
    %v2497 = vunpack.c.h.b16 %v615
    %v2498 = vunpack.c.l.b16 %v616
    %v2499 = vunpack.c.h.b16 %v616
    %v2500 = vunpack.c.l.b16 %v617
    %v2501 = vunpack.c.h.b16 %v617
    %v2502 = vunpack.c.l.b16 %v618
    %v2503 = vunpack.c.h.b16 %v618
    %v2504 = vunpack.c.l.b16 %v619
    %v2505 = vunpack.c.h.b16 %v619
    %v2506 = vunpack.c.l.b16 %v620
    %v2507 = vunpack.c.h.b16 %v620
    %v2508 = vunpack.c.l.b16 %v621
    %v2509 = vunpack.c.h.b16 %v621
    %v2510 = vunpack.c.l.b16 %v622
    %v2511 = vunpack.c.h.b16 %v622
    %v2512 = vunpack.c.l.b16 %v623
    %v2513 = vunpack.c.h.b16 %v623
    %v2514 = vunpack.c.l.b16 %v624
    %v2515 = vunpack.c.h.b16 %v624
    %v2516 = vunpack.c.l.b16 %v625
    %v2517 = vunpack.c.h.b16 %v625
    %v2518 = vunpack.c.l.b16 %v626
    %v2519 = vunpack.c.h.b16 %v626
    %v2520 = vunpack.c.l.b16 %v627
    %v2521 = vunpack.c.h.b16 %v627
    %v2522 = vunpack.c.l.b16 %v628
    %v2523 = vunpack.c.h.b16 %v628
    %v2524 = vunpack.c.l.b16 %v629
    %v2525 = vunpack.c.h.b16 %v629
    %v2526 = vunpack.c.l.b16 %v630
    %v2527 = vunpack.c.h.b16 %v630
    %v2528 = vunpack.c.l.b16 %v631
    %v2529 = vunpack.c.h.b16 %v631
    %v2530 = vunpack.c.l.b16 %v632
    %v2531 = vunpack.c.h.b16 %v632
    %v2532 = vunpack.c.l.b16 %v633
    %v2533 = vunpack.c.h.b16 %v633
    %v2534 = vunpack.c.l.b16 %v634
    %v2535 = vunpack.c.h.b16 %v634
    %v2536 = vunpack.c.l.b16 %v635
    %v2537 = vunpack.c.h.b16 %v635
    %v2538 = vunpack.c.l.b16 %v636
    %v2539 = vunpack.c.h.b16 %v636
    %v2540 = vunpack.c.l.b16 %v637
    %v2541 = vunpack.c.h.b16 %v637
    %v2542 = vunpack.c.l.b16 %v638
    %v2543 = vunpack.c.h.b16 %v638
    %v2544 = vunpack.c.l.b16 %v639
    %v2545 = vunpack.c.h.b16 %v639
    %v2546 = vunpack.c.l.b16 %v640
    %v2547 = vunpack.c.h.b16 %v640
    %v2548 = vunpack.c.l.b16 %v641
    %v2549 = vunpack.c.h.b16 %v641
    %v2550 = vunpack.c.l.b16 %v642
    %v2551 = vunpack.c.h.b16 %v642
    %v2552 = vunpack.c.l.b16 %v643
    %v2553 = vunpack.c.h.b16 %v643
    %v2554 = vunpack.c.l.b16 %v644
    %v2555 = vunpack.c.h.b16 %v644
    %v2556 = vunpack.c.l.b16 %v645
    %v2557 = vunpack.c.h.b16 %v645
    %v2558 = vunpack.c.l.b16 %v646
    %v2559 = vunpack.c.h.b16 %v646
    %v2560 = vunpack.c.l.b16 %v647
    %v2561 = vunpack.c.h.b16 %v647
    %v2562 = vunpack.c.l.b16 %v648
    %v2563 = vunpack.c.h.b16 %v648
    %v2564 = vunpack.c.l.b16 %v649
    %v2565 = vunpack.c.h.b16 %v649
    %v2566 = vunpack.c.l.b16 %v650
    %v2567 = vunpack.c.h.b16 %v650
    %v2568 = vunpack.c.l.b16 %v651
    %v2569 = vunpack.c.h.b16 %v651
    %v2570 = vunpack.c.l.b16 %v652
    %v2571 = vunpack.c.h.b16 %v652
    %v2572 = vunpack.c.l.b16 %v653
    %v2573 = vunpack.c.h.b16 %v653
    %v2574 = vunpack.c.l.b16 %v654
    %v2575 = vunpack.c.h.b16 %v654
    %v2576 = vunpack.c.l.b16 %v655
    %v2577 = vunpack.c.h.b16 %v655
    %v2578 = vunpack.c.l.b16 %v656
    %v2579 = vunpack.c.h.b16 %v656
    %v2580 = vunpack.c.l.b16 %v657
    %v2581 = vunpack.c.h.b16 %v657
    %v2582 = vunpack.c.l.b16 %v658
    %v2583 = vunpack.c.h.b16 %v658
    %v2584 = vunpack.c.l.b16 %v659
    %v2585 = vunpack.c.h.b16 %v659
    %v2586 = vunpack.c.l.b16 %v660
    %v2587 = vunpack.c.h.b16 %v660
    %v2588 = vunpack.c.l.b16 %v661
    %v2589 = vunpack.c.h.b16 %v661
    %v2590 = vunpack.c.l.b16 %v662
    %v2591 = vunpack.c.h.b16 %v662
    %v2592 = vunpack.c.l.b16 %v663
    %v2593 = vunpack.c.h.b16 %v663
    %v2594 = vunpack.c.l.b16 %v664
    %v2595 = vunpack.c.h.b16 %v664
    %v2596 = vunpack.c.l.b16 %v665
    %v2597 = vunpack.c.h.b16 %v665
    %v2598 = vunpack.c.l.b16 %v666
    %v2599 = vunpack.c.h.b16 %v666
    %v2600 = vunpack.c.l.b16 %v667
    %v2601 = vunpack.c.h.b16 %v667
    %v2602 = vunpack.c.l.b16 %v668
    %v2603 = vunpack.c.h.b16 %v668
    %v2604 = vunpack.c.l.b16 %v669
    %v2605 = vunpack.c.h.b16 %v669
    %v2606 = vunpack.c.l.b16 %v670
    %v2607 = vunpack.c.h.b16 %v670
    %v2608 = vunpack.c.l.b16 %v671
    %v2609 = vunpack.c.h.b16 %v671
    %v2610 = vunpack.c.l.b16 %v672
    %v2611 = vunpack.c.h.b16 %v672
    %v2612 = vunpack.c.l.b16 %v673
    %v2613 = vunpack.c.h.b16 %v673
    %v2614 = vunpack.c.l.b16 %v674
    %v2615 = vunpack.c.h.b16 %v674
    %v2616 = vunpack.c.l.b16 %v675
    %v2617 = vunpack.c.h.b16 %v675
    %v2618 = vunpack.c.l.b16 %v676
    %v2619 = vunpack.c.h.b16 %v676
    %v2620 = vunpack.c.l.b16 %v677
    %v2621 = vunpack.c.h.b16 %v677
    %v2622 = vunpack.c.l.b16 %v678
    %v2623 = vunpack.c.h.b16 %v678
    %v2624 = vunpack.c.l.b16 %v679
    %v2625 = vunpack.c.h.b16 %v679
    %v2626 = vunpack.c.l.b16 %v680
    %v2627 = vunpack.c.h.b16 %v680
    %v2628 = vunpack.c.l.b16 %v681
    %v2629 = vunpack.c.h.b16 %v681
    %v2630 = vunpack.c.l.b16 %v682
    %v2631 = vunpack.c.h.b16 %v682
    %v2632 = vunpack.c.l.b16 %v683
    %v2633 = vunpack.c.h.b16 %v683
    %v2634 = vunpack.c.l.b16 %v684
    %v2635 = vunpack.c.h.b16 %v684
    %v2636 = vunpack.c.l.b16 %v685
    %v2637 = vunpack.c.h.b16 %v685
    %v2638 = vunpack.c.l.b16 %v686
    %v2639 = vunpack.c.h.b16 %v686
    %v2640 = vunpack.c.l.b16 %v687
    %v2641 = vunpack.c.h.b16 %v687
    %v2642 = vunpack.c.l.b16 %v688
    %v2643 = vunpack.c.h.b16 %v688
    %v2644 = vunpack.c.l.b16 %v689
    %v2645 = vunpack.c.h.b16 %v689
    %v2646 = vunpack.c.l.b16 %v690
    %v2647 = vunpack.c.h.b16 %v690
    %v2648 = vunpack.c.l.b16 %v691
    %v2649 = vunpack.c.h.b16 %v691
    %v2650 = vunpack.c.l.b16 %v692
    %v2651 = vunpack.c.h.b16 %v692
    %v2652 = vunpack.c.l.b16 %v693
    %v2653 = vunpack.c.h.b16 %v693
    %v2654 = vunpack.c.l.b16 %v694
    %v2655 = vunpack.c.h.b16 %v694
    %v2656 = vunpack.c.l.b16 %v695
    %v2657 = vunpack.c.h.b16 %v695
    %v2658 = vunpack.c.l.b16 %v696
    %v2659 = vunpack.c.h.b16 %v696
    %v2660 = vunpack.c.l.b16 %v697
    %v2661 = vunpack.c.h.b16 %v697
    %v2662 = vunpack.c.l.b16 %v698
    %v2663 = vunpack.c.h.b16 %v698
    %v2664 = vunpack.c.l.b16 %v699
    %v2665 = vunpack.c.h.b16 %v699
    %v2666 = vunpack.c.l.b16 %v700
    %v2667 = vunpack.c.h.b16 %v700
    %v2668 = vunpack.c.l.b16 %v701
    %v2669 = vunpack.c.h.b16 %v701
    %v2670 = vunpack.c.l.b16 %v702
    %v2671 = vunpack.c.h.b16 %v702
    %v2672 = vunpack.c.l.b16 %v703
    %v2673 = vunpack.c.h.b16 %v703
    %v2674 = vunpack.c.l.b16 %v704
    %v2675 = vunpack.c.h.b16 %v704
    %v2676 = vunpack.c.l.b16 %v705
    %v2677 = vunpack.c.h.b16 %v705
    %v2678 = vunpack.c.l.b16 %v706
    %v2679 = vunpack.c.h.b16 %v706
    %v2680 = vunpack.c.l.b16 %v707
    %v2681 = vunpack.c.h.b16 %v707
    %v2682 = vunpack.c.l.b16 %v708
    %v2683 = vunpack.c.h.b16 %v708
    %v2684 = vunpack.c.l.b16 %v709
    %v2685 = vunpack.c.h.b16 %v709
    %v2686 = vunpack.c.l.b16 %v710
    %v2687 = vunpack.c.h.b16 %v710
    %v2688 = vunpack.c.l.b16 %v711
    %v2689 = vunpack.c.h.b16 %v711
    %v2690 = vunpack.c.l.b16 %v712
    %v2691 = vunpack.c.h.b16 %v712
    %v2692 = vunpack.c.l.b16 %v713
    %v2693 = vunpack.c.h.b16 %v713
    %v2694 = vunpack.c.l.b16 %v714
    %v2695 = vunpack.c.h.b16 %v714
    %v2696 = vunpack.c.l.b16 %v715
    %v2697 = vunpack.c.h.b16 %v715
    %v2698 = vunpack.c.l.b16 %v716
    %v2699 = vunpack.c.h.b16 %v716
    %v2700 = vunpack.c.l.b16 %v717
    %v2701 = vunpack.c.h.b16 %v717
    %v2702 = vunpack.c.l.b16 %v718
    %v2703 = vunpack.c.h.b16 %v718
    %v2704 = vunpack.c.l.b16 %v719
    %v2705 = vunpack.c.h.b16 %v719
    %v2706 = vunpack.c.l.b16 %v720
    %v2707 = vunpack.c.h.b16 %v720
    %v2708 = vunpack.c.l.b16 %v721
    %v2709 = vunpack.c.h.b16 %v721
    %v2710 = vunpack.c.l.b16 %v722
    %v2711 = vunpack.c.h.b16 %v722
    %v2712 = vunpack.c.l.b16 %v723
    %v2713 = vunpack.c.h.b16 %v723
    %v2714 = vunpack.c.l.b16 %v724
    %v2715 = vunpack.c.h.b16 %v724
    %v2716 = vunpack.c.l.b16 %v725
    %v2717 = vunpack.c.h.b16 %v725
    %v2718 = vunpack.c.l.b16 %v726
    %v2719 = vunpack.c.h.b16 %v726
    %v2720 = vunpack.c.l.b16 %v727
    %v2721 = vunpack.c.h.b16 %v727
    %v2722 = vunpack.c.l.b16 %v728
    %v2723 = vunpack.c.h.b16 %v728
    %v2724 = vunpack.c.l.b16 %v729
    %v2725 = vunpack.c.h.b16 %v729
    %v2726 = vunpack.c.l.b16 %v730
    %v2727 = vunpack.c.h.b16 %v730
    %v2728 = vunpack.c.l.b16 %v731
    %v2729 = vunpack.c.h.b16 %v731
    %v2730 = vunpack.c.l.b16 %v732
    %v2731 = vunpack.c.h.b16 %v732
    %v2732 = vunpack.c.l.b16 %v733
    %v2733 = vunpack.c.h.b16 %v733
    %v2734 = vunpack.c.l.b16 %v734
    %v2735 = vunpack.c.h.b16 %v734
    %v2736 = vunpack.c.l.b16 %v735
    %v2737 = vunpack.c.h.b16 %v735
    %v2738 = vunpack.c.l.b16 %v736
    %v2739 = vunpack.c.h.b16 %v736
    %v2740 = vunpack.c.l.b16 %v737
    %v2741 = vunpack.c.h.b16 %v737
    %v2742 = vunpack.c.l.b16 %v738
    %v2743 = vunpack.c.h.b16 %v738
    %v2744 = vunpack.c.l.b16 %v739
    %v2745 = vunpack.c.h.b16 %v739
    %v2746 = vunpack.c.l.b16 %v740
    %v2747 = vunpack.c.h.b16 %v740
    %v2748 = vunpack.c.l.b16 %v741
    %v2749 = vunpack.c.h.b16 %v741
    %v2750 = vunpack.c.l.b16 %v742
    %v2751 = vunpack.c.h.b16 %v742
    %v2752 = vunpack.c.l.b16 %v743
    %v2753 = vunpack.c.h.b16 %v743
    %v2754 = vunpack.c.l.b16 %v744
    %v2755 = vunpack.c.h.b16 %v744
    %v2756 = vunpack.c.l.b16 %v745
    %v2757 = vunpack.c.h.b16 %v745
    %v2758 = vunpack.c.l.b16 %v746
    %v2759 = vunpack.c.h.b16 %v746
    %v2760 = vunpack.c.l.b16 %v747
    %v2761 = vunpack.c.h.b16 %v747
    %v2762 = vunpack.c.l.b16 %v748
    %v2763 = vunpack.c.h.b16 %v748
    %v2764 = vunpack.c.l.b16 %v749
    %v2765 = vunpack.c.h.b16 %v749
    %v2766 = vunpack.c.l.b16 %v750
    %v2767 = vunpack.c.h.b16 %v750
    %v2768 = vunpack.c.l.b16 %v751
    %v2769 = vunpack.c.h.b16 %v751
    %v2770 = vunpack.c.l.b16 %v752
    %v2771 = vunpack.c.h.b16 %v752
    %v2772 = vunpack.c.l.b16 %v753
    %v2773 = vunpack.c.h.b16 %v753
    %v2774 = vunpack.c.l.b16 %v754
    %v2775 = vunpack.c.h.b16 %v754
    %v2776 = vunpack.c.l.b16 %v755
    %v2777 = vunpack.c.h.b16 %v755
    %v2778 = vunpack.c.l.b16 %v756
    %v2779 = vunpack.c.h.b16 %v756
    %v2780 = vunpack.c.l.b16 %v757
    %v2781 = vunpack.c.h.b16 %v757
    %v2782 = vunpack.c.l.b16 %v758
    %v2783 = vunpack.c.h.b16 %v758
    %v2784 = vunpack.c.l.b16 %v759
    %v2785 = vunpack.c.h.b16 %v759
    %v2786 = vunpack.c.l.b16 %v760
    %v2787 = vunpack.c.h.b16 %v760
    %v2788 = vunpack.c.l.b16 %v761
    %v2789 = vunpack.c.h.b16 %v761
    %v2790 = vunpack.c.l.b16 %v762
    %v2791 = vunpack.c.h.b16 %v762
    %v2792 = vunpack.c.l.b16 %v763
    %v2793 = vunpack.c.h.b16 %v763
    %v2794 = vunpack.c.l.b16 %v764
    %v2795 = vunpack.c.h.b16 %v764
    %v2796 = vunpack.c.l.b16 %v765
    %v2797 = vunpack.c.h.b16 %v765
    %v2798 = vunpack.c.l.b16 %v766
    %v2799 = vunpack.c.h.b16 %v766
    %v2800 = vunpack.c.l.b16 %v767
    %v2801 = vunpack.c.h.b16 %v767
    %v2802 = vunpack.c.l.b16 %v768
    %v2803 = vunpack.c.h.b16 %v768
    %v2804 = vunpack.c.l.b16 %v769
    %v2805 = vunpack.c.h.b16 %v769
    %v2806 = vunpack.c.l.b16 %v770
    %v2807 = vunpack.c.h.b16 %v770
    %v2808 = vunpack.c.l.b16 %v771
    %v2809 = vunpack.c.h.b16 %v771
    %v2810 = vunpack.c.l.b16 %v772
    %v2811 = vunpack.c.h.b16 %v772
    %v2812 = vunpack.c.l.b16 %v773
    %v2813 = vunpack.c.h.b16 %v773
    %v2814 = vunpack.c.l.b16 %v774
    %v2815 = vunpack.c.h.b16 %v774
    %v2816 = vunpack.c.l.b16 %v775
    %v2817 = vunpack.c.h.b16 %v775
    %v2818 = vunpack.c.l.b16 %v776
    %v2819 = vunpack.c.h.b16 %v776
    %v2820 = vunpack.c.l.b16 %v777
    %v2821 = vunpack.c.h.b16 %v777
    %v2822 = vunpack.c.l.b16 %v778
    %v2823 = vunpack.c.h.b16 %v778
    %v2824 = vunpack.c.l.b16 %v779
    %v2825 = vunpack.c.h.b16 %v779
    %v2826 = vunpack.c.l.b16 %v780
    %v2827 = vunpack.c.h.b16 %v780
    %v2828 = vunpack.c.l.b16 %v781
    %v2829 = vunpack.c.h.b16 %v781
    %v2830 = vunpack.c.l.b16 %v782
    %v2831 = vunpack.c.h.b16 %v782
    %v2832 = vunpack.c.l.b16 %v783
    %v2833 = vunpack.c.h.b16 %v783
    %v2834 = vunpack.c.l.b16 %v784
    %v2835 = vunpack.c.h.b16 %v784
    %v2836 = vunpack.c.l.b16 %v785
    %v2837 = vunpack.c.h.b16 %v785
    %v2838 = vunpack.c.l.b16 %v786
    %v2839 = vunpack.c.h.b16 %v786
    %v2840 = vunpack.c.l.b16 %v787
    %v2841 = vunpack.c.h.b16 %v787
    %v2842 = vunpack.c.l.b16 %v788
    %v2843 = vunpack.c.h.b16 %v788
    %v2844 = vunpack.c.l.b16 %v789
    %v2845 = vunpack.c.h.b16 %v789
    %v2846 = vunpack.c.l.b16 %v790
    %v2847 = vunpack.c.h.b16 %v790
    %v2848 = vunpack.c.l.b16 %v791
    %v2849 = vunpack.c.h.b16 %v791
    %v2850 = vunpack.c.l.b16 %v792
    %v2851 = vunpack.c.h.b16 %v792
    %v2852 = vunpack.c.l.b16 %v793
    %v2853 = vunpack.c.h.b16 %v793
    %v2854 = vunpack.c.l.b16 %v794
    %v2855 = vunpack.c.h.b16 %v794
    %v2856 = vunpack.c.l.b16 %v795
    %v2857 = vunpack.c.h.b16 %v795
    %v2858 = vunpack.c.l.b16 %v796
    %v2859 = vunpack.c.h.b16 %v796
    %v2860 = vunpack.c.l.b16 %v797
    %v2861 = vunpack.c.h.b16 %v797
    %v2862 = vunpack.c.l.b16 %v798
    %v2863 = vunpack.c.h.b16 %v798
    %v2864 = vunpack.c.l.b16 %v799
    %v2865 = vunpack.c.h.b16 %v799
    %v2866 = vunpack.c.l.b16 %v800
    %v2867 = vunpack.c.h.b16 %v800
    %v2868 = vunpack.c.l.b16 %v801
    %v2869 = vunpack.c.h.b16 %v801
    %v2870 = vunpack.c.l.b16 %v802
    %v2871 = vunpack.c.h.b16 %v802
    %v2872 = vunpack.c.l.b16 %v803
    %v2873 = vunpack.c.h.b16 %v803
    %v2874 = vunpack.c.l.b16 %v804
    %v2875 = vunpack.c.h.b16 %v804
    %v2876 = vunpack.c.l.b16 %v805
    %v2877 = vunpack.c.h.b16 %v805
    %v2878 = vunpack.c.l.b16 %v806
    %v2879 = vunpack.c.h.b16 %v806
    %v2880 = vunpack.c.l.b16 %v807
    %v2881 = vunpack.c.h.b16 %v807
    %v2882 = vunpack.c.l.b16 %v808
    %v2883 = vunpack.c.h.b16 %v808
    %v2884 = vunpack.c.l.b16 %v809
    %v2885 = vunpack.c.h.b16 %v809
    %v2886 = vunpack.c.l.b16 %v810
    %v2887 = vunpack.c.h.b16 %v810
    %v2888 = vunpack.c.l.b16 %v811
    %v2889 = vunpack.c.h.b16 %v811
    %v2890 = vunpack.c.l.b16 %v812
    %v2891 = vunpack.c.h.b16 %v812
    %v2892 = vunpack.c.l.b16 %v813
    %v2893 = vunpack.c.h.b16 %v813
    %v2894 = vunpack.c.l.b16 %v814
    %v2895 = vunpack.c.h.b16 %v814
    %v2896 = vunpack.c.l.b16 %v815
    %v2897 = vunpack.c.h.b16 %v815
    %v2898 = vunpack.c.l.b16 %v816
    %v2899 = vunpack.c.h.b16 %v816
    %v2900 = vunpack.c.l.b16 %v817
    %v2901 = vunpack.c.h.b16 %v817
    %v2902 = vunpack.c.l.b16 %v818
    %v2903 = vunpack.c.h.b16 %v818
    %v2904 = vunpack.c.l.b16 %v819
    %v2905 = vunpack.c.h.b16 %v819
    %v2906 = vunpack.c.l.b16 %v820
    %v2907 = vunpack.c.h.b16 %v820
    %v2908 = vunpack.c.l.b16 %v821
    %v2909 = vunpack.c.h.b16 %v821
    %v2910 = vunpack.c.l.b16 %v822
    %v2911 = vunpack.c.h.b16 %v822
    %v2912 = vunpack.c.l.b16 %v823
    %v2913 = vunpack.c.h.b16 %v823
    %v2914 = vunpack.c.l.b16 %v824
    %v2915 = vunpack.c.h.b16 %v824
    %v2916 = vunpack.c.l.b16 %v825
    %v2917 = vunpack.c.h.b16 %v825
    %v2918 = vunpack.c.l.b16 %v826
    %v2919 = vunpack.c.h.b16 %v826
    %v2920 = vunpack.c.l.b16 %v827
    %v2921 = vunpack.c.h.b16 %v827
    %v2922 = vunpack.c.l.b16 %v828
    %v2923 = vunpack.c.h.b16 %v828
    %v2924 = vunpack.c.l.b16 %v829
    %v2925 = vunpack.c.h.b16 %v829
    %v2926 = vunpack.c.l.b16 %v830
    %v2927 = vunpack.c.h.b16 %v830
    %v2928 = vunpack.c.l.b16 %v831
    %v2929 = vunpack.c.h.b16 %v831
    %v2930 = vunpack.c.l.b16 %v832
    %v2931 = vunpack.c.h.b16 %v832
    %v2932 = vunpack.c.l.b16 %v833
    %v2933 = vunpack.c.h.b16 %v833
    %v2934 = vunpack.c.l.b16 %v834
    %v2935 = vunpack.c.h.b16 %v834
    %v2936 = vunpack.c.l.b16 %v835
    %v2937 = vunpack.c.h.b16 %v835
    %v2938 = vunpack.c.l.b16 %v836
    %v2939 = vunpack.c.h.b16 %v836
    %v2940 = vunpack.c.l.b16 %v837
    %v2941 = vunpack.c.h.b16 %v837
    %v2942 = vunpack.c.l.b16 %v838
    %v2943 = vunpack.c.h.b16 %v838
    %v2944 = vunpack.c.l.b16 %v839
    %v2945 = vunpack.c.h.b16 %v839
    %v2946 = vunpack.c.l.b16 %v840
    %v2947 = vunpack.c.h.b16 %v840
    %v2948 = vunpack.c.l.b16 %v841
    %v2949 = vunpack.c.h.b16 %v841
    %v2950 = vunpack.c.l.b16 %v842
    %v2951 = vunpack.c.h.b16 %v842
    %v2952 = vunpack.c.l.b16 %v843
    %v2953 = vunpack.c.h.b16 %v843
    %v2954 = vunpack.c.l.b16 %v844
    %v2955 = vunpack.c.h.b16 %v844
    %v2956 = vunpack.c.l.b16 %v845
    %v2957 = vunpack.c.h.b16 %v845
    %v2958 = vunpack.c.l.b16 %v846
    %v2959 = vunpack.c.h.b16 %v846
    %v2960 = vunpack.c.l.b16 %v847
    %v2961 = vunpack.c.h.b16 %v847
    %v2962 = vunpack.c.l.b16 %v848
    %v2963 = vunpack.c.h.b16 %v848
    %v2964 = vunpack.c.l.b16 %v849
    %v2965 = vunpack.c.h.b16 %v849
    %v2966 = vunpack.c.l.b16 %v850
    %v2967 = vunpack.c.h.b16 %v850
    %v2968 = vunpack.c.l.b16 %v851
    %v2969 = vunpack.c.h.b16 %v851
    %v2970 = vunpack.c.l.b16 %v852
    %v2971 = vunpack.c.h.b16 %v852
    %v2972 = vunpack.c.l.b16 %v853
    %v2973 = vunpack.c.h.b16 %v853
    %v2974 = vunpack.c.l.b16 %v854
    %v2975 = vunpack.c.h.b16 %v854
    %v2976 = vunpack.c.l.b16 %v855
    %v2977 = vunpack.c.h.b16 %v855
    %v2978 = vunpack.c.l.b16 %v856
    %v2979 = vunpack.c.h.b16 %v856
    %v2980 = vunpack.c.l.b16 %v857
    %v2981 = vunpack.c.h.b16 %v857
    %v2982 = vunpack.c.l.b16 %v858
    %v2983 = vunpack.c.h.b16 %v858
    %v2984 = vunpack.c.l.b16 %v859
    %v2985 = vunpack.c.h.b16 %v859
    %v2986 = vunpack.c.l.b16 %v860
    %v2987 = vunpack.c.h.b16 %v860
    %v2988 = vunpack.c.l.b16 %v861
    %v2989 = vunpack.c.h.b16 %v861
    %v2990 = vunpack.c.l.b16 %v862
    %v2991 = vunpack.c.h.b16 %v862
    %v2992 = vunpack.c.l.b16 %v863
    %v2993 = vunpack.c.h.b16 %v863
    %v2994 = vunpack.c.l.b16 %v864
    %v2995 = vunpack.c.h.b16 %v864
    %v2996 = vunpack.c.l.b16 %v865
    %v2997 = vunpack.c.h.b16 %v865
    %v2998 = vunpack.c.l.b16 %v866
    %v2999 = vunpack.c.h.b16 %v866
    %v3000 = vunpack.c.l.b16 %v867
    %v3001 = vunpack.c.h.b16 %v867
    %v3002 = vunpack.c.l.b16 %v868
    %v3003 = vunpack.c.h.b16 %v868
    %v3004 = vunpack.c.l.b16 %v869
    %v3005 = vunpack.c.h.b16 %v869
    %v3006 = vunpack.c.l.b16 %v870
    %v3007 = vunpack.c.h.b16 %v870
    %v3008 = vunpack.c.l.b16 %v871
    %v3009 = vunpack.c.h.b16 %v871
    %v3010 = vunpack.c.l.b16 %v872
    %v3011 = vunpack.c.h.b16 %v872
    %v3012 = vunpack.c.l.b16 %v873
    %v3013 = vunpack.c.h.b16 %v873
    %v3014 = vunpack.c.l.b16 %v874
    %v3015 = vunpack.c.h.b16 %v874
    %v3016 = vunpack.c.l.b16 %v875
    %v3017 = vunpack.c.h.b16 %v875
    %v3018 = vunpack.c.l.b16 %v876
    %v3019 = vunpack.c.h.b16 %v876
    %v3020 = vunpack.c.l.b16 %v877
    %v3021 = vunpack.c.h.b16 %v877
    %v3022 = vunpack.c.l.b16 %v878
    %v3023 = vunpack.c.h.b16 %v878
    %v3024 = vunpack.c.l.b16 %v879
    %v3025 = vunpack.c.h.b16 %v879
    %v3026 = vunpack.c.l.b16 %v880
    %v3027 = vunpack.c.h.b16 %v880
    %v3028 = vunpack.c.l.b16 %v881
    %v3029 = vunpack.c.h.b16 %v881
    %v3030 = vunpack.c.l.b16 %v882
    %v3031 = vunpack.c.h.b16 %v882
    %v3032 = vunpack.c.l.b16 %v883
    %v3033 = vunpack.c.h.b16 %v883
    %v3034 = vunpack.c.l.b16 %v884
    %v3035 = vunpack.c.h.b16 %v884
    %v3036 = vunpack.c.l.b16 %v885
    %v3037 = vunpack.c.h.b16 %v885
    %v3038 = vunpack.c.l.b16 %v886
    %v3039 = vunpack.c.h.b16 %v886
    %v3040 = vunpack.c.l.b16 %v887
    %v3041 = vunpack.c.h.b16 %v887
    %v3042 = vunpack.c.l.b16 %v888
    %v3043 = vunpack.c.h.b16 %v888
    %v3044 = vunpack.c.l.b16 %v889
    %v3045 = vunpack.c.h.b16 %v889
    %v3046 = vunpack.c.l.b16 %v890
    %v3047 = vunpack.c.h.b16 %v890
    %v3048 = vunpack.c.l.b16 %v891
    %v3049 = vunpack.c.h.b16 %v891
    %v3050 = vunpack.c.l.b16 %v892
    %v3051 = vunpack.c.h.b16 %v892
    %v3052 = vunpack.c.l.b16 %v893
    %v3053 = vunpack.c.h.b16 %v893
    %v3054 = vunpack.c.l.b16 %v894
    %v3055 = vunpack.c.h.b16 %v894
    %v3056 = vunpack.c.l.b16 %v895
    %v3057 = vunpack.c.h.b16 %v895
    %v3058 = vunpack.c.l.b16 %v896
    %v3059 = vunpack.c.h.b16 %v896
    %v3060 = vunpack.c.l.b16 %v897
    %v3061 = vunpack.c.h.b16 %v897
    %v3062 = vunpack.c.l.b16 %v898
    %v3063 = vunpack.c.h.b16 %v898
    %v3064 = vunpack.c.l.b16 %v899
    %v3065 = vunpack.c.h.b16 %v899
    %v3066 = vunpack.c.l.b16 %v900
    %v3067 = vunpack.c.h.b16 %v900
    %v3068 = vunpack.c.l.b16 %v901
    %v3069 = vunpack.c.h.b16 %v901
    %v3070 = vunpack.c.l.b16 %v902
    %v3071 = vunpack.c.h.b16 %v902
    %v3072 = vunpack.c.l.b16 %v903
    %v3073 = vunpack.c.h.b16 %v903
    %v3074 = vunpack.c.l.b16 %v904
    %v3075 = vunpack.c.h.b16 %v904
    %v3076 = vunpack.c.l.b16 %v905
    %v3077 = vunpack.c.h.b16 %v905
    %v3078 = vunpack.c.l.b16 %v906
    %v3079 = vunpack.c.h.b16 %v906
    %v3080 = vunpack.c.l.b16 %v907
    %v3081 = vunpack.c.h.b16 %v907
    %v3082 = vunpack.c.l.b16 %v908
    %v3083 = vunpack.c.h.b16 %v908
    %v3084 = vunpack.c.l.b16 %v909
    %v3085 = vunpack.c.h.b16 %v909
    %v3086 = vunpack.c.l.b16 %v910
    %v3087 = vunpack.c.h.b16 %v910
    %v3088 = vunpack.c.l.b16 %v911
    %v3089 = vunpack.c.h.b16 %v911
    %v3090 = vunpack.c.l.b16 %v912
    %v3091 = vunpack.c.h.b16 %v912
    %v3092 = vunpack.c.l.b16 %v913
    %v3093 = vunpack.c.h.b16 %v913
    %v3094 = vunpack.c.l.b16 %v914
    %v3095 = vunpack.c.h.b16 %v914
    %v3096 = vunpack.c.l.b16 %v915
    %v3097 = vunpack.c.h.b16 %v915
    %v3098 = vunpack.c.l.b16 %v916
    %v3099 = vunpack.c.h.b16 %v916
    %v3100 = vunpack.c.l.b16 %v917
    %v3101 = vunpack.c.h.b16 %v917
    %v3102 = vunpack.c.l.b16 %v918
    %v3103 = vunpack.c.h.b16 %v918
    %v3104 = vunpack.c.l.b16 %v919
    %v3105 = vunpack.c.h.b16 %v919
    %v3106 = vunpack.c.l.b16 %v920
    %v3107 = vunpack.c.h.b16 %v920
    %v3108 = vunpack.c.l.b16 %v921
    %v3109 = vunpack.c.h.b16 %v921
    %v3110 = vunpack.c.l.b16 %v922
    %v3111 = vunpack.c.h.b16 %v922
    %v3112 = vunpack.c.l.b16 %v923
    %v3113 = vunpack.c.h.b16 %v923
    %v3114 = vunpack.c.l.b16 %v924
    %v3115 = vunpack.c.h.b16 %v924
    %v3116 = vunpack.c.l.b16 %v925
    %v3117 = vunpack.c.h.b16 %v925
    %v3118 = vunpack.c.l.b16 %v926
    %v3119 = vunpack.c.h.b16 %v926
    %v3120 = vunpack.c.l.b16 %v927
    %v3121 = vunpack.c.h.b16 %v927
    %v3122 = vunpack.c.l.b16 %v928
    %v3123 = vunpack.c.h.b16 %v928
    %v3124 = vunpack.c.l.b16 %v929
    %v3125 = vunpack.c.h.b16 %v929
    %v3126 = vunpack.c.l.b16 %v930
    %v3127 = vunpack.c.h.b16 %v930
    %v3128 = vunpack.c.l.b16 %v931
    %v3129 = vunpack.c.h.b16 %v931
    %v3130 = vunpack.c.l.b16 %v932
    %v3131 = vunpack.c.h.b16 %v932
    %v3132 = vunpack.c.l.b16 %v933
    %v3133 = vunpack.c.h.b16 %v933
    %v3134 = vunpack.c.l.b16 %v934
    %v3135 = vunpack.c.h.b16 %v934
    %v3136 = vunpack.c.l.b16 %v935
    %v3137 = vunpack.c.h.b16 %v935
    %v3138 = vunpack.c.l.b16 %v936
    %v3139 = vunpack.c.h.b16 %v936
    %v3140 = vunpack.c.l.b16 %v937
    %v3141 = vunpack.c.h.b16 %v937
    %v3142 = vunpack.c.l.b16 %v938
    %v3143 = vunpack.c.h.b16 %v938
    %v3144 = vunpack.c.l.b16 %v939
    %v3145 = vunpack.c.h.b16 %v939
    %v3146 = vunpack.c.l.b16 %v940
    %v3147 = vunpack.c.h.b16 %v940
    %v3148 = vunpack.c.l.b16 %v941
    %v3149 = vunpack.c.h.b16 %v941
    %v3150 = vunpack.c.l.b16 %v942
    %v3151 = vunpack.c.h.b16 %v942
    %v3152 = vunpack.c.l.b16 %v943
    %v3153 = vunpack.c.h.b16 %v943
    %v3154 = vunpack.c.l.b16 %v944
    %v3155 = vunpack.c.h.b16 %v944
    %v3156 = vunpack.c.l.b16 %v945
    %v3157 = vunpack.c.h.b16 %v945
    %v3158 = vunpack.c.l.b16 %v946
    %v3159 = vunpack.c.h.b16 %v946
    %v3160 = vunpack.c.l.b16 %v947
    %v3161 = vunpack.c.h.b16 %v947
    %v3162 = vunpack.c.l.b16 %v948
    %v3163 = vunpack.c.h.b16 %v948
    %v3164 = vunpack.c.l.b16 %v949
    %v3165 = vunpack.c.h.b16 %v949
    %v3166 = vunpack.c.l.b16 %v950
    %v3167 = vunpack.c.h.b16 %v950
    %v3168 = vunpack.c.l.b16 %v951
    %v3169 = vunpack.c.h.b16 %v951
    %v3170 = vunpack.c.l.b16 %v952
    %v3171 = vunpack.c.h.b16 %v952
    %v3172 = vunpack.c.l.b16 %v953
    %v3173 = vunpack.c.h.b16 %v953
    %v3174 = vunpack.c.l.b16 %v954
    %v3175 = vunpack.c.h.b16 %v954
    %v3176 = vunpack.c.l.b16 %v955
    %v3177 = vunpack.c.h.b16 %v955
    %v3178 = vunpack.c.l.b16 %v956
    %v3179 = vunpack.c.h.b16 %v956
    %v3180 = vunpack.c.l.b16 %v957
    %v3181 = vunpack.c.h.b16 %v957
    %v3182 = vunpack.c.l.b16 %v958
    %v3183 = vunpack.c.h.b16 %v958
    %v3184 = vunpack.c.l.b16 %v959
    %v3185 = vunpack.c.h.b16 %v959
    %v3186 = vunpack.c.l.b16 %v960
    %v3187 = vunpack.c.h.b16 %v960
    %v3188 = vunpack.c.l.b16 %v961
    %v3189 = vunpack.c.h.b16 %v961
    %v3190 = vunpack.c.l.b16 %v962
    %v3191 = vunpack.c.h.b16 %v962
    %v3192 = vunpack.c.l.b16 %v963
    %v3193 = vunpack.c.h.b16 %v963
    %v3194 = vunpack.c.l.b16 %v964
    %v3195 = vunpack.c.h.b16 %v964
    %v3196 = vunpack.c.l.b16 %v965
    %v3197 = vunpack.c.h.b16 %v965
    %v3198 = vunpack.c.l.b16 %v966
    %v3199 = vunpack.c.h.b16 %v966
    %v3200 = vunpack.c.l.b16 %v967
    %v3201 = vunpack.c.h.b16 %v967
    %v3202 = vunpack.c.l.b16 %v968
    %v3203 = vunpack.c.h.b16 %v968
    %v3204 = vunpack.c.l.b16 %v969
    %v3205 = vunpack.c.h.b16 %v969
    %v3206 = vunpack.c.l.b16 %v970
    %v3207 = vunpack.c.h.b16 %v970
    %v3208 = vunpack.c.l.b16 %v971
    %v3209 = vunpack.c.h.b16 %v971
    %v3210 = vunpack.c.l.b16 %v972
    %v3211 = vunpack.c.h.b16 %v972
    %v3212 = vunpack.c.l.b16 %v973
    %v3213 = vunpack.c.h.b16 %v973
    %v3214 = vunpack.c.l.b16 %v974
    %v3215 = vunpack.c.h.b16 %v974
    %v3216 = vunpack.c.l.b16 %v975
    %v3217 = vunpack.c.h.b16 %v975
    %v3218 = vunpack.c.l.b16 %v976
    %v3219 = vunpack.c.h.b16 %v976
    %v3220 = vunpack.c.l.b16 %v977
    %v3221 = vunpack.c.h.b16 %v977
    %v3222 = vunpack.c.l.b16 %v978
    %v3223 = vunpack.c.h.b16 %v978
    %v3224 = vunpack.c.l.b16 %v979
    %v3225 = vunpack.c.h.b16 %v979
    %v3226 = vunpack.c.l.b16 %v980
    %v3227 = vunpack.c.h.b16 %v980
    %v3228 = vunpack.c.l.b16 %v981
    %v3229 = vunpack.c.h.b16 %v981
    %v3230 = vunpack.c.l.b16 %v982
    %v3231 = vunpack.c.h.b16 %v982
    %v3232 = vunpack.c.l.b16 %v983
    %v3233 = vunpack.c.h.b16 %v983
    %v3234 = vunpack.c.l.b16 %v984
    %v3235 = vunpack.c.h.b16 %v984
    %v3236 = vunpack.c.l.b16 %v985
    %v3237 = vunpack.c.h.b16 %v985
    %v3238 = vunpack.c.l.b16 %v986
    %v3239 = vunpack.c.h.b16 %v986
    %v3240 = vunpack.c.l.b16 %v987
    %v3241 = vunpack.c.h.b16 %v987
    %v3242 = vunpack.c.l.b16 %v988
    %v3243 = vunpack.c.h.b16 %v988
    %v3244 = vunpack.c.l.b16 %v989
    %v3245 = vunpack.c.h.b16 %v989
    %v3246 = vunpack.c.l.b16 %v990
    %v3247 = vunpack.c.h.b16 %v990
    %v3248 = vunpack.c.l.b16 %v991
    %v3249 = vunpack.c.h.b16 %v991
    %v3250 = vunpack.c.l.b16 %v992
    %v3251 = vunpack.c.h.b16 %v992
    %v3252 = vunpack.c.l.b16 %v993
    %v3253 = vunpack.c.h.b16 %v993
    %v3254 = vunpack.c.l.b16 %v994
    %v3255 = vunpack.c.h.b16 %v994
    %v3256 = vunpack.c.l.b16 %v995
    %v3257 = vunpack.c.h.b16 %v995
    %v3258 = vunpack.c.l.b16 %v996
    %v3259 = vunpack.c.h.b16 %v996
    %v3260 = vunpack.c.l.b16 %v997
    %v3261 = vunpack.c.h.b16 %v997
    %v3262 = vunpack.c.l.b16 %v998
    %v3263 = vunpack.c.h.b16 %v998
    %v3264 = vunpack.c.l.b16 %v999
    %v3265 = vunpack.c.h.b16 %v999
    %v3266 = vunpack.c.l.b16 %v1000
    %v3267 = vunpack.c.h.b16 %v1000
    %v3268 = vunpack.c.l.b16 %v1001
    %v3269 = vunpack.c.h.b16 %v1001
    %v3270 = vunpack.c.l.b16 %v1002
    %v3271 = vunpack.c.h.b16 %v1002
    %v3272 = vunpack.c.l.b16 %v1003
    %v3273 = vunpack.c.h.b16 %v1003
    %v3274 = vunpack.c.l.b16 %v1004
    %v3275 = vunpack.c.h.b16 %v1004
    %v3276 = vunpack.c.l.b16 %v1005
    %v3277 = vunpack.c.h.b16 %v1005
    %v3278 = vunpack.c.l.b16 %v1006
    %v3279 = vunpack.c.h.b16 %v1006
    %v3280 = vunpack.c.l.b16 %v1007
    %v3281 = vunpack.c.h.b16 %v1007
    %v3282 = vunpack.c.l.b16 %v1008
    %v3283 = vunpack.c.h.b16 %v1008
    %v3284 = vunpack.c.l.b16 %v1009
    %v3285 = vunpack.c.h.b16 %v1009
    %v3286 = vunpack.c.l.b16 %v1010
    %v3287 = vunpack.c.h.b16 %v1010
    %v3288 = vunpack.c.l.b16 %v1011
    %v3289 = vunpack.c.h.b16 %v1011
    %v3290 = vunpack.c.l.b16 %v1012
    %v3291 = vunpack.c.h.b16 %v1012
    %v3292 = vunpack.c.l.b16 %v1013
    %v3293 = vunpack.c.h.b16 %v1013
    %v3294 = vunpack.c.l.b16 %v1014
    %v3295 = vunpack.c.h.b16 %v1014
    %v3296 = vunpack.c.l.b16 %v1015
    %v3297 = vunpack.c.h.b16 %v1015
    %v3298 = vunpack.c.l.b16 %v1016
    %v3299 = vunpack.c.h.b16 %v1016
    %v3300 = vunpack.c.l.b16 %v1017
    %v3301 = vunpack.c.h.b16 %v1017
    %v3302 = vunpack.c.l.b16 %v1018
    %v3303 = vunpack.c.h.b16 %v1018
    %v3304 = vunpack.c.l.b16 %v1019
    %v3305 = vunpack.c.h.b16 %v1019
    %v3306 = vunpack.c.l.b16 %v1020
    %v3307 = vunpack.c.h.b16 %v1020
    %v3308 = vunpack.c.l.b16 %v1021
    %v3309 = vunpack.c.h.b16 %v1021
    %v3310 = vunpack.c.l.b16 %v1022
    %v3311 = vunpack.c.h.b16 %v1022
    %v3312 = vunpack.c.l.b16 %v1023
    %v3313 = vunpack.c.h.b16 %v1023
    %v3314 = vunpack.c.l.b16 %v1024
    %v3315 = vunpack.c.h.b16 %v1024
    %v3316 = vunpack.c.l.b16 %v1025
    %v3317 = vunpack.c.h.b16 %v1025
    %v3318 = vunpack.c.l.b16 %v1026
    %v3319 = vunpack.c.h.b16 %v1026
    %v3320 = vunpack.c.l.b16 %v1027
    %v3321 = vunpack.c.h.b16 %v1027
    %v3322 = vunpack.c.l.b16 %v1028
    %v3323 = vunpack.c.h.b16 %v1028
    %v3324 = vunpack.c.l.b16 %v1029
    %v3325 = vunpack.c.h.b16 %v1029
    %v3326 = vunpack.c.l.b16 %v1030
    %v3327 = vunpack.c.h.b16 %v1030
    %v3328 = vunpack.c.l.b16 %v1031
    %v3329 = vunpack.c.h.b16 %v1031
    %v3330 = vunpack.c.l.b16 %v1032
    %v3331 = vunpack.c.h.b16 %v1032
    %v3332 = vunpack.c.l.b16 %v1033
    %v3333 = vunpack.c.h.b16 %v1033
    %v3334 = vunpack.c.l.b16 %v1034
    %v3335 = vunpack.c.h.b16 %v1034
    %v3336 = vunpack.c.l.b16 %v1035
    %v3337 = vunpack.c.h.b16 %v1035
    %v3338 = vunpack.c.l.b16 %v1036
    %v3339 = vunpack.c.h.b16 %v1036
    %v3340 = vunpack.c.l.b16 %v1037
    %v3341 = vunpack.c.h.b16 %v1037
    %v3342 = vunpack.c.l.b16 %v1038
    %v3343 = vunpack.c.h.b16 %v1038
    %v3344 = vunpack.c.l.b16 %v1039
    %v3345 = vunpack.c.h.b16 %v1039
    %v3346 = vunpack.c.l.b16 %v1040
    %v3347 = vunpack.c.h.b16 %v1040
    %v3348 = vunpack.c.l.b16 %v1041
    %v3349 = vunpack.c.h.b16 %v1041
    %v3350 = vunpack.c.l.b16 %v1042
    %v3351 = vunpack.c.h.b16 %v1042
    %v3352 = vunpack.c.l.b16 %v1043
    %v3353 = vunpack.c.h.b16 %v1043
    %v3354 = vunpack.c.l.b16 %v1044
    %v3355 = vunpack.c.h.b16 %v1044
    %v3356 = vunpack.c.l.b16 %v1045
    %v3357 = vunpack.c.h.b16 %v1045
    %v3358 = vunpack.c.l.b16 %v1046
    %v3359 = vunpack.c.h.b16 %v1046
    %v3360 = vunpack.c.l.b16 %v1047
    %v3361 = vunpack.c.h.b16 %v1047
    %v3362 = vunpack.c.l.b16 %v1048
    %v3363 = vunpack.c.h.b16 %v1048
    %v3364 = vunpack.c.l.b16 %v1049
    %v3365 = vunpack.c.h.b16 %v1049
    %v3366 = vunpack.c.l.b16 %v1050
    %v3367 = vunpack.c.h.b16 %v1050
    %v3368 = vunpack.c.l.b16 %v1051
    %v3369 = vunpack.c.h.b16 %v1051
    %v3370 = vunpack.c.l.b16 %v1052
    %v3371 = vunpack.c.h.b16 %v1052
    %v3372 = vunpack.c.l.b16 %v1053
    %v3373 = vunpack.c.h.b16 %v1053
    %v3374 = vunpack.c.l.b16 %v1054
    %v3375 = vunpack.c.h.b16 %v1054
    %v3376 = vunpack.c.l.b16 %v1055
    %v3377 = vunpack.c.h.b16 %v1055
    %v3378 = vunpack.c.l.b16 %v1056
    %v3379 = vunpack.c.h.b16 %v1056
    %v3380 = vunpack.c.l.b16 %v1057
    %v3381 = vunpack.c.h.b16 %v1057
    %v3382 = vunpack.c.l.b16 %v1058
    %v3383 = vunpack.c.h.b16 %v1058
    %v3384 = vunpack.c.l.b16 %v1059
    %v3385 = vunpack.c.h.b16 %v1059
    %v3386 = vpack.c.b16 %v1854, %v1850
    %v3387 = vpack.c.b16 %v1855, %v1851
    %v3388 = vpack.c.b16 %v1856, %v1852
    %v3389 = vpack.c.b16 %v1857, %v1853
    %v3390 = vpack.c.b16 %v1862, %v1858
    %v3391 = vpack.c.b16 %v1863, %v1859
    %v3392 = vpack.c.b16 %v1864, %v1860
    %v3393 = vpack.c.b16 %v1865, %v1861
    %v3394 = vpack.c.b16 %v1870, %v1866
    %v3395 = vpack.c.b16 %v1871, %v1867
    %v3396 = vpack.c.b16 %v1872, %v1868
    %v3397 = vpack.c.b16 %v1873, %v1869
    %v3398 = vpack.c.b16 %v1878, %v1874
    %v3399 = vpack.c.b16 %v1879, %v1875
    %v3400 = vpack.c.b16 %v1880, %v1876
    %v3401 = vpack.c.b16 %v1881, %v1877
    %v3402 = vpack.c.b16 %v1886, %v1882
    %v3403 = vpack.c.b16 %v1887, %v1883
    %v3404 = vpack.c.b16 %v1888, %v1884
    %v3405 = vpack.c.b16 %v1889, %v1885
    %v3406 = vpack.c.b16 %v1894, %v1890
    %v3407 = vpack.c.b16 %v1895, %v1891
    %v3408 = vpack.c.b16 %v1896, %v1892
    %v3409 = vpack.c.b16 %v1897, %v1893
    %v3410 = vpack.c.b16 %v1902, %v1898
    %v3411 = vpack.c.b16 %v1903, %v1899
    %v3412 = vpack.c.b16 %v1904, %v1900
    %v3413 = vpack.c.b16 %v1905, %v1901
    %v3414 = vpack.c.b16 %v1910, %v1906
    %v3415 = vpack.c.b16 %v1911, %v1907
    %v3416 = vpack.c.b16 %v1912, %v1908
    %v3417 = vpack.c.b16 %v1913, %v1909
    %v3418 = vpack.c.b16 %v1918, %v1914
    %v3419 = vpack.c.b16 %v1919, %v1915
    %v3420 = vpack.c.b16 %v1920, %v1916
    %v3421 = vpack.c.b16 %v1921, %v1917
    %v3422 = vpack.c.b16 %v1926, %v1922
    %v3423 = vpack.c.b16 %v1927, %v1923
    %v3424 = vpack.c.b16 %v1928, %v1924
    %v3425 = vpack.c.b16 %v1929, %v1925
    %v3426 = vpack.c.b16 %v1934, %v1930
    %v3427 = vpack.c.b16 %v1935, %v1931
    %v3428 = vpack.c.b16 %v1936, %v1932
    %v3429 = vpack.c.b16 %v1937, %v1933
    %v3430 = vpack.c.b16 %v1942, %v1938
    %v3431 = vpack.c.b16 %v1943, %v1939
    %v3432 = vpack.c.b16 %v1944, %v1940
    %v3433 = vpack.c.b16 %v1945, %v1941
    %v3434 = vpack.c.b16 %v1950, %v1946
    %v3435 = vpack.c.b16 %v1951, %v1947
    %v3436 = vpack.c.b16 %v1952, %v1948
    %v3437 = vpack.c.b16 %v1953, %v1949
    %v3438 = vpack.c.b16 %v1958, %v1954
    %v3439 = vpack.c.b16 %v1959, %v1955
    %v3440 = vpack.c.b16 %v1960, %v1956
    %v3441 = vpack.c.b16 %v1961, %v1957
    %v3442 = vpack.c.b16 %v1966, %v1962
    %v3443 = vpack.c.b16 %v1967, %v1963
    %v3444 = vpack.c.b16 %v1968, %v1964
    %v3445 = vpack.c.b16 %v1969, %v1965
    %v3446 = vpack.c.b16 %v1974, %v1970
    %v3447 = vpack.c.b16 %v1975, %v1971
    %v3448 = vpack.c.b16 %v1976, %v1972
    %v3449 = vpack.c.b16 %v1977, %v1973
    %v3450 = vpack.c.b16 %v1982, %v1978
    %v3451 = vpack.c.b16 %v1983, %v1979
    %v3452 = vpack.c.b16 %v1984, %v1980
    %v3453 = vpack.c.b16 %v1985, %v1981
    %v3454 = vpack.c.b16 %v1990, %v1986
    %v3455 = vpack.c.b16 %v1991, %v1987
    %v3456 = vpack.c.b16 %v1992, %v1988
    %v3457 = vpack.c.b16 %v1993, %v1989
    %v3458 = vpack.c.b16 %v1998, %v1994
    %v3459 = vpack.c.b16 %v1999, %v1995
    %v3460 = vpack.c.b16 %v2000, %v1996
    %v3461 = vpack.c.b16 %v2001, %v1997
    %v3462 = vpack.c.b16 %v2006, %v2002
    %v3463 = vpack.c.b16 %v2007, %v2003
    %v3464 = vpack.c.b16 %v2008, %v2004
    %v3465 = vpack.c.b16 %v2009, %v2005
    %v3466 = vpack.c.b16 %v2014, %v2010
    %v3467 = vpack.c.b16 %v2015, %v2011
    %v3468 = vpack.c.b16 %v2016, %v2012
    %v3469 = vpack.c.b16 %v2017, %v2013
    %v3470 = vpack.c.b16 %v2022, %v2018
    %v3471 = vpack.c.b16 %v2023, %v2019
    %v3472 = vpack.c.b16 %v2024, %v2020
    %v3473 = vpack.c.b16 %v2025, %v2021
    %v3474 = vpack.c.b16 %v2030, %v2026
    %v3475 = vpack.c.b16 %v2031, %v2027
    %v3476 = vpack.c.b16 %v2032, %v2028
    %v3477 = vpack.c.b16 %v2033, %v2029
    %v3478 = vpack.c.b16 %v2038, %v2034
    %v3479 = vpack.c.b16 %v2039, %v2035
    %v3480 = vpack.c.b16 %v2040, %v2036
    %v3481 = vpack.c.b16 %v2041, %v2037
    %v3482 = vpack.c.b16 %v2046, %v2042
    %v3483 = vpack.c.b16 %v2047, %v2043
    %v3484 = vpack.c.b16 %v2048, %v2044
    %v3485 = vpack.c.b16 %v2049, %v2045
    %v3486 = vpack.c.b16 %v2054, %v2050
    %v3487 = vpack.c.b16 %v2055, %v2051
    %v3488 = vpack.c.b16 %v2056, %v2052
    %v3489 = vpack.c.b16 %v2057, %v2053
    %v3490 = vpack.c.b16 %v2062, %v2058
    %v3491 = vpack.c.b16 %v2063, %v2059
    %v3492 = vpack.c.b16 %v2064, %v2060
    %v3493 = vpack.c.b16 %v2065, %v2061
    %v3494 = vpack.c.b16 %v2070, %v2066
    %v3495 = vpack.c.b16 %v2071, %v2067
    %v3496 = vpack.c.b16 %v2072, %v2068
    %v3497 = vpack.c.b16 %v2073, %v2069
    %v3498 = vpack.c.b16 %v2078, %v2074
    %v3499 = vpack.c.b16 %v2079, %v2075
    %v3500 = vpack.c.b16 %v2080, %v2076
    %v3501 = vpack.c.b16 %v2081, %v2077
    %v3502 = vpack.c.b16 %v2086, %v2082
    %v3503 = vpack.c.b16 %v2087, %v2083
    %v3504 = vpack.c.b16 %v2088, %v2084
    %v3505 = vpack.c.b16 %v2089, %v2085
    %v3506 = vpack.c.b16 %v2094, %v2090
    %v3507 = vpack.c.b16 %v2095, %v2091
    %v3508 = vpack.c.b16 %v2096, %v2092
    %v3509 = vpack.c.b16 %v2097, %v2093
    %v3510 = vpack.c.b16 %v2102, %v2098
    %v3511 = vpack.c.b16 %v2103, %v2099
    %v3512 = vpack.c.b16 %v2104, %v2100
    %v3513 = vpack.c.b16 %v2105, %v2101
    %v3514 = vpack.c.b16 %v2110, %v2106
    %v3515 = vpack.c.b16 %v2111, %v2107
    %v3516 = vpack.c.b16 %v2112, %v2108
    %v3517 = vpack.c.b16 %v2113, %v2109
    %v3518 = vpack.c.b16 %v2118, %v2114
    %v3519 = vpack.c.b16 %v2119, %v2115
    %v3520 = vpack.c.b16 %v2120, %v2116
    %v3521 = vpack.c.b16 %v2121, %v2117
    %v3522 = vpack.c.b16 %v2126, %v2122
    %v3523 = vpack.c.b16 %v2127, %v2123
    %v3524 = vpack.c.b16 %v2128, %v2124
    %v3525 = vpack.c.b16 %v2129, %v2125
    %v3526 = vpack.c.b16 %v2134, %v2130
    %v3527 = vpack.c.b16 %v2135, %v2131
    %v3528 = vpack.c.b16 %v2136, %v2132
    %v3529 = vpack.c.b16 %v2137, %v2133
    %v3530 = vpack.c.b16 %v2142, %v2138
    %v3531 = vpack.c.b16 %v2143, %v2139
    %v3532 = vpack.c.b16 %v2144, %v2140
    %v3533 = vpack.c.b16 %v2145, %v2141
    %v3534 = vpack.c.b16 %v2150, %v2146
    %v3535 = vpack.c.b16 %v2151, %v2147
    %v3536 = vpack.c.b16 %v2152, %v2148
    %v3537 = vpack.c.b16 %v2153, %v2149
    %v3538 = vpack.c.b16 %v2158, %v2154
    %v3539 = vpack.c.b16 %v2159, %v2155
    %v3540 = vpack.c.b16 %v2160, %v2156
    %v3541 = vpack.c.b16 %v2161, %v2157
    %v3542 = vpack.c.b16 %v2166, %v2162
    %v3543 = vpack.c.b16 %v2167, %v2163
    %v3544 = vpack.c.b16 %v2168, %v2164
    %v3545 = vpack.c.b16 %v2169, %v2165
    %v3546 = vpack.c.b16 %v2174, %v2170
    %v3547 = vpack.c.b16 %v2175, %v2171
    %v3548 = vpack.c.b16 %v2176, %v2172
    %v3549 = vpack.c.b16 %v2177, %v2173
    %v3550 = vpack.c.b16 %v2182, %v2178
    %v3551 = vpack.c.b16 %v2183, %v2179
    %v3552 = vpack.c.b16 %v2184, %v2180
    %v3553 = vpack.c.b16 %v2185, %v2181
    %v3554 = vpack.c.b16 %v2190, %v2186
    %v3555 = vpack.c.b16 %v2191, %v2187
    %v3556 = vpack.c.b16 %v2192, %v2188
    %v3557 = vpack.c.b16 %v2193, %v2189
    %v3558 = vpack.c.b16 %v2198, %v2194
    %v3559 = vpack.c.b16 %v2199, %v2195
    %v3560 = vpack.c.b16 %v2200, %v2196
    %v3561 = vpack.c.b16 %v2201, %v2197
    %v3562 = vpack.c.b16 %v2206, %v2202
    %v3563 = vpack.c.b16 %v2207, %v2203
    %v3564 = vpack.c.b16 %v2208, %v2204
    %v3565 = vpack.c.b16 %v2209, %v2205
    %v3566 = vpack.c.b16 %v2214, %v2210
    %v3567 = vpack.c.b16 %v2215, %v2211
    %v3568 = vpack.c.b16 %v2216, %v2212
    %v3569 = vpack.c.b16 %v2217, %v2213
    %v3570 = vpack.c.b16 %v2222, %v2218
    %v3571 = vpack.c.b16 %v2223, %v2219
    %v3572 = vpack.c.b16 %v2224, %v2220
    %v3573 = vpack.c.b16 %v2225, %v2221
    %v3574 = vpack.c.b16 %v2230, %v2226
    %v3575 = vpack.c.b16 %v2231, %v2227
    %v3576 = vpack.c.b16 %v2232, %v2228
    %v3577 = vpack.c.b16 %v2233, %v2229
    %v3578 = vpack.c.b16 %v2238, %v2234
    %v3579 = vpack.c.b16 %v2239, %v2235
    %v3580 = vpack.c.b16 %v2240, %v2236
    %v3581 = vpack.c.b16 %v2241, %v2237
    %v3582 = vpack.c.b16 %v2246, %v2242
    %v3583 = vpack.c.b16 %v2247, %v2243
    %v3584 = vpack.c.b16 %v2248, %v2244
    %v3585 = vpack.c.b16 %v2249, %v2245
    %v3586 = vpack.c.b16 %v2254, %v2250
    %v3587 = vpack.c.b16 %v2255, %v2251
    %v3588 = vpack.c.b16 %v2256, %v2252
    %v3589 = vpack.c.b16 %v2257, %v2253
    %v3590 = vpack.c.b16 %v2262, %v2258
    %v3591 = vpack.c.b16 %v2263, %v2259
    %v3592 = vpack.c.b16 %v2264, %v2260
    %v3593 = vpack.c.b16 %v2265, %v2261
    %v3594 = vpack.c.b16 %v2270, %v2266
    %v3595 = vpack.c.b16 %v2271, %v2267
    %v3596 = vpack.c.b16 %v2272, %v2268
    %v3597 = vpack.c.b16 %v2273, %v2269
    %v3598 = vpack.c.b16 %v2278, %v2274
    %v3599 = vpack.c.b16 %v2279, %v2275
    %v3600 = vpack.c.b16 %v2280, %v2276
    %v3601 = vpack.c.b16 %v2281, %v2277
    %v3602 = vpack.c.b16 %v2286, %v2282
    %v3603 = vpack.c.b16 %v2287, %v2283
    %v3604 = vpack.c.b16 %v2288, %v2284
    %v3605 = vpack.c.b16 %v2289, %v2285
    %v3606 = vpack.c.b16 %v2294, %v2290
    %v3607 = vpack.c.b16 %v2295, %v2291
    %v3608 = vpack.c.b16 %v2296, %v2292
    %v3609 = vpack.c.b16 %v2297, %v2293
    %v3610 = vpack.c.b16 %v2302, %v2298
    %v3611 = vpack.c.b16 %v2303, %v2299
    %v3612 = vpack.c.b16 %v2304, %v2300
    %v3613 = vpack.c.b16 %v2305, %v2301
    %v3614 = vpack.c.b16 %v2310, %v2306
    %v3615 = vpack.c.b16 %v2311, %v2307
    %v3616 = vpack.c.b16 %v2312, %v2308
    %v3617 = vpack.c.b16 %v2313, %v2309
    %v3618 = vpack.c.b16 %v2318, %v2314
    %v3619 = vpack.c.b16 %v2319, %v2315
    %v3620 = vpack.c.b16 %v2320, %v2316
    %v3621 = vpack.c.b16 %v2321, %v2317
    %v3622 = vpack.c.b16 %v2326, %v2322
    %v3623 = vpack.c.b16 %v2327, %v2323
    %v3624 = vpack.c.b16 %v2328, %v2324
    %v3625 = vpack.c.b16 %v2329, %v2325
    %v3626 = vpack.c.b16 %v2334, %v2330
    %v3627 = vpack.c.b16 %v2335, %v2331
    %v3628 = vpack.c.b16 %v2336, %v2332
    %v3629 = vpack.c.b16 %v2337, %v2333
    %v3630 = vpack.c.b16 %v2342, %v2338
    %v3631 = vpack.c.b16 %v2343, %v2339
    %v3632 = vpack.c.b16 %v2344, %v2340
    %v3633 = vpack.c.b16 %v2345, %v2341
    %v3634 = vpack.c.b16 %v2350, %v2346
    %v3635 = vpack.c.b16 %v2351, %v2347
    %v3636 = vpack.c.b16 %v2352, %v2348
    %v3637 = vpack.c.b16 %v2353, %v2349
    %v3638 = vpack.c.b16 %v2358, %v2354
    %v3639 = vpack.c.b16 %v2359, %v2355
    %v3640 = vpack.c.b16 %v2360, %v2356
    %v3641 = vpack.c.b16 %v2361, %v2357
    %v3642 = vpack.c.b16 %v2366, %v2362
    %v3643 = vpack.c.b16 %v2367, %v2363
    %v3644 = vpack.c.b16 %v2368, %v2364
    %v3645 = vpack.c.b16 %v2369, %v2365
    %v3646 = vpack.c.b16 %v2374, %v2370
    %v3647 = vpack.c.b16 %v2375, %v2371
    %v3648 = vpack.c.b16 %v2376, %v2372
    %v3649 = vpack.c.b16 %v2377, %v2373
    %v3650 = vpack.c.b16 %v2382, %v2378
    %v3651 = vpack.c.b16 %v2383, %v2379
    %v3652 = vpack.c.b16 %v2384, %v2380
    %v3653 = vpack.c.b16 %v2385, %v2381
    %v3654 = vpack.c.b16 %v2390, %v2386
    %v3655 = vpack.c.b16 %v2391, %v2387
    %v3656 = vpack.c.b16 %v2392, %v2388
    %v3657 = vpack.c.b16 %v2393, %v2389
    %v3658 = vpack.c.b16 %v2398, %v2394
    %v3659 = vpack.c.b16 %v2399, %v2395
    %v3660 = vpack.c.b16 %v2400, %v2396
    %v3661 = vpack.c.b16 %v2401, %v2397
    %v3662 = vpack.c.b16 %v2406, %v2402
    %v3663 = vpack.c.b16 %v2407, %v2403
    %v3664 = vpack.c.b16 %v2408, %v2404
    %v3665 = vpack.c.b16 %v2409, %v2405
    %v3666 = vpack.c.b16 %v2414, %v2410
    %v3667 = vpack.c.b16 %v2415, %v2411
    %v3668 = vpack.c.b16 %v2416, %v2412
    %v3669 = vpack.c.b16 %v2417, %v2413
    %v3670 = vpack.c.b16 %v2422, %v2418
    %v3671 = vpack.c.b16 %v2423, %v2419
    %v3672 = vpack.c.b16 %v2424, %v2420
    %v3673 = vpack.c.b16 %v2425, %v2421
    %v3674 = vpack.c.b16 %v2430, %v2426
    %v3675 = vpack.c.b16 %v2431, %v2427
    %v3676 = vpack.c.b16 %v2432, %v2428
    %v3677 = vpack.c.b16 %v2433, %v2429
    %v3678 = vpack.c.b16 %v2438, %v2434
    %v3679 = vpack.c.b16 %v2439, %v2435
    %v3680 = vpack.c.b16 %v2440, %v2436
    %v3681 = vpack.c.b16 %v2441, %v2437
    %v3682 = vpack.c.b16 %v2446, %v2442
    %v3683 = vpack.c.b16 %v2447, %v2443
    %v3684 = vpack.c.b16 %v2448, %v2444
    %v3685 = vpack.c.b16 %v2449, %v2445
    %v3686 = vpack.c.b16 %v2454, %v2450
    %v3687 = vpack.c.b16 %v2455, %v2451
    %v3688 = vpack.c.b16 %v2456, %v2452
    %v3689 = vpack.c.b16 %v2457, %v2453
    %v3690 = vpack.c.b16 %v2462, %v2458
    %v3691 = vpack.c.b16 %v2463, %v2459
    %v3692 = vpack.c.b16 %v2464, %v2460
    %v3693 = vpack.c.b16 %v2465, %v2461
    %v3694 = vpack.c.b16 %v2470, %v2466
    %v3695 = vpack.c.b16 %v2471, %v2467
    %v3696 = vpack.c.b16 %v2472, %v2468
    %v3697 = vpack.c.b16 %v2473, %v2469
    %v3698 = vpack.c.b16 %v2478, %v2474
    %v3699 = vpack.c.b16 %v2479, %v2475
    %v3700 = vpack.c.b16 %v2480, %v2476
    %v3701 = vpack.c.b16 %v2481, %v2477
    %v3702 = vpack.c.b16 %v2486, %v2482
    %v3703 = vpack.c.b16 %v2487, %v2483
    %v3704 = vpack.c.b16 %v2488, %v2484
    %v3705 = vpack.c.b16 %v2489, %v2485
    %v3706 = vpack.c.b16 %v2494, %v2490
    %v3707 = vpack.c.b16 %v2495, %v2491
    %v3708 = vpack.c.b16 %v2496, %v2492
    %v3709 = vpack.c.b16 %v2497, %v2493
    %v3710 = vpack.c.b16 %v2502, %v2498
    %v3711 = vpack.c.b16 %v2503, %v2499
    %v3712 = vpack.c.b16 %v2504, %v2500
    %v3713 = vpack.c.b16 %v2505, %v2501
    %v3714 = vpack.c.b16 %v2510, %v2506
    %v3715 = vpack.c.b16 %v2511, %v2507
    %v3716 = vpack.c.b16 %v2512, %v2508
    %v3717 = vpack.c.b16 %v2513, %v2509
    %v3718 = vpack.c.b16 %v2518, %v2514
    %v3719 = vpack.c.b16 %v2519, %v2515
    %v3720 = vpack.c.b16 %v2520, %v2516
    %v3721 = vpack.c.b16 %v2521, %v2517
    %v3722 = vpack.c.b16 %v2526, %v2522
    %v3723 = vpack.c.b16 %v2527, %v2523
    %v3724 = vpack.c.b16 %v2528, %v2524
    %v3725 = vpack.c.b16 %v2529, %v2525
    %v3726 = vpack.c.b16 %v2534, %v2530
    %v3727 = vpack.c.b16 %v2535, %v2531
    %v3728 = vpack.c.b16 %v2536, %v2532
    %v3729 = vpack.c.b16 %v2537, %v2533
    %v3730 = vpack.c.b16 %v2542, %v2538
    %v3731 = vpack.c.b16 %v2543, %v2539
    %v3732 = vpack.c.b16 %v2544, %v2540
    %v3733 = vpack.c.b16 %v2545, %v2541
    %v3734 = vpack.c.b16 %v2550, %v2546
    %v3735 = vpack.c.b16 %v2551, %v2547
    %v3736 = vpack.c.b16 %v2552, %v2548
    %v3737 = vpack.c.b16 %v2553, %v2549
    %v3738 = vpack.c.b16 %v2558, %v2554
    %v3739 = vpack.c.b16 %v2559, %v2555
    %v3740 = vpack.c.b16 %v2560, %v2556
    %v3741 = vpack.c.b16 %v2561, %v2557
    %v3742 = vpack.c.b16 %v2566, %v2562
    %v3743 = vpack.c.b16 %v2567, %v2563
    %v3744 = vpack.c.b16 %v2568, %v2564
    %v3745 = vpack.c.b16 %v2569, %v2565
    %v3746 = vpack.c.b16 %v2574, %v2570
    %v3747 = vpack.c.b16 %v2575, %v2571
    %v3748 = vpack.c.b16 %v2576, %v2572
    %v3749 = vpack.c.b16 %v2577, %v2573
    %v3750 = vpack.c.b16 %v2582, %v2578
    %v3751 = vpack.c.b16 %v2583, %v2579
    %v3752 = vpack.c.b16 %v2584, %v2580
    %v3753 = vpack.c.b16 %v2585, %v2581
    %v3754 = vpack.c.b16 %v2590, %v2586
    %v3755 = vpack.c.b16 %v2591, %v2587
    %v3756 = vpack.c.b16 %v2592, %v2588
    %v3757 = vpack.c.b16 %v2593, %v2589
    %v3758 = vpack.c.b16 %v2598, %v2594
    %v3759 = vpack.c.b16 %v2599, %v2595
    %v3760 = vpack.c.b16 %v2600, %v2596
    %v3761 = vpack.c.b16 %v2601, %v2597
    %v3762 = vpack.c.b16 %v2606, %v2602
    %v3763 = vpack.c.b16 %v2607, %v2603
    %v3764 = vpack.c.b16 %v2608, %v2604
    %v3765 = vpack.c.b16 %v2609, %v2605
    %v3766 = vpack.c.b16 %v2614, %v2610
    %v3767 = vpack.c.b16 %v2615, %v2611
    %v3768 = vpack.c.b16 %v2616, %v2612
    %v3769 = vpack.c.b16 %v2617, %v2613
    %v3770 = vpack.c.b16 %v2622, %v2618
    %v3771 = vpack.c.b16 %v2623, %v2619
    %v3772 = vpack.c.b16 %v2624, %v2620
    %v3773 = vpack.c.b16 %v2625, %v2621
    %v3774 = vpack.c.b16 %v2630, %v2626
    %v3775 = vpack.c.b16 %v2631, %v2627
    %v3776 = vpack.c.b16 %v2632, %v2628
    %v3777 = vpack.c.b16 %v2633, %v2629
    %v3778 = vpack.c.b16 %v2638, %v2634
    %v3779 = vpack.c.b16 %v2639, %v2635
    %v3780 = vpack.c.b16 %v2640, %v2636
    %v3781 = vpack.c.b16 %v2641, %v2637
    %v3782 = vpack.c.b16 %v2646, %v2642
    %v3783 = vpack.c.b16 %v2647, %v2643
    %v3784 = vpack.c.b16 %v2648, %v2644
    %v3785 = vpack.c.b16 %v2649, %v2645
    %v3786 = vpack.c.b16 %v2654, %v2650
    %v3787 = vpack.c.b16 %v2655, %v2651
    %v3788 = vpack.c.b16 %v2656, %v2652
    %v3789 = vpack.c.b16 %v2657, %v2653
    %v3790 = vpack.c.b16 %v2662, %v2658
    %v3791 = vpack.c.b16 %v2663, %v2659
    %v3792 = vpack.c.b16 %v2664, %v2660
    %v3793 = vpack.c.b16 %v2665, %v2661
    %v3794 = vpack.c.b16 %v2670, %v2666
    %v3795 = vpack.c.b16 %v2671, %v2667
    %v3796 = vpack.c.b16 %v2672, %v2668
    %v3797 = vpack.c.b16 %v2673, %v2669
    %v3798 = vpack.c.b16 %v2678, %v2674
    %v3799 = vpack.c.b16 %v2679, %v2675
    %v3800 = vpack.c.b16 %v2680, %v2676
    %v3801 = vpack.c.b16 %v2681, %v2677
    %v3802 = vpack.c.b16 %v2686, %v2682
    %v3803 = vpack.c.b16 %v2687, %v2683
    %v3804 = vpack.c.b16 %v2688, %v2684
    %v3805 = vpack.c.b16 %v2689, %v2685
    %v3806 = vpack.c.b16 %v2694, %v2690
    %v3807 = vpack.c.b16 %v2695, %v2691
    %v3808 = vpack.c.b16 %v2696, %v2692
    %v3809 = vpack.c.b16 %v2697, %v2693
    %v3810 = vpack.c.b16 %v2702, %v2698
    %v3811 = vpack.c.b16 %v2703, %v2699
    %v3812 = vpack.c.b16 %v2704, %v2700
    %v3813 = vpack.c.b16 %v2705, %v2701
    %v3814 = vpack.c.b16 %v2710, %v2706
    %v3815 = vpack.c.b16 %v2711, %v2707
    %v3816 = vpack.c.b16 %v2712, %v2708
    %v3817 = vpack.c.b16 %v2713, %v2709
    %v3818 = vpack.c.b16 %v2718, %v2714
    %v3819 = vpack.c.b16 %v2719, %v2715
    %v3820 = vpack.c.b16 %v2720, %v2716
    %v3821 = vpack.c.b16 %v2721, %v2717
    %v3822 = vpack.c.b16 %v2726, %v2722
    %v3823 = vpack.c.b16 %v2727, %v2723
    %v3824 = vpack.c.b16 %v2728, %v2724
    %v3825 = vpack.c.b16 %v2729, %v2725
    %v3826 = vpack.c.b16 %v2734, %v2730
    %v3827 = vpack.c.b16 %v2735, %v2731
    %v3828 = vpack.c.b16 %v2736, %v2732
    %v3829 = vpack.c.b16 %v2737, %v2733
    %v3830 = vpack.c.b16 %v2742, %v2738
    %v3831 = vpack.c.b16 %v2743, %v2739
    %v3832 = vpack.c.b16 %v2744, %v2740
    %v3833 = vpack.c.b16 %v2745, %v2741
    %v3834 = vpack.c.b16 %v2750, %v2746
    %v3835 = vpack.c.b16 %v2751, %v2747
    %v3836 = vpack.c.b16 %v2752, %v2748
    %v3837 = vpack.c.b16 %v2753, %v2749
    %v3838 = vpack.c.b16 %v2758, %v2754
    %v3839 = vpack.c.b16 %v2759, %v2755
    %v3840 = vpack.c.b16 %v2760, %v2756
    %v3841 = vpack.c.b16 %v2761, %v2757
    %v3842 = vpack.c.b16 %v2766, %v2762
    %v3843 = vpack.c.b16 %v2767, %v2763
    %v3844 = vpack.c.b16 %v2768, %v2764
    %v3845 = vpack.c.b16 %v2769, %v2765
    %v3846 = vpack.c.b16 %v2774, %v2770
    %v3847 = vpack.c.b16 %v2775, %v2771
    %v3848 = vpack.c.b16 %v2776, %v2772
    %v3849 = vpack.c.b16 %v2777, %v2773
    %v3850 = vpack.c.b16 %v2782, %v2778
    %v3851 = vpack.c.b16 %v2783, %v2779
    %v3852 = vpack.c.b16 %v2784, %v2780
    %v3853 = vpack.c.b16 %v2785, %v2781
    %v3854 = vpack.c.b16 %v2790, %v2786
    %v3855 = vpack.c.b16 %v2791, %v2787
    %v3856 = vpack.c.b16 %v2792, %v2788
    %v3857 = vpack.c.b16 %v2793, %v2789
    %v3858 = vpack.c.b16 %v2798, %v2794
    %v3859 = vpack.c.b16 %v2799, %v2795
    %v3860 = vpack.c.b16 %v2800, %v2796
    %v3861 = vpack.c.b16 %v2801, %v2797
    %v3862 = vpack.c.b16 %v2806, %v2802
    %v3863 = vpack.c.b16 %v2807, %v2803
    %v3864 = vpack.c.b16 %v2808, %v2804
    %v3865 = vpack.c.b16 %v2809, %v2805
    %v3866 = vpack.c.b16 %v2814, %v2810
    %v3867 = vpack.c.b16 %v2815, %v2811
    %v3868 = vpack.c.b16 %v2816, %v2812
    %v3869 = vpack.c.b16 %v2817, %v2813
    %v3870 = vpack.c.b16 %v2822, %v2818
    %v3871 = vpack.c.b16 %v2823, %v2819
    %v3872 = vpack.c.b16 %v2824, %v2820
    %v3873 = vpack.c.b16 %v2825, %v2821
    %v3874 = vpack.c.b16 %v2830, %v2826
    %v3875 = vpack.c.b16 %v2831, %v2827
    %v3876 = vpack.c.b16 %v2832, %v2828
    %v3877 = vpack.c.b16 %v2833, %v2829
    %v3878 = vpack.c.b16 %v2838, %v2834
    %v3879 = vpack.c.b16 %v2839, %v2835
    %v3880 = vpack.c.b16 %v2840, %v2836
    %v3881 = vpack.c.b16 %v2841, %v2837
    %v3882 = vpack.c.b16 %v2846, %v2842
    %v3883 = vpack.c.b16 %v2847, %v2843
    %v3884 = vpack.c.b16 %v2848, %v2844
    %v3885 = vpack.c.b16 %v2849, %v2845
    %v3886 = vpack.c.b16 %v2854, %v2850
    %v3887 = vpack.c.b16 %v2855, %v2851
    %v3888 = vpack.c.b16 %v2856, %v2852
    %v3889 = vpack.c.b16 %v2857, %v2853
    %v3890 = vpack.c.b16 %v2862, %v2858
    %v3891 = vpack.c.b16 %v2863, %v2859
    %v3892 = vpack.c.b16 %v2864, %v2860
    %v3893 = vpack.c.b16 %v2865, %v2861
    %v3894 = vpack.c.b16 %v2870, %v2866
    %v3895 = vpack.c.b16 %v2871, %v2867
    %v3896 = vpack.c.b16 %v2872, %v2868
    %v3897 = vpack.c.b16 %v2873, %v2869
    %v3898 = vpack.c.b16 %v2878, %v2874
    %v3899 = vpack.c.b16 %v2879, %v2875
    %v3900 = vpack.c.b16 %v2880, %v2876
    %v3901 = vpack.c.b16 %v2881, %v2877
    %v3902 = vpack.c.b16 %v2886, %v2882
    %v3903 = vpack.c.b16 %v2887, %v2883
    %v3904 = vpack.c.b16 %v2888, %v2884
    %v3905 = vpack.c.b16 %v2889, %v2885
    %v3906 = vpack.c.b16 %v2894, %v2890
    %v3907 = vpack.c.b16 %v2895, %v2891
    %v3908 = vpack.c.b16 %v2896, %v2892
    %v3909 = vpack.c.b16 %v2897, %v2893
    %v3910 = vpack.c.b16 %v2902, %v2898
    %v3911 = vpack.c.b16 %v2903, %v2899
    %v3912 = vpack.c.b16 %v2904, %v2900
    %v3913 = vpack.c.b16 %v2905, %v2901
    %v3914 = vpack.c.b16 %v2910, %v2906
    %v3915 = vpack.c.b16 %v2911, %v2907
    %v3916 = vpack.c.b16 %v2912, %v2908
    %v3917 = vpack.c.b16 %v2913, %v2909
    %v3918 = vpack.c.b16 %v2918, %v2914
    %v3919 = vpack.c.b16 %v2919, %v2915
    %v3920 = vpack.c.b16 %v2920, %v2916
    %v3921 = vpack.c.b16 %v2921, %v2917
    %v3922 = vpack.c.b16 %v2926, %v2922
    %v3923 = vpack.c.b16 %v2927, %v2923
    %v3924 = vpack.c.b16 %v2928, %v2924
    %v3925 = vpack.c.b16 %v2929, %v2925
    %v3926 = vpack.c.b16 %v2934, %v2930
    %v3927 = vpack.c.b16 %v2935, %v2931
    %v3928 = vpack.c.b16 %v2936, %v2932
    %v3929 = vpack.c.b16 %v2937, %v2933
    %v3930 = vpack.c.b16 %v2942, %v2938
    %v3931 = vpack.c.b16 %v2943, %v2939
    %v3932 = vpack.c.b16 %v2944, %v2940
    %v3933 = vpack.c.b16 %v2945, %v2941
    %v3934 = vpack.c.b16 %v2950, %v2946
    %v3935 = vpack.c.b16 %v2951, %v2947
    %v3936 = vpack.c.b16 %v2952, %v2948
    %v3937 = vpack.c.b16 %v2953, %v2949
    %v3938 = vpack.c.b16 %v2958, %v2954
    %v3939 = vpack.c.b16 %v2959, %v2955
    %v3940 = vpack.c.b16 %v2960, %v2956
    %v3941 = vpack.c.b16 %v2961, %v2957
    %v3942 = vpack.c.b16 %v2966, %v2962
    %v3943 = vpack.c.b16 %v2967, %v2963
    %v3944 = vpack.c.b16 %v2968, %v2964
    %v3945 = vpack.c.b16 %v2969, %v2965
    %v3946 = vpack.c.b16 %v2974, %v2970
    %v3947 = vpack.c.b16 %v2975, %v2971
    %v3948 = vpack.c.b16 %v2976, %v2972
    %v3949 = vpack.c.b16 %v2977, %v2973
    %v3950 = vpack.c.b16 %v2982, %v2978
    %v3951 = vpack.c.b16 %v2983, %v2979
    %v3952 = vpack.c.b16 %v2984, %v2980
    %v3953 = vpack.c.b16 %v2985, %v2981
    %v3954 = vpack.c.b16 %v2990, %v2986
    %v3955 = vpack.c.b16 %v2991, %v2987
    %v3956 = vpack.c.b16 %v2992, %v2988
    %v3957 = vpack.c.b16 %v2993, %v2989
    %v3958 = vpack.c.b16 %v2998, %v2994
    %v3959 = vpack.c.b16 %v2999, %v2995
    %v3960 = vpack.c.b16 %v3000, %v2996
    %v3961 = vpack.c.b16 %v3001, %v2997
    %v3962 = vpack.c.b16 %v3006, %v3002
    %v3963 = vpack.c.b16 %v3007, %v3003
    %v3964 = vpack.c.b16 %v3008, %v3004
    %v3965 = vpack.c.b16 %v3009, %v3005
    %v3966 = vpack.c.b16 %v3014, %v3010
    %v3967 = vpack.c.b16 %v3015, %v3011
    %v3968 = vpack.c.b16 %v3016, %v3012
    %v3969 = vpack.c.b16 %v3017, %v3013
    %v3970 = vpack.c.b16 %v3022, %v3018
    %v3971 = vpack.c.b16 %v3023, %v3019
    %v3972 = vpack.c.b16 %v3024, %v3020
    %v3973 = vpack.c.b16 %v3025, %v3021
    %v3974 = vpack.c.b16 %v3030, %v3026
    %v3975 = vpack.c.b16 %v3031, %v3027
    %v3976 = vpack.c.b16 %v3032, %v3028
    %v3977 = vpack.c.b16 %v3033, %v3029
    %v3978 = vpack.c.b16 %v3038, %v3034
    %v3979 = vpack.c.b16 %v3039, %v3035
    %v3980 = vpack.c.b16 %v3040, %v3036
    %v3981 = vpack.c.b16 %v3041, %v3037
    %v3982 = vpack.c.b16 %v3046, %v3042
    %v3983 = vpack.c.b16 %v3047, %v3043
    %v3984 = vpack.c.b16 %v3048, %v3044
    %v3985 = vpack.c.b16 %v3049, %v3045
    %v3986 = vpack.c.b16 %v3054, %v3050
    %v3987 = vpack.c.b16 %v3055, %v3051
    %v3988 = vpack.c.b16 %v3056, %v3052
    %v3989 = vpack.c.b16 %v3057, %v3053
    %v3990 = vpack.c.b16 %v3062, %v3058
    %v3991 = vpack.c.b16 %v3063, %v3059
    %v3992 = vpack.c.b16 %v3064, %v3060
    %v3993 = vpack.c.b16 %v3065, %v3061
    %v3994 = vpack.c.b16 %v3070, %v3066
    %v3995 = vpack.c.b16 %v3071, %v3067
    %v3996 = vpack.c.b16 %v3072, %v3068
    %v3997 = vpack.c.b16 %v3073, %v3069
    %v3998 = vpack.c.b16 %v3078, %v3074
    %v3999 = vpack.c.b16 %v3079, %v3075
    %v4000 = vpack.c.b16 %v3080, %v3076
    %v4001 = vpack.c.b16 %v3081, %v3077
    %v4002 = vpack.c.b16 %v3086, %v3082
    %v4003 = vpack.c.b16 %v3087, %v3083
    %v4004 = vpack.c.b16 %v3088, %v3084
    %v4005 = vpack.c.b16 %v3089, %v3085
    %v4006 = vpack.c.b16 %v3094, %v3090
    %v4007 = vpack.c.b16 %v3095, %v3091
    %v4008 = vpack.c.b16 %v3096, %v3092
    %v4009 = vpack.c.b16 %v3097, %v3093
    %v4010 = vpack.c.b16 %v3102, %v3098
    %v4011 = vpack.c.b16 %v3103, %v3099
    %v4012 = vpack.c.b16 %v3104, %v3100
    %v4013 = vpack.c.b16 %v3105, %v3101
    %v4014 = vpack.c.b16 %v3110, %v3106
    %v4015 = vpack.c.b16 %v3111, %v3107
    %v4016 = vpack.c.b16 %v3112, %v3108
    %v4017 = vpack.c.b16 %v3113, %v3109
    %v4018 = vpack.c.b16 %v3118, %v3114
    %v4019 = vpack.c.b16 %v3119, %v3115
    %v4020 = vpack.c.b16 %v3120, %v3116
    %v4021 = vpack.c.b16 %v3121, %v3117
    %v4022 = vpack.c.b16 %v3126, %v3122
    %v4023 = vpack.c.b16 %v3127, %v3123
    %v4024 = vpack.c.b16 %v3128, %v3124
    %v4025 = vpack.c.b16 %v3129, %v3125
    %v4026 = vpack.c.b16 %v3134, %v3130
    %v4027 = vpack.c.b16 %v3135, %v3131
    %v4028 = vpack.c.b16 %v3136, %v3132
    %v4029 = vpack.c.b16 %v3137, %v3133
    %v4030 = vpack.c.b16 %v3142, %v3138
    %v4031 = vpack.c.b16 %v3143, %v3139
    %v4032 = vpack.c.b16 %v3144, %v3140
    %v4033 = vpack.c.b16 %v3145, %v3141
    %v4034 = vpack.c.b16 %v3150, %v3146
    %v4035 = vpack.c.b16 %v3151, %v3147
    %v4036 = vpack.c.b16 %v3152, %v3148
    %v4037 = vpack.c.b16 %v3153, %v3149
    %v4038 = vpack.c.b16 %v3158, %v3154
    %v4039 = vpack.c.b16 %v3159, %v3155
    %v4040 = vpack.c.b16 %v3160, %v3156
    %v4041 = vpack.c.b16 %v3161, %v3157
    %v4042 = vpack.c.b16 %v3166, %v3162
    %v4043 = vpack.c.b16 %v3167, %v3163
    %v4044 = vpack.c.b16 %v3168, %v3164
    %v4045 = vpack.c.b16 %v3169, %v3165
    %v4046 = vpack.c.b16 %v3174, %v3170
    %v4047 = vpack.c.b16 %v3175, %v3171
    %v4048 = vpack.c.b16 %v3176, %v3172
    %v4049 = vpack.c.b16 %v3177, %v3173
    %v4050 = vpack.c.b16 %v3182, %v3178
    %v4051 = vpack.c.b16 %v3183, %v3179
    %v4052 = vpack.c.b16 %v3184, %v3180
    %v4053 = vpack.c.b16 %v3185, %v3181
    %v4054 = vpack.c.b16 %v3190, %v3186
    %v4055 = vpack.c.b16 %v3191, %v3187
    %v4056 = vpack.c.b16 %v3192, %v3188
    %v4057 = vpack.c.b16 %v3193, %v3189
    %v4058 = vpack.c.b16 %v3198, %v3194
    %v4059 = vpack.c.b16 %v3199, %v3195
    %v4060 = vpack.c.b16 %v3200, %v3196
    %v4061 = vpack.c.b16 %v3201, %v3197
    %v4062 = vpack.c.b16 %v3206, %v3202
    %v4063 = vpack.c.b16 %v3207, %v3203
    %v4064 = vpack.c.b16 %v3208, %v3204
    %v4065 = vpack.c.b16 %v3209, %v3205
    %v4066 = vpack.c.b16 %v3214, %v3210
    %v4067 = vpack.c.b16 %v3215, %v3211
    %v4068 = vpack.c.b16 %v3216, %v3212
    %v4069 = vpack.c.b16 %v3217, %v3213
    %v4070 = vpack.c.b16 %v3222, %v3218
    %v4071 = vpack.c.b16 %v3223, %v3219
    %v4072 = vpack.c.b16 %v3224, %v3220
    %v4073 = vpack.c.b16 %v3225, %v3221
    %v4074 = vpack.c.b16 %v3230, %v3226
    %v4075 = vpack.c.b16 %v3231, %v3227
    %v4076 = vpack.c.b16 %v3232, %v3228
    %v4077 = vpack.c.b16 %v3233, %v3229
    %v4078 = vpack.c.b16 %v3238, %v3234
    %v4079 = vpack.c.b16 %v3239, %v3235
    %v4080 = vpack.c.b16 %v3240, %v3236
    %v4081 = vpack.c.b16 %v3241, %v3237
    %v4082 = vpack.c.b16 %v3246, %v3242
    %v4083 = vpack.c.b16 %v3247, %v3243
    %v4084 = vpack.c.b16 %v3248, %v3244
    %v4085 = vpack.c.b16 %v3249, %v3245
    %v4086 = vpack.c.b16 %v3254, %v3250
    %v4087 = vpack.c.b16 %v3255, %v3251
    %v4088 = vpack.c.b16 %v3256, %v3252
    %v4089 = vpack.c.b16 %v3257, %v3253
    %v4090 = vpack.c.b16 %v3262, %v3258
    %v4091 = vpack.c.b16 %v3263, %v3259
    %v4092 = vpack.c.b16 %v3264, %v3260
    %v4093 = vpack.c.b16 %v3265, %v3261
    %v4094 = vpack.c.b16 %v3270, %v3266
    %v4095 = vpack.c.b16 %v3271, %v3267
    %v4096 = vpack.c.b16 %v3272, %v3268
    %v4097 = vpack.c.b16 %v3273, %v3269
    %v4098 = vpack.c.b16 %v3278, %v3274
    %v4099 = vpack.c.b16 %v3279, %v3275
    %v4100 = vpack.c.b16 %v3280, %v3276
    %v4101 = vpack.c.b16 %v3281, %v3277
    %v4102 = vpack.c.b16 %v3286, %v3282
    %v4103 = vpack.c.b16 %v3287, %v3283
    %v4104 = vpack.c.b16 %v3288, %v3284
    %v4105 = vpack.c.b16 %v3289, %v3285
    %v4106 = vpack.c.b16 %v3294, %v3290
    %v4107 = vpack.c.b16 %v3295, %v3291
    %v4108 = vpack.c.b16 %v3296, %v3292
    %v4109 = vpack.c.b16 %v3297, %v3293
    %v4110 = vpack.c.b16 %v3302, %v3298
    %v4111 = vpack.c.b16 %v3303, %v3299
    %v4112 = vpack.c.b16 %v3304, %v3300
    %v4113 = vpack.c.b16 %v3305, %v3301
    %v4114 = vpack.c.b16 %v3310, %v3306
    %v4115 = vpack.c.b16 %v3311, %v3307
    %v4116 = vpack.c.b16 %v3312, %v3308
    %v4117 = vpack.c.b16 %v3313, %v3309
    %v4118 = vpack.c.b16 %v3318, %v3314
    %v4119 = vpack.c.b16 %v3319, %v3315
    %v4120 = vpack.c.b16 %v3320, %v3316
    %v4121 = vpack.c.b16 %v3321, %v3317
    %v4122 = vpack.c.b16 %v3326, %v3322
    %v4123 = vpack.c.b16 %v3327, %v3323
    %v4124 = vpack.c.b16 %v3328, %v3324
    %v4125 = vpack.c.b16 %v3329, %v3325
    %v4126 = vpack.c.b16 %v3334, %v3330
    %v4127 = vpack.c.b16 %v3335, %v3331
    %v4128 = vpack.c.b16 %v3336, %v3332
    %v4129 = vpack.c.b16 %v3337, %v3333
    %v4130 = vpack.c.b16 %v3342, %v3338
    %v4131 = vpack.c.b16 %v3343, %v3339
    %v4132 = vpack.c.b16 %v3344, %v3340
    %v4133 = vpack.c.b16 %v3345, %v3341
    %v4134 = vpack.c.b16 %v3350, %v3346
    %v4135 = vpack.c.b16 %v3351, %v3347
    %v4136 = vpack.c.b16 %v3352, %v3348
    %v4137 = vpack.c.b16 %v3353, %v3349
    %v4138 = vpack.c.b16 %v3358, %v3354
    %v4139 = vpack.c.b16 %v3359, %v3355
    %v4140 = vpack.c.b16 %v3360, %v3356
    %v4141 = vpack.c.b16 %v3361, %v3357
    %v4142 = vpack.c.b16 %v3366, %v3362
    %v4143 = vpack.c.b16 %v3367, %v3363
    %v4144 = vpack.c.b16 %v3368, %v3364
    %v4145 = vpack.c.b16 %v3369, %v3365
    %v4146 = vpack.c.b16 %v3374, %v3370
    %v4147 = vpack.c.b16 %v3375, %v3371
    %v4148 = vpack.c.b16 %v3376, %v3372
    %v4149 = vpack.c.b16 %v3377, %v3373
    %v4150 = vpack.c.b16 %v3382, %v3378
    %v4151 = vpack.c.b16 %v3383, %v3379
    %v4152 = vpack.c.b16 %v3384, %v3380
    %v4153 = vpack.c.b16 %v3385, %v3381
    %4922 = vmatprep.subr.bf16.mxu0 %v3387
    %4923 = vmatpush1.bf16.msra.mxu0 %v3386
    %4924 = vmatprep.subr.bf16.mxu0 %v3391
    %4925 = vmatpush1.bf16.msra.mxu0 %v3390
    %4926 = vmatprep.subr.bf16.mxu0 %v3395
    %4927 = vmatpush1.bf16.msra.mxu0 %v3394
    %4928 = vmatprep.subr.bf16.mxu0 %v3399
    %4929 = vmatpush1.bf16.msra.mxu0 %v3398
    %4930 = vmatprep.subr.bf16.mxu0 %v3403
    %4931 = vmatpush1.bf16.msra.mxu0 %v3402
    %4932 = vmatprep.subr.bf16.mxu0 %v3407
    %4933 = vmatpush1.bf16.msra.mxu0 %v3406
    %4934 = vmatprep.subr.bf16.mxu0 %v3411
    %4935 = vmatpush1.bf16.msra.mxu0 %v3410
    %4936 = vmatprep.subr.bf16.mxu0 %v3415
    %4937 = vmatpush1.bf16.msra.mxu0 %v3414
    %4938 = vmatprep.subr.bf16.mxu0 %v3419
    %4939 = vmatpush1.bf16.msra.mxu0 %v3418
    %4940 = vmatprep.subr.bf16.mxu0 %v3423
    %4941 = vmatpush1.bf16.msra.mxu0 %v3422
    %4942 = vmatprep.subr.bf16.mxu0 %v3427
    %4943 = vmatpush1.bf16.msra.mxu0 %v3426
    %4944 = vmatprep.subr.bf16.mxu0 %v3431
    %4945 = vmatpush1.bf16.msra.mxu0 %v3430
    %4946 = vmatprep.subr.bf16.mxu0 %v3435
    %4947 = vmatpush1.bf16.msra.mxu0 %v3434
    %4948 = vmatprep.subr.bf16.mxu0 %v3439
    %4949 = vmatpush1.bf16.msra.mxu0 %v3438
    %4950 = vmatprep.subr.bf16.mxu0 %v3443
    %4951 = vmatpush1.bf16.msra.mxu0 %v3442
    %4952 = vmatprep.subr.bf16.mxu0 %v3447
    %4953 = vmatpush1.bf16.msra.mxu0 %v3446
    %4954 = vmatprep.mubr.bf16.mxu0 %v269
    %4955 = vmatmul.mubr.bf16.gmra.mrb[0].mxu0 %v268
    %v4956 = vpop.f32.mrb[0].mxu0
    %v4957 = vadd.f32 %v1065, %v4956
    %v4958 = vpop.f32.mrb[0].mxu0
    %v4959 = vadd.f32 %v1069, %v4958
    %v4960 = vpop.f32.mrb[0].mxu0
    %v4961 = vpop.f32.mrb[0].mxu0
    %4962 = vdwg.mxu0
    %4963 = vmatprep.subr.bf16.mxu0 %v3451
    %4964 = vmatpush1.bf16.msra.mxu0 %v3450
    %4965 = vmatprep.subr.bf16.mxu0 %v3455
    %4966 = vmatpush1.bf16.msra.mxu0 %v3454
    %4967 = vmatprep.subr.bf16.mxu0 %v3459
    %4968 = vmatpush1.bf16.msra.mxu0 %v3458
    %4969 = vmatprep.subr.bf16.mxu0 %v3463
    %4970 = vmatpush1.bf16.msra.mxu0 %v3462
    %4971 = vmatprep.subr.bf16.mxu0 %v3467
    %4972 = vmatpush1.bf16.msra.mxu0 %v3466
    %4973 = vmatprep.subr.bf16.mxu0 %v3471
    %4974 = vmatpush1.bf16.msra.mxu0 %v3470
    %4975 = vmatprep.subr.bf16.mxu0 %v3475
    %4976 = vmatpush1.bf16.msra.mxu0 %v3474
    %4977 = vmatprep.subr.bf16.mxu0 %v3479
    %4978 = vmatpush1.bf16.msra.mxu0 %v3478
    %4979 = vmatprep.subr.bf16.mxu0 %v3483
    %4980 = vmatpush1.bf16.msra.mxu0 %v3482
    %4981 = vmatprep.subr.bf16.mxu0 %v3487
    %4982 = vmatpush1.bf16.msra.mxu0 %v3486
    %4983 = vmatprep.subr.bf16.mxu0 %v3491
    %4984 = vmatpush1.bf16.msra.mxu0 %v3490
    %4985 = vmatprep.subr.bf16.mxu0 %v3495
    %4986 = vmatpush1.bf16.msra.mxu0 %v3494
    %4987 = vmatprep.subr.bf16.mxu0 %v3499
    %4988 = vmatpush1.bf16.msra.mxu0 %v3498
    %4989 = vmatprep.subr.bf16.mxu0 %v3503
    %4990 = vmatpush1.bf16.msra.mxu0 %v3502
    %4991 = vmatprep.subr.bf16.mxu0 %v3507
    %4992 = vmatpush1.bf16.msra.mxu0 %v3506
    %4993 = vmatprep.subr.bf16.mxu0 %v3511
    %4994 = vmatpush1.bf16.msra.mxu0 %v3510
    %4995 = vmatprep.mubr.bf16.mxu0 %v271
    %4996 = vmatmul.mubr.bf16.gmra.mrb[0].mxu0 %v270
    %v4997 = vpop.f32.mrb[0].mxu0
    %v4998 = vadd.f32 %v4957, %v4997
    %v4999 = vpop.f32.mrb[0].mxu0
    %v5000 = vadd.f32 %v4959, %v4999
    %v5001 = vpop.f32.mrb[0].mxu0
    %v5002 = vpop.f32.mrb[0].mxu0
    %5003 = vdwg.mxu0
    %5004 = vmatprep.subr.bf16.mxu0 %v3515
    %5005 = vmatpush1.bf16.msra.mxu0 %v3514
    %5006 = vmatprep.subr.bf16.mxu0 %v3519
    %5007 = vmatpush1.bf16.msra.mxu0 %v3518
    %5008 = vmatprep.subr.bf16.mxu0 %v3523
    %5009 = vmatpush1.bf16.msra.mxu0 %v3522
    %5010 = vmatprep.subr.bf16.mxu0 %v3527
    %5011 = vmatpush1.bf16.msra.mxu0 %v3526
    %5012 = vmatprep.subr.bf16.mxu0 %v3531
    %5013 = vmatpush1.bf16.msra.mxu0 %v3530
    %5014 = vmatprep.subr.bf16.mxu0 %v3535
    %5015 = vmatpush1.bf16.msra.mxu0 %v3534
    %5016 = vmatprep.subr.bf16.mxu0 %v3539
    %5017 = vmatpush1.bf16.msra.mxu0 %v3538
    %5018 = vmatprep.subr.bf16.mxu0 %v3543
    %5019 = vmatpush1.bf16.msra.mxu0 %v3542
    %5020 = vmatprep.subr.bf16.mxu0 %v3547
    %5021 = vmatpush1.bf16.msra.mxu0 %v3546
    %5022 = vmatprep.subr.bf16.mxu0 %v3551
    %5023 = vmatpush1.bf16.msra.mxu0 %v3550
    %5024 = vmatprep.subr.bf16.mxu0 %v3555
    %5025 = vmatpush1.bf16.msra.mxu0 %v3554
    %5026 = vmatprep.subr.bf16.mxu0 %v3559
    %5027 = vmatpush1.bf16.msra.mxu0 %v3558
    %5028 = vmatprep.subr.bf16.mxu0 %v3563
    %5029 = vmatpush1.bf16.msra.mxu0 %v3562
    %5030 = vmatprep.subr.bf16.mxu0 %v3567
    %5031 = vmatpush1.bf16.msra.mxu0 %v3566
    %5032 = vmatprep.subr.bf16.mxu0 %v3571
    %5033 = vmatpush1.bf16.msra.mxu0 %v3570
    %5034 = vmatprep.subr.bf16.mxu0 %v3575
    %5035 = vmatpush1.bf16.msra.mxu0 %v3574
    %5036 = vmatprep.mubr.bf16.mxu0 %v273
    %5037 = vmatmul.mubr.bf16.gmra.mrb[0].mxu0 %v272
    %v5038 = vpop.f32.mrb[0].mxu0
    %v5039 = vadd.f32 %v4998, %v5038
    %v5040 = vpop.f32.mrb[0].mxu0
    %v5041 = vadd.f32 %v5000, %v5040
    %v5042 = vpop.f32.mrb[0].mxu0
    %v5043 = vpop.f32.mrb[0].mxu0
    %5044 = vdwg.mxu0
    %5045 = vmatprep.subr.bf16.mxu0 %v3579
    %5046 = vmatpush1.bf16.msra.mxu0 %v3578
    %5047 = vmatprep.subr.bf16.mxu0 %v3583
    %5048 = vmatpush1.bf16.msra.mxu0 %v3582
    %5049 = vmatprep.subr.bf16.mxu0 %v3587
    %5050 = vmatpush1.bf16.msra.mxu0 %v3586
    %5051 = vmatprep.subr.bf16.mxu0 %v3591
    %5052 = vmatpush1.bf16.msra.mxu0 %v3590
    %5053 = vmatprep.subr.bf16.mxu0 %v3595
    %5054 = vmatpush1.bf16.msra.mxu0 %v3594
    %5055 = vmatprep.subr.bf16.mxu0 %v3599
    %5056 = vmatpush1.bf16.msra.mxu0 %v3598
    %5057 = vmatprep.subr.bf16.mxu0 %v3603
    %5058 = vmatpush1.bf16.msra.mxu0 %v3602
    %5059 = vmatprep.subr.bf16.mxu0 %v3607
    %5060 = vmatpush1.bf16.msra.mxu0 %v3606
    %5061 = vmatprep.subr.bf16.mxu0 %v3611
    %5062 = vmatpush1.bf16.msra.mxu0 %v3610
    %5063 = vmatprep.subr.bf16.mxu0 %v3615
    %5064 = vmatpush1.bf16.msra.mxu0 %v3614
    %5065 = vmatprep.subr.bf16.mxu0 %v3619
    %5066 = vmatpush1.bf16.msra.mxu0 %v3618
    %5067 = vmatprep.subr.bf16.mxu0 %v3623
    %5068 = vmatpush1.bf16.msra.mxu0 %v3622
    %5069 = vmatprep.subr.bf16.mxu0 %v3627
    %5070 = vmatpush1.bf16.msra.mxu0 %v3626
    %5071 = vmatprep.subr.bf16.mxu0 %v3631
    %5072 = vmatpush1.bf16.msra.mxu0 %v3630
    %5073 = vmatprep.subr.bf16.mxu0 %v3635
    %5074 = vmatpush1.bf16.msra.mxu0 %v3634
    %5075 = vmatprep.subr.bf16.mxu0 %v3639
    %5076 = vmatpush1.bf16.msra.mxu0 %v3638
    %5077 = vmatprep.mubr.bf16.mxu0 %v275
    %5078 = vmatmul.mubr.bf16.gmra.mrb[0].mxu0 %v274
    %v5079 = vpop.f32.mrb[0].mxu0
    %v5080 = vadd.f32 %v5039, %v5079
    %v5081 = vpop.f32.mrb[0].mxu0
    %v5082 = vadd.f32 %v5041, %v5081
    %v5083 = vpop.f32.mrb[0].mxu0
    %v5084 = vpop.f32.mrb[0].mxu0
    %5085 = vdwg.mxu0
    %5086 = vmatprep.subr.bf16.mxu0 %v3643
    %5087 = vmatpush1.bf16.msra.mxu0 %v3642
    %5088 = vmatprep.subr.bf16.mxu0 %v3647
    %5089 = vmatpush1.bf16.msra.mxu0 %v3646
    %5090 = vmatprep.subr.bf16.mxu0 %v3651
    %5091 = vmatpush1.bf16.msra.mxu0 %v3650
    %5092 = vmatprep.subr.bf16.mxu0 %v3655
    %5093 = vmatpush1.bf16.msra.mxu0 %v3654
    %5094 = vmatprep.subr.bf16.mxu0 %v3659
    %5095 = vmatpush1.bf16.msra.mxu0 %v3658
    %5096 = vmatprep.subr.bf16.mxu0 %v3663
    %5097 = vmatpush1.bf16.msra.mxu0 %v3662
    %5098 = vmatprep.subr.bf16.mxu0 %v3667
    %5099 = vmatpush1.bf16.msra.mxu0 %v3666
    %5100 = vmatprep.subr.bf16.mxu0 %v3671
    %5101 = vmatpush1.bf16.msra.mxu0 %v3670
    %5102 = vmatprep.subr.bf16.mxu0 %v3675
    %5103 = vmatpush1.bf16.msra.mxu0 %v3674
    %5104 = vmatprep.subr.bf16.mxu0 %v3679
    %5105 = vmatpush1.bf16.msra.mxu0 %v3678
    %5106 = vmatprep.subr.bf16.mxu0 %v3683
    %5107 = vmatpush1.bf16.msra.mxu0 %v3682
    %5108 = vmatprep.subr.bf16.mxu0 %v3687
    %5109 = vmatpush1.bf16.msra.mxu0 %v3686
    %5110 = vmatprep.subr.bf16.mxu0 %v3691
    %5111 = vmatpush1.bf16.msra.mxu0 %v3690
    %5112 = vmatprep.subr.bf16.mxu0 %v3695
    %5113 = vmatpush1.bf16.msra.mxu0 %v3694
    %5114 = vmatprep.subr.bf16.mxu0 %v3699
    %5115 = vmatpush1.bf16.msra.mxu0 %v3698
    %5116 = vmatprep.subr.bf16.mxu0 %v3703
    %5117 = vmatpush1.bf16.msra.mxu0 %v3702
    %5118 = vmatprep.mubr.bf16.mxu0 %v277
    %5119 = vmatmul.mubr.bf16.gmra.mrb[0].mxu0 %v276
    %v5120 = vpop.f32.mrb[0].mxu0
    %v5121 = vadd.f32 %v5080, %v5120
    %v5122 = vpop.f32.mrb[0].mxu0
    %v5123 = vadd.f32 %v5082, %v5122
    %v5124 = vpop.f32.mrb[0].mxu0
    %v5125 = vpop.f32.mrb[0].mxu0
    %5126 = vdwg.mxu0
    %5127 = vmatprep.subr.bf16.mxu0 %v3707
    %5128 = vmatpush1.bf16.msra.mxu0 %v3706
    %5129 = vmatprep.subr.bf16.mxu0 %v3711
    %5130 = vmatpush1.bf16.msra.mxu0 %v3710
    %5131 = vmatprep.subr.bf16.mxu0 %v3715
    %5132 = vmatpush1.bf16.msra.mxu0 %v3714
    %5133 = vmatprep.subr.bf16.mxu0 %v3719
    %5134 = vmatpush1.bf16.msra.mxu0 %v3718
    %5135 = vmatprep.subr.bf16.mxu0 %v3723
    %5136 = vmatpush1.bf16.msra.mxu0 %v3722
    %5137 = vmatprep.subr.bf16.mxu0 %v3727
    %5138 = vmatpush1.bf16.msra.mxu0 %v3726
    %5139 = vmatprep.subr.bf16.mxu0 %v3731
    %5140 = vmatpush1.bf16.msra.mxu0 %v3730
    %5141 = vmatprep.subr.bf16.mxu0 %v3735
    %5142 = vmatpush1.bf16.msra.mxu0 %v3734
    %5143 = vmatprep.subr.bf16.mxu0 %v3739
    %5144 = vmatpush1.bf16.msra.mxu0 %v3738
    %5145 = vmatprep.subr.bf16.mxu0 %v3743
    %5146 = vmatpush1.bf16.msra.mxu0 %v3742
    %5147 = vmatprep.subr.bf16.mxu0 %v3747
    %5148 = vmatpush1.bf16.msra.mxu0 %v3746
    %5149 = vmatprep.subr.bf16.mxu0 %v3751
    %5150 = vmatpush1.bf16.msra.mxu0 %v3750
    %5151 = vmatprep.subr.bf16.mxu0 %v3755
    %5152 = vmatpush1.bf16.msra.mxu0 %v3754
    %5153 = vmatprep.subr.bf16.mxu0 %v3759
    %5154 = vmatpush1.bf16.msra.mxu0 %v3758
    %5155 = vmatprep.subr.bf16.mxu0 %v3763
    %5156 = vmatpush1.bf16.msra.mxu0 %v3762
    %5157 = vmatprep.subr.bf16.mxu0 %v3767
    %5158 = vmatpush1.bf16.msra.mxu0 %v3766
    %5159 = vmatprep.mubr.bf16.mxu0 %v279
    %5160 = vmatmul.mubr.bf16.gmra.mrb[0].mxu0 %v278
    %v5161 = vpop.f32.mrb[0].mxu0
    %v5162 = vadd.f32 %v5121, %v5161
    %v5163 = vpop.f32.mrb[0].mxu0
    %v5164 = vadd.f32 %v5123, %v5163
    %v5165 = vpop.f32.mrb[0].mxu0
    %v5166 = vpop.f32.mrb[0].mxu0
    %5167 = vdwg.mxu0
    %5168 = vmatprep.subr.bf16.mxu0 %v3771
    %5169 = vmatpush1.bf16.msra.mxu0 %v3770
    %5170 = vmatprep.subr.bf16.mxu0 %v3775
    %5171 = vmatpush1.bf16.msra.mxu0 %v3774
    %5172 = vmatprep.subr.bf16.mxu0 %v3779
    %5173 = vmatpush1.bf16.msra.mxu0 %v3778
    %5174 = vmatprep.subr.bf16.mxu0 %v3783
    %5175 = vmatpush1.bf16.msra.mxu0 %v3782
    %5176 = vmatprep.subr.bf16.mxu0 %v3787
    %5177 = vmatpush1.bf16.msra.mxu0 %v3786
    %5178 = vmatprep.subr.bf16.mxu0 %v3791
    %5179 = vmatpush1.bf16.msra.mxu0 %v3790
    %5180 = vmatprep.subr.bf16.mxu0 %v3795
    %5181 = vmatpush1.bf16.msra.mxu0 %v3794
    %5182 = vmatprep.subr.bf16.mxu0 %v3799
    %5183 = vmatpush1.bf16.msra.mxu0 %v3798
    %5184 = vmatprep.subr.bf16.mxu0 %v3803
    %5185 = vmatpush1.bf16.msra.mxu0 %v3802
    %5186 = vmatprep.subr.bf16.mxu0 %v3807
    %5187 = vmatpush1.bf16.msra.mxu0 %v3806
    %5188 = vmatprep.subr.bf16.mxu0 %v3811
    %5189 = vmatpush1.bf16.msra.mxu0 %v3810
    %5190 = vmatprep.subr.bf16.mxu0 %v3815
    %5191 = vmatpush1.bf16.msra.mxu0 %v3814
    %5192 = vmatprep.subr.bf16.mxu0 %v3819
    %5193 = vmatpush1.bf16.msra.mxu0 %v3818
    %5194 = vmatprep.subr.bf16.mxu0 %v3823
    %5195 = vmatpush1.bf16.msra.mxu0 %v3822
    %5196 = vmatprep.subr.bf16.mxu0 %v3827
    %5197 = vmatpush1.bf16.msra.mxu0 %v3826
    %5198 = vmatprep.subr.bf16.mxu0 %v3831
    %5199 = vmatpush1.bf16.msra.mxu0 %v3830
    %5200 = vmatprep.mubr.bf16.mxu0 %v281
    %5201 = vmatmul.mubr.bf16.gmra.mrb[0].mxu0 %v280
    %v5202 = vpop.f32.mrb[0].mxu0
    %v5203 = vadd.f32 %v5162, %v5202
    %v5204 = vpop.f32.mrb[0].mxu0
    %v5205 = vadd.f32 %v5164, %v5204
    %v5206 = vpop.f32.mrb[0].mxu0
    %v5207 = vpop.f32.mrb[0].mxu0
    %5208 = vdwg.mxu0
    %5209 = vmatprep.subr.bf16.mxu0 %v3835
    %5210 = vmatpush1.bf16.msra.mxu0 %v3834
    %5211 = vmatprep.subr.bf16.mxu0 %v3839
    %5212 = vmatpush1.bf16.msra.mxu0 %v3838
    %5213 = vmatprep.subr.bf16.mxu0 %v3843
    %5214 = vmatpush1.bf16.msra.mxu0 %v3842
    %5215 = vmatprep.subr.bf16.mxu0 %v3847
    %5216 = vmatpush1.bf16.msra.mxu0 %v3846
    %5217 = vmatprep.subr.bf16.mxu0 %v3851
    %5218 = vmatpush1.bf16.msra.mxu0 %v3850
    %5219 = vmatprep.subr.bf16.mxu0 %v3855
    %5220 = vmatpush1.bf16.msra.mxu0 %v3854
    %5221 = vmatprep.subr.bf16.mxu0 %v3859
    %5222 = vmatpush1.bf16.msra.mxu0 %v3858
    %5223 = vmatprep.subr.bf16.mxu0 %v3863
    %5224 = vmatpush1.bf16.msra.mxu0 %v3862
    %5225 = vmatprep.subr.bf16.mxu0 %v3867
    %5226 = vmatpush1.bf16.msra.mxu0 %v3866
    %5227 = vmatprep.subr.bf16.mxu0 %v3871
    %5228 = vmatpush1.bf16.msra.mxu0 %v3870
    %5229 = vmatprep.subr.bf16.mxu0 %v3875
    %5230 = vmatpush1.bf16.msra.mxu0 %v3874
    %5231 = vmatprep.subr.bf16.mxu0 %v3879
    %5232 = vmatpush1.bf16.msra.mxu0 %v3878
    %5233 = vmatprep.subr.bf16.mxu0 %v3883
    %5234 = vmatpush1.bf16.msra.mxu0 %v3882
    %5235 = vmatprep.subr.bf16.mxu0 %v3887
    %5236 = vmatpush1.bf16.msra.mxu0 %v3886
    %5237 = vmatprep.subr.bf16.mxu0 %v3891
    %5238 = vmatpush1.bf16.msra.mxu0 %v3890
    %5239 = vmatprep.subr.bf16.mxu0 %v3895
    %5240 = vmatpush1.bf16.msra.mxu0 %v3894
    %5241 = vmatprep.mubr.bf16.mxu0 %v283
    %5242 = vmatmul.mubr.bf16.gmra.mrb[0].mxu0 %v282
    %v5243 = vpop.f32.mrb[0].mxu0
    %v5244 = vadd.f32 %v5203, %v5243
    %v5245 = vpop.f32.mrb[0].mxu0
    %v5246 = vadd.f32 %v5205, %v5245
    %v5247 = vpop.f32.mrb[0].mxu0
    %v5248 = vpop.f32.mrb[0].mxu0
    %5249 = vdwg.mxu0
    %5250 = vmatprep.subr.bf16.mxu0 %v3899
    %5251 = vmatpush1.bf16.msra.mxu0 %v3898
    %5252 = vmatprep.subr.bf16.mxu0 %v3903
    %5253 = vmatpush1.bf16.msra.mxu0 %v3902
    %5254 = vmatprep.subr.bf16.mxu0 %v3907
    %5255 = vmatpush1.bf16.msra.mxu0 %v3906
    %5256 = vmatprep.subr.bf16.mxu0 %v3911
    %5257 = vmatpush1.bf16.msra.mxu0 %v3910
    %5258 = vmatprep.subr.bf16.mxu0 %v3915
    %5259 = vmatpush1.bf16.msra.mxu0 %v3914
    %5260 = vmatprep.subr.bf16.mxu0 %v3919
    %5261 = vmatpush1.bf16.msra.mxu0 %v3918
    %5262 = vmatprep.subr.bf16.mxu0 %v3923
    %5263 = vmatpush1.bf16.msra.mxu0 %v3922
    %5264 = vmatprep.subr.bf16.mxu0 %v3927
    %5265 = vmatpush1.bf16.msra.mxu0 %v3926
    %5266 = vmatprep.subr.bf16.mxu0 %v3931
    %5267 = vmatpush1.bf16.msra.mxu0 %v3930
    %5268 = vmatprep.subr.bf16.mxu0 %v3935
    %5269 = vmatpush1.bf16.msra.mxu0 %v3934
    %5270 = vmatprep.subr.bf16.mxu0 %v3939
    %5271 = vmatpush1.bf16.msra.mxu0 %v3938
    %5272 = vmatprep.subr.bf16.mxu0 %v3943
    %5273 = vmatpush1.bf16.msra.mxu0 %v3942
    %5274 = vmatprep.subr.bf16.mxu0 %v3947
    %5275 = vmatpush1.bf16.msra.mxu0 %v3946
    %5276 = vmatprep.subr.bf16.mxu0 %v3951
    %5277 = vmatpush1.bf16.msra.mxu0 %v3950
    %5278 = vmatprep.subr.bf16.mxu0 %v3955
    %5279 = vmatpush1.bf16.msra.mxu0 %v3954
    %5280 = vmatprep.subr.bf16.mxu0 %v3959
    %5281 = vmatpush1.bf16.msra.mxu0 %v3958
    %5282 = vmatprep.mubr.bf16.mxu0 %v285
    %5283 = vmatmul.mubr.bf16.gmra.mrb[0].mxu0 %v284
    %v5284 = vpop.f32.mrb[0].mxu0
    %v5285 = vadd.f32 %v5244, %v5284
    %v5286 = vpop.f32.mrb[0].mxu0
    %v5287 = vadd.f32 %v5246, %v5286
    %v5288 = vpop.f32.mrb[0].mxu0
    %v5289 = vpop.f32.mrb[0].mxu0
    %5290 = vdwg.mxu0
    %5291 = vmatprep.subr.bf16.mxu0 %v3963
    %5292 = vmatpush1.bf16.msra.mxu0 %v3962
    %5293 = vmatprep.subr.bf16.mxu0 %v3967
    %5294 = vmatpush1.bf16.msra.mxu0 %v3966
    %5295 = vmatprep.subr.bf16.mxu0 %v3971
    %5296 = vmatpush1.bf16.msra.mxu0 %v3970
    %5297 = vmatprep.subr.bf16.mxu0 %v3975
    %5298 = vmatpush1.bf16.msra.mxu0 %v3974
    %5299 = vmatprep.subr.bf16.mxu0 %v3979
    %5300 = vmatpush1.bf16.msra.mxu0 %v3978
    %5301 = vmatprep.subr.bf16.mxu0 %v3983
    %5302 = vmatpush1.bf16.msra.mxu0 %v3982
    %5303 = vmatprep.subr.bf16.mxu0 %v3987
    %5304 = vmatpush1.bf16.msra.mxu0 %v3986
    %5305 = vmatprep.subr.bf16.mxu0 %v3991
    %5306 = vmatpush1.bf16.msra.mxu0 %v3990
    %5307 = vmatprep.subr.bf16.mxu0 %v3995
    %5308 = vmatpush1.bf16.msra.mxu0 %v3994
    %5309 = vmatprep.subr.bf16.mxu0 %v3999
    %5310 = vmatpush1.bf16.msra.mxu0 %v3998
    %5311 = vmatprep.subr.bf16.mxu0 %v4003
    %5312 = vmatpush1.bf16.msra.mxu0 %v4002
    %5313 = vmatprep.subr.bf16.mxu0 %v4007
    %5314 = vmatpush1.bf16.msra.mxu0 %v4006
    %5315 = vmatprep.subr.bf16.mxu0 %v4011
    %5316 = vmatpush1.bf16.msra.mxu0 %v4010
    %5317 = vmatprep.subr.bf16.mxu0 %v4015
    %5318 = vmatpush1.bf16.msra.mxu0 %v4014
    %5319 = vmatprep.subr.bf16.mxu0 %v4019
    %5320 = vmatpush1.bf16.msra.mxu0 %v4018
    %5321 = vmatprep.subr.bf16.mxu0 %v4023
    %5322 = vmatpush1.bf16.msra.mxu0 %v4022
    %5323 = vmatprep.mubr.bf16.mxu0 %v287
    %5324 = vmatmul.mubr.bf16.gmra.mrb[0].mxu0 %v286
    %v5325 = vpop.f32.mrb[0].mxu0
    %v5326 = vadd.f32 %v5285, %v5325
    %v5327 = vpop.f32.mrb[0].mxu0
    %v5328 = vadd.f32 %v5287, %v5327
    %v5329 = vpop.f32.mrb[0].mxu0
    %v5330 = vpop.f32.mrb[0].mxu0
    %5331 = vdwg.mxu0
    %5332 = vmatprep.subr.bf16.mxu0 %v4027
    %5333 = vmatpush1.bf16.msra.mxu0 %v4026
    %5334 = vmatprep.subr.bf16.mxu0 %v4031
    %5335 = vmatpush1.bf16.msra.mxu0 %v4030
    %5336 = vmatprep.subr.bf16.mxu0 %v4035
    %5337 = vmatpush1.bf16.msra.mxu0 %v4034
    %5338 = vmatprep.subr.bf16.mxu0 %v4039
    %5339 = vmatpush1.bf16.msra.mxu0 %v4038
    %5340 = vmatprep.subr.bf16.mxu0 %v4043
    %5341 = vmatpush1.bf16.msra.mxu0 %v4042
    %5342 = vmatprep.subr.bf16.mxu0 %v4047
    %5343 = vmatpush1.bf16.msra.mxu0 %v4046
    %5344 = vmatprep.subr.bf16.mxu0 %v4051
    %5345 = vmatpush1.bf16.msra.mxu0 %v4050
    %5346 = vmatprep.subr.bf16.mxu0 %v4055
    %5347 = vmatpush1.bf16.msra.mxu0 %v4054
    %5348 = vmatprep.subr.bf16.mxu0 %v4059
    %5349 = vmatpush1.bf16.msra.mxu0 %v4058
    %5350 = vmatprep.subr.bf16.mxu0 %v4063
    %5351 = vmatpush1.bf16.msra.mxu0 %v4062
    %5352 = vmatprep.subr.bf16.mxu0 %v4067
    %5353 = vmatpush1.bf16.msra.mxu0 %v4066
    %5354 = vmatprep.subr.bf16.mxu0 %v4071
    %5355 = vmatpush1.bf16.msra.mxu0 %v4070
    %5356 = vmatprep.subr.bf16.mxu0 %v4075
    %5357 = vmatpush1.bf16.msra.mxu0 %v4074
    %5358 = vmatprep.subr.bf16.mxu0 %v4079
    %5359 = vmatpush1.bf16.msra.mxu0 %v4078
    %5360 = vmatprep.subr.bf16.mxu0 %v4083
    %5361 = vmatpush1.bf16.msra.mxu0 %v4082
    %5362 = vmatprep.subr.bf16.mxu0 %v4087
    %5363 = vmatpush1.bf16.msra.mxu0 %v4086
    %5364 = vmatprep.mubr.bf16.mxu0 %v289
    %5365 = vmatmul.mubr.bf16.gmra.mrb[0].mxu0 %v288
    %v5366 = vpop.f32.mrb[0].mxu0
    %v5367 = vadd.f32 %v5326, %v5366
    %v5368 = vpop.f32.mrb[0].mxu0
    %v5369 = vadd.f32 %v5328, %v5368
    %v5370 = vpop.f32.mrb[0].mxu0
    %v5371 = vpop.f32.mrb[0].mxu0
    %5372 = vdwg.mxu0
    %5373 = vmatprep.subr.bf16.mxu0 %v4091
    %5374 = vmatpush1.bf16.msra.mxu0 %v4090
    %5375 = vmatprep.subr.bf16.mxu0 %v4095
    %5376 = vmatpush1.bf16.msra.mxu0 %v4094
    %5377 = vmatprep.subr.bf16.mxu0 %v4099
    %5378 = vmatpush1.bf16.msra.mxu0 %v4098
    %5379 = vmatprep.subr.bf16.mxu0 %v4103
    %5380 = vmatpush1.bf16.msra.mxu0 %v4102
    %5381 = vmatprep.subr.bf16.mxu0 %v4107
    %5382 = vmatpush1.bf16.msra.mxu0 %v4106
    %5383 = vmatprep.subr.bf16.mxu0 %v4111
    %5384 = vmatpush1.bf16.msra.mxu0 %v4110
    %5385 = vmatprep.subr.bf16.mxu0 %v4115
    %5386 = vmatpush1.bf16.msra.mxu0 %v4114
    %5387 = vmatprep.subr.bf16.mxu0 %v4119
    %5388 = vmatpush1.bf16.msra.mxu0 %v4118
    %5389 = vmatprep.subr.bf16.mxu0 %v4123
    %5390 = vmatpush1.bf16.msra.mxu0 %v4122
    %5391 = vmatprep.subr.bf16.mxu0 %v4127
    %5392 = vmatpush1.bf16.msra.mxu0 %v4126
    %5393 = vmatprep.subr.bf16.mxu0 %v4131
    %5394 = vmatpush1.bf16.msra.mxu0 %v4130
    %5395 = vmatprep.subr.bf16.mxu0 %v4135
    %5396 = vmatpush1.bf16.msra.mxu0 %v4134
    %5397 = vmatprep.subr.bf16.mxu0 %v4139
    %5398 = vmatpush1.bf16.msra.mxu0 %v4138
    %5399 = vmatprep.subr.bf16.mxu0 %v4143
    %5400 = vmatpush1.bf16.msra.mxu0 %v4142
    %5401 = vmatprep.subr.bf16.mxu0 %v4147
    %5402 = vmatpush1.bf16.msra.mxu0 %v4146
    %5403 = vmatprep.subr.bf16.mxu0 %v4151
    %5404 = vmatpush1.bf16.msra.mxu0 %v4150
    %5405 = vmatprep.mubr.bf16.mxu0 %v291
    %5406 = vmatmul.mubr.bf16.gmra.mrb[0].mxu0 %v290
    %v5407 = vpop.f32.mrb[0].mxu0
    %v5408 = vadd.f32 %v5367, %v5407
    %v5409 = vpop.f32.mrb[0].mxu0
    %v5410 = vadd.f32 %v5369, %v5409
    %v5411 = vpop.f32.mrb[0].mxu0
    %v5412 = vpop.f32.mrb[0].mxu0
    %5413 = vdwg.mxu0
    %5414 = vmatprep.subr.bf16.mxu0 %v3389
    %5415 = vmatpush1.bf16.msra.mxu0 %v3388
    %5416 = vmatprep.subr.bf16.mxu0 %v3393
    %5417 = vmatpush1.bf16.msra.mxu0 %v3392
    %5418 = vmatprep.subr.bf16.mxu0 %v3397
    %5419 = vmatpush1.bf16.msra.mxu0 %v3396
    %5420 = vmatprep.subr.bf16.mxu0 %v3401
    %5421 = vmatpush1.bf16.msra.mxu0 %v3400
    %5422 = vmatprep.subr.bf16.mxu0 %v3405
    %5423 = vmatpush1.bf16.msra.mxu0 %v3404
    %5424 = vmatprep.subr.bf16.mxu0 %v3409
    %5425 = vmatpush1.bf16.msra.mxu0 %v3408
    %5426 = vmatprep.subr.bf16.mxu0 %v3413
    %5427 = vmatpush1.bf16.msra.mxu0 %v3412
    %5428 = vmatprep.subr.bf16.mxu0 %v3417
    %5429 = vmatpush1.bf16.msra.mxu0 %v3416
    %5430 = vmatprep.subr.bf16.mxu0 %v3421
    %5431 = vmatpush1.bf16.msra.mxu0 %v3420
    %5432 = vmatprep.subr.bf16.mxu0 %v3425
    %5433 = vmatpush1.bf16.msra.mxu0 %v3424
    %5434 = vmatprep.subr.bf16.mxu0 %v3429
    %5435 = vmatpush1.bf16.msra.mxu0 %v3428
    %5436 = vmatprep.subr.bf16.mxu0 %v3433
    %5437 = vmatpush1.bf16.msra.mxu0 %v3432
    %5438 = vmatprep.subr.bf16.mxu0 %v3437
    %5439 = vmatpush1.bf16.msra.mxu0 %v3436
    %5440 = vmatprep.subr.bf16.mxu0 %v3441
    %5441 = vmatpush1.bf16.msra.mxu0 %v3440
    %5442 = vmatprep.subr.bf16.mxu0 %v3445
    %5443 = vmatpush1.bf16.msra.mxu0 %v3444
    %5444 = vmatprep.subr.bf16.mxu0 %v3449
    %5445 = vmatpush1.bf16.msra.mxu0 %v3448
    %5446 = vmatprep.mubr.bf16.mxu0 %v269
    %5447 = vmatmul.mubr.bf16.gmra.mrb[0].mxu0 %v268
    %v5448 = vpop.f32.mrb[0].mxu0
    %v5449 = vadd.f32 %v1073, %v5448
    %v5450 = vpop.f32.mrb[0].mxu0
    %v5451 = vadd.f32 %v1077, %v5450
    %v5452 = vpop.f32.mrb[0].mxu0
    %v5453 = vpop.f32.mrb[0].mxu0
    %5454 = vdwg.mxu0
    %5455 = vmatprep.subr.bf16.mxu0 %v3453
    %5456 = vmatpush1.bf16.msra.mxu0 %v3452
    %5457 = vmatprep.subr.bf16.mxu0 %v3457
    %5458 = vmatpush1.bf16.msra.mxu0 %v3456
    %5459 = vmatprep.subr.bf16.mxu0 %v3461
    %5460 = vmatpush1.bf16.msra.mxu0 %v3460
    %5461 = vmatprep.subr.bf16.mxu0 %v3465
    %5462 = vmatpush1.bf16.msra.mxu0 %v3464
    %5463 = vmatprep.subr.bf16.mxu0 %v3469
    %5464 = vmatpush1.bf16.msra.mxu0 %v3468
    %5465 = vmatprep.subr.bf16.mxu0 %v3473
    %5466 = vmatpush1.bf16.msra.mxu0 %v3472
    %5467 = vmatprep.subr.bf16.mxu0 %v3477
    %5468 = vmatpush1.bf16.msra.mxu0 %v3476
    %5469 = vmatprep.subr.bf16.mxu0 %v3481
    %5470 = vmatpush1.bf16.msra.mxu0 %v3480
    %5471 = vmatprep.subr.bf16.mxu0 %v3485
    %5472 = vmatpush1.bf16.msra.mxu0 %v3484
    %5473 = vmatprep.subr.bf16.mxu0 %v3489
    %5474 = vmatpush1.bf16.msra.mxu0 %v3488
    %5475 = vmatprep.subr.bf16.mxu0 %v3493
    %5476 = vmatpush1.bf16.msra.mxu0 %v3492
    %5477 = vmatprep.subr.bf16.mxu0 %v3497
    %5478 = vmatpush1.bf16.msra.mxu0 %v3496
    %5479 = vmatprep.subr.bf16.mxu0 %v3501
    %5480 = vmatpush1.bf16.msra.mxu0 %v3500
    %5481 = vmatprep.subr.bf16.mxu0 %v3505
    %5482 = vmatpush1.bf16.msra.mxu0 %v3504
    %5483 = vmatprep.subr.bf16.mxu0 %v3509
    %5484 = vmatpush1.bf16.msra.mxu0 %v3508
    %5485 = vmatprep.subr.bf16.mxu0 %v3513
    %5486 = vmatpush1.bf16.msra.mxu0 %v3512
    %5487 = vmatprep.mubr.bf16.mxu0 %v271
    %5488 = vmatmul.mubr.bf16.gmra.mrb[0].mxu0 %v270
    %v5489 = vpop.f32.mrb[0].mxu0
    %v5490 = vadd.f32 %v5449, %v5489
    %v5491 = vpop.f32.mrb[0].mxu0
    %v5492 = vadd.f32 %v5451, %v5491
    %v5493 = vpop.f32.mrb[0].mxu0
    %v5494 = vpop.f32.mrb[0].mxu0
    %5495 = vdwg.mxu0
    %5496 = vmatprep.subr.bf16.mxu0 %v3517
    %5497 = vmatpush1.bf16.msra.mxu0 %v3516
    %5498 = vmatprep.subr.bf16.mxu0 %v3521
    %5499 = vmatpush1.bf16.msra.mxu0 %v3520
    %5500 = vmatprep.subr.bf16.mxu0 %v3525
    %5501 = vmatpush1.bf16.msra.mxu0 %v3524
    %5502 = vmatprep.subr.bf16.mxu0 %v3529
    %5503 = vmatpush1.bf16.msra.mxu0 %v3528
    %5504 = vmatprep.subr.bf16.mxu0 %v3533
    %5505 = vmatpush1.bf16.msra.mxu0 %v3532
    %5506 = vmatprep.subr.bf16.mxu0 %v3537
    %5507 = vmatpush1.bf16.msra.mxu0 %v3536
    %5508 = vmatprep.subr.bf16.mxu0 %v3541
    %5509 = vmatpush1.bf16.msra.mxu0 %v3540
    %5510 = vmatprep.subr.bf16.mxu0 %v3545
    %5511 = vmatpush1.bf16.msra.mxu0 %v3544
    %5512 = vmatprep.subr.bf16.mxu0 %v3549
    %5513 = vmatpush1.bf16.msra.mxu0 %v3548
    %5514 = vmatprep.subr.bf16.mxu0 %v3553
    %5515 = vmatpush1.bf16.msra.mxu0 %v3552
    %5516 = vmatprep.subr.bf16.mxu0 %v3557
    %5517 = vmatpush1.bf16.msra.mxu0 %v3556
    %5518 = vmatprep.subr.bf16.mxu0 %v3561
    %5519 = vmatpush1.bf16.msra.mxu0 %v3560
    %5520 = vmatprep.subr.bf16.mxu0 %v3565
    %5521 = vmatpush1.bf16.msra.mxu0 %v3564
    %5522 = vmatprep.subr.bf16.mxu0 %v3569
    %5523 = vmatpush1.bf16.msra.mxu0 %v3568
    %5524 = vmatprep.subr.bf16.mxu0 %v3573
    %5525 = vmatpush1.bf16.msra.mxu0 %v3572
    %5526 = vmatprep.subr.bf16.mxu0 %v3577
    %5527 = vmatpush1.bf16.msra.mxu0 %v3576
    %5528 = vmatprep.mubr.bf16.mxu0 %v273
    %5529 = vmatmul.mubr.bf16.gmra.mrb[0].mxu0 %v272
    %v5530 = vpop.f32.mrb[0].mxu0
    %v5531 = vadd.f32 %v5490, %v5530
    %v5532 = vpop.f32.mrb[0].mxu0
    %v5533 = vadd.f32 %v5492, %v5532
    %v5534 = vpop.f32.mrb[0].mxu0
    %v5535 = vpop.f32.mrb[0].mxu0
    %5536 = vdwg.mxu0
    %5537 = vmatprep.subr.bf16.mxu0 %v3581
    %5538 = vmatpush1.bf16.msra.mxu0 %v3580
    %5539 = vmatprep.subr.bf16.mxu0 %v3585
    %5540 = vmatpush1.bf16.msra.mxu0 %v3584
    %5541 = vmatprep.subr.bf16.mxu0 %v3589
    %5542 = vmatpush1.bf16.msra.mxu0 %v3588
    %5543 = vmatprep.subr.bf16.mxu0 %v3593
    %5544 = vmatpush1.bf16.msra.mxu0 %v3592
    %5545 = vmatprep.subr.bf16.mxu0 %v3597
    %5546 = vmatpush1.bf16.msra.mxu0 %v3596
    %5547 = vmatprep.subr.bf16.mxu0 %v3601
    %5548 = vmatpush1.bf16.msra.mxu0 %v3600
    %5549 = vmatprep.subr.bf16.mxu0 %v3605
    %5550 = vmatpush1.bf16.msra.mxu0 %v3604
    %5551 = vmatprep.subr.bf16.mxu0 %v3609
    %5552 = vmatpush1.bf16.msra.mxu0 %v3608
    %5553 = vmatprep.subr.bf16.mxu0 %v3613
    %5554 = vmatpush1.bf16.msra.mxu0 %v3612
    %5555 = vmatprep.subr.bf16.mxu0 %v3617
    %5556 = vmatpush1.bf16.msra.mxu0 %v3616
    %5557 = vmatprep.subr.bf16.mxu0 %v3621
    %5558 = vmatpush1.bf16.msra.mxu0 %v3620
    %5559 = vmatprep.subr.bf16.mxu0 %v3625
    %5560 = vmatpush1.bf16.msra.mxu0 %v3624
    %5561 = vmatprep.subr.bf16.mxu0 %v3629
    %5562 = vmatpush1.bf16.msra.mxu0 %v3628
    %5563 = vmatprep.subr.bf16.mxu0 %v3633
    %5564 = vmatpush1.bf16.msra.mxu0 %v3632
    %5565 = vmatprep.subr.bf16.mxu0 %v3637
    %5566 = vmatpush1.bf16.msra.mxu0 %v3636
    %5567 = vmatprep.subr.bf16.mxu0 %v3641
    %5568 = vmatpush1.bf16.msra.mxu0 %v3640
    %5569 = vmatprep.mubr.bf16.mxu0 %v275
    %5570 = vmatmul.mubr.bf16.gmra.mrb[0].mxu0 %v274
    %v5571 = vpop.f32.mrb[0].mxu0
    %v5572 = vadd.f32 %v5531, %v5571
    %v5573 = vpop.f32.mrb[0].mxu0
    %v5574 = vadd.f32 %v5533, %v5573
    %v5575 = vpop.f32.mrb[0].mxu0
    %v5576 = vpop.f32.mrb[0].mxu0
    %5577 = vdwg.mxu0
    %5578 = vmatprep.subr.bf16.mxu0 %v3645
    %5579 = vmatpush1.bf16.msra.mxu0 %v3644
    %5580 = vmatprep.subr.bf16.mxu0 %v3649
    %5581 = vmatpush1.bf16.msra.mxu0 %v3648
    %5582 = vmatprep.subr.bf16.mxu0 %v3653
    %5583 = vmatpush1.bf16.msra.mxu0 %v3652
    %5584 = vmatprep.subr.bf16.mxu0 %v3657
    %5585 = vmatpush1.bf16.msra.mxu0 %v3656
    %5586 = vmatprep.subr.bf16.mxu0 %v3661
    %5587 = vmatpush1.bf16.msra.mxu0 %v3660
    %5588 = vmatprep.subr.bf16.mxu0 %v3665
    %5589 = vmatpush1.bf16.msra.mxu0 %v3664
    %5590 = vmatprep.subr.bf16.mxu0 %v3669
    %5591 = vmatpush1.bf16.msra.mxu0 %v3668
    %5592 = vmatprep.subr.bf16.mxu0 %v3673
    %5593 = vmatpush1.bf16.msra.mxu0 %v3672
    %5594 = vmatprep.subr.bf16.mxu0 %v3677
    %5595 = vmatpush1.bf16.msra.mxu0 %v3676
    %5596 = vmatprep.subr.bf16.mxu0 %v3681
    %5597 = vmatpush1.bf16.msra.mxu0 %v3680
    %5598 = vmatprep.subr.bf16.mxu0 %v3685
    %5599 = vmatpush1.bf16.msra.mxu0 %v3684
    %5600 = vmatprep.subr.bf16.mxu0 %v3689
    %5601 = vmatpush1.bf16.msra.mxu0 %v3688
    %5602 = vmatprep.subr.bf16.mxu0 %v3693
    %5603 = vmatpush1.bf16.msra.mxu0 %v3692
    %5604 = vmatprep.subr.bf16.mxu0 %v3697
    %5605 = vmatpush1.bf16.msra.mxu0 %v3696
    %5606 = vmatprep.subr.bf16.mxu0 %v3701
    %5607 = vmatpush1.bf16.msra.mxu0 %v3700
    %5608 = vmatprep.subr.bf16.mxu0 %v3705
    %5609 = vmatpush1.bf16.msra.mxu0 %v3704
    %5610 = vmatprep.mubr.bf16.mxu0 %v277
    %5611 = vmatmul.mubr.bf16.gmra.mrb[0].mxu0 %v276
    %v5612 = vpop.f32.mrb[0].mxu0
    %v5613 = vadd.f32 %v5572, %v5612
    %v5614 = vpop.f32.mrb[0].mxu0
    %v5615 = vadd.f32 %v5574, %v5614
    %v5616 = vpop.f32.mrb[0].mxu0
    %v5617 = vpop.f32.mrb[0].mxu0
    %5618 = vdwg.mxu0
    %5619 = vmatprep.subr.bf16.mxu0 %v3709
    %5620 = vmatpush1.bf16.msra.mxu0 %v3708
    %5621 = vmatprep.subr.bf16.mxu0 %v3713
    %5622 = vmatpush1.bf16.msra.mxu0 %v3712
    %5623 = vmatprep.subr.bf16.mxu0 %v3717
    %5624 = vmatpush1.bf16.msra.mxu0 %v3716
    %5625 = vmatprep.subr.bf16.mxu0 %v3721
    %5626 = vmatpush1.bf16.msra.mxu0 %v3720
    %5627 = vmatprep.subr.bf16.mxu0 %v3725
    %5628 = vmatpush1.bf16.msra.mxu0 %v3724
    %5629 = vmatprep.subr.bf16.mxu0 %v3729
    %5630 = vmatpush1.bf16.msra.mxu0 %v3728
    %5631 = vmatprep.subr.bf16.mxu0 %v3733
    %5632 = vmatpush1.bf16.msra.mxu0 %v3732
    %5633 = vmatprep.subr.bf16.mxu0 %v3737
    %5634 = vmatpush1.bf16.msra.mxu0 %v3736
    %5635 = vmatprep.subr.bf16.mxu0 %v3741
    %5636 = vmatpush1.bf16.msra.mxu0 %v3740
    %5637 = vmatprep.subr.bf16.mxu0 %v3745
    %5638 = vmatpush1.bf16.msra.mxu0 %v3744
    %5639 = vmatprep.subr.bf16.mxu0 %v3749
    %5640 = vmatpush1.bf16.msra.mxu0 %v3748
    %5641 = vmatprep.subr.bf16.mxu0 %v3753
    %5642 = vmatpush1.bf16.msra.mxu0 %v3752
    %5643 = vmatprep.subr.bf16.mxu0 %v3757
    %5644 = vmatpush1.bf16.msra.mxu0 %v3756
    %5645 = vmatprep.subr.bf16.mxu0 %v3761
    %5646 = vmatpush1.bf16.msra.mxu0 %v3760
    %5647 = vmatprep.subr.bf16.mxu0 %v3765
    %5648 = vmatpush1.bf16.msra.mxu0 %v3764
    %5649 = vmatprep.subr.bf16.mxu0 %v3769
    %5650 = vmatpush1.bf16.msra.mxu0 %v3768
    %5651 = vmatprep.mubr.bf16.mxu0 %v279
    %5652 = vmatmul.mubr.bf16.gmra.mrb[0].mxu0 %v278
    %v5653 = vpop.f32.mrb[0].mxu0
    %v5654 = vadd.f32 %v5613, %v5653
    %v5655 = vpop.f32.mrb[0].mxu0
    %v5656 = vadd.f32 %v5615, %v5655
    %v5657 = vpop.f32.mrb[0].mxu0
    %v5658 = vpop.f32.mrb[0].mxu0
    %5659 = vdwg.mxu0
    %5660 = vmatprep.subr.bf16.mxu0 %v3773
    %5661 = vmatpush1.bf16.msra.mxu0 %v3772
    %5662 = vmatprep.subr.bf16.mxu0 %v3777
    %5663 = vmatpush1.bf16.msra.mxu0 %v3776
    %5664 = vmatprep.subr.bf16.mxu0 %v3781
    %5665 = vmatpush1.bf16.msra.mxu0 %v3780
    %5666 = vmatprep.subr.bf16.mxu0 %v3785
    %5667 = vmatpush1.bf16.msra.mxu0 %v3784
    %5668 = vmatprep.subr.bf16.mxu0 %v3789
    %5669 = vmatpush1.bf16.msra.mxu0 %v3788
    %5670 = vmatprep.subr.bf16.mxu0 %v3793
    %5671 = vmatpush1.bf16.msra.mxu0 %v3792
    %5672 = vmatprep.subr.bf16.mxu0 %v3797
    %5673 = vmatpush1.bf16.msra.mxu0 %v3796
    %5674 = vmatprep.subr.bf16.mxu0 %v3801
    %5675 = vmatpush1.bf16.msra.mxu0 %v3800
    %5676 = vmatprep.subr.bf16.mxu0 %v3805
    %5677 = vmatpush1.bf16.msra.mxu0 %v3804
    %5678 = vmatprep.subr.bf16.mxu0 %v3809
    %5679 = vmatpush1.bf16.msra.mxu0 %v3808
    %5680 = vmatprep.subr.bf16.mxu0 %v3813
    %5681 = vmatpush1.bf16.msra.mxu0 %v3812
    %5682 = vmatprep.subr.bf16.mxu0 %v3817
    %5683 = vmatpush1.bf16.msra.mxu0 %v3816
    %5684 = vmatprep.subr.bf16.mxu0 %v3821
    %5685 = vmatpush1.bf16.msra.mxu0 %v3820
    %5686 = vmatprep.subr.bf16.mxu0 %v3825
    %5687 = vmatpush1.bf16.msra.mxu0 %v3824
    %5688 = vmatprep.subr.bf16.mxu0 %v3829
    %5689 = vmatpush1.bf16.msra.mxu0 %v3828
    %5690 = vmatprep.subr.bf16.mxu0 %v3833
    %5691 = vmatpush1.bf16.msra.mxu0 %v3832
    %5692 = vmatprep.mubr.bf16.mxu0 %v281
    %5693 = vmatmul.mubr.bf16.gmra.mrb[0].mxu0 %v280
    %v5694 = vpop.f32.mrb[0].mxu0
    %v5695 = vadd.f32 %v5654, %v5694
    %v5696 = vpop.f32.mrb[0].mxu0
    %v5697 = vadd.f32 %v5656, %v5696
    %v5698 = vpop.f32.mrb[0].mxu0
    %v5699 = vpop.f32.mrb[0].mxu0
    %5700 = vdwg.mxu0
    %5701 = vmatprep.subr.bf16.mxu0 %v3837
    %5702 = vmatpush1.bf16.msra.mxu0 %v3836
    %5703 = vmatprep.subr.bf16.mxu0 %v3841
    %5704 = vmatpush1.bf16.msra.mxu0 %v3840
    %5705 = vmatprep.subr.bf16.mxu0 %v3845
    %5706 = vmatpush1.bf16.msra.mxu0 %v3844
    %5707 = vmatprep.subr.bf16.mxu0 %v3849
    %5708 = vmatpush1.bf16.msra.mxu0 %v3848
    %5709 = vmatprep.subr.bf16.mxu0 %v3853
    %5710 = vmatpush1.bf16.msra.mxu0 %v3852
    %5711 = vmatprep.subr.bf16.mxu0 %v3857
    %5712 = vmatpush1.bf16.msra.mxu0 %v3856
    %5713 = vmatprep.subr.bf16.mxu0 %v3861
    %5714 = vmatpush1.bf16.msra.mxu0 %v3860
    %5715 = vmatprep.subr.bf16.mxu0 %v3865
    %5716 = vmatpush1.bf16.msra.mxu0 %v3864
    %5717 = vmatprep.subr.bf16.mxu0 %v3869
    %5718 = vmatpush1.bf16.msra.mxu0 %v3868
    %5719 = vmatprep.subr.bf16.mxu0 %v3873
    %5720 = vmatpush1.bf16.msra.mxu0 %v3872
    %5721 = vmatprep.subr.bf16.mxu0 %v3877
    %5722 = vmatpush1.bf16.msra.mxu0 %v3876
    %5723 = vmatprep.subr.bf16.mxu0 %v3881
    %5724 = vmatpush1.bf16.msra.mxu0 %v3880
    %5725 = vmatprep.subr.bf16.mxu0 %v3885
    %5726 = vmatpush1.bf16.msra.mxu0 %v3884
    %5727 = vmatprep.subr.bf16.mxu0 %v3889
    %5728 = vmatpush1.bf16.msra.mxu0 %v3888
    %5729 = vmatprep.subr.bf16.mxu0 %v3893
    %5730 = vmatpush1.bf16.msra.mxu0 %v3892
    %5731 = vmatprep.subr.bf16.mxu0 %v3897
    %5732 = vmatpush1.bf16.msra.mxu0 %v3896
    %5733 = vmatprep.mubr.bf16.mxu0 %v283
    %5734 = vmatmul.mubr.bf16.gmra.mrb[0].mxu0 %v282
    %v5735 = vpop.f32.mrb[0].mxu0
    %v5736 = vadd.f32 %v5695, %v5735
    %v5737 = vpop.f32.mrb[0].mxu0
    %v5738 = vadd.f32 %v5697, %v5737
    %v5739 = vpop.f32.mrb[0].mxu0
    %v5740 = vpop.f32.mrb[0].mxu0
    %5741 = vdwg.mxu0
    %5742 = vmatprep.subr.bf16.mxu0 %v3901
    %5743 = vmatpush1.bf16.msra.mxu0 %v3900
    %5744 = vmatprep.subr.bf16.mxu0 %v3905
    %5745 = vmatpush1.bf16.msra.mxu0 %v3904
    %5746 = vmatprep.subr.bf16.mxu0 %v3909
    %5747 = vmatpush1.bf16.msra.mxu0 %v3908
    %5748 = vmatprep.subr.bf16.mxu0 %v3913
    %5749 = vmatpush1.bf16.msra.mxu0 %v3912
    %5750 = vmatprep.subr.bf16.mxu0 %v3917
    %5751 = vmatpush1.bf16.msra.mxu0 %v3916
    %5752 = vmatprep.subr.bf16.mxu0 %v3921
    %5753 = vmatpush1.bf16.msra.mxu0 %v3920
    %5754 = vmatprep.subr.bf16.mxu0 %v3925
    %5755 = vmatpush1.bf16.msra.mxu0 %v3924
    %5756 = vmatprep.subr.bf16.mxu0 %v3929
    %5757 = vmatpush1.bf16.msra.mxu0 %v3928
    %5758 = vmatprep.subr.bf16.mxu0 %v3933
    %5759 = vmatpush1.bf16.msra.mxu0 %v3932
    %5760 = vmatprep.subr.bf16.mxu0 %v3937
    %5761 = vmatpush1.bf16.msra.mxu0 %v3936
    %5762 = vmatprep.subr.bf16.mxu0 %v3941
    %5763 = vmatpush1.bf16.msra.mxu0 %v3940
    %5764 = vmatprep.subr.bf16.mxu0 %v3945
    %5765 = vmatpush1.bf16.msra.mxu0 %v3944
    %5766 = vmatprep.subr.bf16.mxu0 %v3949
    %5767 = vmatpush1.bf16.msra.mxu0 %v3948
    %5768 = vmatprep.subr.bf16.mxu0 %v3953
    %5769 = vmatpush1.bf16.msra.mxu0 %v3952
    %5770 = vmatprep.subr.bf16.mxu0 %v3957
    %5771 = vmatpush1.bf16.msra.mxu0 %v3956
    %5772 = vmatprep.subr.bf16.mxu0 %v3961
    %5773 = vmatpush1.bf16.msra.mxu0 %v3960
    %5774 = vmatprep.mubr.bf16.mxu0 %v285
    %5775 = vmatmul.mubr.bf16.gmra.mrb[0].mxu0 %v284
    %v5776 = vpop.f32.mrb[0].mxu0
    %v5777 = vadd.f32 %v5736, %v5776
    %v5778 = vpop.f32.mrb[0].mxu0
    %v5779 = vadd.f32 %v5738, %v5778
    %v5780 = vpop.f32.mrb[0].mxu0
    %v5781 = vpop.f32.mrb[0].mxu0
    %5782 = vdwg.mxu0
    %5783 = vmatprep.subr.bf16.mxu0 %v3965
    %5784 = vmatpush1.bf16.msra.mxu0 %v3964
    %5785 = vmatprep.subr.bf16.mxu0 %v3969
    %5786 = vmatpush1.bf16.msra.mxu0 %v3968
    %5787 = vmatprep.subr.bf16.mxu0 %v3973
    %5788 = vmatpush1.bf16.msra.mxu0 %v3972
    %5789 = vmatprep.subr.bf16.mxu0 %v3977
    %5790 = vmatpush1.bf16.msra.mxu0 %v3976
    %5791 = vmatprep.subr.bf16.mxu0 %v3981
    %5792 = vmatpush1.bf16.msra.mxu0 %v3980
    %5793 = vmatprep.subr.bf16.mxu0 %v3985
    %5794 = vmatpush1.bf16.msra.mxu0 %v3984
    %5795 = vmatprep.subr.bf16.mxu0 %v3989
    %5796 = vmatpush1.bf16.msra.mxu0 %v3988
    %5797 = vmatprep.subr.bf16.mxu0 %v3993
    %5798 = vmatpush1.bf16.msra.mxu0 %v3992
    %5799 = vmatprep.subr.bf16.mxu0 %v3997
    %5800 = vmatpush1.bf16.msra.mxu0 %v3996
    %5801 = vmatprep.subr.bf16.mxu0 %v4001
    %5802 = vmatpush1.bf16.msra.mxu0 %v4000
    %5803 = vmatprep.subr.bf16.mxu0 %v4005
    %5804 = vmatpush1.bf16.msra.mxu0 %v4004
    %5805 = vmatprep.subr.bf16.mxu0 %v4009
    %5806 = vmatpush1.bf16.msra.mxu0 %v4008
    %5807 = vmatprep.subr.bf16.mxu0 %v4013
    %5808 = vmatpush1.bf16.msra.mxu0 %v4012
    %5809 = vmatprep.subr.bf16.mxu0 %v4017
    %5810 = vmatpush1.bf16.msra.mxu0 %v4016
    %5811 = vmatprep.subr.bf16.mxu0 %v4021
    %5812 = vmatpush1.bf16.msra.mxu0 %v4020
    %5813 = vmatprep.subr.bf16.mxu0 %v4025
    %5814 = vmatpush1.bf16.msra.mxu0 %v4024
    %5815 = vmatprep.mubr.bf16.mxu0 %v287
    %5816 = vmatmul.mubr.bf16.gmra.mrb[0].mxu0 %v286
    %v5817 = vpop.f32.mrb[0].mxu0
    %v5818 = vadd.f32 %v5777, %v5817
    %v5819 = vpop.f32.mrb[0].mxu0
    %v5820 = vadd.f32 %v5779, %v5819
    %v5821 = vpop.f32.mrb[0].mxu0
    %v5822 = vpop.f32.mrb[0].mxu0
    %5823 = vdwg.mxu0
    %5824 = vmatprep.subr.bf16.mxu0 %v4029
    %5825 = vmatpush1.bf16.msra.mxu0 %v4028
    %5826 = vmatprep.subr.bf16.mxu0 %v4033
    %5827 = vmatpush1.bf16.msra.mxu0 %v4032
    %5828 = vmatprep.subr.bf16.mxu0 %v4037
    %5829 = vmatpush1.bf16.msra.mxu0 %v4036
    %5830 = vmatprep.subr.bf16.mxu0 %v4041
    %5831 = vmatpush1.bf16.msra.mxu0 %v4040
    %5832 = vmatprep.subr.bf16.mxu0 %v4045
    %5833 = vmatpush1.bf16.msra.mxu0 %v4044
    %5834 = vmatprep.subr.bf16.mxu0 %v4049
    %5835 = vmatpush1.bf16.msra.mxu0 %v4048
    %5836 = vmatprep.subr.bf16.mxu0 %v4053
    %5837 = vmatpush1.bf16.msra.mxu0 %v4052
    %5838 = vmatprep.subr.bf16.mxu0 %v4057
    %5839 = vmatpush1.bf16.msra.mxu0 %v4056
    %5840 = vmatprep.subr.bf16.mxu0 %v4061
    %5841 = vmatpush1.bf16.msra.mxu0 %v4060
    %5842 = vmatprep.subr.bf16.mxu0 %v4065
    %5843 = vmatpush1.bf16.msra.mxu0 %v4064
    %5844 = vmatprep.subr.bf16.mxu0 %v4069
    %5845 = vmatpush1.bf16.msra.mxu0 %v4068
    %5846 = vmatprep.subr.bf16.mxu0 %v4073
    %5847 = vmatpush1.bf16.msra.mxu0 %v4072
    %5848 = vmatprep.subr.bf16.mxu0 %v4077
    %5849 = vmatpush1.bf16.msra.mxu0 %v4076
    %5850 = vmatprep.subr.bf16.mxu0 %v4081
    %5851 = vmatpush1.bf16.msra.mxu0 %v4080
    %5852 = vmatprep.subr.bf16.mxu0 %v4085
    %5853 = vmatpush1.bf16.msra.mxu0 %v4084
    %5854 = vmatprep.subr.bf16.mxu0 %v4089
    %5855 = vmatpush1.bf16.msra.mxu0 %v4088
    %5856 = vmatprep.mubr.bf16.mxu0 %v289
    %5857 = vmatmul.mubr.bf16.gmra.mrb[0].mxu0 %v288
    %v5858 = vpop.f32.mrb[0].mxu0
    %v5859 = vadd.f32 %v5818, %v5858
    %v5860 = vpop.f32.mrb[0].mxu0
    %v5861 = vadd.f32 %v5820, %v5860
    %v5862 = vpop.f32.mrb[0].mxu0
    %v5863 = vpop.f32.mrb[0].mxu0
    %5864 = vdwg.mxu0
    %5865 = vmatprep.subr.bf16.mxu0 %v4093
    %5866 = vmatpush1.bf16.msra.mxu0 %v4092
    %5867 = vmatprep.subr.bf16.mxu0 %v4097
    %5868 = vmatpush1.bf16.msra.mxu0 %v4096
    %5869 = vmatprep.subr.bf16.mxu0 %v4101
    %5870 = vmatpush1.bf16.msra.mxu0 %v4100
    %5871 = vmatprep.subr.bf16.mxu0 %v4105
    %5872 = vmatpush1.bf16.msra.mxu0 %v4104
    %5873 = vmatprep.subr.bf16.mxu0 %v4109
    %5874 = vmatpush1.bf16.msra.mxu0 %v4108
    %5875 = vmatprep.subr.bf16.mxu0 %v4113
    %5876 = vmatpush1.bf16.msra.mxu0 %v4112
    %5877 = vmatprep.subr.bf16.mxu0 %v4117
    %5878 = vmatpush1.bf16.msra.mxu0 %v4116
    %5879 = vmatprep.subr.bf16.mxu0 %v4121
    %5880 = vmatpush1.bf16.msra.mxu0 %v4120
    %5881 = vmatprep.subr.bf16.mxu0 %v4125
    %5882 = vmatpush1.bf16.msra.mxu0 %v4124
    %5883 = vmatprep.subr.bf16.mxu0 %v4129
    %5884 = vmatpush1.bf16.msra.mxu0 %v4128
    %5885 = vmatprep.subr.bf16.mxu0 %v4133
    %5886 = vmatpush1.bf16.msra.mxu0 %v4132
    %5887 = vmatprep.subr.bf16.mxu0 %v4137
    %5888 = vmatpush1.bf16.msra.mxu0 %v4136
    %5889 = vmatprep.subr.bf16.mxu0 %v4141
    %5890 = vmatpush1.bf16.msra.mxu0 %v4140
    %5891 = vmatprep.subr.bf16.mxu0 %v4145
    %5892 = vmatpush1.bf16.msra.mxu0 %v4144
    %5893 = vmatprep.subr.bf16.mxu0 %v4149
    %5894 = vmatpush1.bf16.msra.mxu0 %v4148
    %5895 = vmatprep.subr.bf16.mxu0 %v4153
    %5896 = vmatpush1.bf16.msra.mxu0 %v4152
    %5897 = vmatprep.mubr.bf16.mxu0 %v291
    %5898 = vmatmul.mubr.bf16.gmra.mrb[0].mxu0 %v290
    %v5899 = vpop.f32.mrb[0].mxu0
    %v5900 = vadd.f32 %v5859, %v5899
    %v5901 = vpop.f32.mrb[0].mxu0
    %v5902 = vadd.f32 %v5861, %v5901
    %v5903 = vpop.f32.mrb[0].mxu0
    %v5904 = vpop.f32.mrb[0].mxu0
    %5905 = vdwg.mxu0
    %v5906 = vld [vmem:[%s1] sm:$0xff]
    %v5907 = vld [vmem:[%s1 + $0x8] sm:$0xff]
    %v5908 = vld [vmem:[%s1 + $0x10] sm:$0xff]
    %v5909 = vld [vmem:[%s1 + $0x18] sm:$0xff]
    %v5910 = vld [vmem:[%s1 + $0x20] sm:$0xff]
    %v5911 = vld [vmem:[%s1 + $0x28] sm:$0xff]
    %v5918 = vcombine.high %v5906, %v5906
    %v5920 = vunpack.c.l.s4 1983009808
    %v5921 = vunpack.c.0.s8 %v5920
    %v5922 = vlaneseq
    %v5923 = vshrl.u32 %v5922, 7
    %v5924 = vsub.s32 %v5921, %v5923
    %v5925 = vrot.slane %v5906, %v5924
    %v5927 = vunpack.c.l.s4 1983009808
    %v5928 = vunpack.c.0.s8 %v5927
    %v5929 = vlaneseq
    %v5930 = vshrl.u32 %v5929, 7
    %v5931 = vsub.s32 %v5928, %v5930
    %v5932 = vrot.slane %v5918, %v5931
    %v5933 = vcombine.high %v5925, %v5925
    %v5934 = vcombine.high %v5932, %v5932
    %v5935 = vcombine.high %v5907, %v5907
    %v5937 = vunpack.c.l.s4 1983009808
    %v5938 = vunpack.c.0.s8 %v5937
    %v5939 = vlaneseq
    %v5940 = vshrl.u32 %v5939, 7
    %v5941 = vsub.s32 %v5938, %v5940
    %v5942 = vrot.slane %v5907, %v5941
    %v5944 = vunpack.c.l.s4 1983009808
    %v5945 = vunpack.c.0.s8 %v5944
    %v5946 = vlaneseq
    %v5947 = vshrl.u32 %v5946, 7
    %v5948 = vsub.s32 %v5945, %v5947
    %v5949 = vrot.slane %v5935, %v5948
    %v5950 = vcombine.high %v5942, %v5942
    %v5951 = vcombine.high %v5949, %v5949
    %v5952 = vcombine.high %v5908, %v5908
    %v5954 = vunpack.c.l.s4 1983009808
    %v5955 = vunpack.c.0.s8 %v5954
    %v5956 = vlaneseq
    %v5957 = vshrl.u32 %v5956, 7
    %v5958 = vsub.s32 %v5955, %v5957
    %v5959 = vrot.slane %v5908, %v5958
    %v5961 = vunpack.c.l.s4 1983009808
    %v5962 = vunpack.c.0.s8 %v5961
    %v5963 = vlaneseq
    %v5964 = vshrl.u32 %v5963, 7
    %v5965 = vsub.s32 %v5962, %v5964
    %v5966 = vrot.slane %v5952, %v5965
    %v5967 = vcombine.high %v5959, %v5959
    %v5968 = vcombine.high %v5966, %v5966
    %v5969 = vcombine.high %v5909, %v5909
    %v5971 = vunpack.c.l.s4 1983009808
    %v5972 = vunpack.c.0.s8 %v5971
    %v5973 = vlaneseq
    %v5974 = vshrl.u32 %v5973, 7
    %v5975 = vsub.s32 %v5972, %v5974
    %v5976 = vrot.slane %v5909, %v5975
    %v5978 = vunpack.c.l.s4 1983009808
    %v5979 = vunpack.c.0.s8 %v5978
    %v5980 = vlaneseq
    %v5981 = vshrl.u32 %v5980, 7
    %v5982 = vsub.s32 %v5979, %v5981
    %v5983 = vrot.slane %v5969, %v5982
    %v5984 = vcombine.high %v5976, %v5976
    %v5985 = vcombine.high %v5983, %v5983
    %v5986 = vcombine.high %v5910, %v5910
    %v5988 = vunpack.c.l.s4 1983009808
    %v5989 = vunpack.c.0.s8 %v5988
    %v5990 = vlaneseq
    %v5991 = vshrl.u32 %v5990, 7
    %v5992 = vsub.s32 %v5989, %v5991
    %v5993 = vrot.slane %v5910, %v5992
    %v5995 = vunpack.c.l.s4 1983009808
    %v5996 = vunpack.c.0.s8 %v5995
    %v5997 = vlaneseq
    %v5998 = vshrl.u32 %v5997, 7
    %v5999 = vsub.s32 %v5996, %v5998
    %v6000 = vrot.slane %v5986, %v5999
    %v6001 = vcombine.high %v5993, %v5993
    %v6002 = vcombine.high %v6000, %v6000
    %v6003 = vcombine.high %v5911, %v5911
    %v6005 = vunpack.c.l.s4 1983009808
    %v6006 = vunpack.c.0.s8 %v6005
    %v6007 = vlaneseq
    %v6008 = vshrl.u32 %v6007, 7
    %v6009 = vsub.s32 %v6006, %v6008
    %v6010 = vrot.slane %v5911, %v6009
    %v6012 = vunpack.c.l.s4 1983009808
    %v6013 = vunpack.c.0.s8 %v6012
    %v6014 = vlaneseq
    %v6015 = vshrl.u32 %v6014, 7
    %v6016 = vsub.s32 %v6013, %v6015
    %v6017 = vrot.slane %v6003, %v6016
    %v6018 = vcombine.high %v6010, %v6010
    %v6019 = vcombine.high %v6017, %v6017
    %v6044 = vpack.c.bf16 %v5925, %v5925
    %v6045 = vpack.c.bf16 %v5933, %v5933
    %v6046 = vpack.c.bf16 %v5932, %v5932
    %v6047 = vpack.c.bf16 %v5934, %v5934
    %v6048 = vpack.c.bf16 %v5942, %v5942
    %v6049 = vpack.c.bf16 %v5950, %v5950
    %v6050 = vpack.c.bf16 %v5949, %v5949
    %v6051 = vpack.c.bf16 %v5951, %v5951
    %v6052 = vpack.c.bf16 %v5959, %v5959
    %v6053 = vpack.c.bf16 %v5967, %v5967
    %v6054 = vpack.c.bf16 %v5966, %v5966
    %v6055 = vpack.c.bf16 %v5968, %v5968
    %v6056 = vpack.c.bf16 %v5976, %v5976
    %v6057 = vpack.c.bf16 %v5984, %v5984
    %v6058 = vpack.c.bf16 %v5983, %v5983
    %v6059 = vpack.c.bf16 %v5985, %v5985
    %v6060 = vpack.c.bf16 %v5993, %v5993
    %v6061 = vpack.c.bf16 %v6001, %v6001
    %v6062 = vpack.c.bf16 %v6000, %v6000
    %v6063 = vpack.c.bf16 %v6002, %v6002
    %v6064 = vpack.c.bf16 %v6010, %v6010
    %v6065 = vpack.c.bf16 %v6018, %v6018
    %v6066 = vpack.c.bf16 %v6017, %v6017
    %v6067 = vpack.c.bf16 %v6019, %v6019
    %6068 = vmatprep.subr.bf16.mxu0 %v3387
    %6069 = vmatpush1.bf16.msra.mxu0 %v3386
    %6070 = vmatprep.subr.bf16.mxu0 %v3391
    %6071 = vmatpush1.bf16.msra.mxu0 %v3390
    %6072 = vmatprep.subr.bf16.mxu0 %v3395
    %6073 = vmatpush1.bf16.msra.mxu0 %v3394
    %6074 = vmatprep.subr.bf16.mxu0 %v3399
    %6075 = vmatpush1.bf16.msra.mxu0 %v3398
    %6076 = vmatprep.subr.bf16.mxu0 %v3403
    %6077 = vmatpush1.bf16.msra.mxu0 %v3402
    %6078 = vmatprep.subr.bf16.mxu0 %v3407
    %6079 = vmatpush1.bf16.msra.mxu0 %v3406
    %6080 = vmatprep.subr.bf16.mxu0 %v3411
    %6081 = vmatpush1.bf16.msra.mxu0 %v3410
    %6082 = vmatprep.subr.bf16.mxu0 %v3415
    %6083 = vmatpush1.bf16.msra.mxu0 %v3414
    %6084 = vmatprep.subr.bf16.mxu0 %v3419
    %6085 = vmatpush1.bf16.msra.mxu0 %v3418
    %6086 = vmatprep.subr.bf16.mxu0 %v3423
    %6087 = vmatpush1.bf16.msra.mxu0 %v3422
    %6088 = vmatprep.subr.bf16.mxu0 %v3427
    %6089 = vmatpush1.bf16.msra.mxu0 %v3426
    %6090 = vmatprep.subr.bf16.mxu0 %v3431
    %6091 = vmatpush1.bf16.msra.mxu0 %v3430
    %6092 = vmatprep.subr.bf16.mxu0 %v3435
    %6093 = vmatpush1.bf16.msra.mxu0 %v3434
    %6094 = vmatprep.subr.bf16.mxu0 %v3439
    %6095 = vmatpush1.bf16.msra.mxu0 %v3438
    %6096 = vmatprep.subr.bf16.mxu0 %v3443
    %6097 = vmatpush1.bf16.msra.mxu0 %v3442
    %6098 = vmatprep.subr.bf16.mxu0 %v3447
    %6099 = vmatpush1.bf16.msra.mxu0 %v3446
    %6100 = vmatprep.mubr.bf16.mxu0 %v6045
    %6101 = vmatmul.mubr.bf16.gmra.mrb[0].mxu0 %v6044
    %v6102 = vpop.f32.mrb[0].mxu0
    %v6103 = vadd.f32 %v1065, %v6102
    %v6104 = vpop.f32.mrb[0].mxu0
    %v6105 = vadd.f32 %v1069, %v6104
    %v6106 = vpop.f32.mrb[0].mxu0
    %v6107 = vpop.f32.mrb[0].mxu0
    %6108 = vdwg.mxu0
    %6109 = vmatprep.subr.bf16.mxu0 %v3451
    %6110 = vmatpush1.bf16.msra.mxu0 %v3450
    %6111 = vmatprep.subr.bf16.mxu0 %v3455
    %6112 = vmatpush1.bf16.msra.mxu0 %v3454
    %6113 = vmatprep.subr.bf16.mxu0 %v3459
    %6114 = vmatpush1.bf16.msra.mxu0 %v3458
    %6115 = vmatprep.subr.bf16.mxu0 %v3463
    %6116 = vmatpush1.bf16.msra.mxu0 %v3462
    %6117 = vmatprep.subr.bf16.mxu0 %v3467
    %6118 = vmatpush1.bf16.msra.mxu0 %v3466
    %6119 = vmatprep.subr.bf16.mxu0 %v3471
    %6120 = vmatpush1.bf16.msra.mxu0 %v3470
    %6121 = vmatprep.subr.bf16.mxu0 %v3475
    %6122 = vmatpush1.bf16.msra.mxu0 %v3474
    %6123 = vmatprep.subr.bf16.mxu0 %v3479
    %6124 = vmatpush1.bf16.msra.mxu0 %v3478
    %6125 = vmatprep.subr.bf16.mxu0 %v3483
    %6126 = vmatpush1.bf16.msra.mxu0 %v3482
    %6127 = vmatprep.subr.bf16.mxu0 %v3487
    %6128 = vmatpush1.bf16.msra.mxu0 %v3486
    %6129 = vmatprep.subr.bf16.mxu0 %v3491
    %6130 = vmatpush1.bf16.msra.mxu0 %v3490
    %6131 = vmatprep.subr.bf16.mxu0 %v3495
    %6132 = vmatpush1.bf16.msra.mxu0 %v3494
    %6133 = vmatprep.subr.bf16.mxu0 %v3499
    %6134 = vmatpush1.bf16.msra.mxu0 %v3498
    %6135 = vmatprep.subr.bf16.mxu0 %v3503
    %6136 = vmatpush1.bf16.msra.mxu0 %v3502
    %6137 = vmatprep.subr.bf16.mxu0 %v3507
    %6138 = vmatpush1.bf16.msra.mxu0 %v3506
    %6139 = vmatprep.subr.bf16.mxu0 %v3511
    %6140 = vmatpush1.bf16.msra.mxu0 %v3510
    %6141 = vmatprep.mubr.bf16.mxu0 %v6047
    %6142 = vmatmul.mubr.bf16.gmra.mrb[0].mxu0 %v6046
    %v6143 = vpop.f32.mrb[0].mxu0
    %v6144 = vadd.f32 %v6103, %v6143
    %v6145 = vpop.f32.mrb[0].mxu0
    %v6146 = vadd.f32 %v6105, %v6145
    %v6147 = vpop.f32.mrb[0].mxu0
    %v6148 = vpop.f32.mrb[0].mxu0
    %6149 = vdwg.mxu0
    %6150 = vmatprep.subr.bf16.mxu0 %v3515
    %6151 = vmatpush1.bf16.msra.mxu0 %v3514
    %6152 = vmatprep.subr.bf16.mxu0 %v3519
    %6153 = vmatpush1.bf16.msra.mxu0 %v3518
    %6154 = vmatprep.subr.bf16.mxu0 %v3523
    %6155 = vmatpush1.bf16.msra.mxu0 %v3522
    %6156 = vmatprep.subr.bf16.mxu0 %v3527
    %6157 = vmatpush1.bf16.msra.mxu0 %v3526
    %6158 = vmatprep.subr.bf16.mxu0 %v3531
    %6159 = vmatpush1.bf16.msra.mxu0 %v3530
    %6160 = vmatprep.subr.bf16.mxu0 %v3535
    %6161 = vmatpush1.bf16.msra.mxu0 %v3534
    %6162 = vmatprep.subr.bf16.mxu0 %v3539
    %6163 = vmatpush1.bf16.msra.mxu0 %v3538
    %6164 = vmatprep.subr.bf16.mxu0 %v3543
    %6165 = vmatpush1.bf16.msra.mxu0 %v3542
    %6166 = vmatprep.subr.bf16.mxu0 %v3547
    %6167 = vmatpush1.bf16.msra.mxu0 %v3546
    %6168 = vmatprep.subr.bf16.mxu0 %v3551
    %6169 = vmatpush1.bf16.msra.mxu0 %v3550
    %6170 = vmatprep.subr.bf16.mxu0 %v3555
    %6171 = vmatpush1.bf16.msra.mxu0 %v3554
    %6172 = vmatprep.subr.bf16.mxu0 %v3559
    %6173 = vmatpush1.bf16.msra.mxu0 %v3558
    %6174 = vmatprep.subr.bf16.mxu0 %v3563
    %6175 = vmatpush1.bf16.msra.mxu0 %v3562
    %6176 = vmatprep.subr.bf16.mxu0 %v3567
    %6177 = vmatpush1.bf16.msra.mxu0 %v3566
    %6178 = vmatprep.subr.bf16.mxu0 %v3571
    %6179 = vmatpush1.bf16.msra.mxu0 %v3570
    %6180 = vmatprep.subr.bf16.mxu0 %v3575
    %6181 = vmatpush1.bf16.msra.mxu0 %v3574
    %6182 = vmatprep.mubr.bf16.mxu0 %v6049
    %6183 = vmatmul.mubr.bf16.gmra.mrb[0].mxu0 %v6048
    %v6184 = vpop.f32.mrb[0].mxu0
    %v6185 = vadd.f32 %v6144, %v6184
    %v6186 = vpop.f32.mrb[0].mxu0
    %v6187 = vadd.f32 %v6146, %v6186
    %v6188 = vpop.f32.mrb[0].mxu0
    %v6189 = vpop.f32.mrb[0].mxu0
    %6190 = vdwg.mxu0
    %6191 = vmatprep.subr.bf16.mxu0 %v3579
    %6192 = vmatpush1.bf16.msra.mxu0 %v3578
    %6193 = vmatprep.subr.bf16.mxu0 %v3583
    %6194 = vmatpush1.bf16.msra.mxu0 %v3582
    %6195 = vmatprep.subr.bf16.mxu0 %v3587
    %6196 = vmatpush1.bf16.msra.mxu0 %v3586
    %6197 = vmatprep.subr.bf16.mxu0 %v3591
    %6198 = vmatpush1.bf16.msra.mxu0 %v3590
    %6199 = vmatprep.subr.bf16.mxu0 %v3595
    %6200 = vmatpush1.bf16.msra.mxu0 %v3594
    %6201 = vmatprep.subr.bf16.mxu0 %v3599
    %6202 = vmatpush1.bf16.msra.mxu0 %v3598
    %6203 = vmatprep.subr.bf16.mxu0 %v3603
    %6204 = vmatpush1.bf16.msra.mxu0 %v3602
    %6205 = vmatprep.subr.bf16.mxu0 %v3607
    %6206 = vmatpush1.bf16.msra.mxu0 %v3606
    %6207 = vmatprep.subr.bf16.mxu0 %v3611
    %6208 = vmatpush1.bf16.msra.mxu0 %v3610
    %6209 = vmatprep.subr.bf16.mxu0 %v3615
    %6210 = vmatpush1.bf16.msra.mxu0 %v3614
    %6211 = vmatprep.subr.bf16.mxu0 %v3619
    %6212 = vmatpush1.bf16.msra.mxu0 %v3618
    %6213 = vmatprep.subr.bf16.mxu0 %v3623
    %6214 = vmatpush1.bf16.msra.mxu0 %v3622
    %6215 = vmatprep.subr.bf16.mxu0 %v3627
    %6216 = vmatpush1.bf16.msra.mxu0 %v3626
    %6217 = vmatprep.subr.bf16.mxu0 %v3631
    %6218 = vmatpush1.bf16.msra.mxu0 %v3630
    %6219 = vmatprep.subr.bf16.mxu0 %v3635
    %6220 = vmatpush1.bf16.msra.mxu0 %v3634
    %6221 = vmatprep.subr.bf16.mxu0 %v3639
    %6222 = vmatpush1.bf16.msra.mxu0 %v3638
    %6223 = vmatprep.mubr.bf16.mxu0 %v6051
    %6224 = vmatmul.mubr.bf16.gmra.mrb[0].mxu0 %v6050
    %v6225 = vpop.f32.mrb[0].mxu0
    %v6226 = vadd.f32 %v6185, %v6225
    %v6227 = vpop.f32.mrb[0].mxu0
    %v6228 = vadd.f32 %v6187, %v6227
    %v6229 = vpop.f32.mrb[0].mxu0
    %v6230 = vpop.f32.mrb[0].mxu0
    %6231 = vdwg.mxu0
    %6232 = vmatprep.subr.bf16.mxu0 %v3643
    %6233 = vmatpush1.bf16.msra.mxu0 %v3642
    %6234 = vmatprep.subr.bf16.mxu0 %v3647
    %6235 = vmatpush1.bf16.msra.mxu0 %v3646
    %6236 = vmatprep.subr.bf16.mxu0 %v3651
    %6237 = vmatpush1.bf16.msra.mxu0 %v3650
    %6238 = vmatprep.subr.bf16.mxu0 %v3655
    %6239 = vmatpush1.bf16.msra.mxu0 %v3654
    %6240 = vmatprep.subr.bf16.mxu0 %v3659
    %6241 = vmatpush1.bf16.msra.mxu0 %v3658
    %6242 = vmatprep.subr.bf16.mxu0 %v3663
    %6243 = vmatpush1.bf16.msra.mxu0 %v3662
    %6244 = vmatprep.subr.bf16.mxu0 %v3667
    %6245 = vmatpush1.bf16.msra.mxu0 %v3666
    %6246 = vmatprep.subr.bf16.mxu0 %v3671
    %6247 = vmatpush1.bf16.msra.mxu0 %v3670
    %6248 = vmatprep.subr.bf16.mxu0 %v3675
    %6249 = vmatpush1.bf16.msra.mxu0 %v3674
    %6250 = vmatprep.subr.bf16.mxu0 %v3679
    %6251 = vmatpush1.bf16.msra.mxu0 %v3678
    %6252 = vmatprep.subr.bf16.mxu0 %v3683
    %6253 = vmatpush1.bf16.msra.mxu0 %v3682
    %6254 = vmatprep.subr.bf16.mxu0 %v3687
    %6255 = vmatpush1.bf16.msra.mxu0 %v3686
    %6256 = vmatprep.subr.bf16.mxu0 %v3691
    %6257 = vmatpush1.bf16.msra.mxu0 %v3690
    %6258 = vmatprep.subr.bf16.mxu0 %v3695
    %6259 = vmatpush1.bf16.msra.mxu0 %v3694
    %6260 = vmatprep.subr.bf16.mxu0 %v3699
    %6261 = vmatpush1.bf16.msra.mxu0 %v3698
    %6262 = vmatprep.subr.bf16.mxu0 %v3703
    %6263 = vmatpush1.bf16.msra.mxu0 %v3702
    %6264 = vmatprep.mubr.bf16.mxu0 %v6053
    %6265 = vmatmul.mubr.bf16.gmra.mrb[0].mxu0 %v6052
    %v6266 = vpop.f32.mrb[0].mxu0
    %v6267 = vadd.f32 %v6226, %v6266
    %v6268 = vpop.f32.mrb[0].mxu0
    %v6269 = vadd.f32 %v6228, %v6268
    %v6270 = vpop.f32.mrb[0].mxu0
    %v6271 = vpop.f32.mrb[0].mxu0
    %6272 = vdwg.mxu0
    %6273 = vmatprep.subr.bf16.mxu0 %v3707
    %6274 = vmatpush1.bf16.msra.mxu0 %v3706
    %6275 = vmatprep.subr.bf16.mxu0 %v3711
    %6276 = vmatpush1.bf16.msra.mxu0 %v3710
    %6277 = vmatprep.subr.bf16.mxu0 %v3715
    %6278 = vmatpush1.bf16.msra.mxu0 %v3714
    %6279 = vmatprep.subr.bf16.mxu0 %v3719
    %6280 = vmatpush1.bf16.msra.mxu0 %v3718
    %6281 = vmatprep.subr.bf16.mxu0 %v3723
    %6282 = vmatpush1.bf16.msra.mxu0 %v3722
    %6283 = vmatprep.subr.bf16.mxu0 %v3727
    %6284 = vmatpush1.bf16.msra.mxu0 %v3726
    %6285 = vmatprep.subr.bf16.mxu0 %v3731
    %6286 = vmatpush1.bf16.msra.mxu0 %v3730
    %6287 = vmatprep.subr.bf16.mxu0 %v3735
    %6288 = vmatpush1.bf16.msra.mxu0 %v3734
    %6289 = vmatprep.subr.bf16.mxu0 %v3739
    %6290 = vmatpush1.bf16.msra.mxu0 %v3738
    %6291 = vmatprep.subr.bf16.mxu0 %v3743
    %6292 = vmatpush1.bf16.msra.mxu0 %v3742
    %6293 = vmatprep.subr.bf16.mxu0 %v3747
    %6294 = vmatpush1.bf16.msra.mxu0 %v3746
    %6295 = vmatprep.subr.bf16.mxu0 %v3751
    %6296 = vmatpush1.bf16.msra.mxu0 %v3750
    %6297 = vmatprep.subr.bf16.mxu0 %v3755
    %6298 = vmatpush1.bf16.msra.mxu0 %v3754
    %6299 = vmatprep.subr.bf16.mxu0 %v3759
    %6300 = vmatpush1.bf16.msra.mxu0 %v3758
    %6301 = vmatprep.subr.bf16.mxu0 %v3763
    %6302 = vmatpush1.bf16.msra.mxu0 %v3762
    %6303 = vmatprep.subr.bf16.mxu0 %v3767
    %6304 = vmatpush1.bf16.msra.mxu0 %v3766
    %6305 = vmatprep.mubr.bf16.mxu0 %v6055
    %6306 = vmatmul.mubr.bf16.gmra.mrb[0].mxu0 %v6054
    %v6307 = vpop.f32.mrb[0].mxu0
    %v6308 = vadd.f32 %v6267, %v6307
    %v6309 = vpop.f32.mrb[0].mxu0
    %v6310 = vadd.f32 %v6269, %v6309
    %v6311 = vpop.f32.mrb[0].mxu0
    %v6312 = vpop.f32.mrb[0].mxu0
    %6313 = vdwg.mxu0
    %6314 = vmatprep.subr.bf16.mxu0 %v3771
    %6315 = vmatpush1.bf16.msra.mxu0 %v3770
    %6316 = vmatprep.subr.bf16.mxu0 %v3775
    %6317 = vmatpush1.bf16.msra.mxu0 %v3774
    %6318 = vmatprep.subr.bf16.mxu0 %v3779
    %6319 = vmatpush1.bf16.msra.mxu0 %v3778
    %6320 = vmatprep.subr.bf16.mxu0 %v3783
    %6321 = vmatpush1.bf16.msra.mxu0 %v3782
    %6322 = vmatprep.subr.bf16.mxu0 %v3787
    %6323 = vmatpush1.bf16.msra.mxu0 %v3786
    %6324 = vmatprep.subr.bf16.mxu0 %v3791
    %6325 = vmatpush1.bf16.msra.mxu0 %v3790
    %6326 = vmatprep.subr.bf16.mxu0 %v3795
    %6327 = vmatpush1.bf16.msra.mxu0 %v3794
    %6328 = vmatprep.subr.bf16.mxu0 %v3799
    %6329 = vmatpush1.bf16.msra.mxu0 %v3798
    %6330 = vmatprep.subr.bf16.mxu0 %v3803
    %6331 = vmatpush1.bf16.msra.mxu0 %v3802
    %6332 = vmatprep.subr.bf16.mxu0 %v3807
    %6333 = vmatpush1.bf16.msra.mxu0 %v3806
    %6334 = vmatprep.subr.bf16.mxu0 %v3811
    %6335 = vmatpush1.bf16.msra.mxu0 %v3810
    %6336 = vmatprep.subr.bf16.mxu0 %v3815
    %6337 = vmatpush1.bf16.msra.mxu0 %v3814
    %6338 = vmatprep.subr.bf16.mxu0 %v3819
    %6339 = vmatpush1.bf16.msra.mxu0 %v3818
    %6340 = vmatprep.subr.bf16.mxu0 %v3823
    %6341 = vmatpush1.bf16.msra.mxu0 %v3822
    %6342 = vmatprep.subr.bf16.mxu0 %v3827
    %6343 = vmatpush1.bf16.msra.mxu0 %v3826
    %6344 = vmatprep.subr.bf16.mxu0 %v3831
    %6345 = vmatpush1.bf16.msra.mxu0 %v3830
    %6346 = vmatprep.mubr.bf16.mxu0 %v6057
    %6347 = vmatmul.mubr.bf16.gmra.mrb[0].mxu0 %v6056
    %v6348 = vpop.f32.mrb[0].mxu0
    %v6349 = vadd.f32 %v6308, %v6348
    %v6350 = vpop.f32.mrb[0].mxu0
    %v6351 = vadd.f32 %v6310, %v6350
    %v6352 = vpop.f32.mrb[0].mxu0
    %v6353 = vpop.f32.mrb[0].mxu0
    %6354 = vdwg.mxu0
    %6355 = vmatprep.subr.bf16.mxu0 %v3835
    %6356 = vmatpush1.bf16.msra.mxu0 %v3834
    %6357 = vmatprep.subr.bf16.mxu0 %v3839
    %6358 = vmatpush1.bf16.msra.mxu0 %v3838
    %6359 = vmatprep.subr.bf16.mxu0 %v3843
    %6360 = vmatpush1.bf16.msra.mxu0 %v3842
    %6361 = vmatprep.subr.bf16.mxu0 %v3847
    %6362 = vmatpush1.bf16.msra.mxu0 %v3846
    %6363 = vmatprep.subr.bf16.mxu0 %v3851
    %6364 = vmatpush1.bf16.msra.mxu0 %v3850
    %6365 = vmatprep.subr.bf16.mxu0 %v3855
    %6366 = vmatpush1.bf16.msra.mxu0 %v3854
    %6367 = vmatprep.subr.bf16.mxu0 %v3859
    %6368 = vmatpush1.bf16.msra.mxu0 %v3858
    %6369 = vmatprep.subr.bf16.mxu0 %v3863
    %6370 = vmatpush1.bf16.msra.mxu0 %v3862
    %6371 = vmatprep.subr.bf16.mxu0 %v3867
    %6372 = vmatpush1.bf16.msra.mxu0 %v3866
    %6373 = vmatprep.subr.bf16.mxu0 %v3871
    %6374 = vmatpush1.bf16.msra.mxu0 %v3870
    %6375 = vmatprep.subr.bf16.mxu0 %v3875
    %6376 = vmatpush1.bf16.msra.mxu0 %v3874
    %6377 = vmatprep.subr.bf16.mxu0 %v3879
    %6378 = vmatpush1.bf16.msra.mxu0 %v3878
    %6379 = vmatprep.subr.bf16.mxu0 %v3883
    %6380 = vmatpush1.bf16.msra.mxu0 %v3882
    %6381 = vmatprep.subr.bf16.mxu0 %v3887
    %6382 = vmatpush1.bf16.msra.mxu0 %v3886
    %6383 = vmatprep.subr.bf16.mxu0 %v3891
    %6384 = vmatpush1.bf16.msra.mxu0 %v3890
    %6385 = vmatprep.subr.bf16.mxu0 %v3895
    %6386 = vmatpush1.bf16.msra.mxu0 %v3894
    %6387 = vmatprep.mubr.bf16.mxu0 %v6059
    %6388 = vmatmul.mubr.bf16.gmra.mrb[0].mxu0 %v6058
    %v6389 = vpop.f32.mrb[0].mxu0
    %v6390 = vadd.f32 %v6349, %v6389
    %v6391 = vpop.f32.mrb[0].mxu0
    %v6392 = vadd.f32 %v6351, %v6391
    %v6393 = vpop.f32.mrb[0].mxu0
    %v6394 = vpop.f32.mrb[0].mxu0
    %6395 = vdwg.mxu0
    %6396 = vmatprep.subr.bf16.mxu0 %v3899
    %6397 = vmatpush1.bf16.msra.mxu0 %v3898
    %6398 = vmatprep.subr.bf16.mxu0 %v3903
    %6399 = vmatpush1.bf16.msra.mxu0 %v3902
    %6400 = vmatprep.subr.bf16.mxu0 %v3907
    %6401 = vmatpush1.bf16.msra.mxu0 %v3906
    %6402 = vmatprep.subr.bf16.mxu0 %v3911
    %6403 = vmatpush1.bf16.msra.mxu0 %v3910
    %6404 = vmatprep.subr.bf16.mxu0 %v3915
    %6405 = vmatpush1.bf16.msra.mxu0 %v3914
    %6406 = vmatprep.subr.bf16.mxu0 %v3919
    %6407 = vmatpush1.bf16.msra.mxu0 %v3918
    %6408 = vmatprep.subr.bf16.mxu0 %v3923
    %6409 = vmatpush1.bf16.msra.mxu0 %v3922
    %6410 = vmatprep.subr.bf16.mxu0 %v3927
    %6411 = vmatpush1.bf16.msra.mxu0 %v3926
    %6412 = vmatprep.subr.bf16.mxu0 %v3931
    %6413 = vmatpush1.bf16.msra.mxu0 %v3930
    %6414 = vmatprep.subr.bf16.mxu0 %v3935
    %6415 = vmatpush1.bf16.msra.mxu0 %v3934
    %6416 = vmatprep.subr.bf16.mxu0 %v3939
    %6417 = vmatpush1.bf16.msra.mxu0 %v3938
    %6418 = vmatprep.subr.bf16.mxu0 %v3943
    %6419 = vmatpush1.bf16.msra.mxu0 %v3942
    %6420 = vmatprep.subr.bf16.mxu0 %v3947
    %6421 = vmatpush1.bf16.msra.mxu0 %v3946
    %6422 = vmatprep.subr.bf16.mxu0 %v3951
    %6423 = vmatpush1.bf16.msra.mxu0 %v3950
    %6424 = vmatprep.subr.bf16.mxu0 %v3955
    %6425 = vmatpush1.bf16.msra.mxu0 %v3954
    %6426 = vmatprep.subr.bf16.mxu0 %v3959
    %6427 = vmatpush1.bf16.msra.mxu0 %v3958
    %6428 = vmatprep.mubr.bf16.mxu0 %v6061
    %6429 = vmatmul.mubr.bf16.gmra.mrb[0].mxu0 %v6060
    %v6430 = vpop.f32.mrb[0].mxu0
    %v6431 = vadd.f32 %v6390, %v6430
    %v6432 = vpop.f32.mrb[0].mxu0
    %v6433 = vadd.f32 %v6392, %v6432
    %v6434 = vpop.f32.mrb[0].mxu0
    %v6435 = vpop.f32.mrb[0].mxu0
    %6436 = vdwg.mxu0
    %6437 = vmatprep.subr.bf16.mxu0 %v3963
    %6438 = vmatpush1.bf16.msra.mxu0 %v3962
    %6439 = vmatprep.subr.bf16.mxu0 %v3967
    %6440 = vmatpush1.bf16.msra.mxu0 %v3966
    %6441 = vmatprep.subr.bf16.mxu0 %v3971
    %6442 = vmatpush1.bf16.msra.mxu0 %v3970
    %6443 = vmatprep.subr.bf16.mxu0 %v3975
    %6444 = vmatpush1.bf16.msra.mxu0 %v3974
    %6445 = vmatprep.subr.bf16.mxu0 %v3979
    %6446 = vmatpush1.bf16.msra.mxu0 %v3978
    %6447 = vmatprep.subr.bf16.mxu0 %v3983
    %6448 = vmatpush1.bf16.msra.mxu0 %v3982
    %6449 = vmatprep.subr.bf16.mxu0 %v3987
    %6450 = vmatpush1.bf16.msra.mxu0 %v3986
    %6451 = vmatprep.subr.bf16.mxu0 %v3991
    %6452 = vmatpush1.bf16.msra.mxu0 %v3990
    %6453 = vmatprep.subr.bf16.mxu0 %v3995
    %6454 = vmatpush1.bf16.msra.mxu0 %v3994
    %6455 = vmatprep.subr.bf16.mxu0 %v3999
    %6456 = vmatpush1.bf16.msra.mxu0 %v3998
    %6457 = vmatprep.subr.bf16.mxu0 %v4003
    %6458 = vmatpush1.bf16.msra.mxu0 %v4002
    %6459 = vmatprep.subr.bf16.mxu0 %v4007
    %6460 = vmatpush1.bf16.msra.mxu0 %v4006
    %6461 = vmatprep.subr.bf16.mxu0 %v4011
    %6462 = vmatpush1.bf16.msra.mxu0 %v4010
    %6463 = vmatprep.subr.bf16.mxu0 %v4015
    %6464 = vmatpush1.bf16.msra.mxu0 %v4014
    %6465 = vmatprep.subr.bf16.mxu0 %v4019
    %6466 = vmatpush1.bf16.msra.mxu0 %v4018
    %6467 = vmatprep.subr.bf16.mxu0 %v4023
    %6468 = vmatpush1.bf16.msra.mxu0 %v4022
    %6469 = vmatprep.mubr.bf16.mxu0 %v6063
    %6470 = vmatmul.mubr.bf16.gmra.mrb[0].mxu0 %v6062
    %v6471 = vpop.f32.mrb[0].mxu0
    %v6472 = vadd.f32 %v6431, %v6471
    %v6473 = vpop.f32.mrb[0].mxu0
    %v6474 = vadd.f32 %v6433, %v6473
    %v6475 = vpop.f32.mrb[0].mxu0
    %v6476 = vpop.f32.mrb[0].mxu0
    %6477 = vdwg.mxu0
    %6478 = vmatprep.subr.bf16.mxu0 %v4027
    %6479 = vmatpush1.bf16.msra.mxu0 %v4026
    %6480 = vmatprep.subr.bf16.mxu0 %v4031
    %6481 = vmatpush1.bf16.msra.mxu0 %v4030
    %6482 = vmatprep.subr.bf16.mxu0 %v4035
    %6483 = vmatpush1.bf16.msra.mxu0 %v4034
    %6484 = vmatprep.subr.bf16.mxu0 %v4039
    %6485 = vmatpush1.bf16.msra.mxu0 %v4038
    %6486 = vmatprep.subr.bf16.mxu0 %v4043
    %6487 = vmatpush1.bf16.msra.mxu0 %v4042
    %6488 = vmatprep.subr.bf16.mxu0 %v4047
    %6489 = vmatpush1.bf16.msra.mxu0 %v4046
    %6490 = vmatprep.subr.bf16.mxu0 %v4051
    %6491 = vmatpush1.bf16.msra.mxu0 %v4050
    %6492 = vmatprep.subr.bf16.mxu0 %v4055
    %6493 = vmatpush1.bf16.msra.mxu0 %v4054
    %6494 = vmatprep.subr.bf16.mxu0 %v4059
    %6495 = vmatpush1.bf16.msra.mxu0 %v4058
    %6496 = vmatprep.subr.bf16.mxu0 %v4063
    %6497 = vmatpush1.bf16.msra.mxu0 %v4062
    %6498 = vmatprep.subr.bf16.mxu0 %v4067
    %6499 = vmatpush1.bf16.msra.mxu0 %v4066
    %6500 = vmatprep.subr.bf16.mxu0 %v4071
    %6501 = vmatpush1.bf16.msra.mxu0 %v4070
    %6502 = vmatprep.subr.bf16.mxu0 %v4075
    %6503 = vmatpush1.bf16.msra.mxu0 %v4074
    %6504 = vmatprep.subr.bf16.mxu0 %v4079
    %6505 = vmatpush1.bf16.msra.mxu0 %v4078
    %6506 = vmatprep.subr.bf16.mxu0 %v4083
    %6507 = vmatpush1.bf16.msra.mxu0 %v4082
    %6508 = vmatprep.subr.bf16.mxu0 %v4087
    %6509 = vmatpush1.bf16.msra.mxu0 %v4086
    %6510 = vmatprep.mubr.bf16.mxu0 %v6065
    %6511 = vmatmul.mubr.bf16.gmra.mrb[0].mxu0 %v6064
    %v6512 = vpop.f32.mrb[0].mxu0
    %v6513 = vadd.f32 %v6472, %v6512
    %v6514 = vpop.f32.mrb[0].mxu0
    %v6515 = vadd.f32 %v6474, %v6514
    %v6516 = vpop.f32.mrb[0].mxu0
    %v6517 = vpop.f32.mrb[0].mxu0
    %6518 = vdwg.mxu0
    %6519 = vmatprep.subr.bf16.mxu0 %v4091
    %6520 = vmatpush1.bf16.msra.mxu0 %v4090
    %6521 = vmatprep.subr.bf16.mxu0 %v4095
    %6522 = vmatpush1.bf16.msra.mxu0 %v4094
    %6523 = vmatprep.subr.bf16.mxu0 %v4099
    %6524 = vmatpush1.bf16.msra.mxu0 %v4098
    %6525 = vmatprep.subr.bf16.mxu0 %v4103
    %6526 = vmatpush1.bf16.msra.mxu0 %v4102
    %6527 = vmatprep.subr.bf16.mxu0 %v4107
    %6528 = vmatpush1.bf16.msra.mxu0 %v4106
    %6529 = vmatprep.subr.bf16.mxu0 %v4111
    %6530 = vmatpush1.bf16.msra.mxu0 %v4110
    %6531 = vmatprep.subr.bf16.mxu0 %v4115
    %6532 = vmatpush1.bf16.msra.mxu0 %v4114
    %6533 = vmatprep.subr.bf16.mxu0 %v4119
    %6534 = vmatpush1.bf16.msra.mxu0 %v4118
    %6535 = vmatprep.subr.bf16.mxu0 %v4123
    %6536 = vmatpush1.bf16.msra.mxu0 %v4122
    %6537 = vmatprep.subr.bf16.mxu0 %v4127
    %6538 = vmatpush1.bf16.msra.mxu0 %v4126
    %6539 = vmatprep.subr.bf16.mxu0 %v4131
    %6540 = vmatpush1.bf16.msra.mxu0 %v4130
    %6541 = vmatprep.subr.bf16.mxu0 %v4135
    %6542 = vmatpush1.bf16.msra.mxu0 %v4134
    %6543 = vmatprep.subr.bf16.mxu0 %v4139
    %6544 = vmatpush1.bf16.msra.mxu0 %v4138
    %6545 = vmatprep.subr.bf16.mxu0 %v4143
    %6546 = vmatpush1.bf16.msra.mxu0 %v4142
    %6547 = vmatprep.subr.bf16.mxu0 %v4147
    %6548 = vmatpush1.bf16.msra.mxu0 %v4146
    %6549 = vmatprep.subr.bf16.mxu0 %v4151
    %6550 = vmatpush1.bf16.msra.mxu0 %v4150
    %6551 = vmatprep.mubr.bf16.mxu0 %v6067
    %6552 = vmatmul.mubr.bf16.gmra.mrb[0].mxu0 %v6066
    %v6553 = vpop.f32.mrb[0].mxu0
    %v6554 = vadd.f32 %v6513, %v6553
    %v6555 = vpop.f32.mrb[0].mxu0
    %v6556 = vadd.f32 %v6515, %v6555
    %v6557 = vpop.f32.mrb[0].mxu0
    %v6558 = vpop.f32.mrb[0].mxu0
    %6559 = vdwg.mxu0
    %6560 = vmatprep.subr.bf16.mxu0 %v3389
    %6561 = vmatpush1.bf16.msra.mxu0 %v3388
    %6562 = vmatprep.subr.bf16.mxu0 %v3393
    %6563 = vmatpush1.bf16.msra.mxu0 %v3392
    %6564 = vmatprep.subr.bf16.mxu0 %v3397
    %6565 = vmatpush1.bf16.msra.mxu0 %v3396
    %6566 = vmatprep.subr.bf16.mxu0 %v3401
    %6567 = vmatpush1.bf16.msra.mxu0 %v3400
    %6568 = vmatprep.subr.bf16.mxu0 %v3405
    %6569 = vmatpush1.bf16.msra.mxu0 %v3404
    %6570 = vmatprep.subr.bf16.mxu0 %v3409
    %6571 = vmatpush1.bf16.msra.mxu0 %v3408
    %6572 = vmatprep.subr.bf16.mxu0 %v3413
    %6573 = vmatpush1.bf16.msra.mxu0 %v3412
    %6574 = vmatprep.subr.bf16.mxu0 %v3417
    %6575 = vmatpush1.bf16.msra.mxu0 %v3416
    %6576 = vmatprep.subr.bf16.mxu0 %v3421
    %6577 = vmatpush1.bf16.msra.mxu0 %v3420
    %6578 = vmatprep.subr.bf16.mxu0 %v3425
    %6579 = vmatpush1.bf16.msra.mxu0 %v3424
    %6580 = vmatprep.subr.bf16.mxu0 %v3429
    %6581 = vmatpush1.bf16.msra.mxu0 %v3428
    %6582 = vmatprep.subr.bf16.mxu0 %v3433
    %6583 = vmatpush1.bf16.msra.mxu0 %v3432
    %6584 = vmatprep.subr.bf16.mxu0 %v3437
    %6585 = vmatpush1.bf16.msra.mxu0 %v3436
    %6586 = vmatprep.subr.bf16.mxu0 %v3441
    %6587 = vmatpush1.bf16.msra.mxu0 %v3440
    %6588 = vmatprep.subr.bf16.mxu0 %v3445
    %6589 = vmatpush1.bf16.msra.mxu0 %v3444
    %6590 = vmatprep.subr.bf16.mxu0 %v3449
    %6591 = vmatpush1.bf16.msra.mxu0 %v3448
    %6592 = vmatprep.mubr.bf16.mxu0 %v6045
    %6593 = vmatmul.mubr.bf16.gmra.mrb[0].mxu0 %v6044
    %v6594 = vpop.f32.mrb[0].mxu0
    %v6595 = vadd.f32 %v1073, %v6594
    %v6596 = vpop.f32.mrb[0].mxu0
    %v6597 = vadd.f32 %v1077, %v6596
    %v6598 = vpop.f32.mrb[0].mxu0
    %v6599 = vpop.f32.mrb[0].mxu0
    %6600 = vdwg.mxu0
    %6601 = vmatprep.subr.bf16.mxu0 %v3453
    %6602 = vmatpush1.bf16.msra.mxu0 %v3452
    %6603 = vmatprep.subr.bf16.mxu0 %v3457
    %6604 = vmatpush1.bf16.msra.mxu0 %v3456
    %6605 = vmatprep.subr.bf16.mxu0 %v3461
    %6606 = vmatpush1.bf16.msra.mxu0 %v3460
    %6607 = vmatprep.subr.bf16.mxu0 %v3465
    %6608 = vmatpush1.bf16.msra.mxu0 %v3464
    %6609 = vmatprep.subr.bf16.mxu0 %v3469
    %6610 = vmatpush1.bf16.msra.mxu0 %v3468
    %6611 = vmatprep.subr.bf16.mxu0 %v3473
    %6612 = vmatpush1.bf16.msra.mxu0 %v3472
    %6613 = vmatprep.subr.bf16.mxu0 %v3477
    %6614 = vmatpush1.bf16.msra.mxu0 %v3476
    %6615 = vmatprep.subr.bf16.mxu0 %v3481
    %6616 = vmatpush1.bf16.msra.mxu0 %v3480
    %6617 = vmatprep.subr.bf16.mxu0 %v3485
    %6618 = vmatpush1.bf16.msra.mxu0 %v3484
    %6619 = vmatprep.subr.bf16.mxu0 %v3489
    %6620 = vmatpush1.bf16.msra.mxu0 %v3488
    %6621 = vmatprep.subr.bf16.mxu0 %v3493
    %6622 = vmatpush1.bf16.msra.mxu0 %v3492
    %6623 = vmatprep.subr.bf16.mxu0 %v3497
    %6624 = vmatpush1.bf16.msra.mxu0 %v3496
    %6625 = vmatprep.subr.bf16.mxu0 %v3501
    %6626 = vmatpush1.bf16.msra.mxu0 %v3500
    %6627 = vmatprep.subr.bf16.mxu0 %v3505
    %6628 = vmatpush1.bf16.msra.mxu0 %v3504
    %6629 = vmatprep.subr.bf16.mxu0 %v3509
    %6630 = vmatpush1.bf16.msra.mxu0 %v3508
    %6631 = vmatprep.subr.bf16.mxu0 %v3513
    %6632 = vmatpush1.bf16.msra.mxu0 %v3512
    %6633 = vmatprep.mubr.bf16.mxu0 %v6047
    %6634 = vmatmul.mubr.bf16.gmra.mrb[0].mxu0 %v6046
    %v6635 = vpop.f32.mrb[0].mxu0
    %v6636 = vadd.f32 %v6595, %v6635
    %v6637 = vpop.f32.mrb[0].mxu0
    %v6638 = vadd.f32 %v6597, %v6637
    %v6639 = vpop.f32.mrb[0].mxu0
    %v6640 = vpop.f32.mrb[0].mxu0
    %6641 = vdwg.mxu0
    %6642 = vmatprep.subr.bf16.mxu0 %v3517
    %6643 = vmatpush1.bf16.msra.mxu0 %v3516
    %6644 = vmatprep.subr.bf16.mxu0 %v3521
    %6645 = vmatpush1.bf16.msra.mxu0 %v3520
    %6646 = vmatprep.subr.bf16.mxu0 %v3525
    %6647 = vmatpush1.bf16.msra.mxu0 %v3524
    %6648 = vmatprep.subr.bf16.mxu0 %v3529
    %6649 = vmatpush1.bf16.msra.mxu0 %v3528
    %6650 = vmatprep.subr.bf16.mxu0 %v3533
    %6651 = vmatpush1.bf16.msra.mxu0 %v3532
    %6652 = vmatprep.subr.bf16.mxu0 %v3537
    %6653 = vmatpush1.bf16.msra.mxu0 %v3536
    %6654 = vmatprep.subr.bf16.mxu0 %v3541
    %6655 = vmatpush1.bf16.msra.mxu0 %v3540
    %6656 = vmatprep.subr.bf16.mxu0 %v3545
    %6657 = vmatpush1.bf16.msra.mxu0 %v3544
    %6658 = vmatprep.subr.bf16.mxu0 %v3549
    %6659 = vmatpush1.bf16.msra.mxu0 %v3548
    %6660 = vmatprep.subr.bf16.mxu0 %v3553
    %6661 = vmatpush1.bf16.msra.mxu0 %v3552
    %6662 = vmatprep.subr.bf16.mxu0 %v3557
    %6663 = vmatpush1.bf16.msra.mxu0 %v3556
    %6664 = vmatprep.subr.bf16.mxu0 %v3561
    %6665 = vmatpush1.bf16.msra.mxu0 %v3560
    %6666 = vmatprep.subr.bf16.mxu0 %v3565
    %6667 = vmatpush1.bf16.msra.mxu0 %v3564
    %6668 = vmatprep.subr.bf16.mxu0 %v3569
    %6669 = vmatpush1.bf16.msra.mxu0 %v3568
    %6670 = vmatprep.subr.bf16.mxu0 %v3573
    %6671 = vmatpush1.bf16.msra.mxu0 %v3572
    %6672 = vmatprep.subr.bf16.mxu0 %v3577
    %6673 = vmatpush1.bf16.msra.mxu0 %v3576
    %6674 = vmatprep.mubr.bf16.mxu0 %v6049
    %6675 = vmatmul.mubr.bf16.gmra.mrb[0].mxu0 %v6048
    %v6676 = vpop.f32.mrb[0].mxu0
    %v6677 = vadd.f32 %v6636, %v6676
    %v6678 = vpop.f32.mrb[0].mxu0
    %v6679 = vadd.f32 %v6638, %v6678
    %v6680 = vpop.f32.mrb[0].mxu0
    %v6681 = vpop.f32.mrb[0].mxu0
    %6682 = vdwg.mxu0
    %6683 = vmatprep.subr.bf16.mxu0 %v3581
    %6684 = vmatpush1.bf16.msra.mxu0 %v3580
    %6685 = vmatprep.subr.bf16.mxu0 %v3585
    %6686 = vmatpush1.bf16.msra.mxu0 %v3584
    %6687 = vmatprep.subr.bf16.mxu0 %v3589
    %6688 = vmatpush1.bf16.msra.mxu0 %v3588
    %6689 = vmatprep.subr.bf16.mxu0 %v3593
    %6690 = vmatpush1.bf16.msra.mxu0 %v3592
    %6691 = vmatprep.subr.bf16.mxu0 %v3597
    %6692 = vmatpush1.bf16.msra.mxu0 %v3596
    %6693 = vmatprep.subr.bf16.mxu0 %v3601
    %6694 = vmatpush1.bf16.msra.mxu0 %v3600
    %6695 = vmatprep.subr.bf16.mxu0 %v3605
    %6696 = vmatpush1.bf16.msra.mxu0 %v3604
    %6697 = vmatprep.subr.bf16.mxu0 %v3609
    %6698 = vmatpush1.bf16.msra.mxu0 %v3608
    %6699 = vmatprep.subr.bf16.mxu0 %v3613
    %6700 = vmatpush1.bf16.msra.mxu0 %v3612
    %6701 = vmatprep.subr.bf16.mxu0 %v3617
    %6702 = vmatpush1.bf16.msra.mxu0 %v3616
    %6703 = vmatprep.subr.bf16.mxu0 %v3621
    %6704 = vmatpush1.bf16.msra.mxu0 %v3620
    %6705 = vmatprep.subr.bf16.mxu0 %v3625
    %6706 = vmatpush1.bf16.msra.mxu0 %v3624
    %6707 = vmatprep.subr.bf16.mxu0 %v3629
    %6708 = vmatpush1.bf16.msra.mxu0 %v3628
    %6709 = vmatprep.subr.bf16.mxu0 %v3633
    %6710 = vmatpush1.bf16.msra.mxu0 %v3632
    %6711 = vmatprep.subr.bf16.mxu0 %v3637
    %6712 = vmatpush1.bf16.msra.mxu0 %v3636
    %6713 = vmatprep.subr.bf16.mxu0 %v3641
    %6714 = vmatpush1.bf16.msra.mxu0 %v3640
    %6715 = vmatprep.mubr.bf16.mxu0 %v6051
    %6716 = vmatmul.mubr.bf16.gmra.mrb[0].mxu0 %v6050
    %v6717 = vpop.f32.mrb[0].mxu0
    %v6718 = vadd.f32 %v6677, %v6717
    %v6719 = vpop.f32.mrb[0].mxu0
    %v6720 = vadd.f32 %v6679, %v6719
    %v6721 = vpop.f32.mrb[0].mxu0
    %v6722 = vpop.f32.mrb[0].mxu0
    %6723 = vdwg.mxu0
    %6724 = vmatprep.subr.bf16.mxu0 %v3645
    %6725 = vmatpush1.bf16.msra.mxu0 %v3644
    %6726 = vmatprep.subr.bf16.mxu0 %v3649
    %6727 = vmatpush1.bf16.msra.mxu0 %v3648
    %6728 = vmatprep.subr.bf16.mxu0 %v3653
    %6729 = vmatpush1.bf16.msra.mxu0 %v3652
    %6730 = vmatprep.subr.bf16.mxu0 %v3657
    %6731 = vmatpush1.bf16.msra.mxu0 %v3656
    %6732 = vmatprep.subr.bf16.mxu0 %v3661
    %6733 = vmatpush1.bf16.msra.mxu0 %v3660
    %6734 = vmatprep.subr.bf16.mxu0 %v3665
    %6735 = vmatpush1.bf16.msra.mxu0 %v3664
    %6736 = vmatprep.subr.bf16.mxu0 %v3669
    %6737 = vmatpush1.bf16.msra.mxu0 %v3668
    %6738 = vmatprep.subr.bf16.mxu0 %v3673
    %6739 = vmatpush1.bf16.msra.mxu0 %v3672
    %6740 = vmatprep.subr.bf16.mxu0 %v3677
    %6741 = vmatpush1.bf16.msra.mxu0 %v3676
    %6742 = vmatprep.subr.bf16.mxu0 %v3681
    %6743 = vmatpush1.bf16.msra.mxu0 %v3680
    %6744 = vmatprep.subr.bf16.mxu0 %v3685
    %6745 = vmatpush1.bf16.msra.mxu0 %v3684
    %6746 = vmatprep.subr.bf16.mxu0 %v3689
    %6747 = vmatpush1.bf16.msra.mxu0 %v3688
    %6748 = vmatprep.subr.bf16.mxu0 %v3693
    %6749 = vmatpush1.bf16.msra.mxu0 %v3692
    %6750 = vmatprep.subr.bf16.mxu0 %v3697
    %6751 = vmatpush1.bf16.msra.mxu0 %v3696
    %6752 = vmatprep.subr.bf16.mxu0 %v3701
    %6753 = vmatpush1.bf16.msra.mxu0 %v3700
    %6754 = vmatprep.subr.bf16.mxu0 %v3705
    %6755 = vmatpush1.bf16.msra.mxu0 %v3704
    %6756 = vmatprep.mubr.bf16.mxu0 %v6053
    %6757 = vmatmul.mubr.bf16.gmra.mrb[0].mxu0 %v6052
    %v6758 = vpop.f32.mrb[0].mxu0
    %v6759 = vadd.f32 %v6718, %v6758
    %v6760 = vpop.f32.mrb[0].mxu0
    %v6761 = vadd.f32 %v6720, %v6760
    %v6762 = vpop.f32.mrb[0].mxu0
    %v6763 = vpop.f32.mrb[0].mxu0
    %6764 = vdwg.mxu0
    %6765 = vmatprep.subr.bf16.mxu0 %v3709
    %6766 = vmatpush1.bf16.msra.mxu0 %v3708
    %6767 = vmatprep.subr.bf16.mxu0 %v3713
    %6768 = vmatpush1.bf16.msra.mxu0 %v3712
    %6769 = vmatprep.subr.bf16.mxu0 %v3717
    %6770 = vmatpush1.bf16.msra.mxu0 %v3716
    %6771 = vmatprep.subr.bf16.mxu0 %v3721
    %6772 = vmatpush1.bf16.msra.mxu0 %v3720
    %6773 = vmatprep.subr.bf16.mxu0 %v3725
    %6774 = vmatpush1.bf16.msra.mxu0 %v3724
    %6775 = vmatprep.subr.bf16.mxu0 %v3729
    %6776 = vmatpush1.bf16.msra.mxu0 %v3728
    %6777 = vmatprep.subr.bf16.mxu0 %v3733
    %6778 = vmatpush1.bf16.msra.mxu0 %v3732
    %6779 = vmatprep.subr.bf16.mxu0 %v3737
    %6780 = vmatpush1.bf16.msra.mxu0 %v3736
    %6781 = vmatprep.subr.bf16.mxu0 %v3741
    %6782 = vmatpush1.bf16.msra.mxu0 %v3740
    %6783 = vmatprep.subr.bf16.mxu0 %v3745
    %6784 = vmatpush1.bf16.msra.mxu0 %v3744
    %6785 = vmatprep.subr.bf16.mxu0 %v3749
    %6786 = vmatpush1.bf16.msra.mxu0 %v3748
    %6787 = vmatprep.subr.bf16.mxu0 %v3753
    %6788 = vmatpush1.bf16.msra.mxu0 %v3752
    %6789 = vmatprep.subr.bf16.mxu0 %v3757
    %6790 = vmatpush1.bf16.msra.mxu0 %v3756
    %6791 = vmatprep.subr.bf16.mxu0 %v3761
    %6792 = vmatpush1.bf16.msra.mxu0 %v3760
    %6793 = vmatprep.subr.bf16.mxu0 %v3765
    %6794 = vmatpush1.bf16.msra.mxu0 %v3764
    %6795 = vmatprep.subr.bf16.mxu0 %v3769
    %6796 = vmatpush1.bf16.msra.mxu0 %v3768
    %6797 = vmatprep.mubr.bf16.mxu0 %v6055
    %6798 = vmatmul.mubr.bf16.gmra.mrb[0].mxu0 %v6054
    %v6799 = vpop.f32.mrb[0].mxu0
    %v6800 = vadd.f32 %v6759, %v6799
    %v6801 = vpop.f32.mrb[0].mxu0
    %v6802 = vadd.f32 %v6761, %v6801
    %v6803 = vpop.f32.mrb[0].mxu0
    %v6804 = vpop.f32.mrb[0].mxu0
    %6805 = vdwg.mxu0
    %6806 = vmatprep.subr.bf16.mxu0 %v3773
    %6807 = vmatpush1.bf16.msra.mxu0 %v3772
    %6808 = vmatprep.subr.bf16.mxu0 %v3777
    %6809 = vmatpush1.bf16.msra.mxu0 %v3776
    %6810 = vmatprep.subr.bf16.mxu0 %v3781
    %6811 = vmatpush1.bf16.msra.mxu0 %v3780
    %6812 = vmatprep.subr.bf16.mxu0 %v3785
    %6813 = vmatpush1.bf16.msra.mxu0 %v3784
    %6814 = vmatprep.subr.bf16.mxu0 %v3789
    %6815 = vmatpush1.bf16.msra.mxu0 %v3788
    %6816 = vmatprep.subr.bf16.mxu0 %v3793
    %6817 = vmatpush1.bf16.msra.mxu0 %v3792
    %6818 = vmatprep.subr.bf16.mxu0 %v3797
    %6819 = vmatpush1.bf16.msra.mxu0 %v3796
    %6820 = vmatprep.subr.bf16.mxu0 %v3801
    %6821 = vmatpush1.bf16.msra.mxu0 %v3800
    %6822 = vmatprep.subr.bf16.mxu0 %v3805
    %6823 = vmatpush1.bf16.msra.mxu0 %v3804
    %6824 = vmatprep.subr.bf16.mxu0 %v3809
    %6825 = vmatpush1.bf16.msra.mxu0 %v3808
    %6826 = vmatprep.subr.bf16.mxu0 %v3813
    %6827 = vmatpush1.bf16.msra.mxu0 %v3812
    %6828 = vmatprep.subr.bf16.mxu0 %v3817
    %6829 = vmatpush1.bf16.msra.mxu0 %v3816
    %6830 = vmatprep.subr.bf16.mxu0 %v3821
    %6831 = vmatpush1.bf16.msra.mxu0 %v3820
    %6832 = vmatprep.subr.bf16.mxu0 %v3825
    %6833 = vmatpush1.bf16.msra.mxu0 %v3824
    %6834 = vmatprep.subr.bf16.mxu0 %v3829
    %6835 = vmatpush1.bf16.msra.mxu0 %v3828
    %6836 = vmatprep.subr.bf16.mxu0 %v3833
    %6837 = vmatpush1.bf16.msra.mxu0 %v3832
    %6838 = vmatprep.mubr.bf16.mxu0 %v6057
    %6839 = vmatmul.mubr.bf16.gmra.mrb[0].mxu0 %v6056
    %v6840 = vpop.f32.mrb[0].mxu0
    %v6841 = vadd.f32 %v6800, %v6840
    %v6842 = vpop.f32.mrb[0].mxu0
    %v6843 = vadd.f32 %v6802, %v6842
    %v6844 = vpop.f32.mrb[0].mxu0
    %v6845 = vpop.f32.mrb[0].mxu0
    %6846 = vdwg.mxu0
    %6847 = vmatprep.subr.bf16.mxu0 %v3837
    %6848 = vmatpush1.bf16.msra.mxu0 %v3836
    %6849 = vmatprep.subr.bf16.mxu0 %v3841
    %6850 = vmatpush1.bf16.msra.mxu0 %v3840
    %6851 = vmatprep.subr.bf16.mxu0 %v3845
    %6852 = vmatpush1.bf16.msra.mxu0 %v3844
    %6853 = vmatprep.subr.bf16.mxu0 %v3849
    %6854 = vmatpush1.bf16.msra.mxu0 %v3848
    %6855 = vmatprep.subr.bf16.mxu0 %v3853
    %6856 = vmatpush1.bf16.msra.mxu0 %v3852
    %6857 = vmatprep.subr.bf16.mxu0 %v3857
    %6858 = vmatpush1.bf16.msra.mxu0 %v3856
    %6859 = vmatprep.subr.bf16.mxu0 %v3861
    %6860 = vmatpush1.bf16.msra.mxu0 %v3860
    %6861 = vmatprep.subr.bf16.mxu0 %v3865
    %6862 = vmatpush1.bf16.msra.mxu0 %v3864
    %6863 = vmatprep.subr.bf16.mxu0 %v3869
    %6864 = vmatpush1.bf16.msra.mxu0 %v3868
    %6865 = vmatprep.subr.bf16.mxu0 %v3873
    %6866 = vmatpush1.bf16.msra.mxu0 %v3872
    %6867 = vmatprep.subr.bf16.mxu0 %v3877
    %6868 = vmatpush1.bf16.msra.mxu0 %v3876
    %6869 = vmatprep.subr.bf16.mxu0 %v3881
    %6870 = vmatpush1.bf16.msra.mxu0 %v3880
    %6871 = vmatprep.subr.bf16.mxu0 %v3885
    %6872 = vmatpush1.bf16.msra.mxu0 %v3884
    %6873 = vmatprep.subr.bf16.mxu0 %v3889
    %6874 = vmatpush1.bf16.msra.mxu0 %v3888
    %6875 = vmatprep.subr.bf16.mxu0 %v3893
    %6876 = vmatpush1.bf16.msra.mxu0 %v3892
    %6877 = vmatprep.subr.bf16.mxu0 %v3897
    %6878 = vmatpush1.bf16.msra.mxu0 %v3896
    %6879 = vmatprep.mubr.bf16.mxu0 %v6059
    %6880 = vmatmul.mubr.bf16.gmra.mrb[0].mxu0 %v6058
    %v6881 = vpop.f32.mrb[0].mxu0
    %v6882 = vadd.f32 %v6841, %v6881
    %v6883 = vpop.f32.mrb[0].mxu0
    %v6884 = vadd.f32 %v6843, %v6883
    %v6885 = vpop.f32.mrb[0].mxu0
    %v6886 = vpop.f32.mrb[0].mxu0
    %6887 = vdwg.mxu0
    %6888 = vmatprep.subr.bf16.mxu0 %v3901
    %6889 = vmatpush1.bf16.msra.mxu0 %v3900
    %6890 = vmatprep.subr.bf16.mxu0 %v3905
    %6891 = vmatpush1.bf16.msra.mxu0 %v3904
    %6892 = vmatprep.subr.bf16.mxu0 %v3909
    %6893 = vmatpush1.bf16.msra.mxu0 %v3908
    %6894 = vmatprep.subr.bf16.mxu0 %v3913
    %6895 = vmatpush1.bf16.msra.mxu0 %v3912
    %6896 = vmatprep.subr.bf16.mxu0 %v3917
    %6897 = vmatpush1.bf16.msra.mxu0 %v3916
    %6898 = vmatprep.subr.bf16.mxu0 %v3921
    %6899 = vmatpush1.bf16.msra.mxu0 %v3920
    %6900 = vmatprep.subr.bf16.mxu0 %v3925
    %6901 = vmatpush1.bf16.msra.mxu0 %v3924
    %6902 = vmatprep.subr.bf16.mxu0 %v3929
    %6903 = vmatpush1.bf16.msra.mxu0 %v3928
    %6904 = vmatprep.subr.bf16.mxu0 %v3933
    %6905 = vmatpush1.bf16.msra.mxu0 %v3932
    %6906 = vmatprep.subr.bf16.mxu0 %v3937
    %6907 = vmatpush1.bf16.msra.mxu0 %v3936
    %6908 = vmatprep.subr.bf16.mxu0 %v3941
    %6909 = vmatpush1.bf16.msra.mxu0 %v3940
    %6910 = vmatprep.subr.bf16.mxu0 %v3945
    %6911 = vmatpush1.bf16.msra.mxu0 %v3944
    %6912 = vmatprep.subr.bf16.mxu0 %v3949
    %6913 = vmatpush1.bf16.msra.mxu0 %v3948
    %6914 = vmatprep.subr.bf16.mxu0 %v3953
    %6915 = vmatpush1.bf16.msra.mxu0 %v3952
    %6916 = vmatprep.subr.bf16.mxu0 %v3957
    %6917 = vmatpush1.bf16.msra.mxu0 %v3956
    %6918 = vmatprep.subr.bf16.mxu0 %v3961
    %6919 = vmatpush1.bf16.msra.mxu0 %v3960
    %6920 = vmatprep.mubr.bf16.mxu0 %v6061
    %6921 = vmatmul.mubr.bf16.gmra.mrb[0].mxu0 %v6060
    %v6922 = vpop.f32.mrb[0].mxu0
    %v6923 = vadd.f32 %v6882, %v6922
    %v6924 = vpop.f32.mrb[0].mxu0
    %v6925 = vadd.f32 %v6884, %v6924
    %v6926 = vpop.f32.mrb[0].mxu0
    %v6927 = vpop.f32.mrb[0].mxu0
    %6928 = vdwg.mxu0
    %6929 = vmatprep.subr.bf16.mxu0 %v3965
    %6930 = vmatpush1.bf16.msra.mxu0 %v3964
    %6931 = vmatprep.subr.bf16.mxu0 %v3969
    %6932 = vmatpush1.bf16.msra.mxu0 %v3968
    %6933 = vmatprep.subr.bf16.mxu0 %v3973
    %6934 = vmatpush1.bf16.msra.mxu0 %v3972
    %6935 = vmatprep.subr.bf16.mxu0 %v3977
    %6936 = vmatpush1.bf16.msra.mxu0 %v3976
    %6937 = vmatprep.subr.bf16.mxu0 %v3981
    %6938 = vmatpush1.bf16.msra.mxu0 %v3980
    %6939 = vmatprep.subr.bf16.mxu0 %v3985
    %6940 = vmatpush1.bf16.msra.mxu0 %v3984
    %6941 = vmatprep.subr.bf16.mxu0 %v3989
    %6942 = vmatpush1.bf16.msra.mxu0 %v3988
    %6943 = vmatprep.subr.bf16.mxu0 %v3993
    %6944 = vmatpush1.bf16.msra.mxu0 %v3992
    %6945 = vmatprep.subr.bf16.mxu0 %v3997
    %6946 = vmatpush1.bf16.msra.mxu0 %v3996
    %6947 = vmatprep.subr.bf16.mxu0 %v4001
    %6948 = vmatpush1.bf16.msra.mxu0 %v4000
    %6949 = vmatprep.subr.bf16.mxu0 %v4005
    %6950 = vmatpush1.bf16.msra.mxu0 %v4004
    %6951 = vmatprep.subr.bf16.mxu0 %v4009
    %6952 = vmatpush1.bf16.msra.mxu0 %v4008
    %6953 = vmatprep.subr.bf16.mxu0 %v4013
    %6954 = vmatpush1.bf16.msra.mxu0 %v4012
    %6955 = vmatprep.subr.bf16.mxu0 %v4017
    %6956 = vmatpush1.bf16.msra.mxu0 %v4016
    %6957 = vmatprep.subr.bf16.mxu0 %v4021
    %6958 = vmatpush1.bf16.msra.mxu0 %v4020
    %6959 = vmatprep.subr.bf16.mxu0 %v4025
    %6960 = vmatpush1.bf16.msra.mxu0 %v4024
    %6961 = vmatprep.mubr.bf16.mxu0 %v6063
    %6962 = vmatmul.mubr.bf16.gmra.mrb[0].mxu0 %v6062
    %v6963 = vpop.f32.mrb[0].mxu0
    %v6964 = vadd.f32 %v6923, %v6963
    %v6965 = vpop.f32.mrb[0].mxu0
    %v6966 = vadd.f32 %v6925, %v6965
    %v6967 = vpop.f32.mrb[0].mxu0
    %v6968 = vpop.f32.mrb[0].mxu0
    %6969 = vdwg.mxu0
    %6970 = vmatprep.subr.bf16.mxu0 %v4029
    %6971 = vmatpush1.bf16.msra.mxu0 %v4028
    %6972 = vmatprep.subr.bf16.mxu0 %v4033
    %6973 = vmatpush1.bf16.msra.mxu0 %v4032
    %6974 = vmatprep.subr.bf16.mxu0 %v4037
    %6975 = vmatpush1.bf16.msra.mxu0 %v4036
    %6976 = vmatprep.subr.bf16.mxu0 %v4041
    %6977 = vmatpush1.bf16.msra.mxu0 %v4040
    %6978 = vmatprep.subr.bf16.mxu0 %v4045
    %6979 = vmatpush1.bf16.msra.mxu0 %v4044
    %6980 = vmatprep.subr.bf16.mxu0 %v4049
    %6981 = vmatpush1.bf16.msra.mxu0 %v4048
    %6982 = vmatprep.subr.bf16.mxu0 %v4053
    %6983 = vmatpush1.bf16.msra.mxu0 %v4052
    %6984 = vmatprep.subr.bf16.mxu0 %v4057
    %6985 = vmatpush1.bf16.msra.mxu0 %v4056
    %6986 = vmatprep.subr.bf16.mxu0 %v4061
    %6987 = vmatpush1.bf16.msra.mxu0 %v4060
    %6988 = vmatprep.subr.bf16.mxu0 %v4065
    %6989 = vmatpush1.bf16.msra.mxu0 %v4064
    %6990 = vmatprep.subr.bf16.mxu0 %v4069
    %6991 = vmatpush1.bf16.msra.mxu0 %v4068
    %6992 = vmatprep.subr.bf16.mxu0 %v4073
    %6993 = vmatpush1.bf16.msra.mxu0 %v4072
    %6994 = vmatprep.subr.bf16.mxu0 %v4077
    %6995 = vmatpush1.bf16.msra.mxu0 %v4076
    %6996 = vmatprep.subr.bf16.mxu0 %v4081
    %6997 = vmatpush1.bf16.msra.mxu0 %v4080
    %6998 = vmatprep.subr.bf16.mxu0 %v4085
    %6999 = vmatpush1.bf16.msra.mxu0 %v4084
    %7000 = vmatprep.subr.bf16.mxu0 %v4089
    %7001 = vmatpush1.bf16.msra.mxu0 %v4088
    %7002 = vmatprep.mubr.bf16.mxu0 %v6065
    %7003 = vmatmul.mubr.bf16.gmra.mrb[0].mxu0 %v6064
    %v7004 = vpop.f32.mrb[0].mxu0
    %v7005 = vadd.f32 %v6964, %v7004
    %v7006 = vpop.f32.mrb[0].mxu0
    %v7007 = vadd.f32 %v6966, %v7006
    %v7008 = vpop.f32.mrb[0].mxu0
    %v7009 = vpop.f32.mrb[0].mxu0
    %7010 = vdwg.mxu0
    %7011 = vmatprep.subr.bf16.mxu0 %v4093
    %7012 = vmatpush1.bf16.msra.mxu0 %v4092
    %7013 = vmatprep.subr.bf16.mxu0 %v4097
    %7014 = vmatpush1.bf16.msra.mxu0 %v4096
    %7015 = vmatprep.subr.bf16.mxu0 %v4101
    %7016 = vmatpush1.bf16.msra.mxu0 %v4100
    %7017 = vmatprep.subr.bf16.mxu0 %v4105
    %7018 = vmatpush1.bf16.msra.mxu0 %v4104
    %7019 = vmatprep.subr.bf16.mxu0 %v4109
    %7020 = vmatpush1.bf16.msra.mxu0 %v4108
    %7021 = vmatprep.subr.bf16.mxu0 %v4113
    %7022 = vmatpush1.bf16.msra.mxu0 %v4112
    %7023 = vmatprep.subr.bf16.mxu0 %v4117
    %7024 = vmatpush1.bf16.msra.mxu0 %v4116
    %7025 = vmatprep.subr.bf16.mxu0 %v4121
    %7026 = vmatpush1.bf16.msra.mxu0 %v4120
    %7027 = vmatprep.subr.bf16.mxu0 %v4125
    %7028 = vmatpush1.bf16.msra.mxu0 %v4124
    %7029 = vmatprep.subr.bf16.mxu0 %v4129
    %7030 = vmatpush1.bf16.msra.mxu0 %v4128
    %7031 = vmatprep.subr.bf16.mxu0 %v4133
    %7032 = vmatpush1.bf16.msra.mxu0 %v4132
    %7033 = vmatprep.subr.bf16.mxu0 %v4137
    %7034 = vmatpush1.bf16.msra.mxu0 %v4136
    %7035 = vmatprep.subr.bf16.mxu0 %v4141
    %7036 = vmatpush1.bf16.msra.mxu0 %v4140
    %7037 = vmatprep.subr.bf16.mxu0 %v4145
    %7038 = vmatpush1.bf16.msra.mxu0 %v4144
    %7039 = vmatprep.subr.bf16.mxu0 %v4149
    %7040 = vmatpush1.bf16.msra.mxu0 %v4148
    %7041 = vmatprep.subr.bf16.mxu0 %v4153
    %7042 = vmatpush1.bf16.msra.mxu0 %v4152
    %7043 = vmatprep.mubr.bf16.mxu0 %v6067
    %7044 = vmatmul.mubr.bf16.gmra.mrb[0].mxu0 %v6066
    %v7045 = vpop.f32.mrb[0].mxu0
    %v7046 = vadd.f32 %v7005, %v7045
    %v7047 = vpop.f32.mrb[0].mxu0
    %v7048 = vadd.f32 %v7007, %v7047
    %v7049 = vpop.f32.mrb[0].mxu0
    %v7050 = vpop.f32.mrb[0].mxu0
    %7051 = vdwg.mxu0
    %v7056 = vcombine.low %v6554, %v6556
    %v7057 = vcombine.low %v7046, %v7048
    %v7059 = vunpack.c.l.s4 1983009808
    %v7060 = vunpack.c.0.s8 %v7059
    %v7061 = vlaneseq
    %v7062 = vshrl.u32 %v7061, 7
    %v7063 = vsub.s32 %v7060, %v7062
    %v7064 = vrot.slane %v7056, %v7063
    %v7066 = vunpack.c.l.s4 1983009808
    %v7067 = vunpack.c.0.s8 %v7066
    %v7068 = vlaneseq
    %v7069 = vshrl.u32 %v7068, 7
    %v7070 = vsub.s32 %v7067, %v7069
    %v7071 = vrot.slane %v7057, %v7070
    %v7072 = vcombine.low %v7064, %v7071
    %7074 = vst [vmem:[#allocation13] sm:$0xff] %v7072
    %v7075 = vpack.c.bf16 %v5408, %v5408
    %v7076 = vpack.c.bf16 %v5410, %v5410
    %v7077 = vpack.c.bf16 %v5900, %v5900
    %v7078 = vpack.c.bf16 %v5902, %v5902
    %v7079 = vpack.c.bf16 %v6554, %v6554
    %v7080 = vpack.c.bf16 %v6556, %v6556
    %v7081 = vpack.c.bf16 %v7046, %v7046
    %v7082 = vpack.c.bf16 %v7048, %v7048
    %v7083 = vld [vmem:[%s5] sm:$0xff]
    %v7084 = vld [vmem:[%s5 + $0x8] sm:$0xff]
    %v7085 = vld [vmem:[%s5 + $0x10] sm:$0xff]
    %v7086 = vld [vmem:[%s5 + $0x18] sm:$0xff]
    %v7087 = vld [vmem:[%s5 + $0x20] sm:$0xff]
    %v7088 = vld [vmem:[%s5 + $0x28] sm:$0xff]
    %v7089 = vld [vmem:[%s5 + $0x30] sm:$0xff]
    %v7090 = vld [vmem:[%s5 + $0x38] sm:$0xff]
    %v7091 = vld [vmem:[%s5 + $0x40] sm:$0xff]
    %v7092 = vld [vmem:[%s5 + $0x48] sm:$0xff]
    %v7093 = vld [vmem:[%s5 + $0x50] sm:$0xff]
    %v7094 = vld [vmem:[%s5 + $0x58] sm:$0xff]
    %v7095 = vld [vmem:[%s5 + $0x60] sm:$0xff]
    %v7096 = vld [vmem:[%s5 + $0x68] sm:$0xff]
    %v7097 = vld [vmem:[%s5 + $0x70] sm:$0xff]
    %v7098 = vld [vmem:[%s5 + $0x78] sm:$0xff]
    %v7099 = vld [vmem:[%s5 + $0x80] sm:$0xff]
    %v7100 = vld [vmem:[%s5 + $0x88] sm:$0xff]
    %v7101 = vld [vmem:[%s5 + $0x90] sm:$0xff]
    %v7102 = vld [vmem:[%s5 + $0x98] sm:$0xff]
    %v7103 = vld [vmem:[%s5 + $0xa0] sm:$0xff]
    %v7104 = vld [vmem:[%s5 + $0xa8] sm:$0xff]
    %v7105 = vld [vmem:[%s5 + $0xb0] sm:$0xff]
    %v7106 = vld [vmem:[%s5 + $0xb8] sm:$0xff]
    %v7107 = vld [vmem:[%s5 + $0xc0] sm:$0xff]
    %v7108 = vld [vmem:[%s5 + $0xc8] sm:$0xff]
    %v7109 = vld [vmem:[%s5 + $0xd0] sm:$0xff]
    %v7110 = vld [vmem:[%s5 + $0xd8] sm:$0xff]
    %v7111 = vld [vmem:[%s5 + $0xe0] sm:$0xff]
    %v7112 = vld [vmem:[%s5 + $0xe8] sm:$0xff]
    %v7113 = vld [vmem:[%s5 + $0xf0] sm:$0xff]
    %v7114 = vld [vmem:[%s5 + $0xf8] sm:$0xff]
    %v7115 = vld [vmem:[%s5 + $0x100] sm:$0xff]
    %v7116 = vld [vmem:[%s5 + $0x108] sm:$0xff]
    %v7117 = vld [vmem:[%s5 + $0x110] sm:$0xff]
    %v7118 = vld [vmem:[%s5 + $0x118] sm:$0xff]
    %v7119 = vld [vmem:[%s5 + $0x120] sm:$0xff]
    %v7120 = vld [vmem:[%s5 + $0x128] sm:$0xff]
    %v7121 = vld [vmem:[%s5 + $0x130] sm:$0xff]
    %v7122 = vld [vmem:[%s5 + $0x138] sm:$0xff]
    %v7123 = vld [vmem:[%s5 + $0x140] sm:$0xff]
    %v7124 = vld [vmem:[%s5 + $0x148] sm:$0xff]
    %v7125 = vld [vmem:[%s5 + $0x150] sm:$0xff]
    %v7126 = vld [vmem:[%s5 + $0x158] sm:$0xff]
    %v7127 = vld [vmem:[%s5 + $0x160] sm:$0xff]
    %v7128 = vld [vmem:[%s5 + $0x168] sm:$0xff]
    %v7129 = vld [vmem:[%s5 + $0x170] sm:$0xff]
    %v7130 = vld [vmem:[%s5 + $0x178] sm:$0xff]
    %v7131 = vld [vmem:[%s5 + $0x180] sm:$0xff]
    %v7132 = vld [vmem:[%s5 + $0x188] sm:$0xff]
    %v7133 = vld [vmem:[%s5 + $0x190] sm:$0xff]
    %v7134 = vld [vmem:[%s5 + $0x198] sm:$0xff]
    %v7135 = vld [vmem:[%s5 + $0x1a0] sm:$0xff]
    %v7136 = vld [vmem:[%s5 + $0x1a8] sm:$0xff]
    %v7137 = vld [vmem:[%s5 + $0x1b0] sm:$0xff]
    %v7138 = vld [vmem:[%s5 + $0x1b8] sm:$0xff]
    %v7139 = vld [vmem:[%s5 + $0x1c0] sm:$0xff]
    %v7140 = vld [vmem:[%s5 + $0x1c8] sm:$0xff]
    %v7141 = vld [vmem:[%s5 + $0x1d0] sm:$0xff]
    %v7142 = vld [vmem:[%s5 + $0x1d8] sm:$0xff]
    %v7143 = vld [vmem:[%s5 + $0x1e0] sm:$0xff]
    %v7144 = vld [vmem:[%s5 + $0x1e8] sm:$0xff]
    %v7145 = vld [vmem:[%s5 + $0x1f0] sm:$0xff]
    %v7146 = vld [vmem:[%s5 + $0x1f8] sm:$0xff]
    %v7147 = vld [vmem:[%s5 + $0x200] sm:$0xff]
    %v7148 = vld [vmem:[%s5 + $0x208] sm:$0xff]
    %v7149 = vld [vmem:[%s5 + $0x210] sm:$0xff]
    %v7150 = vld [vmem:[%s5 + $0x218] sm:$0xff]
    %v7151 = vld [vmem:[%s5 + $0x220] sm:$0xff]
    %v7152 = vld [vmem:[%s5 + $0x228] sm:$0xff]
    %v7153 = vld [vmem:[%s5 + $0x230] sm:$0xff]
    %v7154 = vld [vmem:[%s5 + $0x238] sm:$0xff]
    %v7155 = vld [vmem:[%s5 + $0x240] sm:$0xff]
    %v7156 = vld [vmem:[%s5 + $0x248] sm:$0xff]
    %v7157 = vld [vmem:[%s5 + $0x250] sm:$0xff]
    %v7158 = vld [vmem:[%s5 + $0x258] sm:$0xff]
    %v7159 = vld [vmem:[%s5 + $0x260] sm:$0xff]
    %v7160 = vld [vmem:[%s5 + $0x268] sm:$0xff]
    %v7161 = vld [vmem:[%s5 + $0x270] sm:$0xff]
    %v7162 = vld [vmem:[%s5 + $0x278] sm:$0xff]
    %v7163 = vld [vmem:[%s5 + $0x280] sm:$0xff]
    %v7164 = vld [vmem:[%s5 + $0x288] sm:$0xff]
    %v7165 = vld [vmem:[%s5 + $0x290] sm:$0xff]
    %v7166 = vld [vmem:[%s5 + $0x298] sm:$0xff]
    %v7167 = vld [vmem:[%s5 + $0x2a0] sm:$0xff]
    %v7168 = vld [vmem:[%s5 + $0x2a8] sm:$0xff]
    %v7169 = vld [vmem:[%s5 + $0x2b0] sm:$0xff]
    %v7170 = vld [vmem:[%s5 + $0x2b8] sm:$0xff]
    %v7171 = vld [vmem:[%s5 + $0x2c0] sm:$0xff]
    %v7172 = vld [vmem:[%s5 + $0x2c8] sm:$0xff]
    %v7173 = vld [vmem:[%s5 + $0x2d0] sm:$0xff]
    %v7174 = vld [vmem:[%s5 + $0x2d8] sm:$0xff]
    %v7175 = vld [vmem:[%s5 + $0x2e0] sm:$0xff]
    %v7176 = vld [vmem:[%s5 + $0x2e8] sm:$0xff]
    %v7177 = vld [vmem:[%s5 + $0x2f0] sm:$0xff]
    %v7178 = vld [vmem:[%s5 + $0x2f8] sm:$0xff]
    %v7179 = vld [vmem:[%s5 + $0x300] sm:$0xff]
    %v7180 = vld [vmem:[%s5 + $0x308] sm:$0xff]
    %v7181 = vld [vmem:[%s5 + $0x310] sm:$0xff]
    %v7182 = vld [vmem:[%s5 + $0x318] sm:$0xff]
    %v7183 = vld [vmem:[%s5 + $0x320] sm:$0xff]
    %v7184 = vld [vmem:[%s5 + $0x328] sm:$0xff]
    %v7185 = vld [vmem:[%s5 + $0x330] sm:$0xff]
    %v7186 = vld [vmem:[%s5 + $0x338] sm:$0xff]
    %v7187 = vld [vmem:[%s5 + $0x340] sm:$0xff]
    %v7188 = vld [vmem:[%s5 + $0x348] sm:$0xff]
    %v7189 = vld [vmem:[%s5 + $0x350] sm:$0xff]
    %v7190 = vld [vmem:[%s5 + $0x358] sm:$0xff]
    %v7191 = vld [vmem:[%s5 + $0x360] sm:$0xff]
    %v7192 = vld [vmem:[%s5 + $0x368] sm:$0xff]
    %v7193 = vld [vmem:[%s5 + $0x370] sm:$0xff]
    %v7194 = vld [vmem:[%s5 + $0x378] sm:$0xff]
    %v7195 = vld [vmem:[%s5 + $0x380] sm:$0xff]
    %v7196 = vld [vmem:[%s5 + $0x388] sm:$0xff]
    %v7197 = vld [vmem:[%s5 + $0x390] sm:$0xff]
    %v7198 = vld [vmem:[%s5 + $0x398] sm:$0xff]
    %v7199 = vld [vmem:[%s5 + $0x3a0] sm:$0xff]
    %v7200 = vld [vmem:[%s5 + $0x3a8] sm:$0xff]
    %v7201 = vld [vmem:[%s5 + $0x3b0] sm:$0xff]
    %v7202 = vld [vmem:[%s5 + $0x3b8] sm:$0xff]
    %v7203 = vld [vmem:[%s5 + $0x3c0] sm:$0xff]
    %v7204 = vld [vmem:[%s5 + $0x3c8] sm:$0xff]
    %v7205 = vld [vmem:[%s5 + $0x3d0] sm:$0xff]
    %v7206 = vld [vmem:[%s5 + $0x3d8] sm:$0xff]
    %v7207 = vld [vmem:[%s5 + $0x3e0] sm:$0xff]
    %v7208 = vld [vmem:[%s5 + $0x3e8] sm:$0xff]
    %v7209 = vld [vmem:[%s5 + $0x3f0] sm:$0xff]
    %v7210 = vld [vmem:[%s5 + $0x3f8] sm:$0xff]
    %v7211 = vld [vmem:[%s6] sm:$0xff]
    %v7212 = vld [vmem:[%s6 + $0x8] sm:$0xff]
    %v7213 = vld [vmem:[%s6 + $0x10] sm:$0xff]
    %v7214 = vld [vmem:[%s6 + $0x18] sm:$0xff]
    %v7215 = vld [vmem:[%s6 + $0x20] sm:$0xff]
    %v7216 = vld [vmem:[%s6 + $0x28] sm:$0xff]
    %v7217 = vld [vmem:[%s6 + $0x30] sm:$0xff]
    %v7218 = vld [vmem:[%s6 + $0x38] sm:$0xff]
    %v7219 = vld [vmem:[%s6 + $0x40] sm:$0xff]
    %v7220 = vld [vmem:[%s6 + $0x48] sm:$0xff]
    %v7221 = vld [vmem:[%s6 + $0x50] sm:$0xff]
    %v7222 = vld [vmem:[%s6 + $0x58] sm:$0xff]
    %v7223 = vld [vmem:[%s6 + $0x60] sm:$0xff]
    %v7224 = vld [vmem:[%s6 + $0x68] sm:$0xff]
    %v7225 = vld [vmem:[%s6 + $0x70] sm:$0xff]
    %v7226 = vld [vmem:[%s6 + $0x78] sm:$0xff]
    %v7227 = vld [vmem:[%s6 + $0x80] sm:$0xff]
    %v7228 = vld [vmem:[%s6 + $0x88] sm:$0xff]
    %v7229 = vld [vmem:[%s6 + $0x90] sm:$0xff]
    %v7230 = vld [vmem:[%s6 + $0x98] sm:$0xff]
    %v7231 = vld [vmem:[%s6 + $0xa0] sm:$0xff]
    %v7232 = vld [vmem:[%s6 + $0xa8] sm:$0xff]
    %v7233 = vld [vmem:[%s6 + $0xb0] sm:$0xff]
    %v7234 = vld [vmem:[%s6 + $0xb8] sm:$0xff]
    %v7235 = vld [vmem:[%s6 + $0xc0] sm:$0xff]
    %v7236 = vld [vmem:[%s6 + $0xc8] sm:$0xff]
    %v7237 = vld [vmem:[%s6 + $0xd0] sm:$0xff]
    %v7238 = vld [vmem:[%s6 + $0xd8] sm:$0xff]
    %v7239 = vld [vmem:[%s6 + $0xe0] sm:$0xff]
    %v7240 = vld [vmem:[%s6 + $0xe8] sm:$0xff]
    %v7241 = vld [vmem:[%s6 + $0xf0] sm:$0xff]
    %v7242 = vld [vmem:[%s6 + $0xf8] sm:$0xff]
    %v7243 = vld [vmem:[%s6 + $0x100] sm:$0xff]
    %v7244 = vld [vmem:[%s6 + $0x108] sm:$0xff]
    %v7245 = vld [vmem:[%s6 + $0x110] sm:$0xff]
    %v7246 = vld [vmem:[%s6 + $0x118] sm:$0xff]
    %v7247 = vld [vmem:[%s6 + $0x120] sm:$0xff]
    %v7248 = vld [vmem:[%s6 + $0x128] sm:$0xff]
    %v7249 = vld [vmem:[%s6 + $0x130] sm:$0xff]
    %v7250 = vld [vmem:[%s6 + $0x138] sm:$0xff]
    %v7251 = vld [vmem:[%s6 + $0x140] sm:$0xff]
    %v7252 = vld [vmem:[%s6 + $0x148] sm:$0xff]
    %v7253 = vld [vmem:[%s6 + $0x150] sm:$0xff]
    %v7254 = vld [vmem:[%s6 + $0x158] sm:$0xff]
    %v7255 = vld [vmem:[%s6 + $0x160] sm:$0xff]
    %v7256 = vld [vmem:[%s6 + $0x168] sm:$0xff]
    %v7257 = vld [vmem:[%s6 + $0x170] sm:$0xff]
    %v7258 = vld [vmem:[%s6 + $0x178] sm:$0xff]
    %v7259 = vld [vmem:[%s6 + $0x180] sm:$0xff]
    %v7260 = vld [vmem:[%s6 + $0x188] sm:$0xff]
    %v7261 = vld [vmem:[%s6 + $0x190] sm:$0xff]
    %v7262 = vld [vmem:[%s6 + $0x198] sm:$0xff]
    %v7263 = vld [vmem:[%s6 + $0x1a0] sm:$0xff]
    %v7264 = vld [vmem:[%s6 + $0x1a8] sm:$0xff]
    %v7265 = vld [vmem:[%s6 + $0x1b0] sm:$0xff]
    %v7266 = vld [vmem:[%s6 + $0x1b8] sm:$0xff]
    %v7267 = vld [vmem:[%s6 + $0x1c0] sm:$0xff]
    %v7268 = vld [vmem:[%s6 + $0x1c8] sm:$0xff]
    %v7269 = vld [vmem:[%s6 + $0x1d0] sm:$0xff]
    %v7270 = vld [vmem:[%s6 + $0x1d8] sm:$0xff]
    %v7271 = vld [vmem:[%s6 + $0x1e0] sm:$0xff]
    %v7272 = vld [vmem:[%s6 + $0x1e8] sm:$0xff]
    %v7273 = vld [vmem:[%s6 + $0x1f0] sm:$0xff]
    %v7274 = vld [vmem:[%s6 + $0x1f8] sm:$0xff]
    %v7275 = vld [vmem:[%s6 + $0x200] sm:$0xff]
    %v7276 = vld [vmem:[%s6 + $0x208] sm:$0xff]
    %v7277 = vld [vmem:[%s6 + $0x210] sm:$0xff]
    %v7278 = vld [vmem:[%s6 + $0x218] sm:$0xff]
    %v7279 = vld [vmem:[%s6 + $0x220] sm:$0xff]
    %v7280 = vld [vmem:[%s6 + $0x228] sm:$0xff]
    %v7281 = vld [vmem:[%s6 + $0x230] sm:$0xff]
    %v7282 = vld [vmem:[%s6 + $0x238] sm:$0xff]
    %v7283 = vld [vmem:[%s6 + $0x240] sm:$0xff]
    %v7284 = vld [vmem:[%s6 + $0x248] sm:$0xff]
    %v7285 = vld [vmem:[%s6 + $0x250] sm:$0xff]
    %v7286 = vld [vmem:[%s6 + $0x258] sm:$0xff]
    %v7287 = vld [vmem:[%s6 + $0x260] sm:$0xff]
    %v7288 = vld [vmem:[%s6 + $0x268] sm:$0xff]
    %v7289 = vld [vmem:[%s6 + $0x270] sm:$0xff]
    %v7290 = vld [vmem:[%s6 + $0x278] sm:$0xff]
    %v7291 = vld [vmem:[%s6 + $0x280] sm:$0xff]
    %v7292 = vld [vmem:[%s6 + $0x288] sm:$0xff]
    %v7293 = vld [vmem:[%s6 + $0x290] sm:$0xff]
    %v7294 = vld [vmem:[%s6 + $0x298] sm:$0xff]
    %v7295 = vld [vmem:[%s6 + $0x2a0] sm:$0xff]
    %v7296 = vld [vmem:[%s6 + $0x2a8] sm:$0xff]
    %v7297 = vld [vmem:[%s6 + $0x2b0] sm:$0xff]
    %v7298 = vld [vmem:[%s6 + $0x2b8] sm:$0xff]
    %v7299 = vld [vmem:[%s6 + $0x2c0] sm:$0xff]
    %v7300 = vld [vmem:[%s6 + $0x2c8] sm:$0xff]
    %v7301 = vld [vmem:[%s6 + $0x2d0] sm:$0xff]
    %v7302 = vld [vmem:[%s6 + $0x2d8] sm:$0xff]
    %v7303 = vld [vmem:[%s6 + $0x2e0] sm:$0xff]
    %v7304 = vld [vmem:[%s6 + $0x2e8] sm:$0xff]
    %v7305 = vld [vmem:[%s6 + $0x2f0] sm:$0xff]
    %v7306 = vld [vmem:[%s6 + $0x2f8] sm:$0xff]
    %v7307 = vld [vmem:[%s6 + $0x300] sm:$0xff]
    %v7308 = vld [vmem:[%s6 + $0x308] sm:$0xff]
    %v7309 = vld [vmem:[%s6 + $0x310] sm:$0xff]
    %v7310 = vld [vmem:[%s6 + $0x318] sm:$0xff]
    %v7311 = vld [vmem:[%s6 + $0x320] sm:$0xff]
    %v7312 = vld [vmem:[%s6 + $0x328] sm:$0xff]
    %v7313 = vld [vmem:[%s6 + $0x330] sm:$0xff]
    %v7314 = vld [vmem:[%s6 + $0x338] sm:$0xff]
    %v7315 = vld [vmem:[%s6 + $0x340] sm:$0xff]
    %v7316 = vld [vmem:[%s6 + $0x348] sm:$0xff]
    %v7317 = vld [vmem:[%s6 + $0x350] sm:$0xff]
    %v7318 = vld [vmem:[%s6 + $0x358] sm:$0xff]
    %v7319 = vld [vmem:[%s6 + $0x360] sm:$0xff]
    %v7320 = vld [vmem:[%s6 + $0x368] sm:$0xff]
    %v7321 = vld [vmem:[%s6 + $0x370] sm:$0xff]
    %v7322 = vld [vmem:[%s6 + $0x378] sm:$0xff]
    %v7323 = vld [vmem:[%s6 + $0x380] sm:$0xff]
    %v7324 = vld [vmem:[%s6 + $0x388] sm:$0xff]
    %v7325 = vld [vmem:[%s6 + $0x390] sm:$0xff]
    %v7326 = vld [vmem:[%s6 + $0x398] sm:$0xff]
    %v7327 = vld [vmem:[%s6 + $0x3a0] sm:$0xff]
    %v7328 = vld [vmem:[%s6 + $0x3a8] sm:$0xff]
    %v7329 = vld [vmem:[%s6 + $0x3b0] sm:$0xff]
    %v7330 = vld [vmem:[%s6 + $0x3b8] sm:$0xff]
    %v7331 = vld [vmem:[%s6 + $0x3c0] sm:$0xff]
    %v7332 = vld [vmem:[%s6 + $0x3c8] sm:$0xff]
    %v7333 = vld [vmem:[%s6 + $0x3d0] sm:$0xff]
    %v7334 = vld [vmem:[%s6 + $0x3d8] sm:$0xff]
    %v7335 = vld [vmem:[%s6 + $0x3e0] sm:$0xff]
    %v7336 = vld [vmem:[%s6 + $0x3e8] sm:$0xff]
    %v7337 = vld [vmem:[%s6 + $0x3f0] sm:$0xff]
    %v7338 = vld [vmem:[%s6 + $0x3f8] sm:$0xff]
    %v7467 = vunpack.c.l.b16 %v7211
    %v7468 = vunpack.c.h.b16 %v7211
    %v7469 = vunpack.c.l.b16 %v7212
    %v7470 = vunpack.c.h.b16 %v7212
    %v7471 = vunpack.c.l.b16 %v7213
    %v7472 = vunpack.c.h.b16 %v7213
    %v7473 = vunpack.c.l.b16 %v7214
    %v7474 = vunpack.c.h.b16 %v7214
    %v7475 = vunpack.c.l.b16 %v7215
    %v7476 = vunpack.c.h.b16 %v7215
    %v7477 = vunpack.c.l.b16 %v7216
    %v7478 = vunpack.c.h.b16 %v7216
    %v7479 = vunpack.c.l.b16 %v7217
    %v7480 = vunpack.c.h.b16 %v7217
    %v7481 = vunpack.c.l.b16 %v7218
    %v7482 = vunpack.c.h.b16 %v7218
    %v7483 = vunpack.c.l.b16 %v7219
    %v7484 = vunpack.c.h.b16 %v7219
    %v7485 = vunpack.c.l.b16 %v7220
    %v7486 = vunpack.c.h.b16 %v7220
    %v7487 = vunpack.c.l.b16 %v7221
    %v7488 = vunpack.c.h.b16 %v7221
    %v7489 = vunpack.c.l.b16 %v7222
    %v7490 = vunpack.c.h.b16 %v7222
    %v7491 = vunpack.c.l.b16 %v7223
    %v7492 = vunpack.c.h.b16 %v7223
    %v7493 = vunpack.c.l.b16 %v7224
    %v7494 = vunpack.c.h.b16 %v7224
    %v7495 = vunpack.c.l.b16 %v7225
    %v7496 = vunpack.c.h.b16 %v7225
    %v7497 = vunpack.c.l.b16 %v7226
    %v7498 = vunpack.c.h.b16 %v7226
    %v7499 = vunpack.c.l.b16 %v7227
    %v7500 = vunpack.c.h.b16 %v7227
    %v7501 = vunpack.c.l.b16 %v7228
    %v7502 = vunpack.c.h.b16 %v7228
    %v7503 = vunpack.c.l.b16 %v7229
    %v7504 = vunpack.c.h.b16 %v7229
    %v7505 = vunpack.c.l.b16 %v7230
    %v7506 = vunpack.c.h.b16 %v7230
    %v7507 = vunpack.c.l.b16 %v7231
    %v7508 = vunpack.c.h.b16 %v7231
    %v7509 = vunpack.c.l.b16 %v7232
    %v7510 = vunpack.c.h.b16 %v7232
    %v7511 = vunpack.c.l.b16 %v7233
    %v7512 = vunpack.c.h.b16 %v7233
    %v7513 = vunpack.c.l.b16 %v7234
    %v7514 = vunpack.c.h.b16 %v7234
    %v7515 = vunpack.c.l.b16 %v7235
    %v7516 = vunpack.c.h.b16 %v7235
    %v7517 = vunpack.c.l.b16 %v7236
    %v7518 = vunpack.c.h.b16 %v7236
    %v7519 = vunpack.c.l.b16 %v7237
    %v7520 = vunpack.c.h.b16 %v7237
    %v7521 = vunpack.c.l.b16 %v7238
    %v7522 = vunpack.c.h.b16 %v7238
    %v7523 = vunpack.c.l.b16 %v7239
    %v7524 = vunpack.c.h.b16 %v7239
    %v7525 = vunpack.c.l.b16 %v7240
    %v7526 = vunpack.c.h.b16 %v7240
    %v7527 = vunpack.c.l.b16 %v7241
    %v7528 = vunpack.c.h.b16 %v7241
    %v7529 = vunpack.c.l.b16 %v7242
    %v7530 = vunpack.c.h.b16 %v7242
    %v7531 = vunpack.c.l.b16 %v7243
    %v7532 = vunpack.c.h.b16 %v7243
    %v7533 = vunpack.c.l.b16 %v7244
    %v7534 = vunpack.c.h.b16 %v7244
    %v7535 = vunpack.c.l.b16 %v7245
    %v7536 = vunpack.c.h.b16 %v7245
    %v7537 = vunpack.c.l.b16 %v7246
    %v7538 = vunpack.c.h.b16 %v7246
    %v7539 = vunpack.c.l.b16 %v7247
    %v7540 = vunpack.c.h.b16 %v7247
    %v7541 = vunpack.c.l.b16 %v7248
    %v7542 = vunpack.c.h.b16 %v7248
    %v7543 = vunpack.c.l.b16 %v7249
    %v7544 = vunpack.c.h.b16 %v7249
    %v7545 = vunpack.c.l.b16 %v7250
    %v7546 = vunpack.c.h.b16 %v7250
    %v7547 = vunpack.c.l.b16 %v7251
    %v7548 = vunpack.c.h.b16 %v7251
    %v7549 = vunpack.c.l.b16 %v7252
    %v7550 = vunpack.c.h.b16 %v7252
    %v7551 = vunpack.c.l.b16 %v7253
    %v7552 = vunpack.c.h.b16 %v7253
    %v7553 = vunpack.c.l.b16 %v7254
    %v7554 = vunpack.c.h.b16 %v7254
    %v7555 = vunpack.c.l.b16 %v7255
    %v7556 = vunpack.c.h.b16 %v7255
    %v7557 = vunpack.c.l.b16 %v7256
    %v7558 = vunpack.c.h.b16 %v7256
    %v7559 = vunpack.c.l.b16 %v7257
    %v7560 = vunpack.c.h.b16 %v7257
    %v7561 = vunpack.c.l.b16 %v7258
    %v7562 = vunpack.c.h.b16 %v7258
    %v7563 = vunpack.c.l.b16 %v7259
    %v7564 = vunpack.c.h.b16 %v7259
    %v7565 = vunpack.c.l.b16 %v7260
    %v7566 = vunpack.c.h.b16 %v7260
    %v7567 = vunpack.c.l.b16 %v7261
    %v7568 = vunpack.c.h.b16 %v7261
    %v7569 = vunpack.c.l.b16 %v7262
    %v7570 = vunpack.c.h.b16 %v7262
    %v7571 = vunpack.c.l.b16 %v7263
    %v7572 = vunpack.c.h.b16 %v7263
    %v7573 = vunpack.c.l.b16 %v7264
    %v7574 = vunpack.c.h.b16 %v7264
    %v7575 = vunpack.c.l.b16 %v7265
    %v7576 = vunpack.c.h.b16 %v7265
    %v7577 = vunpack.c.l.b16 %v7266
    %v7578 = vunpack.c.h.b16 %v7266
    %v7579 = vunpack.c.l.b16 %v7267
    %v7580 = vunpack.c.h.b16 %v7267
    %v7581 = vunpack.c.l.b16 %v7268
    %v7582 = vunpack.c.h.b16 %v7268
    %v7583 = vunpack.c.l.b16 %v7269
    %v7584 = vunpack.c.h.b16 %v7269
    %v7585 = vunpack.c.l.b16 %v7270
    %v7586 = vunpack.c.h.b16 %v7270
    %v7587 = vunpack.c.l.b16 %v7271
    %v7588 = vunpack.c.h.b16 %v7271
    %v7589 = vunpack.c.l.b16 %v7272
    %v7590 = vunpack.c.h.b16 %v7272
    %v7591 = vunpack.c.l.b16 %v7273
    %v7592 = vunpack.c.h.b16 %v7273
    %v7593 = vunpack.c.l.b16 %v7274
    %v7594 = vunpack.c.h.b16 %v7274
    %v7595 = vunpack.c.l.b16 %v7275
    %v7596 = vunpack.c.h.b16 %v7275
    %v7597 = vunpack.c.l.b16 %v7276
    %v7598 = vunpack.c.h.b16 %v7276
    %v7599 = vunpack.c.l.b16 %v7277
    %v7600 = vunpack.c.h.b16 %v7277
    %v7601 = vunpack.c.l.b16 %v7278
    %v7602 = vunpack.c.h.b16 %v7278
    %v7603 = vunpack.c.l.b16 %v7279
    %v7604 = vunpack.c.h.b16 %v7279
    %v7605 = vunpack.c.l.b16 %v7280
    %v7606 = vunpack.c.h.b16 %v7280
    %v7607 = vunpack.c.l.b16 %v7281
    %v7608 = vunpack.c.h.b16 %v7281
    %v7609 = vunpack.c.l.b16 %v7282
    %v7610 = vunpack.c.h.b16 %v7282
    %v7611 = vunpack.c.l.b16 %v7283
    %v7612 = vunpack.c.h.b16 %v7283
    %v7613 = vunpack.c.l.b16 %v7284
    %v7614 = vunpack.c.h.b16 %v7284
    %v7615 = vunpack.c.l.b16 %v7285
    %v7616 = vunpack.c.h.b16 %v7285
    %v7617 = vunpack.c.l.b16 %v7286
    %v7618 = vunpack.c.h.b16 %v7286
    %v7619 = vunpack.c.l.b16 %v7287
    %v7620 = vunpack.c.h.b16 %v7287
    %v7621 = vunpack.c.l.b16 %v7288
    %v7622 = vunpack.c.h.b16 %v7288
    %v7623 = vunpack.c.l.b16 %v7289
    %v7624 = vunpack.c.h.b16 %v7289
    %v7625 = vunpack.c.l.b16 %v7290
    %v7626 = vunpack.c.h.b16 %v7290
    %v7627 = vunpack.c.l.b16 %v7291
    %v7628 = vunpack.c.h.b16 %v7291
    %v7629 = vunpack.c.l.b16 %v7292
    %v7630 = vunpack.c.h.b16 %v7292
    %v7631 = vunpack.c.l.b16 %v7293
    %v7632 = vunpack.c.h.b16 %v7293
    %v7633 = vunpack.c.l.b16 %v7294
    %v7634 = vunpack.c.h.b16 %v7294
    %v7635 = vunpack.c.l.b16 %v7295
    %v7636 = vunpack.c.h.b16 %v7295
    %v7637 = vunpack.c.l.b16 %v7296
    %v7638 = vunpack.c.h.b16 %v7296
    %v7639 = vunpack.c.l.b16 %v7297
    %v7640 = vunpack.c.h.b16 %v7297
    %v7641 = vunpack.c.l.b16 %v7298
    %v7642 = vunpack.c.h.b16 %v7298
    %v7643 = vunpack.c.l.b16 %v7299
    %v7644 = vunpack.c.h.b16 %v7299
    %v7645 = vunpack.c.l.b16 %v7300
    %v7646 = vunpack.c.h.b16 %v7300
    %v7647 = vunpack.c.l.b16 %v7301
    %v7648 = vunpack.c.h.b16 %v7301
    %v7649 = vunpack.c.l.b16 %v7302
    %v7650 = vunpack.c.h.b16 %v7302
    %v7651 = vunpack.c.l.b16 %v7303
    %v7652 = vunpack.c.h.b16 %v7303
    %v7653 = vunpack.c.l.b16 %v7304
    %v7654 = vunpack.c.h.b16 %v7304
    %v7655 = vunpack.c.l.b16 %v7305
    %v7656 = vunpack.c.h.b16 %v7305
    %v7657 = vunpack.c.l.b16 %v7306
    %v7658 = vunpack.c.h.b16 %v7306
    %v7659 = vunpack.c.l.b16 %v7307
    %v7660 = vunpack.c.h.b16 %v7307
    %v7661 = vunpack.c.l.b16 %v7308
    %v7662 = vunpack.c.h.b16 %v7308
    %v7663 = vunpack.c.l.b16 %v7309
    %v7664 = vunpack.c.h.b16 %v7309
    %v7665 = vunpack.c.l.b16 %v7310
    %v7666 = vunpack.c.h.b16 %v7310
    %v7667 = vunpack.c.l.b16 %v7311
    %v7668 = vunpack.c.h.b16 %v7311
    %v7669 = vunpack.c.l.b16 %v7312
    %v7670 = vunpack.c.h.b16 %v7312
    %v7671 = vunpack.c.l.b16 %v7313
    %v7672 = vunpack.c.h.b16 %v7313
    %v7673 = vunpack.c.l.b16 %v7314
    %v7674 = vunpack.c.h.b16 %v7314
    %v7675 = vunpack.c.l.b16 %v7315
    %v7676 = vunpack.c.h.b16 %v7315
    %v7677 = vunpack.c.l.b16 %v7316
    %v7678 = vunpack.c.h.b16 %v7316
    %v7679 = vunpack.c.l.b16 %v7317
    %v7680 = vunpack.c.h.b16 %v7317
    %v7681 = vunpack.c.l.b16 %v7318
    %v7682 = vunpack.c.h.b16 %v7318
    %v7683 = vunpack.c.l.b16 %v7319
    %v7684 = vunpack.c.h.b16 %v7319
    %v7685 = vunpack.c.l.b16 %v7320
    %v7686 = vunpack.c.h.b16 %v7320
    %v7687 = vunpack.c.l.b16 %v7321
    %v7688 = vunpack.c.h.b16 %v7321
    %v7689 = vunpack.c.l.b16 %v7322
    %v7690 = vunpack.c.h.b16 %v7322
    %v7691 = vunpack.c.l.b16 %v7323
    %v7692 = vunpack.c.h.b16 %v7323
    %v7693 = vunpack.c.l.b16 %v7324
    %v7694 = vunpack.c.h.b16 %v7324
    %v7695 = vunpack.c.l.b16 %v7325
    %v7696 = vunpack.c.h.b16 %v7325
    %v7697 = vunpack.c.l.b16 %v7326
    %v7698 = vunpack.c.h.b16 %v7326
    %v7699 = vunpack.c.l.b16 %v7327
    %v7700 = vunpack.c.h.b16 %v7327
    %v7701 = vunpack.c.l.b16 %v7328
    %v7702 = vunpack.c.h.b16 %v7328
    %v7703 = vunpack.c.l.b16 %v7329
    %v7704 = vunpack.c.h.b16 %v7329
    %v7705 = vunpack.c.l.b16 %v7330
    %v7706 = vunpack.c.h.b16 %v7330
    %v7707 = vunpack.c.l.b16 %v7331
    %v7708 = vunpack.c.h.b16 %v7331
    %v7709 = vunpack.c.l.b16 %v7332
    %v7710 = vunpack.c.h.b16 %v7332
    %v7711 = vunpack.c.l.b16 %v7333
    %v7712 = vunpack.c.h.b16 %v7333
    %v7713 = vunpack.c.l.b16 %v7334
    %v7714 = vunpack.c.h.b16 %v7334
    %v7715 = vunpack.c.l.b16 %v7335
    %v7716 = vunpack.c.h.b16 %v7335
    %v7717 = vunpack.c.l.b16 %v7336
    %v7718 = vunpack.c.h.b16 %v7336
    %v7719 = vunpack.c.l.b16 %v7337
    %v7720 = vunpack.c.h.b16 %v7337
    %v7721 = vunpack.c.l.b16 %v7338
    %v7722 = vunpack.c.h.b16 %v7338
    %v7723 = vpack.c.b16 %v7471, %v7467
    %v7724 = vpack.c.b16 %v7472, %v7468
    %v7725 = vpack.c.b16 %v7473, %v7469
    %v7726 = vpack.c.b16 %v7474, %v7470
    %v7727 = vpack.c.b16 %v7479, %v7475
    %v7728 = vpack.c.b16 %v7480, %v7476
    %v7729 = vpack.c.b16 %v7481, %v7477
    %v7730 = vpack.c.b16 %v7482, %v7478
    %v7731 = vpack.c.b16 %v7487, %v7483
    %v7732 = vpack.c.b16 %v7488, %v7484
    %v7733 = vpack.c.b16 %v7489, %v7485
    %v7734 = vpack.c.b16 %v7490, %v7486
    %v7735 = vpack.c.b16 %v7495, %v7491
    %v7736 = vpack.c.b16 %v7496, %v7492
    %v7737 = vpack.c.b16 %v7497, %v7493
    %v7738 = vpack.c.b16 %v7498, %v7494
    %v7739 = vpack.c.b16 %v7503, %v7499
    %v7740 = vpack.c.b16 %v7504, %v7500
    %v7741 = vpack.c.b16 %v7505, %v7501
    %v7742 = vpack.c.b16 %v7506, %v7502
    %v7743 = vpack.c.b16 %v7511, %v7507
    %v7744 = vpack.c.b16 %v7512, %v7508
    %v7745 = vpack.c.b16 %v7513, %v7509
    %v7746 = vpack.c.b16 %v7514, %v7510
    %v7747 = vpack.c.b16 %v7519, %v7515
    %v7748 = vpack.c.b16 %v7520, %v7516
    %v7749 = vpack.c.b16 %v7521, %v7517
    %v7750 = vpack.c.b16 %v7522, %v7518
    %v7751 = vpack.c.b16 %v7527, %v7523
    %v7752 = vpack.c.b16 %v7528, %v7524
    %v7753 = vpack.c.b16 %v7529, %v7525
    %v7754 = vpack.c.b16 %v7530, %v7526
    %v7755 = vpack.c.b16 %v7535, %v7531
    %v7756 = vpack.c.b16 %v7536, %v7532
    %v7757 = vpack.c.b16 %v7537, %v7533
    %v7758 = vpack.c.b16 %v7538, %v7534
    %v7759 = vpack.c.b16 %v7543, %v7539
    %v7760 = vpack.c.b16 %v7544, %v7540
    %v7761 = vpack.c.b16 %v7545, %v7541
    %v7762 = vpack.c.b16 %v7546, %v7542
    %v7763 = vpack.c.b16 %v7551, %v7547
    %v7764 = vpack.c.b16 %v7552, %v7548
    %v7765 = vpack.c.b16 %v7553, %v7549
    %v7766 = vpack.c.b16 %v7554, %v7550
    %v7767 = vpack.c.b16 %v7559, %v7555
    %v7768 = vpack.c.b16 %v7560, %v7556
    %v7769 = vpack.c.b16 %v7561, %v7557
    %v7770 = vpack.c.b16 %v7562, %v7558
    %v7771 = vpack.c.b16 %v7567, %v7563
    %v7772 = vpack.c.b16 %v7568, %v7564
    %v7773 = vpack.c.b16 %v7569, %v7565
    %v7774 = vpack.c.b16 %v7570, %v7566
    %v7775 = vpack.c.b16 %v7575, %v7571
    %v7776 = vpack.c.b16 %v7576, %v7572
    %v7777 = vpack.c.b16 %v7577, %v7573
    %v7778 = vpack.c.b16 %v7578, %v7574
    %v7779 = vpack.c.b16 %v7583, %v7579
    %v7780 = vpack.c.b16 %v7584, %v7580
    %v7781 = vpack.c.b16 %v7585, %v7581
    %v7782 = vpack.c.b16 %v7586, %v7582
    %v7783 = vpack.c.b16 %v7591, %v7587
    %v7784 = vpack.c.b16 %v7592, %v7588
    %v7785 = vpack.c.b16 %v7593, %v7589
    %v7786 = vpack.c.b16 %v7594, %v7590
    %v7787 = vpack.c.b16 %v7599, %v7595
    %v7788 = vpack.c.b16 %v7600, %v7596
    %v7789 = vpack.c.b16 %v7601, %v7597
    %v7790 = vpack.c.b16 %v7602, %v7598
    %v7791 = vpack.c.b16 %v7607, %v7603
    %v7792 = vpack.c.b16 %v7608, %v7604
    %v7793 = vpack.c.b16 %v7609, %v7605
    %v7794 = vpack.c.b16 %v7610, %v7606
    %v7795 = vpack.c.b16 %v7615, %v7611
    %v7796 = vpack.c.b16 %v7616, %v7612
    %v7797 = vpack.c.b16 %v7617, %v7613
    %v7798 = vpack.c.b16 %v7618, %v7614
    %v7799 = vpack.c.b16 %v7623, %v7619
    %v7800 = vpack.c.b16 %v7624, %v7620
    %v7801 = vpack.c.b16 %v7625, %v7621
    %v7802 = vpack.c.b16 %v7626, %v7622
    %v7803 = vpack.c.b16 %v7631, %v7627
    %v7804 = vpack.c.b16 %v7632, %v7628
    %v7805 = vpack.c.b16 %v7633, %v7629
    %v7806 = vpack.c.b16 %v7634, %v7630
    %v7807 = vpack.c.b16 %v7639, %v7635
    %v7808 = vpack.c.b16 %v7640, %v7636
    %v7809 = vpack.c.b16 %v7641, %v7637
    %v7810 = vpack.c.b16 %v7642, %v7638
    %v7811 = vpack.c.b16 %v7647, %v7643
    %v7812 = vpack.c.b16 %v7648, %v7644
    %v7813 = vpack.c.b16 %v7649, %v7645
    %v7814 = vpack.c.b16 %v7650, %v7646
    %v7815 = vpack.c.b16 %v7655, %v7651
    %v7816 = vpack.c.b16 %v7656, %v7652
    %v7817 = vpack.c.b16 %v7657, %v7653
    %v7818 = vpack.c.b16 %v7658, %v7654
    %v7819 = vpack.c.b16 %v7663, %v7659
    %v7820 = vpack.c.b16 %v7664, %v7660
    %v7821 = vpack.c.b16 %v7665, %v7661
    %v7822 = vpack.c.b16 %v7666, %v7662
    %v7823 = vpack.c.b16 %v7671, %v7667
    %v7824 = vpack.c.b16 %v7672, %v7668
    %v7825 = vpack.c.b16 %v7673, %v7669
    %v7826 = vpack.c.b16 %v7674, %v7670
    %v7827 = vpack.c.b16 %v7679, %v7675
    %v7828 = vpack.c.b16 %v7680, %v7676
    %v7829 = vpack.c.b16 %v7681, %v7677
    %v7830 = vpack.c.b16 %v7682, %v7678
    %v7831 = vpack.c.b16 %v7687, %v7683
    %v7832 = vpack.c.b16 %v7688, %v7684
    %v7833 = vpack.c.b16 %v7689, %v7685
    %v7834 = vpack.c.b16 %v7690, %v7686
    %v7835 = vpack.c.b16 %v7695, %v7691
    %v7836 = vpack.c.b16 %v7696, %v7692
    %v7837 = vpack.c.b16 %v7697, %v7693
    %v7838 = vpack.c.b16 %v7698, %v7694
    %v7839 = vpack.c.b16 %v7703, %v7699
    %v7840 = vpack.c.b16 %v7704, %v7700
    %v7841 = vpack.c.b16 %v7705, %v7701
    %v7842 = vpack.c.b16 %v7706, %v7702
    %v7843 = vpack.c.b16 %v7711, %v7707
    %v7844 = vpack.c.b16 %v7712, %v7708
    %v7845 = vpack.c.b16 %v7713, %v7709
    %v7846 = vpack.c.b16 %v7714, %v7710
    %v7847 = vpack.c.b16 %v7719, %v7715
    %v7848 = vpack.c.b16 %v7720, %v7716
    %v7849 = vpack.c.b16 %v7721, %v7717
    %v7850 = vpack.c.b16 %v7722, %v7718
    %7979 = vmatprep.subr.bf16.mxu0 %v7724
    %7980 = vmatpush1.bf16.msra.mxu0 %v7723
    %7981 = vmatprep.subr.bf16.mxu0 %v7728
    %7982 = vmatpush1.bf16.msra.mxu0 %v7727
    %7983 = vmatprep.subr.bf16.mxu0 %v7732
    %7984 = vmatpush1.bf16.msra.mxu0 %v7731
    %7985 = vmatprep.subr.bf16.mxu0 %v7736
    %7986 = vmatpush1.bf16.msra.mxu0 %v7735
    %7987 = vmatprep.subr.bf16.mxu0 %v7740
    %7988 = vmatpush1.bf16.msra.mxu0 %v7739
    %7989 = vmatprep.subr.bf16.mxu0 %v7744
    %7990 = vmatpush1.bf16.msra.mxu0 %v7743
    %7991 = vmatprep.subr.bf16.mxu0 %v7748
    %7992 = vmatpush1.bf16.msra.mxu0 %v7747
    %7993 = vmatprep.subr.bf16.mxu0 %v7752
    %7994 = vmatpush1.bf16.msra.mxu0 %v7751
    %7995 = vmatprep.subr.bf16.mxu0 %v7756
    %7996 = vmatpush1.bf16.msra.mxu0 %v7755
    %7997 = vmatprep.subr.bf16.mxu0 %v7760
    %7998 = vmatpush1.bf16.msra.mxu0 %v7759
    %7999 = vmatprep.subr.bf16.mxu0 %v7764
    %8000 = vmatpush1.bf16.msra.mxu0 %v7763
    %8001 = vmatprep.subr.bf16.mxu0 %v7768
    %8002 = vmatpush1.bf16.msra.mxu0 %v7767
    %8003 = vmatprep.subr.bf16.mxu0 %v7772
    %8004 = vmatpush1.bf16.msra.mxu0 %v7771
    %8005 = vmatprep.subr.bf16.mxu0 %v7776
    %8006 = vmatpush1.bf16.msra.mxu0 %v7775
    %8007 = vmatprep.subr.bf16.mxu0 %v7780
    %8008 = vmatpush1.bf16.msra.mxu0 %v7779
    %8009 = vmatprep.subr.bf16.mxu0 %v7784
    %8010 = vmatpush1.bf16.msra.mxu0 %v7783
    %8011 = vmatprep.mubr.bf16.mxu0 %v7080
    %8012 = vmatmul.mubr.bf16.gmra.mrb[0].mxu0 %v7079
    %v8013 = vpop.f32.mrb[0].mxu0
    %v8014 = vadd.f32 0.0, %v8013
    %v8015 = vpop.f32.mrb[0].mxu0
    %v8016 = vadd.f32 0.0, %v8015
    %v8017 = vpop.f32.mrb[0].mxu0
    %v8018 = vpop.f32.mrb[0].mxu0
    %8019 = vdwg.mxu0
    %8020 = vmatprep.subr.bf16.mxu0 %v7788
    %8021 = vmatpush1.bf16.msra.mxu0 %v7787
    %8022 = vmatprep.subr.bf16.mxu0 %v7792
    %8023 = vmatpush1.bf16.msra.mxu0 %v7791
    %8024 = vmatprep.subr.bf16.mxu0 %v7796
    %8025 = vmatpush1.bf16.msra.mxu0 %v7795
    %8026 = vmatprep.subr.bf16.mxu0 %v7800
    %8027 = vmatpush1.bf16.msra.mxu0 %v7799
    %8028 = vmatprep.subr.bf16.mxu0 %v7804
    %8029 = vmatpush1.bf16.msra.mxu0 %v7803
    %8030 = vmatprep.subr.bf16.mxu0 %v7808
    %8031 = vmatpush1.bf16.msra.mxu0 %v7807
    %8032 = vmatprep.subr.bf16.mxu0 %v7812
    %8033 = vmatpush1.bf16.msra.mxu0 %v7811
    %8034 = vmatprep.subr.bf16.mxu0 %v7816
    %8035 = vmatpush1.bf16.msra.mxu0 %v7815
    %8036 = vmatprep.subr.bf16.mxu0 %v7820
    %8037 = vmatpush1.bf16.msra.mxu0 %v7819
    %8038 = vmatprep.subr.bf16.mxu0 %v7824
    %8039 = vmatpush1.bf16.msra.mxu0 %v7823
    %8040 = vmatprep.subr.bf16.mxu0 %v7828
    %8041 = vmatpush1.bf16.msra.mxu0 %v7827
    %8042 = vmatprep.subr.bf16.mxu0 %v7832
    %8043 = vmatpush1.bf16.msra.mxu0 %v7831
    %8044 = vmatprep.subr.bf16.mxu0 %v7836
    %8045 = vmatpush1.bf16.msra.mxu0 %v7835
    %8046 = vmatprep.subr.bf16.mxu0 %v7840
    %8047 = vmatpush1.bf16.msra.mxu0 %v7839
    %8048 = vmatprep.subr.bf16.mxu0 %v7844
    %8049 = vmatpush1.bf16.msra.mxu0 %v7843
    %8050 = vmatprep.subr.bf16.mxu0 %v7848
    %8051 = vmatpush1.bf16.msra.mxu0 %v7847
    %8052 = vmatprep.mubr.bf16.mxu0 %v7082
    %8053 = vmatmul.mubr.bf16.gmra.mrb[0].mxu0 %v7081
    %v8054 = vpop.f32.mrb[0].mxu0
    %v8055 = vadd.f32 %v8014, %v8054
    %v8056 = vpop.f32.mrb[0].mxu0
    %v8057 = vadd.f32 %v8016, %v8056
    %v8058 = vpop.f32.mrb[0].mxu0
    %v8059 = vpop.f32.mrb[0].mxu0
    %8060 = vdwg.mxu0
    %8061 = vmatprep.subr.bf16.mxu0 %v7726
    %8062 = vmatpush1.bf16.msra.mxu0 %v7725
    %8063 = vmatprep.subr.bf16.mxu0 %v7730
    %8064 = vmatpush1.bf16.msra.mxu0 %v7729
    %8065 = vmatprep.subr.bf16.mxu0 %v7734
    %8066 = vmatpush1.bf16.msra.mxu0 %v7733
    %8067 = vmatprep.subr.bf16.mxu0 %v7738
    %8068 = vmatpush1.bf16.msra.mxu0 %v7737
    %8069 = vmatprep.subr.bf16.mxu0 %v7742
    %8070 = vmatpush1.bf16.msra.mxu0 %v7741
    %8071 = vmatprep.subr.bf16.mxu0 %v7746
    %8072 = vmatpush1.bf16.msra.mxu0 %v7745
    %8073 = vmatprep.subr.bf16.mxu0 %v7750
    %8074 = vmatpush1.bf16.msra.mxu0 %v7749
    %8075 = vmatprep.subr.bf16.mxu0 %v7754
    %8076 = vmatpush1.bf16.msra.mxu0 %v7753
    %8077 = vmatprep.subr.bf16.mxu0 %v7758
    %8078 = vmatpush1.bf16.msra.mxu0 %v7757
    %8079 = vmatprep.subr.bf16.mxu0 %v7762
    %8080 = vmatpush1.bf16.msra.mxu0 %v7761
    %8081 = vmatprep.subr.bf16.mxu0 %v7766
    %8082 = vmatpush1.bf16.msra.mxu0 %v7765
    %8083 = vmatprep.subr.bf16.mxu0 %v7770
    %8084 = vmatpush1.bf16.msra.mxu0 %v7769
    %8085 = vmatprep.subr.bf16.mxu0 %v7774
    %8086 = vmatpush1.bf16.msra.mxu0 %v7773
    %8087 = vmatprep.subr.bf16.mxu0 %v7778
    %8088 = vmatpush1.bf16.msra.mxu0 %v7777
    %8089 = vmatprep.subr.bf16.mxu0 %v7782
    %8090 = vmatpush1.bf16.msra.mxu0 %v7781
    %8091 = vmatprep.subr.bf16.mxu0 %v7786
    %8092 = vmatpush1.bf16.msra.mxu0 %v7785
    %8093 = vmatprep.mubr.bf16.mxu0 %v7080
    %8094 = vmatmul.mubr.bf16.gmra.mrb[0].mxu0 %v7079
    %v8095 = vpop.f32.mrb[0].mxu0
    %v8096 = vadd.f32 0.0, %v8095
    %v8097 = vpop.f32.mrb[0].mxu0
    %v8098 = vadd.f32 0.0, %v8097
    %v8099 = vpop.f32.mrb[0].mxu0
    %v8100 = vpop.f32.mrb[0].mxu0
    %8101 = vdwg.mxu0
    %8102 = vmatprep.subr.bf16.mxu0 %v7790
    %8103 = vmatpush1.bf16.msra.mxu0 %v7789
    %8104 = vmatprep.subr.bf16.mxu0 %v7794
    %8105 = vmatpush1.bf16.msra.mxu0 %v7793
    %8106 = vmatprep.subr.bf16.mxu0 %v7798
    %8107 = vmatpush1.bf16.msra.mxu0 %v7797
    %8108 = vmatprep.subr.bf16.mxu0 %v7802
    %8109 = vmatpush1.bf16.msra.mxu0 %v7801
    %8110 = vmatprep.subr.bf16.mxu0 %v7806
    %8111 = vmatpush1.bf16.msra.mxu0 %v7805
    %8112 = vmatprep.subr.bf16.mxu0 %v7810
    %8113 = vmatpush1.bf16.msra.mxu0 %v7809
    %8114 = vmatprep.subr.bf16.mxu0 %v7814
    %8115 = vmatpush1.bf16.msra.mxu0 %v7813
    %8116 = vmatprep.subr.bf16.mxu0 %v7818
    %8117 = vmatpush1.bf16.msra.mxu0 %v7817
    %8118 = vmatprep.subr.bf16.mxu0 %v7822
    %8119 = vmatpush1.bf16.msra.mxu0 %v7821
    %8120 = vmatprep.subr.bf16.mxu0 %v7826
    %8121 = vmatpush1.bf16.msra.mxu0 %v7825
    %8122 = vmatprep.subr.bf16.mxu0 %v7830
    %8123 = vmatpush1.bf16.msra.mxu0 %v7829
    %8124 = vmatprep.subr.bf16.mxu0 %v7834
    %8125 = vmatpush1.bf16.msra.mxu0 %v7833
    %8126 = vmatprep.subr.bf16.mxu0 %v7838
    %8127 = vmatpush1.bf16.msra.mxu0 %v7837
    %8128 = vmatprep.subr.bf16.mxu0 %v7842
    %8129 = vmatpush1.bf16.msra.mxu0 %v7841
    %8130 = vmatprep.subr.bf16.mxu0 %v7846
    %8131 = vmatpush1.bf16.msra.mxu0 %v7845
    %8132 = vmatprep.subr.bf16.mxu0 %v7850
    %8133 = vmatpush1.bf16.msra.mxu0 %v7849
    %8134 = vmatprep.mubr.bf16.mxu0 %v7082
    %8135 = vmatmul.mubr.bf16.gmra.mrb[0].mxu0 %v7081
    %v8136 = vpop.f32.mrb[0].mxu0
    %v8137 = vadd.f32 %v8096, %v8136
    %v8138 = vpop.f32.mrb[0].mxu0
    %v8139 = vadd.f32 %v8098, %v8138
    %v8140 = vpop.f32.mrb[0].mxu0
    %v8141 = vpop.f32.mrb[0].mxu0
    %8142 = vdwg.mxu0
    %v8271 = vunpack.c.l.b16 %v7083
    %v8272 = vunpack.c.h.b16 %v7083
    %v8273 = vunpack.c.l.b16 %v7084
    %v8274 = vunpack.c.h.b16 %v7084
    %v8275 = vunpack.c.l.b16 %v7085
    %v8276 = vunpack.c.h.b16 %v7085
    %v8277 = vunpack.c.l.b16 %v7086
    %v8278 = vunpack.c.h.b16 %v7086
    %v8279 = vunpack.c.l.b16 %v7087
    %v8280 = vunpack.c.h.b16 %v7087
    %v8281 = vunpack.c.l.b16 %v7088
    %v8282 = vunpack.c.h.b16 %v7088
    %v8283 = vunpack.c.l.b16 %v7089
    %v8284 = vunpack.c.h.b16 %v7089
    %v8285 = vunpack.c.l.b16 %v7090
    %v8286 = vunpack.c.h.b16 %v7090
    %v8287 = vunpack.c.l.b16 %v7091
    %v8288 = vunpack.c.h.b16 %v7091
    %v8289 = vunpack.c.l.b16 %v7092
    %v8290 = vunpack.c.h.b16 %v7092
    %v8291 = vunpack.c.l.b16 %v7093
    %v8292 = vunpack.c.h.b16 %v7093
    %v8293 = vunpack.c.l.b16 %v7094
    %v8294 = vunpack.c.h.b16 %v7094
    %v8295 = vunpack.c.l.b16 %v7095
    %v8296 = vunpack.c.h.b16 %v7095
    %v8297 = vunpack.c.l.b16 %v7096
    %v8298 = vunpack.c.h.b16 %v7096
    %v8299 = vunpack.c.l.b16 %v7097
    %v8300 = vunpack.c.h.b16 %v7097
    %v8301 = vunpack.c.l.b16 %v7098
    %v8302 = vunpack.c.h.b16 %v7098
    %v8303 = vunpack.c.l.b16 %v7099
    %v8304 = vunpack.c.h.b16 %v7099
    %v8305 = vunpack.c.l.b16 %v7100
    %v8306 = vunpack.c.h.b16 %v7100
    %v8307 = vunpack.c.l.b16 %v7101
    %v8308 = vunpack.c.h.b16 %v7101
    %v8309 = vunpack.c.l.b16 %v7102
    %v8310 = vunpack.c.h.b16 %v7102
    %v8311 = vunpack.c.l.b16 %v7103
    %v8312 = vunpack.c.h.b16 %v7103
    %v8313 = vunpack.c.l.b16 %v7104
    %v8314 = vunpack.c.h.b16 %v7104
    %v8315 = vunpack.c.l.b16 %v7105
    %v8316 = vunpack.c.h.b16 %v7105
    %v8317 = vunpack.c.l.b16 %v7106
    %v8318 = vunpack.c.h.b16 %v7106
    %v8319 = vunpack.c.l.b16 %v7107
    %v8320 = vunpack.c.h.b16 %v7107
    %v8321 = vunpack.c.l.b16 %v7108
    %v8322 = vunpack.c.h.b16 %v7108
    %v8323 = vunpack.c.l.b16 %v7109
    %v8324 = vunpack.c.h.b16 %v7109
    %v8325 = vunpack.c.l.b16 %v7110
    %v8326 = vunpack.c.h.b16 %v7110
    %v8327 = vunpack.c.l.b16 %v7111
    %v8328 = vunpack.c.h.b16 %v7111
    %v8329 = vunpack.c.l.b16 %v7112
    %v8330 = vunpack.c.h.b16 %v7112
    %v8331 = vunpack.c.l.b16 %v7113
    %v8332 = vunpack.c.h.b16 %v7113
    %v8333 = vunpack.c.l.b16 %v7114
    %v8334 = vunpack.c.h.b16 %v7114
    %v8335 = vunpack.c.l.b16 %v7115
    %v8336 = vunpack.c.h.b16 %v7115
    %v8337 = vunpack.c.l.b16 %v7116
    %v8338 = vunpack.c.h.b16 %v7116
    %v8339 = vunpack.c.l.b16 %v7117
    %v8340 = vunpack.c.h.b16 %v7117
    %v8341 = vunpack.c.l.b16 %v7118
    %v8342 = vunpack.c.h.b16 %v7118
    %v8343 = vunpack.c.l.b16 %v7119
    %v8344 = vunpack.c.h.b16 %v7119
    %v8345 = vunpack.c.l.b16 %v7120
    %v8346 = vunpack.c.h.b16 %v7120
    %v8347 = vunpack.c.l.b16 %v7121
    %v8348 = vunpack.c.h.b16 %v7121
    %v8349 = vunpack.c.l.b16 %v7122
    %v8350 = vunpack.c.h.b16 %v7122
    %v8351 = vunpack.c.l.b16 %v7123
    %v8352 = vunpack.c.h.b16 %v7123
    %v8353 = vunpack.c.l.b16 %v7124
    %v8354 = vunpack.c.h.b16 %v7124
    %v8355 = vunpack.c.l.b16 %v7125
    %v8356 = vunpack.c.h.b16 %v7125
    %v8357 = vunpack.c.l.b16 %v7126
    %v8358 = vunpack.c.h.b16 %v7126
    %v8359 = vunpack.c.l.b16 %v7127
    %v8360 = vunpack.c.h.b16 %v7127
    %v8361 = vunpack.c.l.b16 %v7128
    %v8362 = vunpack.c.h.b16 %v7128
    %v8363 = vunpack.c.l.b16 %v7129
    %v8364 = vunpack.c.h.b16 %v7129
    %v8365 = vunpack.c.l.b16 %v7130
    %v8366 = vunpack.c.h.b16 %v7130
    %v8367 = vunpack.c.l.b16 %v7131
    %v8368 = vunpack.c.h.b16 %v7131
    %v8369 = vunpack.c.l.b16 %v7132
    %v8370 = vunpack.c.h.b16 %v7132
    %v8371 = vunpack.c.l.b16 %v7133
    %v8372 = vunpack.c.h.b16 %v7133
    %v8373 = vunpack.c.l.b16 %v7134
    %v8374 = vunpack.c.h.b16 %v7134
    %v8375 = vunpack.c.l.b16 %v7135
    %v8376 = vunpack.c.h.b16 %v7135
    %v8377 = vunpack.c.l.b16 %v7136
    %v8378 = vunpack.c.h.b16 %v7136
    %v8379 = vunpack.c.l.b16 %v7137
    %v8380 = vunpack.c.h.b16 %v7137
    %v8381 = vunpack.c.l.b16 %v7138
    %v8382 = vunpack.c.h.b16 %v7138
    %v8383 = vunpack.c.l.b16 %v7139
    %v8384 = vunpack.c.h.b16 %v7139
    %v8385 = vunpack.c.l.b16 %v7140
    %v8386 = vunpack.c.h.b16 %v7140
    %v8387 = vunpack.c.l.b16 %v7141
    %v8388 = vunpack.c.h.b16 %v7141
    %v8389 = vunpack.c.l.b16 %v7142
    %v8390 = vunpack.c.h.b16 %v7142
    %v8391 = vunpack.c.l.b16 %v7143
    %v8392 = vunpack.c.h.b16 %v7143
    %v8393 = vunpack.c.l.b16 %v7144
    %v8394 = vunpack.c.h.b16 %v7144
    %v8395 = vunpack.c.l.b16 %v7145
    %v8396 = vunpack.c.h.b16 %v7145
    %v8397 = vunpack.c.l.b16 %v7146
    %v8398 = vunpack.c.h.b16 %v7146
    %v8399 = vunpack.c.l.b16 %v7147
    %v8400 = vunpack.c.h.b16 %v7147
    %v8401 = vunpack.c.l.b16 %v7148
    %v8402 = vunpack.c.h.b16 %v7148
    %v8403 = vunpack.c.l.b16 %v7149
    %v8404 = vunpack.c.h.b16 %v7149
    %v8405 = vunpack.c.l.b16 %v7150
    %v8406 = vunpack.c.h.b16 %v7150
    %v8407 = vunpack.c.l.b16 %v7151
    %v8408 = vunpack.c.h.b16 %v7151
    %v8409 = vunpack.c.l.b16 %v7152
    %v8410 = vunpack.c.h.b16 %v7152
    %v8411 = vunpack.c.l.b16 %v7153
    %v8412 = vunpack.c.h.b16 %v7153
    %v8413 = vunpack.c.l.b16 %v7154
    %v8414 = vunpack.c.h.b16 %v7154
    %v8415 = vunpack.c.l.b16 %v7155
    %v8416 = vunpack.c.h.b16 %v7155
    %v8417 = vunpack.c.l.b16 %v7156
    %v8418 = vunpack.c.h.b16 %v7156
    %v8419 = vunpack.c.l.b16 %v7157
    %v8420 = vunpack.c.h.b16 %v7157
    %v8421 = vunpack.c.l.b16 %v7158
    %v8422 = vunpack.c.h.b16 %v7158
    %v8423 = vunpack.c.l.b16 %v7159
    %v8424 = vunpack.c.h.b16 %v7159
    %v8425 = vunpack.c.l.b16 %v7160
    %v8426 = vunpack.c.h.b16 %v7160
    %v8427 = vunpack.c.l.b16 %v7161
    %v8428 = vunpack.c.h.b16 %v7161
    %v8429 = vunpack.c.l.b16 %v7162
    %v8430 = vunpack.c.h.b16 %v7162
    %v8431 = vunpack.c.l.b16 %v7163
    %v8432 = vunpack.c.h.b16 %v7163
    %v8433 = vunpack.c.l.b16 %v7164
    %v8434 = vunpack.c.h.b16 %v7164
    %v8435 = vunpack.c.l.b16 %v7165
    %v8436 = vunpack.c.h.b16 %v7165
    %v8437 = vunpack.c.l.b16 %v7166
    %v8438 = vunpack.c.h.b16 %v7166
    %v8439 = vunpack.c.l.b16 %v7167
    %v8440 = vunpack.c.h.b16 %v7167
    %v8441 = vunpack.c.l.b16 %v7168
    %v8442 = vunpack.c.h.b16 %v7168
    %v8443 = vunpack.c.l.b16 %v7169
    %v8444 = vunpack.c.h.b16 %v7169
    %v8445 = vunpack.c.l.b16 %v7170
    %v8446 = vunpack.c.h.b16 %v7170
    %v8447 = vunpack.c.l.b16 %v7171
    %v8448 = vunpack.c.h.b16 %v7171
    %v8449 = vunpack.c.l.b16 %v7172
    %v8450 = vunpack.c.h.b16 %v7172
    %v8451 = vunpack.c.l.b16 %v7173
    %v8452 = vunpack.c.h.b16 %v7173
    %v8453 = vunpack.c.l.b16 %v7174
    %v8454 = vunpack.c.h.b16 %v7174
    %v8455 = vunpack.c.l.b16 %v7175
    %v8456 = vunpack.c.h.b16 %v7175
    %v8457 = vunpack.c.l.b16 %v7176
    %v8458 = vunpack.c.h.b16 %v7176
    %v8459 = vunpack.c.l.b16 %v7177
    %v8460 = vunpack.c.h.b16 %v7177
    %v8461 = vunpack.c.l.b16 %v7178
    %v8462 = vunpack.c.h.b16 %v7178
    %v8463 = vunpack.c.l.b16 %v7179
    %v8464 = vunpack.c.h.b16 %v7179
    %v8465 = vunpack.c.l.b16 %v7180
    %v8466 = vunpack.c.h.b16 %v7180
    %v8467 = vunpack.c.l.b16 %v7181
    %v8468 = vunpack.c.h.b16 %v7181
    %v8469 = vunpack.c.l.b16 %v7182
    %v8470 = vunpack.c.h.b16 %v7182
    %v8471 = vunpack.c.l.b16 %v7183
    %v8472 = vunpack.c.h.b16 %v7183
    %v8473 = vunpack.c.l.b16 %v7184
    %v8474 = vunpack.c.h.b16 %v7184
    %v8475 = vunpack.c.l.b16 %v7185
    %v8476 = vunpack.c.h.b16 %v7185
    %v8477 = vunpack.c.l.b16 %v7186
    %v8478 = vunpack.c.h.b16 %v7186
    %v8479 = vunpack.c.l.b16 %v7187
    %v8480 = vunpack.c.h.b16 %v7187
    %v8481 = vunpack.c.l.b16 %v7188
    %v8482 = vunpack.c.h.b16 %v7188
    %v8483 = vunpack.c.l.b16 %v7189
    %v8484 = vunpack.c.h.b16 %v7189
    %v8485 = vunpack.c.l.b16 %v7190
    %v8486 = vunpack.c.h.b16 %v7190
    %v8487 = vunpack.c.l.b16 %v7191
    %v8488 = vunpack.c.h.b16 %v7191
    %v8489 = vunpack.c.l.b16 %v7192
    %v8490 = vunpack.c.h.b16 %v7192
    %v8491 = vunpack.c.l.b16 %v7193
    %v8492 = vunpack.c.h.b16 %v7193
    %v8493 = vunpack.c.l.b16 %v7194
    %v8494 = vunpack.c.h.b16 %v7194
    %v8495 = vunpack.c.l.b16 %v7195
    %v8496 = vunpack.c.h.b16 %v7195
    %v8497 = vunpack.c.l.b16 %v7196
    %v8498 = vunpack.c.h.b16 %v7196
    %v8499 = vunpack.c.l.b16 %v7197
    %v8500 = vunpack.c.h.b16 %v7197
    %v8501 = vunpack.c.l.b16 %v7198
    %v8502 = vunpack.c.h.b16 %v7198
    %v8503 = vunpack.c.l.b16 %v7199
    %v8504 = vunpack.c.h.b16 %v7199
    %v8505 = vunpack.c.l.b16 %v7200
    %v8506 = vunpack.c.h.b16 %v7200
    %v8507 = vunpack.c.l.b16 %v7201
    %v8508 = vunpack.c.h.b16 %v7201
    %v8509 = vunpack.c.l.b16 %v7202
    %v8510 = vunpack.c.h.b16 %v7202
    %v8511 = vunpack.c.l.b16 %v7203
    %v8512 = vunpack.c.h.b16 %v7203
    %v8513 = vunpack.c.l.b16 %v7204
    %v8514 = vunpack.c.h.b16 %v7204
    %v8515 = vunpack.c.l.b16 %v7205
    %v8516 = vunpack.c.h.b16 %v7205
    %v8517 = vunpack.c.l.b16 %v7206
    %v8518 = vunpack.c.h.b16 %v7206
    %v8519 = vunpack.c.l.b16 %v7207
    %v8520 = vunpack.c.h.b16 %v7207
    %v8521 = vunpack.c.l.b16 %v7208
    %v8522 = vunpack.c.h.b16 %v7208
    %v8523 = vunpack.c.l.b16 %v7209
    %v8524 = vunpack.c.h.b16 %v7209
    %v8525 = vunpack.c.l.b16 %v7210
    %v8526 = vunpack.c.h.b16 %v7210
    %v8527 = vpack.c.b16 %v8275, %v8271
    %v8528 = vpack.c.b16 %v8276, %v8272
    %v8529 = vpack.c.b16 %v8277, %v8273
    %v8530 = vpack.c.b16 %v8278, %v8274
    %v8531 = vpack.c.b16 %v8283, %v8279
    %v8532 = vpack.c.b16 %v8284, %v8280
    %v8533 = vpack.c.b16 %v8285, %v8281
    %v8534 = vpack.c.b16 %v8286, %v8282
    %v8535 = vpack.c.b16 %v8291, %v8287
    %v8536 = vpack.c.b16 %v8292, %v8288
    %v8537 = vpack.c.b16 %v8293, %v8289
    %v8538 = vpack.c.b16 %v8294, %v8290
    %v8539 = vpack.c.b16 %v8299, %v8295
    %v8540 = vpack.c.b16 %v8300, %v8296
    %v8541 = vpack.c.b16 %v8301, %v8297
    %v8542 = vpack.c.b16 %v8302, %v8298
    %v8543 = vpack.c.b16 %v8307, %v8303
    %v8544 = vpack.c.b16 %v8308, %v8304
    %v8545 = vpack.c.b16 %v8309, %v8305
    %v8546 = vpack.c.b16 %v8310, %v8306
    %v8547 = vpack.c.b16 %v8315, %v8311
    %v8548 = vpack.c.b16 %v8316, %v8312
    %v8549 = vpack.c.b16 %v8317, %v8313
    %v8550 = vpack.c.b16 %v8318, %v8314
    %v8551 = vpack.c.b16 %v8323, %v8319
    %v8552 = vpack.c.b16 %v8324, %v8320
    %v8553 = vpack.c.b16 %v8325, %v8321
    %v8554 = vpack.c.b16 %v8326, %v8322
    %v8555 = vpack.c.b16 %v8331, %v8327
    %v8556 = vpack.c.b16 %v8332, %v8328
    %v8557 = vpack.c.b16 %v8333, %v8329
    %v8558 = vpack.c.b16 %v8334, %v8330
    %v8559 = vpack.c.b16 %v8339, %v8335
    %v8560 = vpack.c.b16 %v8340, %v8336
    %v8561 = vpack.c.b16 %v8341, %v8337
    %v8562 = vpack.c.b16 %v8342, %v8338
    %v8563 = vpack.c.b16 %v8347, %v8343
    %v8564 = vpack.c.b16 %v8348, %v8344
    %v8565 = vpack.c.b16 %v8349, %v8345
    %v8566 = vpack.c.b16 %v8350, %v8346
    %v8567 = vpack.c.b16 %v8355, %v8351
    %v8568 = vpack.c.b16 %v8356, %v8352
    %v8569 = vpack.c.b16 %v8357, %v8353
    %v8570 = vpack.c.b16 %v8358, %v8354
    %v8571 = vpack.c.b16 %v8363, %v8359
    %v8572 = vpack.c.b16 %v8364, %v8360
    %v8573 = vpack.c.b16 %v8365, %v8361
    %v8574 = vpack.c.b16 %v8366, %v8362
    %v8575 = vpack.c.b16 %v8371, %v8367
    %v8576 = vpack.c.b16 %v8372, %v8368
    %v8577 = vpack.c.b16 %v8373, %v8369
    %v8578 = vpack.c.b16 %v8374, %v8370
    %v8579 = vpack.c.b16 %v8379, %v8375
    %v8580 = vpack.c.b16 %v8380, %v8376
    %v8581 = vpack.c.b16 %v8381, %v8377
    %v8582 = vpack.c.b16 %v8382, %v8378
    %v8583 = vpack.c.b16 %v8387, %v8383
    %v8584 = vpack.c.b16 %v8388, %v8384
    %v8585 = vpack.c.b16 %v8389, %v8385
    %v8586 = vpack.c.b16 %v8390, %v8386
    %v8587 = vpack.c.b16 %v8395, %v8391
    %v8588 = vpack.c.b16 %v8396, %v8392
    %v8589 = vpack.c.b16 %v8397, %v8393
    %v8590 = vpack.c.b16 %v8398, %v8394
    %v8591 = vpack.c.b16 %v8403, %v8399
    %v8592 = vpack.c.b16 %v8404, %v8400
    %v8593 = vpack.c.b16 %v8405, %v8401
    %v8594 = vpack.c.b16 %v8406, %v8402
    %v8595 = vpack.c.b16 %v8411, %v8407
    %v8596 = vpack.c.b16 %v8412, %v8408
    %v8597 = vpack.c.b16 %v8413, %v8409
    %v8598 = vpack.c.b16 %v8414, %v8410
    %v8599 = vpack.c.b16 %v8419, %v8415
    %v8600 = vpack.c.b16 %v8420, %v8416
    %v8601 = vpack.c.b16 %v8421, %v8417
    %v8602 = vpack.c.b16 %v8422, %v8418
    %v8603 = vpack.c.b16 %v8427, %v8423
    %v8604 = vpack.c.b16 %v8428, %v8424
    %v8605 = vpack.c.b16 %v8429, %v8425
    %v8606 = vpack.c.b16 %v8430, %v8426
    %v8607 = vpack.c.b16 %v8435, %v8431
    %v8608 = vpack.c.b16 %v8436, %v8432
    %v8609 = vpack.c.b16 %v8437, %v8433
    %v8610 = vpack.c.b16 %v8438, %v8434
    %v8611 = vpack.c.b16 %v8443, %v8439
    %v8612 = vpack.c.b16 %v8444, %v8440
    %v8613 = vpack.c.b16 %v8445, %v8441
    %v8614 = vpack.c.b16 %v8446, %v8442
    %v8615 = vpack.c.b16 %v8451, %v8447
    %v8616 = vpack.c.b16 %v8452, %v8448
    %v8617 = vpack.c.b16 %v8453, %v8449
    %v8618 = vpack.c.b16 %v8454, %v8450
    %v8619 = vpack.c.b16 %v8459, %v8455
    %v8620 = vpack.c.b16 %v8460, %v8456
    %v8621 = vpack.c.b16 %v8461, %v8457
    %v8622 = vpack.c.b16 %v8462, %v8458
    %v8623 = vpack.c.b16 %v8467, %v8463
    %v8624 = vpack.c.b16 %v8468, %v8464
    %v8625 = vpack.c.b16 %v8469, %v8465
    %v8626 = vpack.c.b16 %v8470, %v8466
    %v8627 = vpack.c.b16 %v8475, %v8471
    %v8628 = vpack.c.b16 %v8476, %v8472
    %v8629 = vpack.c.b16 %v8477, %v8473
    %v8630 = vpack.c.b16 %v8478, %v8474
    %v8631 = vpack.c.b16 %v8483, %v8479
    %v8632 = vpack.c.b16 %v8484, %v8480
    %v8633 = vpack.c.b16 %v8485, %v8481
    %v8634 = vpack.c.b16 %v8486, %v8482
    %v8635 = vpack.c.b16 %v8491, %v8487
    %v8636 = vpack.c.b16 %v8492, %v8488
    %v8637 = vpack.c.b16 %v8493, %v8489
    %v8638 = vpack.c.b16 %v8494, %v8490
    %v8639 = vpack.c.b16 %v8499, %v8495
    %v8640 = vpack.c.b16 %v8500, %v8496
    %v8641 = vpack.c.b16 %v8501, %v8497
    %v8642 = vpack.c.b16 %v8502, %v8498
    %v8643 = vpack.c.b16 %v8507, %v8503
    %v8644 = vpack.c.b16 %v8508, %v8504
    %v8645 = vpack.c.b16 %v8509, %v8505
    %v8646 = vpack.c.b16 %v8510, %v8506
    %v8647 = vpack.c.b16 %v8515, %v8511
    %v8648 = vpack.c.b16 %v8516, %v8512
    %v8649 = vpack.c.b16 %v8517, %v8513
    %v8650 = vpack.c.b16 %v8518, %v8514
    %v8651 = vpack.c.b16 %v8523, %v8519
    %v8652 = vpack.c.b16 %v8524, %v8520
    %v8653 = vpack.c.b16 %v8525, %v8521
    %v8654 = vpack.c.b16 %v8526, %v8522
    %8783 = vmatprep.subr.bf16.mxu0 %v8528
    %8784 = vmatpush1.bf16.msra.mxu0 %v8527
    %8785 = vmatprep.subr.bf16.mxu0 %v8532
    %8786 = vmatpush1.bf16.msra.mxu0 %v8531
    %8787 = vmatprep.subr.bf16.mxu0 %v8536
    %8788 = vmatpush1.bf16.msra.mxu0 %v8535
    %8789 = vmatprep.subr.bf16.mxu0 %v8540
    %8790 = vmatpush1.bf16.msra.mxu0 %v8539
    %8791 = vmatprep.subr.bf16.mxu0 %v8544
    %8792 = vmatpush1.bf16.msra.mxu0 %v8543
    %8793 = vmatprep.subr.bf16.mxu0 %v8548
    %8794 = vmatpush1.bf16.msra.mxu0 %v8547
    %8795 = vmatprep.subr.bf16.mxu0 %v8552
    %8796 = vmatpush1.bf16.msra.mxu0 %v8551
    %8797 = vmatprep.subr.bf16.mxu0 %v8556
    %8798 = vmatpush1.bf16.msra.mxu0 %v8555
    %8799 = vmatprep.subr.bf16.mxu0 %v8560
    %8800 = vmatpush1.bf16.msra.mxu0 %v8559
    %8801 = vmatprep.subr.bf16.mxu0 %v8564
    %8802 = vmatpush1.bf16.msra.mxu0 %v8563
    %8803 = vmatprep.subr.bf16.mxu0 %v8568
    %8804 = vmatpush1.bf16.msra.mxu0 %v8567
    %8805 = vmatprep.subr.bf16.mxu0 %v8572
    %8806 = vmatpush1.bf16.msra.mxu0 %v8571
    %8807 = vmatprep.subr.bf16.mxu0 %v8576
    %8808 = vmatpush1.bf16.msra.mxu0 %v8575
    %8809 = vmatprep.subr.bf16.mxu0 %v8580
    %8810 = vmatpush1.bf16.msra.mxu0 %v8579
    %8811 = vmatprep.subr.bf16.mxu0 %v8584
    %8812 = vmatpush1.bf16.msra.mxu0 %v8583
    %8813 = vmatprep.subr.bf16.mxu0 %v8588
    %8814 = vmatpush1.bf16.msra.mxu0 %v8587
    %8815 = vmatprep.mubr.bf16.mxu0 %v7076
    %8816 = vmatmul.mubr.bf16.gmra.mrb[0].mxu0 %v7075
    %v8817 = vpop.f32.mrb[0].mxu0
    %v8818 = vadd.f32 %v8055, %v8817
    %v8819 = vpop.f32.mrb[0].mxu0
    %v8820 = vadd.f32 %v8057, %v8819
    %v8821 = vpop.f32.mrb[0].mxu0
    %v8822 = vpop.f32.mrb[0].mxu0
    %8823 = vdwg.mxu0
    %8824 = vmatprep.subr.bf16.mxu0 %v8592
    %8825 = vmatpush1.bf16.msra.mxu0 %v8591
    %8826 = vmatprep.subr.bf16.mxu0 %v8596
    %8827 = vmatpush1.bf16.msra.mxu0 %v8595
    %8828 = vmatprep.subr.bf16.mxu0 %v8600
    %8829 = vmatpush1.bf16.msra.mxu0 %v8599
    %8830 = vmatprep.subr.bf16.mxu0 %v8604
    %8831 = vmatpush1.bf16.msra.mxu0 %v8603
    %8832 = vmatprep.subr.bf16.mxu0 %v8608
    %8833 = vmatpush1.bf16.msra.mxu0 %v8607
    %8834 = vmatprep.subr.bf16.mxu0 %v8612
    %8835 = vmatpush1.bf16.msra.mxu0 %v8611
    %8836 = vmatprep.subr.bf16.mxu0 %v8616
    %8837 = vmatpush1.bf16.msra.mxu0 %v8615
    %8838 = vmatprep.subr.bf16.mxu0 %v8620
    %8839 = vmatpush1.bf16.msra.mxu0 %v8619
    %8840 = vmatprep.subr.bf16.mxu0 %v8624
    %8841 = vmatpush1.bf16.msra.mxu0 %v8623
    %8842 = vmatprep.subr.bf16.mxu0 %v8628
    %8843 = vmatpush1.bf16.msra.mxu0 %v8627
    %8844 = vmatprep.subr.bf16.mxu0 %v8632
    %8845 = vmatpush1.bf16.msra.mxu0 %v8631
    %8846 = vmatprep.subr.bf16.mxu0 %v8636
    %8847 = vmatpush1.bf16.msra.mxu0 %v8635
    %8848 = vmatprep.subr.bf16.mxu0 %v8640
    %8849 = vmatpush1.bf16.msra.mxu0 %v8639
    %8850 = vmatprep.subr.bf16.mxu0 %v8644
    %8851 = vmatpush1.bf16.msra.mxu0 %v8643
    %8852 = vmatprep.subr.bf16.mxu0 %v8648
    %8853 = vmatpush1.bf16.msra.mxu0 %v8647
    %8854 = vmatprep.subr.bf16.mxu0 %v8652
    %8855 = vmatpush1.bf16.msra.mxu0 %v8651
    %8856 = vmatprep.mubr.bf16.mxu0 %v7078
    %8857 = vmatmul.mubr.bf16.gmra.mrb[0].mxu0 %v7077
    %v8858 = vpop.f32.mrb[0].mxu0
    %v8859 = vadd.f32 %v8818, %v8858
    %v8860 = vpop.f32.mrb[0].mxu0
    %v8861 = vadd.f32 %v8820, %v8860
    %v8862 = vpop.f32.mrb[0].mxu0
    %v8863 = vpop.f32.mrb[0].mxu0
    %8864 = vdwg.mxu0
    %8865 = vmatprep.subr.bf16.mxu0 %v8530
    %8866 = vmatpush1.bf16.msra.mxu0 %v8529
    %8867 = vmatprep.subr.bf16.mxu0 %v8534
    %8868 = vmatpush1.bf16.msra.mxu0 %v8533
    %8869 = vmatprep.subr.bf16.mxu0 %v8538
    %8870 = vmatpush1.bf16.msra.mxu0 %v8537
    %8871 = vmatprep.subr.bf16.mxu0 %v8542
    %8872 = vmatpush1.bf16.msra.mxu0 %v8541
    %8873 = vmatprep.subr.bf16.mxu0 %v8546
    %8874 = vmatpush1.bf16.msra.mxu0 %v8545
    %8875 = vmatprep.subr.bf16.mxu0 %v8550
    %8876 = vmatpush1.bf16.msra.mxu0 %v8549
    %8877 = vmatprep.subr.bf16.mxu0 %v8554
    %8878 = vmatpush1.bf16.msra.mxu0 %v8553
    %8879 = vmatprep.subr.bf16.mxu0 %v8558
    %8880 = vmatpush1.bf16.msra.mxu0 %v8557
    %8881 = vmatprep.subr.bf16.mxu0 %v8562
    %8882 = vmatpush1.bf16.msra.mxu0 %v8561
    %8883 = vmatprep.subr.bf16.mxu0 %v8566
    %8884 = vmatpush1.bf16.msra.mxu0 %v8565
    %8885 = vmatprep.subr.bf16.mxu0 %v8570
    %8886 = vmatpush1.bf16.msra.mxu0 %v8569
    %8887 = vmatprep.subr.bf16.mxu0 %v8574
    %8888 = vmatpush1.bf16.msra.mxu0 %v8573
    %8889 = vmatprep.subr.bf16.mxu0 %v8578
    %8890 = vmatpush1.bf16.msra.mxu0 %v8577
    %8891 = vmatprep.subr.bf16.mxu0 %v8582
    %8892 = vmatpush1.bf16.msra.mxu0 %v8581
    %8893 = vmatprep.subr.bf16.mxu0 %v8586
    %8894 = vmatpush1.bf16.msra.mxu0 %v8585
    %8895 = vmatprep.subr.bf16.mxu0 %v8590
    %8896 = vmatpush1.bf16.msra.mxu0 %v8589
    %8897 = vmatprep.mubr.bf16.mxu0 %v7076
    %8898 = vmatmul.mubr.bf16.gmra.mrb[0].mxu0 %v7075
    %v8899 = vpop.f32.mrb[0].mxu0
    %v8900 = vadd.f32 %v8137, %v8899
    %v8901 = vpop.f32.mrb[0].mxu0
    %v8902 = vadd.f32 %v8139, %v8901
    %v8903 = vpop.f32.mrb[0].mxu0
    %v8904 = vpop.f32.mrb[0].mxu0
    %8905 = vdwg.mxu0
    %8906 = vmatprep.subr.bf16.mxu0 %v8594
    %8907 = vmatpush1.bf16.msra.mxu0 %v8593
    %8908 = vmatprep.subr.bf16.mxu0 %v8598
    %8909 = vmatpush1.bf16.msra.mxu0 %v8597
    %8910 = vmatprep.subr.bf16.mxu0 %v8602
    %8911 = vmatpush1.bf16.msra.mxu0 %v8601
    %8912 = vmatprep.subr.bf16.mxu0 %v8606
    %8913 = vmatpush1.bf16.msra.mxu0 %v8605
    %8914 = vmatprep.subr.bf16.mxu0 %v8610
    %8915 = vmatpush1.bf16.msra.mxu0 %v8609
    %8916 = vmatprep.subr.bf16.mxu0 %v8614
    %8917 = vmatpush1.bf16.msra.mxu0 %v8613
    %8918 = vmatprep.subr.bf16.mxu0 %v8618
    %8919 = vmatpush1.bf16.msra.mxu0 %v8617
    %8920 = vmatprep.subr.bf16.mxu0 %v8622
    %8921 = vmatpush1.bf16.msra.mxu0 %v8621
    %8922 = vmatprep.subr.bf16.mxu0 %v8626
    %8923 = vmatpush1.bf16.msra.mxu0 %v8625
    %8924 = vmatprep.subr.bf16.mxu0 %v8630
    %8925 = vmatpush1.bf16.msra.mxu0 %v8629
    %8926 = vmatprep.subr.bf16.mxu0 %v8634
    %8927 = vmatpush1.bf16.msra.mxu0 %v8633
    %8928 = vmatprep.subr.bf16.mxu0 %v8638
    %8929 = vmatpush1.bf16.msra.mxu0 %v8637
    %8930 = vmatprep.subr.bf16.mxu0 %v8642
    %8931 = vmatpush1.bf16.msra.mxu0 %v8641
    %8932 = vmatprep.subr.bf16.mxu0 %v8646
    %8933 = vmatpush1.bf16.msra.mxu0 %v8645
    %8934 = vmatprep.subr.bf16.mxu0 %v8650
    %8935 = vmatpush1.bf16.msra.mxu0 %v8649
    %8936 = vmatprep.subr.bf16.mxu0 %v8654
    %8937 = vmatpush1.bf16.msra.mxu0 %v8653
    %8938 = vmatprep.mubr.bf16.mxu0 %v7078
    %8939 = vmatmul.mubr.bf16.gmra.mrb[0].mxu0 %v7077
    %v8940 = vpop.f32.mrb[0].mxu0
    %v8941 = vadd.f32 %v8900, %v8940
    %v8942 = vpop.f32.mrb[0].mxu0
    %v8943 = vadd.f32 %v8902, %v8942
    %v8944 = vpop.f32.mrb[0].mxu0
    %v8945 = vpop.f32.mrb[0].mxu0
    %8946 = vdwg.mxu0
    %v8947 = vld [vmem:[#allocation5] sm:$0xf]
    %v8949 = vlaneseq
    %v8950 = vshrl.u32 %v8949, 7
    %v8951 = vsub.s32 0, %v8950
    %v8952 = vrot.slane %v8947, %v8951
    %v8953 = vlaneseq
    %v8954 = vshrl.u32 %v8953, 7
    %v8955 = vsub.s32 1, %v8954
    %v8956 = vrot.slane %v8947, %v8955
    %v8957 = vlaneseq
    %v8958 = vshrl.u32 %v8957, 7
    %v8959 = vsub.s32 2, %v8958
    %v8960 = vrot.slane %v8947, %v8959
    %v8961 = vlaneseq
    %v8962 = vshrl.u32 %v8961, 7
    %v8963 = vsub.s32 3, %v8962
    %v8964 = vrot.slane %v8947, %v8963
    %v8969 = vadd.f32 %v8859, %v8952
    %v8970 = vadd.f32 %v8861, %v8956
    %v8971 = vadd.f32 %v8941, %v8960
    %v8972 = vadd.f32 %v8943, %v8964
    %v8973 = vmax.f32 %v8969, 0.0
    %v8974 = vmax.f32 %v8970, 0.0
    %v8975 = vmax.f32 %v8971, 0.0
    %v8976 = vmax.f32 %v8972, 0.0
    %v8977 = vpack.c.bf16 %v8973, %v8973
    %v8978 = vpack.c.bf16 %v8974, %v8974
    %v8979 = vpack.c.bf16 %v8975, %v8975
    %v8980 = vpack.c.bf16 %v8976, %v8976
    %v8981 = vld [vmem:[#allocation7] sm:$0xf]
    %v8982 = vld [vmem:[#allocation7 + $0x4] sm:$0xf]
    %v8983 = vld [vmem:[#allocation7 + $0x8] sm:$0xf]
    %v8984 = vld [vmem:[#allocation7 + $0xc] sm:$0xf]
    %v8985 = vld [vmem:[#allocation7 + $0x10] sm:$0xf]
    %v8986 = vld [vmem:[#allocation7 + $0x14] sm:$0xf]
    %v8987 = vld [vmem:[#allocation7 + $0x18] sm:$0xf]
    %v8988 = vld [vmem:[#allocation7 + $0x1c] sm:$0xf]
    %v8989 = vld [vmem:[#allocation7 + $0x20] sm:$0xf]
    %v8990 = vld [vmem:[#allocation7 + $0x24] sm:$0xf]
    %v8991 = vld [vmem:[#allocation7 + $0x28] sm:$0xf]
    %v8992 = vld [vmem:[#allocation7 + $0x2c] sm:$0xf]
    %v8993 = vld [vmem:[#allocation7 + $0x30] sm:$0xf]
    %v8994 = vld [vmem:[#allocation7 + $0x34] sm:$0xf]
    %v8995 = vld [vmem:[#allocation7 + $0x38] sm:$0xf]
    %v8996 = vld [vmem:[#allocation7 + $0x3c] sm:$0xf]
    %v8997 = vld [vmem:[#allocation7 + $0x40] sm:$0xf]
    %v8998 = vld [vmem:[#allocation7 + $0x44] sm:$0xf]
    %v8999 = vld [vmem:[#allocation7 + $0x48] sm:$0xf]
    %v9000 = vld [vmem:[#allocation7 + $0x4c] sm:$0xf]
    %v9001 = vld [vmem:[#allocation7 + $0x50] sm:$0xf]
    %v9002 = vld [vmem:[#allocation7 + $0x54] sm:$0xf]
    %v9003 = vld [vmem:[#allocation7 + $0x58] sm:$0xf]
    %v9004 = vld [vmem:[#allocation7 + $0x5c] sm:$0xf]
    %v9005 = vld [vmem:[#allocation7 + $0x60] sm:$0xf]
    %v9006 = vld [vmem:[#allocation7 + $0x64] sm:$0xf]
    %v9007 = vld [vmem:[#allocation7 + $0x68] sm:$0xf]
    %v9008 = vld [vmem:[#allocation7 + $0x6c] sm:$0xf]
    %v9009 = vld [vmem:[#allocation7 + $0x70] sm:$0xf]
    %v9010 = vld [vmem:[#allocation7 + $0x74] sm:$0xf]
    %v9011 = vld [vmem:[#allocation7 + $0x78] sm:$0xf]
    %v9012 = vld [vmem:[#allocation7 + $0x7c] sm:$0xf]
    %v9013 = vld [vmem:[#allocation7 + $0x80] sm:$0xf]
    %v9014 = vld [vmem:[#allocation7 + $0x84] sm:$0xf]
    %v9015 = vld [vmem:[#allocation7 + $0x88] sm:$0xf]
    %v9016 = vld [vmem:[#allocation7 + $0x8c] sm:$0xf]
    %v9017 = vld [vmem:[#allocation7 + $0x90] sm:$0xf]
    %v9018 = vld [vmem:[#allocation7 + $0x94] sm:$0xf]
    %v9019 = vld [vmem:[#allocation7 + $0x98] sm:$0xf]
    %v9020 = vld [vmem:[#allocation7 + $0x9c] sm:$0xf]
    %v9021 = vld [vmem:[#allocation7 + $0xa0] sm:$0xf]
    %v9022 = vld [vmem:[#allocation7 + $0xa4] sm:$0xf]
    %v9023 = vld [vmem:[#allocation7 + $0xa8] sm:$0xf]
    %v9024 = vld [vmem:[#allocation7 + $0xac] sm:$0xf]
    %v9025 = vld [vmem:[#allocation7 + $0xb0] sm:$0xf]
    %v9026 = vld [vmem:[#allocation7 + $0xb4] sm:$0xf]
    %v9027 = vld [vmem:[#allocation7 + $0xb8] sm:$0xf]
    %v9028 = vld [vmem:[#allocation7 + $0xbc] sm:$0xf]
    %v9029 = vld [vmem:[#allocation7 + $0xc0] sm:$0xf]
    %v9030 = vld [vmem:[#allocation7 + $0xc4] sm:$0xf]
    %v9031 = vld [vmem:[#allocation7 + $0xc8] sm:$0xf]
    %v9032 = vld [vmem:[#allocation7 + $0xcc] sm:$0xf]
    %v9033 = vld [vmem:[#allocation7 + $0xd0] sm:$0xf]
    %v9034 = vld [vmem:[#allocation7 + $0xd4] sm:$0xf]
    %v9035 = vld [vmem:[#allocation7 + $0xd8] sm:$0xf]
    %v9036 = vld [vmem:[#allocation7 + $0xdc] sm:$0xf]
    %v9037 = vld [vmem:[#allocation7 + $0xe0] sm:$0xf]
    %v9038 = vld [vmem:[#allocation7 + $0xe4] sm:$0xf]
    %v9039 = vld [vmem:[#allocation7 + $0xe8] sm:$0xf]
    %v9040 = vld [vmem:[#allocation7 + $0xec] sm:$0xf]
    %v9041 = vld [vmem:[#allocation7 + $0xf0] sm:$0xf]
    %v9042 = vld [vmem:[#allocation7 + $0xf4] sm:$0xf]
    %v9043 = vld [vmem:[#allocation7 + $0xf8] sm:$0xf]
    %v9044 = vld [vmem:[#allocation7 + $0xfc] sm:$0xf]
    %v9045 = vld [vmem:[%s9] sm:$0x1]
    %v9047 = vlaneseq
    %v9048 = vshrl.u32 %v9047, 7
    %v9049 = vsub.s32 0, %v9048
    %v9050 = vrot.slane %v9045, %v9049
    %v9116 = vunpack.c.l.b16 %v8981
    %v9117 = vunpack.c.l.b16 %v8982
    %v9118 = vunpack.c.l.b16 %v8983
    %v9119 = vunpack.c.l.b16 %v8984
    %v9120 = vunpack.c.l.b16 %v8985
    %v9121 = vunpack.c.l.b16 %v8986
    %v9122 = vunpack.c.l.b16 %v8987
    %v9123 = vunpack.c.l.b16 %v8988
    %v9124 = vunpack.c.l.b16 %v8989
    %v9125 = vunpack.c.l.b16 %v8990
    %v9126 = vunpack.c.l.b16 %v8991
    %v9127 = vunpack.c.l.b16 %v8992
    %v9128 = vunpack.c.l.b16 %v8993
    %v9129 = vunpack.c.l.b16 %v8994
    %v9130 = vunpack.c.l.b16 %v8995
    %v9131 = vunpack.c.l.b16 %v8996
    %v9132 = vunpack.c.l.b16 %v8997
    %v9133 = vunpack.c.l.b16 %v8998
    %v9134 = vunpack.c.l.b16 %v8999
    %v9135 = vunpack.c.l.b16 %v9000
    %v9136 = vunpack.c.l.b16 %v9001
    %v9137 = vunpack.c.l.b16 %v9002
    %v9138 = vunpack.c.l.b16 %v9003
    %v9139 = vunpack.c.l.b16 %v9004
    %v9140 = vunpack.c.l.b16 %v9005
    %v9141 = vunpack.c.l.b16 %v9006
    %v9142 = vunpack.c.l.b16 %v9007
    %v9143 = vunpack.c.l.b16 %v9008
    %v9144 = vunpack.c.l.b16 %v9009
    %v9145 = vunpack.c.l.b16 %v9010
    %v9146 = vunpack.c.l.b16 %v9011
    %v9147 = vunpack.c.l.b16 %v9012
    %v9148 = vunpack.c.l.b16 %v9013
    %v9149 = vunpack.c.l.b16 %v9014
    %v9150 = vunpack.c.l.b16 %v9015
    %v9151 = vunpack.c.l.b16 %v9016
    %v9152 = vunpack.c.l.b16 %v9017
    %v9153 = vunpack.c.l.b16 %v9018
    %v9154 = vunpack.c.l.b16 %v9019
    %v9155 = vunpack.c.l.b16 %v9020
    %v9156 = vunpack.c.l.b16 %v9021
    %v9157 = vunpack.c.l.b16 %v9022
    %v9158 = vunpack.c.l.b16 %v9023
    %v9159 = vunpack.c.l.b16 %v9024
    %v9160 = vunpack.c.l.b16 %v9025
    %v9161 = vunpack.c.l.b16 %v9026
    %v9162 = vunpack.c.l.b16 %v9027
    %v9163 = vunpack.c.l.b16 %v9028
    %v9164 = vunpack.c.l.b16 %v9029
    %v9165 = vunpack.c.l.b16 %v9030
    %v9166 = vunpack.c.l.b16 %v9031
    %v9167 = vunpack.c.l.b16 %v9032
    %v9168 = vunpack.c.l.b16 %v9033
    %v9169 = vunpack.c.l.b16 %v9034
    %v9170 = vunpack.c.l.b16 %v9035
    %v9171 = vunpack.c.l.b16 %v9036
    %v9172 = vunpack.c.l.b16 %v9037
    %v9173 = vunpack.c.l.b16 %v9038
    %v9174 = vunpack.c.l.b16 %v9039
    %v9175 = vunpack.c.l.b16 %v9040
    %v9176 = vunpack.c.l.b16 %v9041
    %v9177 = vunpack.c.l.b16 %v9042
    %v9178 = vunpack.c.l.b16 %v9043
    %v9179 = vunpack.c.l.b16 %v9044
    %v9180 = vpack.c.b16 %v9117, %v9116
    %v9181 = vpack.c.b16 %v9119, %v9118
    %v9182 = vpack.c.b16 %v9121, %v9120
    %v9183 = vpack.c.b16 %v9123, %v9122
    %v9184 = vpack.c.b16 %v9125, %v9124
    %v9185 = vpack.c.b16 %v9127, %v9126
    %v9186 = vpack.c.b16 %v9129, %v9128
    %v9187 = vpack.c.b16 %v9131, %v9130
    %v9188 = vpack.c.b16 %v9133, %v9132
    %v9189 = vpack.c.b16 %v9135, %v9134
    %v9190 = vpack.c.b16 %v9137, %v9136
    %v9191 = vpack.c.b16 %v9139, %v9138
    %v9192 = vpack.c.b16 %v9141, %v9140
    %v9193 = vpack.c.b16 %v9143, %v9142
    %v9194 = vpack.c.b16 %v9145, %v9144
    %v9195 = vpack.c.b16 %v9147, %v9146
    %v9196 = vpack.c.b16 %v9149, %v9148
    %v9197 = vpack.c.b16 %v9151, %v9150
    %v9198 = vpack.c.b16 %v9153, %v9152
    %v9199 = vpack.c.b16 %v9155, %v9154
    %v9200 = vpack.c.b16 %v9157, %v9156
    %v9201 = vpack.c.b16 %v9159, %v9158
    %v9202 = vpack.c.b16 %v9161, %v9160
    %v9203 = vpack.c.b16 %v9163, %v9162
    %v9204 = vpack.c.b16 %v9165, %v9164
    %v9205 = vpack.c.b16 %v9167, %v9166
    %v9206 = vpack.c.b16 %v9169, %v9168
    %v9207 = vpack.c.b16 %v9171, %v9170
    %v9208 = vpack.c.b16 %v9173, %v9172
    %v9209 = vpack.c.b16 %v9175, %v9174
    %v9210 = vpack.c.b16 %v9177, %v9176
    %v9211 = vpack.c.b16 %v9179, %v9178
    %9244 = vmatprep.subr.bf16.mxu0 0
    %9245 = vmatpush1.bf16.msra.mxu0 %v9180
    %9246 = vmatprep.subr.bf16.mxu0 0
    %9247 = vmatpush1.bf16.msra.mxu0 %v9181
    %9248 = vmatprep.subr.bf16.mxu0 0
    %9249 = vmatpush1.bf16.msra.mxu0 %v9182
    %9250 = vmatprep.subr.bf16.mxu0 0
    %9251 = vmatpush1.bf16.msra.mxu0 %v9183
    %9252 = vmatprep.subr.bf16.mxu0 0
    %9253 = vmatpush1.bf16.msra.mxu0 %v9184
    %9254 = vmatprep.subr.bf16.mxu0 0
    %9255 = vmatpush1.bf16.msra.mxu0 %v9185
    %9256 = vmatprep.subr.bf16.mxu0 0
    %9257 = vmatpush1.bf16.msra.mxu0 %v9186
    %9258 = vmatprep.subr.bf16.mxu0 0
    %9259 = vmatpush1.bf16.msra.mxu0 %v9187
    %9260 = vmatprep.subr.bf16.mxu0 0
    %9261 = vmatpush1.bf16.msra.mxu0 %v9188
    %9262 = vmatprep.subr.bf16.mxu0 0
    %9263 = vmatpush1.bf16.msra.mxu0 %v9189
    %9264 = vmatprep.subr.bf16.mxu0 0
    %9265 = vmatpush1.bf16.msra.mxu0 %v9190
    %9266 = vmatprep.subr.bf16.mxu0 0
    %9267 = vmatpush1.bf16.msra.mxu0 %v9191
    %9268 = vmatprep.subr.bf16.mxu0 0
    %9269 = vmatpush1.bf16.msra.mxu0 %v9192
    %9270 = vmatprep.subr.bf16.mxu0 0
    %9271 = vmatpush1.bf16.msra.mxu0 %v9193
    %9272 = vmatprep.subr.bf16.mxu0 0
    %9273 = vmatpush1.bf16.msra.mxu0 %v9194
    %9274 = vmatprep.subr.bf16.mxu0 0
    %9275 = vmatpush1.bf16.msra.mxu0 %v9195
    %9276 = vmatprep.mubr.bf16.mxu0 %v8978
    %9277 = vmatmul.mubr.bf16.gmra.mrb[0].mxu0 %v8977
    %v9278 = vpop.f32.mrb[0].mxu0
    %v9279 = vadd.f32 %v9050, %v9278
    %v9280 = vpop.f32.mrb[0].mxu0
    %v9281 = vpop.f32.mrb[0].mxu0
    %v9282 = vpop.f32.mrb[0].mxu0
    %9283 = vdwg.mxu0
    %9284 = vmatprep.subr.bf16.mxu0 0
    %9285 = vmatpush1.bf16.msra.mxu0 %v9196
    %9286 = vmatprep.subr.bf16.mxu0 0
    %9287 = vmatpush1.bf16.msra.mxu0 %v9197
    %9288 = vmatprep.subr.bf16.mxu0 0
    %9289 = vmatpush1.bf16.msra.mxu0 %v9198
    %9290 = vmatprep.subr.bf16.mxu0 0
    %9291 = vmatpush1.bf16.msra.mxu0 %v9199
    %9292 = vmatprep.subr.bf16.mxu0 0
    %9293 = vmatpush1.bf16.msra.mxu0 %v9200
    %9294 = vmatprep.subr.bf16.mxu0 0
    %9295 = vmatpush1.bf16.msra.mxu0 %v9201
    %9296 = vmatprep.subr.bf16.mxu0 0
    %9297 = vmatpush1.bf16.msra.mxu0 %v9202
    %9298 = vmatprep.subr.bf16.mxu0 0
    %9299 = vmatpush1.bf16.msra.mxu0 %v9203
    %9300 = vmatprep.subr.bf16.mxu0 0
    %9301 = vmatpush1.bf16.msra.mxu0 %v9204
    %9302 = vmatprep.subr.bf16.mxu0 0
    %9303 = vmatpush1.bf16.msra.mxu0 %v9205
    %9304 = vmatprep.subr.bf16.mxu0 0
    %9305 = vmatpush1.bf16.msra.mxu0 %v9206
    %9306 = vmatprep.subr.bf16.mxu0 0
    %9307 = vmatpush1.bf16.msra.mxu0 %v9207
    %9308 = vmatprep.subr.bf16.mxu0 0
    %9309 = vmatpush1.bf16.msra.mxu0 %v9208
    %9310 = vmatprep.subr.bf16.mxu0 0
    %9311 = vmatpush1.bf16.msra.mxu0 %v9209
    %9312 = vmatprep.subr.bf16.mxu0 0
    %9313 = vmatpush1.bf16.msra.mxu0 %v9210
    %9314 = vmatprep.subr.bf16.mxu0 0
    %9315 = vmatpush1.bf16.msra.mxu0 %v9211
    %9316 = vmatprep.mubr.bf16.mxu0 %v8980
    %9317 = vmatmul.mubr.bf16.gmra.mrb[0].mxu0 %v8979
    %v9318 = vpop.f32.mrb[0].mxu0
    %v9319 = vadd.f32 %v9279, %v9318
    %v9320 = vpop.f32.mrb[0].mxu0
    %v9321 = vpop.f32.mrb[0].mxu0
    %v9322 = vpop.f32.mrb[0].mxu0
    %9323 = vdwg.mxu0
    %9324 = vst [vmem:[#allocation14] sm:$0x3] %v9319
    %v9325 = vld [vmem:[%s10] sm:$0xff]
    %v9326 = vld [vmem:[%s10 + $0x8] sm:$0xff]
    %v9327 = vld [vmem:[%s10 + $0x10] sm:$0xff]
    %v9328 = vld [vmem:[%s10 + $0x18] sm:$0xff]
    %v9329 = vld [vmem:[%s10 + $0x20] sm:$0xff]
    %v9330 = vld [vmem:[%s10 + $0x28] sm:$0xff]
    %v9331 = vld [vmem:[%s10 + $0x30] sm:$0xff]
    %v9332 = vld [vmem:[%s10 + $0x38] sm:$0xff]
    %v9333 = vld [vmem:[%s10 + $0x40] sm:$0xff]
    %v9334 = vld [vmem:[%s10 + $0x48] sm:$0xff]
    %v9335 = vld [vmem:[%s10 + $0x50] sm:$0xff]
    %v9336 = vld [vmem:[%s10 + $0x58] sm:$0xff]
    %v9337 = vld [vmem:[%s10 + $0x60] sm:$0xff]
    %v9338 = vld [vmem:[%s10 + $0x68] sm:$0xff]
    %v9339 = vld [vmem:[%s10 + $0x70] sm:$0xff]
    %v9340 = vld [vmem:[%s10 + $0x78] sm:$0xff]
    %v9341 = vld [vmem:[%s10 + $0x80] sm:$0xff]
    %v9342 = vld [vmem:[%s10 + $0x88] sm:$0xff]
    %v9343 = vld [vmem:[%s10 + $0x90] sm:$0xff]
    %v9344 = vld [vmem:[%s10 + $0x98] sm:$0xff]
    %v9345 = vld [vmem:[%s10 + $0xa0] sm:$0xff]
    %v9346 = vld [vmem:[%s10 + $0xa8] sm:$0xff]
    %v9347 = vld [vmem:[%s10 + $0xb0] sm:$0xff]
    %v9348 = vld [vmem:[%s10 + $0xb8] sm:$0xff]
    %v9349 = vld [vmem:[%s10 + $0xc0] sm:$0xff]
    %v9350 = vld [vmem:[%s10 + $0xc8] sm:$0xff]
    %v9351 = vld [vmem:[%s10 + $0xd0] sm:$0xff]
    %v9352 = vld [vmem:[%s10 + $0xd8] sm:$0xff]
    %v9353 = vld [vmem:[%s10 + $0xe0] sm:$0xff]
    %v9354 = vld [vmem:[%s10 + $0xe8] sm:$0xff]
    %v9355 = vld [vmem:[%s10 + $0xf0] sm:$0xff]
    %v9356 = vld [vmem:[%s10 + $0xf8] sm:$0xff]
    %v9357 = vld [vmem:[%s10 + $0x100] sm:$0xff]
    %v9358 = vld [vmem:[%s10 + $0x108] sm:$0xff]
    %v9359 = vld [vmem:[%s10 + $0x110] sm:$0xff]
    %v9360 = vld [vmem:[%s10 + $0x118] sm:$0xff]
    %v9361 = vld [vmem:[%s10 + $0x120] sm:$0xff]
    %v9362 = vld [vmem:[%s10 + $0x128] sm:$0xff]
    %v9363 = vld [vmem:[%s10 + $0x130] sm:$0xff]
    %v9364 = vld [vmem:[%s10 + $0x138] sm:$0xff]
    %v9365 = vld [vmem:[%s10 + $0x140] sm:$0xff]
    %v9366 = vld [vmem:[%s10 + $0x148] sm:$0xff]
    %v9367 = vld [vmem:[%s10 + $0x150] sm:$0xff]
    %v9368 = vld [vmem:[%s10 + $0x158] sm:$0xff]
    %v9369 = vld [vmem:[%s10 + $0x160] sm:$0xff]
    %v9370 = vld [vmem:[%s10 + $0x168] sm:$0xff]
    %v9371 = vld [vmem:[%s10 + $0x170] sm:$0xff]
    %v9372 = vld [vmem:[%s10 + $0x178] sm:$0xff]
    %v9373 = vld [vmem:[%s10 + $0x180] sm:$0xff]
    %v9374 = vld [vmem:[%s10 + $0x188] sm:$0xff]
    %v9375 = vld [vmem:[%s10 + $0x190] sm:$0xff]
    %v9376 = vld [vmem:[%s10 + $0x198] sm:$0xff]
    %v9377 = vld [vmem:[%s10 + $0x1a0] sm:$0xff]
    %v9378 = vld [vmem:[%s10 + $0x1a8] sm:$0xff]
    %v9379 = vld [vmem:[%s10 + $0x1b0] sm:$0xff]
    %v9380 = vld [vmem:[%s10 + $0x1b8] sm:$0xff]
    %v9381 = vld [vmem:[%s10 + $0x1c0] sm:$0xff]
    %v9382 = vld [vmem:[%s10 + $0x1c8] sm:$0xff]
    %v9383 = vld [vmem:[%s10 + $0x1d0] sm:$0xff]
    %v9384 = vld [vmem:[%s10 + $0x1d8] sm:$0xff]
    %v9385 = vld [vmem:[%s10 + $0x1e0] sm:$0xff]
    %v9386 = vld [vmem:[%s10 + $0x1e8] sm:$0xff]
    %v9387 = vld [vmem:[%s10 + $0x1f0] sm:$0xff]
    %v9388 = vld [vmem:[%s10 + $0x1f8] sm:$0xff]
    %v9389 = vld [vmem:[%s10 + $0x200] sm:$0xff]
    %v9390 = vld [vmem:[%s10 + $0x208] sm:$0xff]
    %v9391 = vld [vmem:[%s10 + $0x210] sm:$0xff]
    %v9392 = vld [vmem:[%s10 + $0x218] sm:$0xff]
    %v9393 = vld [vmem:[%s10 + $0x220] sm:$0xff]
    %v9394 = vld [vmem:[%s10 + $0x228] sm:$0xff]
    %v9395 = vld [vmem:[%s10 + $0x230] sm:$0xff]
    %v9396 = vld [vmem:[%s10 + $0x238] sm:$0xff]
    %v9397 = vld [vmem:[%s10 + $0x240] sm:$0xff]
    %v9398 = vld [vmem:[%s10 + $0x248] sm:$0xff]
    %v9399 = vld [vmem:[%s10 + $0x250] sm:$0xff]
    %v9400 = vld [vmem:[%s10 + $0x258] sm:$0xff]
    %v9401 = vld [vmem:[%s10 + $0x260] sm:$0xff]
    %v9402 = vld [vmem:[%s10 + $0x268] sm:$0xff]
    %v9403 = vld [vmem:[%s10 + $0x270] sm:$0xff]
    %v9404 = vld [vmem:[%s10 + $0x278] sm:$0xff]
    %v9405 = vld [vmem:[%s10 + $0x280] sm:$0xff]
    %v9406 = vld [vmem:[%s10 + $0x288] sm:$0xff]
    %v9407 = vld [vmem:[%s10 + $0x290] sm:$0xff]
    %v9408 = vld [vmem:[%s10 + $0x298] sm:$0xff]
    %v9409 = vld [vmem:[%s10 + $0x2a0] sm:$0xff]
    %v9410 = vld [vmem:[%s10 + $0x2a8] sm:$0xff]
    %v9411 = vld [vmem:[%s10 + $0x2b0] sm:$0xff]
    %v9412 = vld [vmem:[%s10 + $0x2b8] sm:$0xff]
    %v9413 = vld [vmem:[%s10 + $0x2c0] sm:$0xff]
    %v9414 = vld [vmem:[%s10 + $0x2c8] sm:$0xff]
    %v9415 = vld [vmem:[%s10 + $0x2d0] sm:$0xff]
    %v9416 = vld [vmem:[%s10 + $0x2d8] sm:$0xff]
    %v9417 = vld [vmem:[%s10 + $0x2e0] sm:$0xff]
    %v9418 = vld [vmem:[%s10 + $0x2e8] sm:$0xff]
    %v9419 = vld [vmem:[%s10 + $0x2f0] sm:$0xff]
    %v9420 = vld [vmem:[%s10 + $0x2f8] sm:$0xff]
    %v9421 = vld [vmem:[%s10 + $0x300] sm:$0xff]
    %v9422 = vld [vmem:[%s10 + $0x308] sm:$0xff]
    %v9423 = vld [vmem:[%s10 + $0x310] sm:$0xff]
    %v9424 = vld [vmem:[%s10 + $0x318] sm:$0xff]
    %v9425 = vld [vmem:[%s10 + $0x320] sm:$0xff]
    %v9426 = vld [vmem:[%s10 + $0x328] sm:$0xff]
    %v9427 = vld [vmem:[%s10 + $0x330] sm:$0xff]
    %v9428 = vld [vmem:[%s10 + $0x338] sm:$0xff]
    %v9429 = vld [vmem:[%s10 + $0x340] sm:$0xff]
    %v9430 = vld [vmem:[%s10 + $0x348] sm:$0xff]
    %v9431 = vld [vmem:[%s10 + $0x350] sm:$0xff]
    %v9432 = vld [vmem:[%s10 + $0x358] sm:$0xff]
    %v9433 = vld [vmem:[%s10 + $0x360] sm:$0xff]
    %v9434 = vld [vmem:[%s10 + $0x368] sm:$0xff]
    %v9435 = vld [vmem:[%s10 + $0x370] sm:$0xff]
    %v9436 = vld [vmem:[%s10 + $0x378] sm:$0xff]
    %v9437 = vld [vmem:[%s10 + $0x380] sm:$0xff]
    %v9438 = vld [vmem:[%s10 + $0x388] sm:$0xff]
    %v9439 = vld [vmem:[%s10 + $0x390] sm:$0xff]
    %v9440 = vld [vmem:[%s10 + $0x398] sm:$0xff]
    %v9441 = vld [vmem:[%s10 + $0x3a0] sm:$0xff]
    %v9442 = vld [vmem:[%s10 + $0x3a8] sm:$0xff]
    %v9443 = vld [vmem:[%s10 + $0x3b0] sm:$0xff]
    %v9444 = vld [vmem:[%s10 + $0x3b8] sm:$0xff]
    %v9445 = vld [vmem:[%s10 + $0x3c0] sm:$0xff]
    %v9446 = vld [vmem:[%s10 + $0x3c8] sm:$0xff]
    %v9447 = vld [vmem:[%s10 + $0x3d0] sm:$0xff]
    %v9448 = vld [vmem:[%s10 + $0x3d8] sm:$0xff]
    %v9449 = vld [vmem:[%s10 + $0x3e0] sm:$0xff]
    %v9450 = vld [vmem:[%s10 + $0x3e8] sm:$0xff]
    %v9451 = vld [vmem:[%s10 + $0x3f0] sm:$0xff]
    %v9452 = vld [vmem:[%s10 + $0x3f8] sm:$0xff]
    %v9453 = vld [vmem:[%s2] sm:$0x1]
    %v9454 = vld [vmem:[%s11] sm:$0xff]
    %v9455 = vld [vmem:[%s11 + $0x8] sm:$0xff]
    %v9458 = vunpack.c.l.b16 %v9454
    %v9459 = vunpack.c.h.b16 %v9454
    %v9460 = vunpack.c.l.b16 %v9455
    %v9461 = vunpack.c.h.b16 %v9455
    %v9462 = vpack.c.b16 %v9458, %v9458
    %v9463 = vpack.c.b16 %v9459, %v9459
    %v9464 = vpack.c.b16 %v9460, %v9460
    %v9465 = vpack.c.b16 %v9461, %v9461
    %vm9466 = vcmask 64512
    %v9468 = vsel %vm9466, %v9453, 0
    %vm9470 = vcmask 1043456
    %v9472 = vsel %vm9470, %v9462, 0
    %v9475 = vsel %vm9470, %v9463, 0
    %v9478 = vsel %vm9470, %v9464, 0
    %v9481 = vsel %vm9470, %v9465, 0
    %9483 = vmatprep.subr.bf16.mxu0 %v9475
    %9484 = vmatpush1.bf16.msra.mxu0 %v9472
    %9485 = vmatprep.subr.bf16.mxu0 0
    %9486 = vmatpush1.bf16.msra.mxu0 0
    %9487 = vmatprep.subr.bf16.mxu0 0
    %9488 = vmatpush1.bf16.msra.mxu0 0
    %9489 = vmatprep.subr.bf16.mxu0 0
    %9490 = vmatpush1.bf16.msra.mxu0 0
    %9491 = vmatprep.subr.bf16.mxu0 0
    %9492 = vmatpush1.bf16.msra.mxu0 0
    %9493 = vmatprep.subr.bf16.mxu0 0
    %9494 = vmatpush1.bf16.msra.mxu0 0
    %9495 = vmatprep.subr.bf16.mxu0 0
    %9496 = vmatpush1.bf16.msra.mxu0 0
    %9497 = vmatprep.subr.bf16.mxu0 0
    %9498 = vmatpush1.bf16.msra.mxu0 0
    %9499 = vmatprep.subr.bf16.mxu0 0
    %9500 = vmatpush1.bf16.msra.mxu0 0
    %9501 = vmatprep.subr.bf16.mxu0 0
    %9502 = vmatpush1.bf16.msra.mxu0 0
    %9503 = vmatprep.subr.bf16.mxu0 0
    %9504 = vmatpush1.bf16.msra.mxu0 0
    %9505 = vmatprep.subr.bf16.mxu0 0
    %9506 = vmatpush1.bf16.msra.mxu0 0
    %9507 = vmatprep.subr.bf16.mxu0 0
    %9508 = vmatpush1.bf16.msra.mxu0 0
    %9509 = vmatprep.subr.bf16.mxu0 0
    %9510 = vmatpush1.bf16.msra.mxu0 0
    %9511 = vmatprep.subr.bf16.mxu0 0
    %9512 = vmatpush1.bf16.msra.mxu0 0
    %9513 = vmatprep.subr.bf16.mxu0 0
    %9514 = vmatpush1.bf16.msra.mxu0 0
    %9515 = vmatprep.mubr.bf16.mxu0 0
    %9516 = vmatmul.mubr.bf16.gmra.mrb[0].mxu0 %v9468
    %v9517 = vpop.f32.mrb[0].mxu0
    %v9518 = vadd.f32 0.0, %v9517
    %v9519 = vpop.f32.mrb[0].mxu0
    %v9520 = vadd.f32 0.0, %v9519
    %v9521 = vpop.f32.mrb[0].mxu0
    %v9522 = vpop.f32.mrb[0].mxu0
    %9523 = vdwg.mxu0
    %9524 = vmatprep.subr.bf16.mxu0 %v9481
    %9525 = vmatpush1.bf16.msra.mxu0 %v9478
    %9526 = vmatprep.subr.bf16.mxu0 0
    %9527 = vmatpush1.bf16.msra.mxu0 0
    %9528 = vmatprep.subr.bf16.mxu0 0
    %9529 = vmatpush1.bf16.msra.mxu0 0
    %9530 = vmatprep.subr.bf16.mxu0 0
    %9531 = vmatpush1.bf16.msra.mxu0 0
    %9532 = vmatprep.subr.bf16.mxu0 0
    %9533 = vmatpush1.bf16.msra.mxu0 0
    %9534 = vmatprep.subr.bf16.mxu0 0
    %9535 = vmatpush1.bf16.msra.mxu0 0
    %9536 = vmatprep.subr.bf16.mxu0 0
    %9537 = vmatpush1.bf16.msra.mxu0 0
    %9538 = vmatprep.subr.bf16.mxu0 0
    %9539 = vmatpush1.bf16.msra.mxu0 0
    %9540 = vmatprep.subr.bf16.mxu0 0
    %9541 = vmatpush1.bf16.msra.mxu0 0
    %9542 = vmatprep.subr.bf16.mxu0 0
    %9543 = vmatpush1.bf16.msra.mxu0 0
    %9544 = vmatprep.subr.bf16.mxu0 0
    %9545 = vmatpush1.bf16.msra.mxu0 0
    %9546 = vmatprep.subr.bf16.mxu0 0
    %9547 = vmatpush1.bf16.msra.mxu0 0
    %9548 = vmatprep.subr.bf16.mxu0 0
    %9549 = vmatpush1.bf16.msra.mxu0 0
    %9550 = vmatprep.subr.bf16.mxu0 0
    %9551 = vmatpush1.bf16.msra.mxu0 0
    %9552 = vmatprep.subr.bf16.mxu0 0
    %9553 = vmatpush1.bf16.msra.mxu0 0
    %9554 = vmatprep.subr.bf16.mxu0 0
    %9555 = vmatpush1.bf16.msra.mxu0 0
    %9556 = vmatprep.mubr.bf16.mxu0 0
    %9557 = vmatmul.mubr.bf16.gmra.mrb[0].mxu0 %v9468
    %v9558 = vpop.f32.mrb[0].mxu0
    %v9559 = vadd.f32 0.0, %v9558
    %v9560 = vpop.f32.mrb[0].mxu0
    %v9561 = vadd.f32 0.0, %v9560
    %v9562 = vpop.f32.mrb[0].mxu0
    %v9563 = vpop.f32.mrb[0].mxu0
    %9564 = vdwg.mxu0
    %v9693 = vunpack.c.l.b16 %v9325
    %v9694 = vunpack.c.h.b16 %v9325
    %v9695 = vunpack.c.l.b16 %v9326
    %v9696 = vunpack.c.h.b16 %v9326
    %v9697 = vunpack.c.l.b16 %v9327
    %v9698 = vunpack.c.h.b16 %v9327
    %v9699 = vunpack.c.l.b16 %v9328
    %v9700 = vunpack.c.h.b16 %v9328
    %v9701 = vunpack.c.l.b16 %v9329
    %v9702 = vunpack.c.h.b16 %v9329
    %v9703 = vunpack.c.l.b16 %v9330
    %v9704 = vunpack.c.h.b16 %v9330
    %v9705 = vunpack.c.l.b16 %v9331
    %v9706 = vunpack.c.h.b16 %v9331
    %v9707 = vunpack.c.l.b16 %v9332
    %v9708 = vunpack.c.h.b16 %v9332
    %v9709 = vunpack.c.l.b16 %v9333
    %v9710 = vunpack.c.h.b16 %v9333
    %v9711 = vunpack.c.l.b16 %v9334
    %v9712 = vunpack.c.h.b16 %v9334
    %v9713 = vunpack.c.l.b16 %v9335
    %v9714 = vunpack.c.h.b16 %v9335
    %v9715 = vunpack.c.l.b16 %v9336
    %v9716 = vunpack.c.h.b16 %v9336
    %v9717 = vunpack.c.l.b16 %v9337
    %v9718 = vunpack.c.h.b16 %v9337
    %v9719 = vunpack.c.l.b16 %v9338
    %v9720 = vunpack.c.h.b16 %v9338
    %v9721 = vunpack.c.l.b16 %v9339
    %v9722 = vunpack.c.h.b16 %v9339
    %v9723 = vunpack.c.l.b16 %v9340
    %v9724 = vunpack.c.h.b16 %v9340
    %v9725 = vunpack.c.l.b16 %v9341
    %v9726 = vunpack.c.h.b16 %v9341
    %v9727 = vunpack.c.l.b16 %v9342
    %v9728 = vunpack.c.h.b16 %v9342
    %v9729 = vunpack.c.l.b16 %v9343
    %v9730 = vunpack.c.h.b16 %v9343
    %v9731 = vunpack.c.l.b16 %v9344
    %v9732 = vunpack.c.h.b16 %v9344
    %v9733 = vunpack.c.l.b16 %v9345
    %v9734 = vunpack.c.h.b16 %v9345
    %v9735 = vunpack.c.l.b16 %v9346
    %v9736 = vunpack.c.h.b16 %v9346
    %v9737 = vunpack.c.l.b16 %v9347
    %v9738 = vunpack.c.h.b16 %v9347
    %v9739 = vunpack.c.l.b16 %v9348
    %v9740 = vunpack.c.h.b16 %v9348
    %v9741 = vunpack.c.l.b16 %v9349
    %v9742 = vunpack.c.h.b16 %v9349
    %v9743 = vunpack.c.l.b16 %v9350
    %v9744 = vunpack.c.h.b16 %v9350
    %v9745 = vunpack.c.l.b16 %v9351
    %v9746 = vunpack.c.h.b16 %v9351
    %v9747 = vunpack.c.l.b16 %v9352
    %v9748 = vunpack.c.h.b16 %v9352
    %v9749 = vunpack.c.l.b16 %v9353
    %v9750 = vunpack.c.h.b16 %v9353
    %v9751 = vunpack.c.l.b16 %v9354
    %v9752 = vunpack.c.h.b16 %v9354
    %v9753 = vunpack.c.l.b16 %v9355
    %v9754 = vunpack.c.h.b16 %v9355
    %v9755 = vunpack.c.l.b16 %v9356
    %v9756 = vunpack.c.h.b16 %v9356
    %v9757 = vunpack.c.l.b16 %v9357
    %v9758 = vunpack.c.h.b16 %v9357
    %v9759 = vunpack.c.l.b16 %v9358
    %v9760 = vunpack.c.h.b16 %v9358
    %v9761 = vunpack.c.l.b16 %v9359
    %v9762 = vunpack.c.h.b16 %v9359
    %v9763 = vunpack.c.l.b16 %v9360
    %v9764 = vunpack.c.h.b16 %v9360
    %v9765 = vunpack.c.l.b16 %v9361
    %v9766 = vunpack.c.h.b16 %v9361
    %v9767 = vunpack.c.l.b16 %v9362
    %v9768 = vunpack.c.h.b16 %v9362
    %v9769 = vunpack.c.l.b16 %v9363
    %v9770 = vunpack.c.h.b16 %v9363
    %v9771 = vunpack.c.l.b16 %v9364
    %v9772 = vunpack.c.h.b16 %v9364
    %v9773 = vunpack.c.l.b16 %v9365
    %v9774 = vunpack.c.h.b16 %v9365
    %v9775 = vunpack.c.l.b16 %v9366
    %v9776 = vunpack.c.h.b16 %v9366
    %v9777 = vunpack.c.l.b16 %v9367
    %v9778 = vunpack.c.h.b16 %v9367
    %v9779 = vunpack.c.l.b16 %v9368
    %v9780 = vunpack.c.h.b16 %v9368
    %v9781 = vunpack.c.l.b16 %v9369
    %v9782 = vunpack.c.h.b16 %v9369
    %v9783 = vunpack.c.l.b16 %v9370
    %v9784 = vunpack.c.h.b16 %v9370
    %v9785 = vunpack.c.l.b16 %v9371
    %v9786 = vunpack.c.h.b16 %v9371
    %v9787 = vunpack.c.l.b16 %v9372
    %v9788 = vunpack.c.h.b16 %v9372
    %v9789 = vunpack.c.l.b16 %v9373
    %v9790 = vunpack.c.h.b16 %v9373
    %v9791 = vunpack.c.l.b16 %v9374
    %v9792 = vunpack.c.h.b16 %v9374
    %v9793 = vunpack.c.l.b16 %v9375
    %v9794 = vunpack.c.h.b16 %v9375
    %v9795 = vunpack.c.l.b16 %v9376
    %v9796 = vunpack.c.h.b16 %v9376
    %v9797 = vunpack.c.l.b16 %v9377
    %v9798 = vunpack.c.h.b16 %v9377
    %v9799 = vunpack.c.l.b16 %v9378
    %v9800 = vunpack.c.h.b16 %v9378
    %v9801 = vunpack.c.l.b16 %v9379
    %v9802 = vunpack.c.h.b16 %v9379
    %v9803 = vunpack.c.l.b16 %v9380
    %v9804 = vunpack.c.h.b16 %v9380
    %v9805 = vunpack.c.l.b16 %v9381
    %v9806 = vunpack.c.h.b16 %v9381
    %v9807 = vunpack.c.l.b16 %v9382
    %v9808 = vunpack.c.h.b16 %v9382
    %v9809 = vunpack.c.l.b16 %v9383
    %v9810 = vunpack.c.h.b16 %v9383
    %v9811 = vunpack.c.l.b16 %v9384
    %v9812 = vunpack.c.h.b16 %v9384
    %v9813 = vunpack.c.l.b16 %v9385
    %v9814 = vunpack.c.h.b16 %v9385
    %v9815 = vunpack.c.l.b16 %v9386
    %v9816 = vunpack.c.h.b16 %v9386
    %v9817 = vunpack.c.l.b16 %v9387
    %v9818 = vunpack.c.h.b16 %v9387
    %v9819 = vunpack.c.l.b16 %v9388
    %v9820 = vunpack.c.h.b16 %v9388
    %v9821 = vunpack.c.l.b16 %v9389
    %v9822 = vunpack.c.h.b16 %v9389
    %v9823 = vunpack.c.l.b16 %v9390
    %v9824 = vunpack.c.h.b16 %v9390
    %v9825 = vunpack.c.l.b16 %v9391
    %v9826 = vunpack.c.h.b16 %v9391
    %v9827 = vunpack.c.l.b16 %v9392
    %v9828 = vunpack.c.h.b16 %v9392
    %v9829 = vunpack.c.l.b16 %v9393
    %v9830 = vunpack.c.h.b16 %v9393
    %v9831 = vunpack.c.l.b16 %v9394
    %v9832 = vunpack.c.h.b16 %v9394
    %v9833 = vunpack.c.l.b16 %v9395
    %v9834 = vunpack.c.h.b16 %v9395
    %v9835 = vunpack.c.l.b16 %v9396
    %v9836 = vunpack.c.h.b16 %v9396
    %v9837 = vunpack.c.l.b16 %v9397
    %v9838 = vunpack.c.h.b16 %v9397
    %v9839 = vunpack.c.l.b16 %v9398
    %v9840 = vunpack.c.h.b16 %v9398
    %v9841 = vunpack.c.l.b16 %v9399
    %v9842 = vunpack.c.h.b16 %v9399
    %v9843 = vunpack.c.l.b16 %v9400
    %v9844 = vunpack.c.h.b16 %v9400
    %v9845 = vunpack.c.l.b16 %v9401
    %v9846 = vunpack.c.h.b16 %v9401
    %v9847 = vunpack.c.l.b16 %v9402
    %v9848 = vunpack.c.h.b16 %v9402
    %v9849 = vunpack.c.l.b16 %v9403
    %v9850 = vunpack.c.h.b16 %v9403
    %v9851 = vunpack.c.l.b16 %v9404
    %v9852 = vunpack.c.h.b16 %v9404
    %v9853 = vunpack.c.l.b16 %v9405
    %v9854 = vunpack.c.h.b16 %v9405
    %v9855 = vunpack.c.l.b16 %v9406
    %v9856 = vunpack.c.h.b16 %v9406
    %v9857 = vunpack.c.l.b16 %v9407
    %v9858 = vunpack.c.h.b16 %v9407
    %v9859 = vunpack.c.l.b16 %v9408
    %v9860 = vunpack.c.h.b16 %v9408
    %v9861 = vunpack.c.l.b16 %v9409
    %v9862 = vunpack.c.h.b16 %v9409
    %v9863 = vunpack.c.l.b16 %v9410
    %v9864 = vunpack.c.h.b16 %v9410
    %v9865 = vunpack.c.l.b16 %v9411
    %v9866 = vunpack.c.h.b16 %v9411
    %v9867 = vunpack.c.l.b16 %v9412
    %v9868 = vunpack.c.h.b16 %v9412
    %v9869 = vunpack.c.l.b16 %v9413
    %v9870 = vunpack.c.h.b16 %v9413
    %v9871 = vunpack.c.l.b16 %v9414
    %v9872 = vunpack.c.h.b16 %v9414
    %v9873 = vunpack.c.l.b16 %v9415
    %v9874 = vunpack.c.h.b16 %v9415
    %v9875 = vunpack.c.l.b16 %v9416
    %v9876 = vunpack.c.h.b16 %v9416
    %v9877 = vunpack.c.l.b16 %v9417
    %v9878 = vunpack.c.h.b16 %v9417
    %v9879 = vunpack.c.l.b16 %v9418
    %v9880 = vunpack.c.h.b16 %v9418
    %v9881 = vunpack.c.l.b16 %v9419
    %v9882 = vunpack.c.h.b16 %v9419
    %v9883 = vunpack.c.l.b16 %v9420
    %v9884 = vunpack.c.h.b16 %v9420
    %v9885 = vunpack.c.l.b16 %v9421
    %v9886 = vunpack.c.h.b16 %v9421
    %v9887 = vunpack.c.l.b16 %v9422
    %v9888 = vunpack.c.h.b16 %v9422
    %v9889 = vunpack.c.l.b16 %v9423
    %v9890 = vunpack.c.h.b16 %v9423
    %v9891 = vunpack.c.l.b16 %v9424
    %v9892 = vunpack.c.h.b16 %v9424
    %v9893 = vunpack.c.l.b16 %v9425
    %v9894 = vunpack.c.h.b16 %v9425
    %v9895 = vunpack.c.l.b16 %v9426
    %v9896 = vunpack.c.h.b16 %v9426
    %v9897 = vunpack.c.l.b16 %v9427
    %v9898 = vunpack.c.h.b16 %v9427
    %v9899 = vunpack.c.l.b16 %v9428
    %v9900 = vunpack.c.h.b16 %v9428
    %v9901 = vunpack.c.l.b16 %v9429
    %v9902 = vunpack.c.h.b16 %v9429
    %v9903 = vunpack.c.l.b16 %v9430
    %v9904 = vunpack.c.h.b16 %v9430
    %v9905 = vunpack.c.l.b16 %v9431
    %v9906 = vunpack.c.h.b16 %v9431
    %v9907 = vunpack.c.l.b16 %v9432
    %v9908 = vunpack.c.h.b16 %v9432
    %v9909 = vunpack.c.l.b16 %v9433
    %v9910 = vunpack.c.h.b16 %v9433
    %v9911 = vunpack.c.l.b16 %v9434
    %v9912 = vunpack.c.h.b16 %v9434
    %v9913 = vunpack.c.l.b16 %v9435
    %v9914 = vunpack.c.h.b16 %v9435
    %v9915 = vunpack.c.l.b16 %v9436
    %v9916 = vunpack.c.h.b16 %v9436
    %v9917 = vunpack.c.l.b16 %v9437
    %v9918 = vunpack.c.h.b16 %v9437
    %v9919 = vunpack.c.l.b16 %v9438
    %v9920 = vunpack.c.h.b16 %v9438
    %v9921 = vunpack.c.l.b16 %v9439
    %v9922 = vunpack.c.h.b16 %v9439
    %v9923 = vunpack.c.l.b16 %v9440
    %v9924 = vunpack.c.h.b16 %v9440
    %v9925 = vunpack.c.l.b16 %v9441
    %v9926 = vunpack.c.h.b16 %v9441
    %v9927 = vunpack.c.l.b16 %v9442
    %v9928 = vunpack.c.h.b16 %v9442
    %v9929 = vunpack.c.l.b16 %v9443
    %v9930 = vunpack.c.h.b16 %v9443
    %v9931 = vunpack.c.l.b16 %v9444
    %v9932 = vunpack.c.h.b16 %v9444
    %v9933 = vunpack.c.l.b16 %v9445
    %v9934 = vunpack.c.h.b16 %v9445
    %v9935 = vunpack.c.l.b16 %v9446
    %v9936 = vunpack.c.h.b16 %v9446
    %v9937 = vunpack.c.l.b16 %v9447
    %v9938 = vunpack.c.h.b16 %v9447
    %v9939 = vunpack.c.l.b16 %v9448
    %v9940 = vunpack.c.h.b16 %v9448
    %v9941 = vunpack.c.l.b16 %v9449
    %v9942 = vunpack.c.h.b16 %v9449
    %v9943 = vunpack.c.l.b16 %v9450
    %v9944 = vunpack.c.h.b16 %v9450
    %v9945 = vunpack.c.l.b16 %v9451
    %v9946 = vunpack.c.h.b16 %v9451
    %v9947 = vunpack.c.l.b16 %v9452
    %v9948 = vunpack.c.h.b16 %v9452
    %v9949 = vpack.c.b16 %v9697, %v9693
    %v9950 = vpack.c.b16 %v9698, %v9694
    %v9951 = vpack.c.b16 %v9699, %v9695
    %v9952 = vpack.c.b16 %v9700, %v9696
    %v9953 = vpack.c.b16 %v9705, %v9701
    %v9954 = vpack.c.b16 %v9706, %v9702
    %v9955 = vpack.c.b16 %v9707, %v9703
    %v9956 = vpack.c.b16 %v9708, %v9704
    %v9957 = vpack.c.b16 %v9713, %v9709
    %v9958 = vpack.c.b16 %v9714, %v9710
    %v9959 = vpack.c.b16 %v9715, %v9711
    %v9960 = vpack.c.b16 %v9716, %v9712
    %v9961 = vpack.c.b16 %v9721, %v9717
    %v9962 = vpack.c.b16 %v9722, %v9718
    %v9963 = vpack.c.b16 %v9723, %v9719
    %v9964 = vpack.c.b16 %v9724, %v9720
    %v9965 = vpack.c.b16 %v9729, %v9725
    %v9966 = vpack.c.b16 %v9730, %v9726
    %v9967 = vpack.c.b16 %v9731, %v9727
    %v9968 = vpack.c.b16 %v9732, %v9728
    %v9969 = vpack.c.b16 %v9737, %v9733
    %v9970 = vpack.c.b16 %v9738, %v9734
    %v9971 = vpack.c.b16 %v9739, %v9735
    %v9972 = vpack.c.b16 %v9740, %v9736
    %v9973 = vpack.c.b16 %v9745, %v9741
    %v9974 = vpack.c.b16 %v9746, %v9742
    %v9975 = vpack.c.b16 %v9747, %v9743
    %v9976 = vpack.c.b16 %v9748, %v9744
    %v9977 = vpack.c.b16 %v9753, %v9749
    %v9978 = vpack.c.b16 %v9754, %v9750
    %v9979 = vpack.c.b16 %v9755, %v9751
    %v9980 = vpack.c.b16 %v9756, %v9752
    %v9981 = vpack.c.b16 %v9761, %v9757
    %v9982 = vpack.c.b16 %v9762, %v9758
    %v9983 = vpack.c.b16 %v9763, %v9759
    %v9984 = vpack.c.b16 %v9764, %v9760
    %v9985 = vpack.c.b16 %v9769, %v9765
    %v9986 = vpack.c.b16 %v9770, %v9766
    %v9987 = vpack.c.b16 %v9771, %v9767
    %v9988 = vpack.c.b16 %v9772, %v9768
    %v9989 = vpack.c.b16 %v9777, %v9773
    %v9990 = vpack.c.b16 %v9778, %v9774
    %v9991 = vpack.c.b16 %v9779, %v9775
    %v9992 = vpack.c.b16 %v9780, %v9776
    %v9993 = vpack.c.b16 %v9785, %v9781
    %v9994 = vpack.c.b16 %v9786, %v9782
    %v9995 = vpack.c.b16 %v9787, %v9783
    %v9996 = vpack.c.b16 %v9788, %v9784
    %v9997 = vpack.c.b16 %v9793, %v9789
    %v9998 = vpack.c.b16 %v9794, %v9790
    %v9999 = vpack.c.b16 %v9795, %v9791
    %v10000 = vpack.c.b16 %v9796, %v9792
    %v10001 = vpack.c.b16 %v9801, %v9797
    %v10002 = vpack.c.b16 %v9802, %v9798
    %v10003 = vpack.c.b16 %v9803, %v9799
    %v10004 = vpack.c.b16 %v9804, %v9800
    %v10005 = vpack.c.b16 %v9809, %v9805
    %v10006 = vpack.c.b16 %v9810, %v9806
    %v10007 = vpack.c.b16 %v9811, %v9807
    %v10008 = vpack.c.b16 %v9812, %v9808
    %v10009 = vpack.c.b16 %v9817, %v9813
    %v10010 = vpack.c.b16 %v9818, %v9814
    %v10011 = vpack.c.b16 %v9819, %v9815
    %v10012 = vpack.c.b16 %v9820, %v9816
    %v10013 = vpack.c.b16 %v9825, %v9821
    %v10014 = vpack.c.b16 %v9826, %v9822
    %v10015 = vpack.c.b16 %v9827, %v9823
    %v10016 = vpack.c.b16 %v9828, %v9824
    %v10017 = vpack.c.b16 %v9833, %v9829
    %v10018 = vpack.c.b16 %v9834, %v9830
    %v10019 = vpack.c.b16 %v9835, %v9831
    %v10020 = vpack.c.b16 %v9836, %v9832
    %v10021 = vpack.c.b16 %v9841, %v9837
    %v10022 = vpack.c.b16 %v9842, %v9838
    %v10023 = vpack.c.b16 %v9843, %v9839
    %v10024 = vpack.c.b16 %v9844, %v9840
    %v10025 = vpack.c.b16 %v9849, %v9845
    %v10026 = vpack.c.b16 %v9850, %v9846
    %v10027 = vpack.c.b16 %v9851, %v9847
    %v10028 = vpack.c.b16 %v9852, %v9848
    %v10029 = vpack.c.b16 %v9857, %v9853
    %v10030 = vpack.c.b16 %v9858, %v9854
    %v10031 = vpack.c.b16 %v9859, %v9855
    %v10032 = vpack.c.b16 %v9860, %v9856
    %v10033 = vpack.c.b16 %v9865, %v9861
    %v10034 = vpack.c.b16 %v9866, %v9862
    %v10035 = vpack.c.b16 %v9867, %v9863
    %v10036 = vpack.c.b16 %v9868, %v9864
    %v10037 = vpack.c.b16 %v9873, %v9869
    %v10038 = vpack.c.b16 %v9874, %v9870
    %v10039 = vpack.c.b16 %v9875, %v9871
    %v10040 = vpack.c.b16 %v9876, %v9872
    %v10041 = vpack.c.b16 %v9881, %v9877
    %v10042 = vpack.c.b16 %v9882, %v9878
    %v10043 = vpack.c.b16 %v9883, %v9879
    %v10044 = vpack.c.b16 %v9884, %v9880
    %v10045 = vpack.c.b16 %v9889, %v9885
    %v10046 = vpack.c.b16 %v9890, %v9886
    %v10047 = vpack.c.b16 %v9891, %v9887
    %v10048 = vpack.c.b16 %v9892, %v9888
    %v10049 = vpack.c.b16 %v9897, %v9893
    %v10050 = vpack.c.b16 %v9898, %v9894
    %v10051 = vpack.c.b16 %v9899, %v9895
    %v10052 = vpack.c.b16 %v9900, %v9896
    %v10053 = vpack.c.b16 %v9905, %v9901
    %v10054 = vpack.c.b16 %v9906, %v9902
    %v10055 = vpack.c.b16 %v9907, %v9903
    %v10056 = vpack.c.b16 %v9908, %v9904
    %v10057 = vpack.c.b16 %v9913, %v9909
    %v10058 = vpack.c.b16 %v9914, %v9910
    %v10059 = vpack.c.b16 %v9915, %v9911
    %v10060 = vpack.c.b16 %v9916, %v9912
    %v10061 = vpack.c.b16 %v9921, %v9917
    %v10062 = vpack.c.b16 %v9922, %v9918
    %v10063 = vpack.c.b16 %v9923, %v9919
    %v10064 = vpack.c.b16 %v9924, %v9920
    %v10065 = vpack.c.b16 %v9929, %v9925
    %v10066 = vpack.c.b16 %v9930, %v9926
    %v10067 = vpack.c.b16 %v9931, %v9927
    %v10068 = vpack.c.b16 %v9932, %v9928
    %v10069 = vpack.c.b16 %v9937, %v9933
    %v10070 = vpack.c.b16 %v9938, %v9934
    %v10071 = vpack.c.b16 %v9939, %v9935
    %v10072 = vpack.c.b16 %v9940, %v9936
    %v10073 = vpack.c.b16 %v9945, %v9941
    %v10074 = vpack.c.b16 %v9946, %v9942
    %v10075 = vpack.c.b16 %v9947, %v9943
    %v10076 = vpack.c.b16 %v9948, %v9944
    %10205 = vmatprep.subr.bf16.mxu0 %v9950
    %10206 = vmatpush1.bf16.msra.mxu0 %v9949
    %10207 = vmatprep.subr.bf16.mxu0 %v9954
    %10208 = vmatpush1.bf16.msra.mxu0 %v9953
    %10209 = vmatprep.subr.bf16.mxu0 %v9958
    %10210 = vmatpush1.bf16.msra.mxu0 %v9957
    %10211 = vmatprep.subr.bf16.mxu0 %v9962
    %10212 = vmatpush1.bf16.msra.mxu0 %v9961
    %10213 = vmatprep.subr.bf16.mxu0 %v9966
    %10214 = vmatpush1.bf16.msra.mxu0 %v9965
    %10215 = vmatprep.subr.bf16.mxu0 %v9970
    %10216 = vmatpush1.bf16.msra.mxu0 %v9969
    %10217 = vmatprep.subr.bf16.mxu0 %v9974
    %10218 = vmatpush1.bf16.msra.mxu0 %v9973
    %10219 = vmatprep.subr.bf16.mxu0 %v9978
    %10220 = vmatpush1.bf16.msra.mxu0 %v9977
    %10221 = vmatprep.subr.bf16.mxu0 %v9982
    %10222 = vmatpush1.bf16.msra.mxu0 %v9981
    %10223 = vmatprep.subr.bf16.mxu0 %v9986
    %10224 = vmatpush1.bf16.msra.mxu0 %v9985
    %10225 = vmatprep.subr.bf16.mxu0 %v9990
    %10226 = vmatpush1.bf16.msra.mxu0 %v9989
    %10227 = vmatprep.subr.bf16.mxu0 %v9994
    %10228 = vmatpush1.bf16.msra.mxu0 %v9993
    %10229 = vmatprep.subr.bf16.mxu0 %v9998
    %10230 = vmatpush1.bf16.msra.mxu0 %v9997
    %10231 = vmatprep.subr.bf16.mxu0 %v10002
    %10232 = vmatpush1.bf16.msra.mxu0 %v10001
    %10233 = vmatprep.subr.bf16.mxu0 %v10006
    %10234 = vmatpush1.bf16.msra.mxu0 %v10005
    %10235 = vmatprep.subr.bf16.mxu0 %v10010
    %10236 = vmatpush1.bf16.msra.mxu0 %v10009
    %10237 = vmatprep.mubr.bf16.mxu0 %v7076
    %10238 = vmatmul.mubr.bf16.gmra.mrb[0].mxu0 %v7075
    %v10239 = vpop.f32.mrb[0].mxu0
    %v10240 = vadd.f32 %v9518, %v10239
    %v10241 = vpop.f32.mrb[0].mxu0
    %v10242 = vadd.f32 %v9520, %v10241
    %v10243 = vpop.f32.mrb[0].mxu0
    %v10244 = vpop.f32.mrb[0].mxu0
    %10245 = vdwg.mxu0
    %10246 = vmatprep.subr.bf16.mxu0 %v10014
    %10247 = vmatpush1.bf16.msra.mxu0 %v10013
    %10248 = vmatprep.subr.bf16.mxu0 %v10018
    %10249 = vmatpush1.bf16.msra.mxu0 %v10017
    %10250 = vmatprep.subr.bf16.mxu0 %v10022
    %10251 = vmatpush1.bf16.msra.mxu0 %v10021
    %10252 = vmatprep.subr.bf16.mxu0 %v10026
    %10253 = vmatpush1.bf16.msra.mxu0 %v10025
    %10254 = vmatprep.subr.bf16.mxu0 %v10030
    %10255 = vmatpush1.bf16.msra.mxu0 %v10029
    %10256 = vmatprep.subr.bf16.mxu0 %v10034
    %10257 = vmatpush1.bf16.msra.mxu0 %v10033
    %10258 = vmatprep.subr.bf16.mxu0 %v10038
    %10259 = vmatpush1.bf16.msra.mxu0 %v10037
    %10260 = vmatprep.subr.bf16.mxu0 %v10042
    %10261 = vmatpush1.bf16.msra.mxu0 %v10041
    %10262 = vmatprep.subr.bf16.mxu0 %v10046
    %10263 = vmatpush1.bf16.msra.mxu0 %v10045
    %10264 = vmatprep.subr.bf16.mxu0 %v10050
    %10265 = vmatpush1.bf16.msra.mxu0 %v10049
    %10266 = vmatprep.subr.bf16.mxu0 %v10054
    %10267 = vmatpush1.bf16.msra.mxu0 %v10053
    %10268 = vmatprep.subr.bf16.mxu0 %v10058
    %10269 = vmatpush1.bf16.msra.mxu0 %v10057
    %10270 = vmatprep.subr.bf16.mxu0 %v10062
    %10271 = vmatpush1.bf16.msra.mxu0 %v10061
    %10272 = vmatprep.subr.bf16.mxu0 %v10066
    %10273 = vmatpush1.bf16.msra.mxu0 %v10065
    %10274 = vmatprep.subr.bf16.mxu0 %v10070
    %10275 = vmatpush1.bf16.msra.mxu0 %v10069
    %10276 = vmatprep.subr.bf16.mxu0 %v10074
    %10277 = vmatpush1.bf16.msra.mxu0 %v10073
    %10278 = vmatprep.mubr.bf16.mxu0 %v7078
    %10279 = vmatmul.mubr.bf16.gmra.mrb[0].mxu0 %v7077
    %v10280 = vpop.f32.mrb[0].mxu0
    %v10281 = vadd.f32 %v10240, %v10280
    %v10282 = vpop.f32.mrb[0].mxu0
    %v10283 = vadd.f32 %v10242, %v10282
    %v10284 = vpop.f32.mrb[0].mxu0
    %v10285 = vpop.f32.mrb[0].mxu0
    %10286 = vdwg.mxu0
    %10287 = vmatprep.subr.bf16.mxu0 %v9952
    %10288 = vmatpush1.bf16.msra.mxu0 %v9951
    %10289 = vmatprep.subr.bf16.mxu0 %v9956
    %10290 = vmatpush1.bf16.msra.mxu0 %v9955
    %10291 = vmatprep.subr.bf16.mxu0 %v9960
    %10292 = vmatpush1.bf16.msra.mxu0 %v9959
    %10293 = vmatprep.subr.bf16.mxu0 %v9964
    %10294 = vmatpush1.bf16.msra.mxu0 %v9963
    %10295 = vmatprep.subr.bf16.mxu0 %v9968
    %10296 = vmatpush1.bf16.msra.mxu0 %v9967
    %10297 = vmatprep.subr.bf16.mxu0 %v9972
    %10298 = vmatpush1.bf16.msra.mxu0 %v9971
    %10299 = vmatprep.subr.bf16.mxu0 %v9976
    %10300 = vmatpush1.bf16.msra.mxu0 %v9975
    %10301 = vmatprep.subr.bf16.mxu0 %v9980
    %10302 = vmatpush1.bf16.msra.mxu0 %v9979
    %10303 = vmatprep.subr.bf16.mxu0 %v9984
    %10304 = vmatpush1.bf16.msra.mxu0 %v9983
    %10305 = vmatprep.subr.bf16.mxu0 %v9988
    %10306 = vmatpush1.bf16.msra.mxu0 %v9987
    %10307 = vmatprep.subr.bf16.mxu0 %v9992
    %10308 = vmatpush1.bf16.msra.mxu0 %v9991
    %10309 = vmatprep.subr.bf16.mxu0 %v9996
    %10310 = vmatpush1.bf16.msra.mxu0 %v9995
    %10311 = vmatprep.subr.bf16.mxu0 %v10000
    %10312 = vmatpush1.bf16.msra.mxu0 %v9999
    %10313 = vmatprep.subr.bf16.mxu0 %v10004
    %10314 = vmatpush1.bf16.msra.mxu0 %v10003
    %10315 = vmatprep.subr.bf16.mxu0 %v10008
    %10316 = vmatpush1.bf16.msra.mxu0 %v10007
    %10317 = vmatprep.subr.bf16.mxu0 %v10012
    %10318 = vmatpush1.bf16.msra.mxu0 %v10011
    %10319 = vmatprep.mubr.bf16.mxu0 %v7076
    %10320 = vmatmul.mubr.bf16.gmra.mrb[0].mxu0 %v7075
    %v10321 = vpop.f32.mrb[0].mxu0
    %v10322 = vadd.f32 %v9559, %v10321
    %v10323 = vpop.f32.mrb[0].mxu0
    %v10324 = vadd.f32 %v9561, %v10323
    %v10325 = vpop.f32.mrb[0].mxu0
    %v10326 = vpop.f32.mrb[0].mxu0
    %10327 = vdwg.mxu0
    %10328 = vmatprep.subr.bf16.mxu0 %v10016
    %10329 = vmatpush1.bf16.msra.mxu0 %v10015
    %10330 = vmatprep.subr.bf16.mxu0 %v10020
    %10331 = vmatpush1.bf16.msra.mxu0 %v10019
    %10332 = vmatprep.subr.bf16.mxu0 %v10024
    %10333 = vmatpush1.bf16.msra.mxu0 %v10023
    %10334 = vmatprep.subr.bf16.mxu0 %v10028
    %10335 = vmatpush1.bf16.msra.mxu0 %v10027
    %10336 = vmatprep.subr.bf16.mxu0 %v10032
    %10337 = vmatpush1.bf16.msra.mxu0 %v10031
    %10338 = vmatprep.subr.bf16.mxu0 %v10036
    %10339 = vmatpush1.bf16.msra.mxu0 %v10035
    %10340 = vmatprep.subr.bf16.mxu0 %v10040
    %10341 = vmatpush1.bf16.msra.mxu0 %v10039
    %10342 = vmatprep.subr.bf16.mxu0 %v10044
    %10343 = vmatpush1.bf16.msra.mxu0 %v10043
    %10344 = vmatprep.subr.bf16.mxu0 %v10048
    %10345 = vmatpush1.bf16.msra.mxu0 %v10047
    %10346 = vmatprep.subr.bf16.mxu0 %v10052
    %10347 = vmatpush1.bf16.msra.mxu0 %v10051
    %10348 = vmatprep.subr.bf16.mxu0 %v10056
    %10349 = vmatpush1.bf16.msra.mxu0 %v10055
    %10350 = vmatprep.subr.bf16.mxu0 %v10060
    %10351 = vmatpush1.bf16.msra.mxu0 %v10059
    %10352 = vmatprep.subr.bf16.mxu0 %v10064
    %10353 = vmatpush1.bf16.msra.mxu0 %v10063
    %10354 = vmatprep.subr.bf16.mxu0 %v10068
    %10355 = vmatpush1.bf16.msra.mxu0 %v10067
    %10356 = vmatprep.subr.bf16.mxu0 %v10072
    %10357 = vmatpush1.bf16.msra.mxu0 %v10071
    %10358 = vmatprep.subr.bf16.mxu0 %v10076
    %10359 = vmatpush1.bf16.msra.mxu0 %v10075
    %10360 = vmatprep.mubr.bf16.mxu0 %v7078
    %10361 = vmatmul.mubr.bf16.gmra.mrb[0].mxu0 %v7077
    %v10362 = vpop.f32.mrb[0].mxu0
    %v10363 = vadd.f32 %v10322, %v10362
    %v10364 = vpop.f32.mrb[0].mxu0
    %v10365 = vadd.f32 %v10324, %v10364
    %v10366 = vpop.f32.mrb[0].mxu0
    %v10367 = vpop.f32.mrb[0].mxu0
    %10368 = vdwg.mxu0
    %v10369 = vld [vmem:[#allocation8] sm:$0xf]
    %v10371 = vlaneseq
    %v10372 = vshrl.u32 %v10371, 7
    %v10373 = vsub.s32 0, %v10372
    %v10374 = vrot.slane %v10369, %v10373
    %v10375 = vlaneseq
    %v10376 = vshrl.u32 %v10375, 7
    %v10377 = vsub.s32 1, %v10376
    %v10378 = vrot.slane %v10369, %v10377
    %v10379 = vlaneseq
    %v10380 = vshrl.u32 %v10379, 7
    %v10381 = vsub.s32 2, %v10380
    %v10382 = vrot.slane %v10369, %v10381
    %v10383 = vlaneseq
    %v10384 = vshrl.u32 %v10383, 7
    %v10385 = vsub.s32 3, %v10384
    %v10386 = vrot.slane %v10369, %v10385
    %v10391 = vadd.f32 %v10281, %v10374
    %v10392 = vadd.f32 %v10283, %v10378
    %v10393 = vadd.f32 %v10363, %v10382
    %v10394 = vadd.f32 %v10365, %v10386
    %v10395 = vmax.f32 %v10391, 0.0
    %v10396 = vmax.f32 %v10392, 0.0
    %v10397 = vmax.f32 %v10393, 0.0
    %v10398 = vmax.f32 %v10394, 0.0
    %v10399 = vpack.c.bf16 %v10395, %v10395
    %v10400 = vpack.c.bf16 %v10396, %v10396
    %v10401 = vpack.c.bf16 %v10397, %v10397
    %v10402 = vpack.c.bf16 %v10398, %v10398
    %v10403 = vld [vmem:[#allocation10] sm:$0xff]
    %v10404 = vld [vmem:[#allocation10 + $0x8] sm:$0xff]
    %v10405 = vld [vmem:[#allocation10 + $0x10] sm:$0xff]
    %v10406 = vld [vmem:[#allocation10 + $0x18] sm:$0xff]
    %v10407 = vld [vmem:[#allocation10 + $0x20] sm:$0xff]
    %v10408 = vld [vmem:[#allocation10 + $0x28] sm:$0xff]
    %v10409 = vld [vmem:[#allocation10 + $0x30] sm:$0xff]
    %v10410 = vld [vmem:[#allocation10 + $0x38] sm:$0xff]
    %v10411 = vld [vmem:[#allocation10 + $0x40] sm:$0xff]
    %v10412 = vld [vmem:[#allocation10 + $0x48] sm:$0xff]
    %v10413 = vld [vmem:[#allocation10 + $0x50] sm:$0xff]
    %v10414 = vld [vmem:[#allocation10 + $0x58] sm:$0xff]
    %v10415 = vld [vmem:[#allocation10 + $0x60] sm:$0xff]
    %v10416 = vld [vmem:[#allocation10 + $0x68] sm:$0xff]
    %v10417 = vld [vmem:[#allocation10 + $0x70] sm:$0xff]
    %v10418 = vld [vmem:[#allocation10 + $0x78] sm:$0xff]
    %v10419 = vld [vmem:[#allocation10 + $0x80] sm:$0xff]
    %v10420 = vld [vmem:[#allocation10 + $0x88] sm:$0xff]
    %v10421 = vld [vmem:[#allocation10 + $0x90] sm:$0xff]
    %v10422 = vld [vmem:[#allocation10 + $0x98] sm:$0xff]
    %v10423 = vld [vmem:[#allocation10 + $0xa0] sm:$0xff]
    %v10424 = vld [vmem:[#allocation10 + $0xa8] sm:$0xff]
    %v10425 = vld [vmem:[#allocation10 + $0xb0] sm:$0xff]
    %v10426 = vld [vmem:[#allocation10 + $0xb8] sm:$0xff]
    %v10427 = vld [vmem:[#allocation10 + $0xc0] sm:$0xff]
    %v10428 = vld [vmem:[#allocation10 + $0xc8] sm:$0xff]
    %v10429 = vld [vmem:[#allocation10 + $0xd0] sm:$0xff]
    %v10430 = vld [vmem:[#allocation10 + $0xd8] sm:$0xff]
    %v10431 = vld [vmem:[#allocation10 + $0xe0] sm:$0xff]
    %v10432 = vld [vmem:[#allocation10 + $0xe8] sm:$0xff]
    %v10433 = vld [vmem:[#allocation10 + $0xf0] sm:$0xff]
    %v10434 = vld [vmem:[#allocation10 + $0xf8] sm:$0xff]
    %v10435 = vld [vmem:[#allocation10 + $0x100] sm:$0xff]
    %v10436 = vld [vmem:[#allocation10 + $0x108] sm:$0xff]
    %v10437 = vld [vmem:[#allocation10 + $0x110] sm:$0xff]
    %v10438 = vld [vmem:[#allocation10 + $0x118] sm:$0xff]
    %v10439 = vld [vmem:[#allocation10 + $0x120] sm:$0xff]
    %v10440 = vld [vmem:[#allocation10 + $0x128] sm:$0xff]
    %v10441 = vld [vmem:[#allocation10 + $0x130] sm:$0xff]
    %v10442 = vld [vmem:[#allocation10 + $0x138] sm:$0xff]
    %v10443 = vld [vmem:[#allocation10 + $0x140] sm:$0xff]
    %v10444 = vld [vmem:[#allocation10 + $0x148] sm:$0xff]
    %v10445 = vld [vmem:[#allocation10 + $0x150] sm:$0xff]
    %v10446 = vld [vmem:[#allocation10 + $0x158] sm:$0xff]
    %v10447 = vld [vmem:[#allocation10 + $0x160] sm:$0xff]
    %v10448 = vld [vmem:[#allocation10 + $0x168] sm:$0xff]
    %v10449 = vld [vmem:[#allocation10 + $0x170] sm:$0xff]
    %v10450 = vld [vmem:[#allocation10 + $0x178] sm:$0xff]
    %v10451 = vld [vmem:[#allocation10 + $0x180] sm:$0xff]
    %v10452 = vld [vmem:[#allocation10 + $0x188] sm:$0xff]
    %v10453 = vld [vmem:[#allocation10 + $0x190] sm:$0xff]
    %v10454 = vld [vmem:[#allocation10 + $0x198] sm:$0xff]
    %v10455 = vld [vmem:[#allocation10 + $0x1a0] sm:$0xff]
    %v10456 = vld [vmem:[#allocation10 + $0x1a8] sm:$0xff]
    %v10457 = vld [vmem:[#allocation10 + $0x1b0] sm:$0xff]
    %v10458 = vld [vmem:[#allocation10 + $0x1b8] sm:$0xff]
    %v10459 = vld [vmem:[#allocation10 + $0x1c0] sm:$0xff]
    %v10460 = vld [vmem:[#allocation10 + $0x1c8] sm:$0xff]
    %v10461 = vld [vmem:[#allocation10 + $0x1d0] sm:$0xff]
    %v10462 = vld [vmem:[#allocation10 + $0x1d8] sm:$0xff]
    %v10463 = vld [vmem:[#allocation10 + $0x1e0] sm:$0xff]
    %v10464 = vld [vmem:[#allocation10 + $0x1e8] sm:$0xff]
    %v10465 = vld [vmem:[#allocation10 + $0x1f0] sm:$0xff]
    %v10466 = vld [vmem:[#allocation10 + $0x1f8] sm:$0xff]
    %v10467 = vld [vmem:[#allocation10 + $0x200] sm:$0xff]
    %v10468 = vld [vmem:[#allocation10 + $0x208] sm:$0xff]
    %v10469 = vld [vmem:[#allocation10 + $0x210] sm:$0xff]
    %v10470 = vld [vmem:[#allocation10 + $0x218] sm:$0xff]
    %v10471 = vld [vmem:[#allocation10 + $0x220] sm:$0xff]
    %v10472 = vld [vmem:[#allocation10 + $0x228] sm:$0xff]
    %v10473 = vld [vmem:[#allocation10 + $0x230] sm:$0xff]
    %v10474 = vld [vmem:[#allocation10 + $0x238] sm:$0xff]
    %v10475 = vld [vmem:[#allocation10 + $0x240] sm:$0xff]
    %v10476 = vld [vmem:[#allocation10 + $0x248] sm:$0xff]
    %v10477 = vld [vmem:[#allocation10 + $0x250] sm:$0xff]
    %v10478 = vld [vmem:[#allocation10 + $0x258] sm:$0xff]
    %v10479 = vld [vmem:[#allocation10 + $0x260] sm:$0xff]
    %v10480 = vld [vmem:[#allocation10 + $0x268] sm:$0xff]
    %v10481 = vld [vmem:[#allocation10 + $0x270] sm:$0xff]
    %v10482 = vld [vmem:[#allocation10 + $0x278] sm:$0xff]
    %v10483 = vld [vmem:[#allocation10 + $0x280] sm:$0xff]
    %v10484 = vld [vmem:[#allocation10 + $0x288] sm:$0xff]
    %v10485 = vld [vmem:[#allocation10 + $0x290] sm:$0xff]
    %v10486 = vld [vmem:[#allocation10 + $0x298] sm:$0xff]
    %v10487 = vld [vmem:[#allocation10 + $0x2a0] sm:$0xff]
    %v10488 = vld [vmem:[#allocation10 + $0x2a8] sm:$0xff]
    %v10489 = vld [vmem:[#allocation10 + $0x2b0] sm:$0xff]
    %v10490 = vld [vmem:[#allocation10 + $0x2b8] sm:$0xff]
    %v10491 = vld [vmem:[#allocation10 + $0x2c0] sm:$0xff]
    %v10492 = vld [vmem:[#allocation10 + $0x2c8] sm:$0xff]
    %v10493 = vld [vmem:[#allocation10 + $0x2d0] sm:$0xff]
    %v10494 = vld [vmem:[#allocation10 + $0x2d8] sm:$0xff]
    %v10495 = vld [vmem:[#allocation10 + $0x2e0] sm:$0xff]
    %v10496 = vld [vmem:[#allocation10 + $0x2e8] sm:$0xff]
    %v10497 = vld [vmem:[#allocation10 + $0x2f0] sm:$0xff]
    %v10498 = vld [vmem:[#allocation10 + $0x2f8] sm:$0xff]
    %v10499 = vld [vmem:[#allocation10 + $0x300] sm:$0xff]
    %v10500 = vld [vmem:[#allocation10 + $0x308] sm:$0xff]
    %v10501 = vld [vmem:[#allocation10 + $0x310] sm:$0xff]
    %v10502 = vld [vmem:[#allocation10 + $0x318] sm:$0xff]
    %v10503 = vld [vmem:[#allocation10 + $0x320] sm:$0xff]
    %v10504 = vld [vmem:[#allocation10 + $0x328] sm:$0xff]
    %v10505 = vld [vmem:[#allocation10 + $0x330] sm:$0xff]
    %v10506 = vld [vmem:[#allocation10 + $0x338] sm:$0xff]
    %v10507 = vld [vmem:[#allocation10 + $0x340] sm:$0xff]
    %v10508 = vld [vmem:[#allocation10 + $0x348] sm:$0xff]
    %v10509 = vld [vmem:[#allocation10 + $0x350] sm:$0xff]
    %v10510 = vld [vmem:[#allocation10 + $0x358] sm:$0xff]
    %v10511 = vld [vmem:[#allocation10 + $0x360] sm:$0xff]
    %v10512 = vld [vmem:[#allocation10 + $0x368] sm:$0xff]
    %v10513 = vld [vmem:[#allocation10 + $0x370] sm:$0xff]
    %v10514 = vld [vmem:[#allocation10 + $0x378] sm:$0xff]
    %v10515 = vld [vmem:[#allocation10 + $0x380] sm:$0xff]
    %v10516 = vld [vmem:[#allocation10 + $0x388] sm:$0xff]
    %v10517 = vld [vmem:[#allocation10 + $0x390] sm:$0xff]
    %v10518 = vld [vmem:[#allocation10 + $0x398] sm:$0xff]
    %v10519 = vld [vmem:[#allocation10 + $0x3a0] sm:$0xff]
    %v10520 = vld [vmem:[#allocation10 + $0x3a8] sm:$0xff]
    %v10521 = vld [vmem:[#allocation10 + $0x3b0] sm:$0xff]
    %v10522 = vld [vmem:[#allocation10 + $0x3b8] sm:$0xff]
    %v10523 = vld [vmem:[#allocation10 + $0x3c0] sm:$0xff]
    %v10524 = vld [vmem:[#allocation10 + $0x3c8] sm:$0xff]
    %v10525 = vld [vmem:[#allocation10 + $0x3d0] sm:$0xff]
    %v10526 = vld [vmem:[#allocation10 + $0x3d8] sm:$0xff]
    %v10527 = vld [vmem:[#allocation10 + $0x3e0] sm:$0xff]
    %v10528 = vld [vmem:[#allocation10 + $0x3e8] sm:$0xff]
    %v10529 = vld [vmem:[#allocation10 + $0x3f0] sm:$0xff]
    %v10530 = vld [vmem:[#allocation10 + $0x3f8] sm:$0xff]
    %v10531 = vld [vmem:[#allocation11] sm:$0xf]
    %v10533 = vlaneseq
    %v10534 = vshrl.u32 %v10533, 7
    %v10535 = vsub.s32 0, %v10534
    %v10536 = vrot.slane %v10531, %v10535
    %v10537 = vlaneseq
    %v10538 = vshrl.u32 %v10537, 7
    %v10539 = vsub.s32 1, %v10538
    %v10540 = vrot.slane %v10531, %v10539
    %v10541 = vlaneseq
    %v10542 = vshrl.u32 %v10541, 7
    %v10543 = vsub.s32 2, %v10542
    %v10544 = vrot.slane %v10531, %v10543
    %v10545 = vlaneseq
    %v10546 = vshrl.u32 %v10545, 7
    %v10547 = vsub.s32 3, %v10546
    %v10548 = vrot.slane %v10531, %v10547
    %v10681 = vunpack.c.l.b16 %v10403
    %v10682 = vunpack.c.h.b16 %v10403
    %v10683 = vunpack.c.l.b16 %v10404
    %v10684 = vunpack.c.h.b16 %v10404
    %v10685 = vunpack.c.l.b16 %v10405
    %v10686 = vunpack.c.h.b16 %v10405
    %v10687 = vunpack.c.l.b16 %v10406
    %v10688 = vunpack.c.h.b16 %v10406
    %v10689 = vunpack.c.l.b16 %v10407
    %v10690 = vunpack.c.h.b16 %v10407
    %v10691 = vunpack.c.l.b16 %v10408
    %v10692 = vunpack.c.h.b16 %v10408
    %v10693 = vunpack.c.l.b16 %v10409
    %v10694 = vunpack.c.h.b16 %v10409
    %v10695 = vunpack.c.l.b16 %v10410
    %v10696 = vunpack.c.h.b16 %v10410
    %v10697 = vunpack.c.l.b16 %v10411
    %v10698 = vunpack.c.h.b16 %v10411
    %v10699 = vunpack.c.l.b16 %v10412
    %v10700 = vunpack.c.h.b16 %v10412
    %v10701 = vunpack.c.l.b16 %v10413
    %v10702 = vunpack.c.h.b16 %v10413
    %v10703 = vunpack.c.l.b16 %v10414
    %v10704 = vunpack.c.h.b16 %v10414
    %v10705 = vunpack.c.l.b16 %v10415
    %v10706 = vunpack.c.h.b16 %v10415
    %v10707 = vunpack.c.l.b16 %v10416
    %v10708 = vunpack.c.h.b16 %v10416
    %v10709 = vunpack.c.l.b16 %v10417
    %v10710 = vunpack.c.h.b16 %v10417
    %v10711 = vunpack.c.l.b16 %v10418
    %v10712 = vunpack.c.h.b16 %v10418
    %v10713 = vunpack.c.l.b16 %v10419
    %v10714 = vunpack.c.h.b16 %v10419
    %v10715 = vunpack.c.l.b16 %v10420
    %v10716 = vunpack.c.h.b16 %v10420
    %v10717 = vunpack.c.l.b16 %v10421
    %v10718 = vunpack.c.h.b16 %v10421
    %v10719 = vunpack.c.l.b16 %v10422
    %v10720 = vunpack.c.h.b16 %v10422
    %v10721 = vunpack.c.l.b16 %v10423
    %v10722 = vunpack.c.h.b16 %v10423
    %v10723 = vunpack.c.l.b16 %v10424
    %v10724 = vunpack.c.h.b16 %v10424
    %v10725 = vunpack.c.l.b16 %v10425
    %v10726 = vunpack.c.h.b16 %v10425
    %v10727 = vunpack.c.l.b16 %v10426
    %v10728 = vunpack.c.h.b16 %v10426
    %v10729 = vunpack.c.l.b16 %v10427
    %v10730 = vunpack.c.h.b16 %v10427
    %v10731 = vunpack.c.l.b16 %v10428
    %v10732 = vunpack.c.h.b16 %v10428
    %v10733 = vunpack.c.l.b16 %v10429
    %v10734 = vunpack.c.h.b16 %v10429
    %v10735 = vunpack.c.l.b16 %v10430
    %v10736 = vunpack.c.h.b16 %v10430
    %v10737 = vunpack.c.l.b16 %v10431
    %v10738 = vunpack.c.h.b16 %v10431
    %v10739 = vunpack.c.l.b16 %v10432
    %v10740 = vunpack.c.h.b16 %v10432
    %v10741 = vunpack.c.l.b16 %v10433
    %v10742 = vunpack.c.h.b16 %v10433
    %v10743 = vunpack.c.l.b16 %v10434
    %v10744 = vunpack.c.h.b16 %v10434
    %v10745 = vunpack.c.l.b16 %v10435
    %v10746 = vunpack.c.h.b16 %v10435
    %v10747 = vunpack.c.l.b16 %v10436
    %v10748 = vunpack.c.h.b16 %v10436
    %v10749 = vunpack.c.l.b16 %v10437
    %v10750 = vunpack.c.h.b16 %v10437
    %v10751 = vunpack.c.l.b16 %v10438
    %v10752 = vunpack.c.h.b16 %v10438
    %v10753 = vunpack.c.l.b16 %v10439
    %v10754 = vunpack.c.h.b16 %v10439
    %v10755 = vunpack.c.l.b16 %v10440
    %v10756 = vunpack.c.h.b16 %v10440
    %v10757 = vunpack.c.l.b16 %v10441
    %v10758 = vunpack.c.h.b16 %v10441
    %v10759 = vunpack.c.l.b16 %v10442
    %v10760 = vunpack.c.h.b16 %v10442
    %v10761 = vunpack.c.l.b16 %v10443
    %v10762 = vunpack.c.h.b16 %v10443
    %v10763 = vunpack.c.l.b16 %v10444
    %v10764 = vunpack.c.h.b16 %v10444
    %v10765 = vunpack.c.l.b16 %v10445
    %v10766 = vunpack.c.h.b16 %v10445
    %v10767 = vunpack.c.l.b16 %v10446
    %v10768 = vunpack.c.h.b16 %v10446
    %v10769 = vunpack.c.l.b16 %v10447
    %v10770 = vunpack.c.h.b16 %v10447
    %v10771 = vunpack.c.l.b16 %v10448
    %v10772 = vunpack.c.h.b16 %v10448
    %v10773 = vunpack.c.l.b16 %v10449
    %v10774 = vunpack.c.h.b16 %v10449
    %v10775 = vunpack.c.l.b16 %v10450
    %v10776 = vunpack.c.h.b16 %v10450
    %v10777 = vunpack.c.l.b16 %v10451
    %v10778 = vunpack.c.h.b16 %v10451
    %v10779 = vunpack.c.l.b16 %v10452
    %v10780 = vunpack.c.h.b16 %v10452
    %v10781 = vunpack.c.l.b16 %v10453
    %v10782 = vunpack.c.h.b16 %v10453
    %v10783 = vunpack.c.l.b16 %v10454
    %v10784 = vunpack.c.h.b16 %v10454
    %v10785 = vunpack.c.l.b16 %v10455
    %v10786 = vunpack.c.h.b16 %v10455
    %v10787 = vunpack.c.l.b16 %v10456
    %v10788 = vunpack.c.h.b16 %v10456
    %v10789 = vunpack.c.l.b16 %v10457
    %v10790 = vunpack.c.h.b16 %v10457
    %v10791 = vunpack.c.l.b16 %v10458
    %v10792 = vunpack.c.h.b16 %v10458
    %v10793 = vunpack.c.l.b16 %v10459
    %v10794 = vunpack.c.h.b16 %v10459
    %v10795 = vunpack.c.l.b16 %v10460
    %v10796 = vunpack.c.h.b16 %v10460
    %v10797 = vunpack.c.l.b16 %v10461
    %v10798 = vunpack.c.h.b16 %v10461
    %v10799 = vunpack.c.l.b16 %v10462
    %v10800 = vunpack.c.h.b16 %v10462
    %v10801 = vunpack.c.l.b16 %v10463
    %v10802 = vunpack.c.h.b16 %v10463
    %v10803 = vunpack.c.l.b16 %v10464
    %v10804 = vunpack.c.h.b16 %v10464
    %v10805 = vunpack.c.l.b16 %v10465
    %v10806 = vunpack.c.h.b16 %v10465
    %v10807 = vunpack.c.l.b16 %v10466
    %v10808 = vunpack.c.h.b16 %v10466
    %v10809 = vunpack.c.l.b16 %v10467
    %v10810 = vunpack.c.h.b16 %v10467
    %v10811 = vunpack.c.l.b16 %v10468
    %v10812 = vunpack.c.h.b16 %v10468
    %v10813 = vunpack.c.l.b16 %v10469
    %v10814 = vunpack.c.h.b16 %v10469
    %v10815 = vunpack.c.l.b16 %v10470
    %v10816 = vunpack.c.h.b16 %v10470
    %v10817 = vunpack.c.l.b16 %v10471
    %v10818 = vunpack.c.h.b16 %v10471
    %v10819 = vunpack.c.l.b16 %v10472
    %v10820 = vunpack.c.h.b16 %v10472
    %v10821 = vunpack.c.l.b16 %v10473
    %v10822 = vunpack.c.h.b16 %v10473
    %v10823 = vunpack.c.l.b16 %v10474
    %v10824 = vunpack.c.h.b16 %v10474
    %v10825 = vunpack.c.l.b16 %v10475
    %v10826 = vunpack.c.h.b16 %v10475
    %v10827 = vunpack.c.l.b16 %v10476
    %v10828 = vunpack.c.h.b16 %v10476
    %v10829 = vunpack.c.l.b16 %v10477
    %v10830 = vunpack.c.h.b16 %v10477
    %v10831 = vunpack.c.l.b16 %v10478
    %v10832 = vunpack.c.h.b16 %v10478
    %v10833 = vunpack.c.l.b16 %v10479
    %v10834 = vunpack.c.h.b16 %v10479
    %v10835 = vunpack.c.l.b16 %v10480
    %v10836 = vunpack.c.h.b16 %v10480
    %v10837 = vunpack.c.l.b16 %v10481
    %v10838 = vunpack.c.h.b16 %v10481
    %v10839 = vunpack.c.l.b16 %v10482
    %v10840 = vunpack.c.h.b16 %v10482
    %v10841 = vunpack.c.l.b16 %v10483
    %v10842 = vunpack.c.h.b16 %v10483
    %v10843 = vunpack.c.l.b16 %v10484
    %v10844 = vunpack.c.h.b16 %v10484
    %v10845 = vunpack.c.l.b16 %v10485
    %v10846 = vunpack.c.h.b16 %v10485
    %v10847 = vunpack.c.l.b16 %v10486
    %v10848 = vunpack.c.h.b16 %v10486
    %v10849 = vunpack.c.l.b16 %v10487
    %v10850 = vunpack.c.h.b16 %v10487
    %v10851 = vunpack.c.l.b16 %v10488
    %v10852 = vunpack.c.h.b16 %v10488
    %v10853 = vunpack.c.l.b16 %v10489
    %v10854 = vunpack.c.h.b16 %v10489
    %v10855 = vunpack.c.l.b16 %v10490
    %v10856 = vunpack.c.h.b16 %v10490
    %v10857 = vunpack.c.l.b16 %v10491
    %v10858 = vunpack.c.h.b16 %v10491
    %v10859 = vunpack.c.l.b16 %v10492
    %v10860 = vunpack.c.h.b16 %v10492
    %v10861 = vunpack.c.l.b16 %v10493
    %v10862 = vunpack.c.h.b16 %v10493
    %v10863 = vunpack.c.l.b16 %v10494
    %v10864 = vunpack.c.h.b16 %v10494
    %v10865 = vunpack.c.l.b16 %v10495
    %v10866 = vunpack.c.h.b16 %v10495
    %v10867 = vunpack.c.l.b16 %v10496
    %v10868 = vunpack.c.h.b16 %v10496
    %v10869 = vunpack.c.l.b16 %v10497
    %v10870 = vunpack.c.h.b16 %v10497
    %v10871 = vunpack.c.l.b16 %v10498
    %v10872 = vunpack.c.h.b16 %v10498
    %v10873 = vunpack.c.l.b16 %v10499
    %v10874 = vunpack.c.h.b16 %v10499
    %v10875 = vunpack.c.l.b16 %v10500
    %v10876 = vunpack.c.h.b16 %v10500
    %v10877 = vunpack.c.l.b16 %v10501
    %v10878 = vunpack.c.h.b16 %v10501
    %v10879 = vunpack.c.l.b16 %v10502
    %v10880 = vunpack.c.h.b16 %v10502
    %v10881 = vunpack.c.l.b16 %v10503
    %v10882 = vunpack.c.h.b16 %v10503
    %v10883 = vunpack.c.l.b16 %v10504
    %v10884 = vunpack.c.h.b16 %v10504
    %v10885 = vunpack.c.l.b16 %v10505
    %v10886 = vunpack.c.h.b16 %v10505
    %v10887 = vunpack.c.l.b16 %v10506
    %v10888 = vunpack.c.h.b16 %v10506
    %v10889 = vunpack.c.l.b16 %v10507
    %v10890 = vunpack.c.h.b16 %v10507
    %v10891 = vunpack.c.l.b16 %v10508
    %v10892 = vunpack.c.h.b16 %v10508
    %v10893 = vunpack.c.l.b16 %v10509
    %v10894 = vunpack.c.h.b16 %v10509
    %v10895 = vunpack.c.l.b16 %v10510
    %v10896 = vunpack.c.h.b16 %v10510
    %v10897 = vunpack.c.l.b16 %v10511
    %v10898 = vunpack.c.h.b16 %v10511
    %v10899 = vunpack.c.l.b16 %v10512
    %v10900 = vunpack.c.h.b16 %v10512
    %v10901 = vunpack.c.l.b16 %v10513
    %v10902 = vunpack.c.h.b16 %v10513
    %v10903 = vunpack.c.l.b16 %v10514
    %v10904 = vunpack.c.h.b16 %v10514
    %v10905 = vunpack.c.l.b16 %v10515
    %v10906 = vunpack.c.h.b16 %v10515
    %v10907 = vunpack.c.l.b16 %v10516
    %v10908 = vunpack.c.h.b16 %v10516
    %v10909 = vunpack.c.l.b16 %v10517
    %v10910 = vunpack.c.h.b16 %v10517
    %v10911 = vunpack.c.l.b16 %v10518
    %v10912 = vunpack.c.h.b16 %v10518
    %v10913 = vunpack.c.l.b16 %v10519
    %v10914 = vunpack.c.h.b16 %v10519
    %v10915 = vunpack.c.l.b16 %v10520
    %v10916 = vunpack.c.h.b16 %v10520
    %v10917 = vunpack.c.l.b16 %v10521
    %v10918 = vunpack.c.h.b16 %v10521
    %v10919 = vunpack.c.l.b16 %v10522
    %v10920 = vunpack.c.h.b16 %v10522
    %v10921 = vunpack.c.l.b16 %v10523
    %v10922 = vunpack.c.h.b16 %v10523
    %v10923 = vunpack.c.l.b16 %v10524
    %v10924 = vunpack.c.h.b16 %v10524
    %v10925 = vunpack.c.l.b16 %v10525
    %v10926 = vunpack.c.h.b16 %v10525
    %v10927 = vunpack.c.l.b16 %v10526
    %v10928 = vunpack.c.h.b16 %v10526
    %v10929 = vunpack.c.l.b16 %v10527
    %v10930 = vunpack.c.h.b16 %v10527
    %v10931 = vunpack.c.l.b16 %v10528
    %v10932 = vunpack.c.h.b16 %v10528
    %v10933 = vunpack.c.l.b16 %v10529
    %v10934 = vunpack.c.h.b16 %v10529
    %v10935 = vunpack.c.l.b16 %v10530
    %v10936 = vunpack.c.h.b16 %v10530
    %v10937 = vpack.c.b16 %v10685, %v10681
    %v10938 = vpack.c.b16 %v10686, %v10682
    %v10939 = vpack.c.b16 %v10687, %v10683
    %v10940 = vpack.c.b16 %v10688, %v10684
    %v10941 = vpack.c.b16 %v10693, %v10689
    %v10942 = vpack.c.b16 %v10694, %v10690
    %v10943 = vpack.c.b16 %v10695, %v10691
    %v10944 = vpack.c.b16 %v10696, %v10692
    %v10945 = vpack.c.b16 %v10701, %v10697
    %v10946 = vpack.c.b16 %v10702, %v10698
    %v10947 = vpack.c.b16 %v10703, %v10699
    %v10948 = vpack.c.b16 %v10704, %v10700
    %v10949 = vpack.c.b16 %v10709, %v10705
    %v10950 = vpack.c.b16 %v10710, %v10706
    %v10951 = vpack.c.b16 %v10711, %v10707
    %v10952 = vpack.c.b16 %v10712, %v10708
    %v10953 = vpack.c.b16 %v10717, %v10713
    %v10954 = vpack.c.b16 %v10718, %v10714
    %v10955 = vpack.c.b16 %v10719, %v10715
    %v10956 = vpack.c.b16 %v10720, %v10716
    %v10957 = vpack.c.b16 %v10725, %v10721
    %v10958 = vpack.c.b16 %v10726, %v10722
    %v10959 = vpack.c.b16 %v10727, %v10723
    %v10960 = vpack.c.b16 %v10728, %v10724
    %v10961 = vpack.c.b16 %v10733, %v10729
    %v10962 = vpack.c.b16 %v10734, %v10730
    %v10963 = vpack.c.b16 %v10735, %v10731
    %v10964 = vpack.c.b16 %v10736, %v10732
    %v10965 = vpack.c.b16 %v10741, %v10737
    %v10966 = vpack.c.b16 %v10742, %v10738
    %v10967 = vpack.c.b16 %v10743, %v10739
    %v10968 = vpack.c.b16 %v10744, %v10740
    %v10969 = vpack.c.b16 %v10749, %v10745
    %v10970 = vpack.c.b16 %v10750, %v10746
    %v10971 = vpack.c.b16 %v10751, %v10747
    %v10972 = vpack.c.b16 %v10752, %v10748
    %v10973 = vpack.c.b16 %v10757, %v10753
    %v10974 = vpack.c.b16 %v10758, %v10754
    %v10975 = vpack.c.b16 %v10759, %v10755
    %v10976 = vpack.c.b16 %v10760, %v10756
    %v10977 = vpack.c.b16 %v10765, %v10761
    %v10978 = vpack.c.b16 %v10766, %v10762
    %v10979 = vpack.c.b16 %v10767, %v10763
    %v10980 = vpack.c.b16 %v10768, %v10764
    %v10981 = vpack.c.b16 %v10773, %v10769
    %v10982 = vpack.c.b16 %v10774, %v10770
    %v10983 = vpack.c.b16 %v10775, %v10771
    %v10984 = vpack.c.b16 %v10776, %v10772
    %v10985 = vpack.c.b16 %v10781, %v10777
    %v10986 = vpack.c.b16 %v10782, %v10778
    %v10987 = vpack.c.b16 %v10783, %v10779
    %v10988 = vpack.c.b16 %v10784, %v10780
    %v10989 = vpack.c.b16 %v10789, %v10785
    %v10990 = vpack.c.b16 %v10790, %v10786
    %v10991 = vpack.c.b16 %v10791, %v10787
    %v10992 = vpack.c.b16 %v10792, %v10788
    %v10993 = vpack.c.b16 %v10797, %v10793
    %v10994 = vpack.c.b16 %v10798, %v10794
    %v10995 = vpack.c.b16 %v10799, %v10795
    %v10996 = vpack.c.b16 %v10800, %v10796
    %v10997 = vpack.c.b16 %v10805, %v10801
    %v10998 = vpack.c.b16 %v10806, %v10802
    %v10999 = vpack.c.b16 %v10807, %v10803
    %v11000 = vpack.c.b16 %v10808, %v10804
    %v11001 = vpack.c.b16 %v10813, %v10809
    %v11002 = vpack.c.b16 %v10814, %v10810
    %v11003 = vpack.c.b16 %v10815, %v10811
    %v11004 = vpack.c.b16 %v10816, %v10812
    %v11005 = vpack.c.b16 %v10821, %v10817
    %v11006 = vpack.c.b16 %v10822, %v10818
    %v11007 = vpack.c.b16 %v10823, %v10819
    %v11008 = vpack.c.b16 %v10824, %v10820
    %v11009 = vpack.c.b16 %v10829, %v10825
    %v11010 = vpack.c.b16 %v10830, %v10826
    %v11011 = vpack.c.b16 %v10831, %v10827
    %v11012 = vpack.c.b16 %v10832, %v10828
    %v11013 = vpack.c.b16 %v10837, %v10833
    %v11014 = vpack.c.b16 %v10838, %v10834
    %v11015 = vpack.c.b16 %v10839, %v10835
    %v11016 = vpack.c.b16 %v10840, %v10836
    %v11017 = vpack.c.b16 %v10845, %v10841
    %v11018 = vpack.c.b16 %v10846, %v10842
    %v11019 = vpack.c.b16 %v10847, %v10843
    %v11020 = vpack.c.b16 %v10848, %v10844
    %v11021 = vpack.c.b16 %v10853, %v10849
    %v11022 = vpack.c.b16 %v10854, %v10850
    %v11023 = vpack.c.b16 %v10855, %v10851
    %v11024 = vpack.c.b16 %v10856, %v10852
    %v11025 = vpack.c.b16 %v10861, %v10857
    %v11026 = vpack.c.b16 %v10862, %v10858
    %v11027 = vpack.c.b16 %v10863, %v10859
    %v11028 = vpack.c.b16 %v10864, %v10860
    %v11029 = vpack.c.b16 %v10869, %v10865
    %v11030 = vpack.c.b16 %v10870, %v10866
    %v11031 = vpack.c.b16 %v10871, %v10867
    %v11032 = vpack.c.b16 %v10872, %v10868
    %v11033 = vpack.c.b16 %v10877, %v10873
    %v11034 = vpack.c.b16 %v10878, %v10874
    %v11035 = vpack.c.b16 %v10879, %v10875
    %v11036 = vpack.c.b16 %v10880, %v10876
    %v11037 = vpack.c.b16 %v10885, %v10881
    %v11038 = vpack.c.b16 %v10886, %v10882
    %v11039 = vpack.c.b16 %v10887, %v10883
    %v11040 = vpack.c.b16 %v10888, %v10884
    %v11041 = vpack.c.b16 %v10893, %v10889
    %v11042 = vpack.c.b16 %v10894, %v10890
    %v11043 = vpack.c.b16 %v10895, %v10891
    %v11044 = vpack.c.b16 %v10896, %v10892
    %v11045 = vpack.c.b16 %v10901, %v10897
    %v11046 = vpack.c.b16 %v10902, %v10898
    %v11047 = vpack.c.b16 %v10903, %v10899
    %v11048 = vpack.c.b16 %v10904, %v10900
    %v11049 = vpack.c.b16 %v10909, %v10905
    %v11050 = vpack.c.b16 %v10910, %v10906
    %v11051 = vpack.c.b16 %v10911, %v10907
    %v11052 = vpack.c.b16 %v10912, %v10908
    %v11053 = vpack.c.b16 %v10917, %v10913
    %v11054 = vpack.c.b16 %v10918, %v10914
    %v11055 = vpack.c.b16 %v10919, %v10915
    %v11056 = vpack.c.b16 %v10920, %v10916
    %v11057 = vpack.c.b16 %v10925, %v10921
    %v11058 = vpack.c.b16 %v10926, %v10922
    %v11059 = vpack.c.b16 %v10927, %v10923
    %v11060 = vpack.c.b16 %v10928, %v10924
    %v11061 = vpack.c.b16 %v10933, %v10929
    %v11062 = vpack.c.b16 %v10934, %v10930
    %v11063 = vpack.c.b16 %v10935, %v10931
    %v11064 = vpack.c.b16 %v10936, %v10932
    %11193 = vmatprep.subr.bf16.mxu0 %v10938
    %11194 = vmatpush1.bf16.msra.mxu0 %v10937
    %11195 = vmatprep.subr.bf16.mxu0 %v10942
    %11196 = vmatpush1.bf16.msra.mxu0 %v10941
    %11197 = vmatprep.subr.bf16.mxu0 %v10946
    %11198 = vmatpush1.bf16.msra.mxu0 %v10945
    %11199 = vmatprep.subr.bf16.mxu0 %v10950
    %11200 = vmatpush1.bf16.msra.mxu0 %v10949
    %11201 = vmatprep.subr.bf16.mxu0 %v10954
    %11202 = vmatpush1.bf16.msra.mxu0 %v10953
    %11203 = vmatprep.subr.bf16.mxu0 %v10958
    %11204 = vmatpush1.bf16.msra.mxu0 %v10957
    %11205 = vmatprep.subr.bf16.mxu0 %v10962
    %11206 = vmatpush1.bf16.msra.mxu0 %v10961
    %11207 = vmatprep.subr.bf16.mxu0 %v10966
    %11208 = vmatpush1.bf16.msra.mxu0 %v10965
    %11209 = vmatprep.subr.bf16.mxu0 %v10970
    %11210 = vmatpush1.bf16.msra.mxu0 %v10969
    %11211 = vmatprep.subr.bf16.mxu0 %v10974
    %11212 = vmatpush1.bf16.msra.mxu0 %v10973
    %11213 = vmatprep.subr.bf16.mxu0 %v10978
    %11214 = vmatpush1.bf16.msra.mxu0 %v10977
    %11215 = vmatprep.subr.bf16.mxu0 %v10982
    %11216 = vmatpush1.bf16.msra.mxu0 %v10981
    %11217 = vmatprep.subr.bf16.mxu0 %v10986
    %11218 = vmatpush1.bf16.msra.mxu0 %v10985
    %11219 = vmatprep.subr.bf16.mxu0 %v10990
    %11220 = vmatpush1.bf16.msra.mxu0 %v10989
    %11221 = vmatprep.subr.bf16.mxu0 %v10994
    %11222 = vmatpush1.bf16.msra.mxu0 %v10993
    %11223 = vmatprep.subr.bf16.mxu0 %v10998
    %11224 = vmatpush1.bf16.msra.mxu0 %v10997
    %11225 = vmatprep.mubr.bf16.mxu0 %v10400
    %11226 = vmatmul.mubr.bf16.gmra.mrb[0].mxu0 %v10399
    %v11227 = vpop.f32.mrb[0].mxu0
    %v11228 = vadd.f32 %v10536, %v11227
    %v11229 = vpop.f32.mrb[0].mxu0
    %v11230 = vadd.f32 %v10540, %v11229
    %v11231 = vpop.f32.mrb[0].mxu0
    %v11232 = vpop.f32.mrb[0].mxu0
    %11233 = vdwg.mxu0
    %11234 = vmatprep.subr.bf16.mxu0 %v11002
    %11235 = vmatpush1.bf16.msra.mxu0 %v11001
    %11236 = vmatprep.subr.bf16.mxu0 %v11006
    %11237 = vmatpush1.bf16.msra.mxu0 %v11005
    %11238 = vmatprep.subr.bf16.mxu0 %v11010
    %11239 = vmatpush1.bf16.msra.mxu0 %v11009
    %11240 = vmatprep.subr.bf16.mxu0 %v11014
    %11241 = vmatpush1.bf16.msra.mxu0 %v11013
    %11242 = vmatprep.subr.bf16.mxu0 %v11018
    %11243 = vmatpush1.bf16.msra.mxu0 %v11017
    %11244 = vmatprep.subr.bf16.mxu0 %v11022
    %11245 = vmatpush1.bf16.msra.mxu0 %v11021
    %11246 = vmatprep.subr.bf16.mxu0 %v11026
    %11247 = vmatpush1.bf16.msra.mxu0 %v11025
    %11248 = vmatprep.subr.bf16.mxu0 %v11030
    %11249 = vmatpush1.bf16.msra.mxu0 %v11029
    %11250 = vmatprep.subr.bf16.mxu0 %v11034
    %11251 = vmatpush1.bf16.msra.mxu0 %v11033
    %11252 = vmatprep.subr.bf16.mxu0 %v11038
    %11253 = vmatpush1.bf16.msra.mxu0 %v11037
    %11254 = vmatprep.subr.bf16.mxu0 %v11042
    %11255 = vmatpush1.bf16.msra.mxu0 %v11041
    %11256 = vmatprep.subr.bf16.mxu0 %v11046
    %11257 = vmatpush1.bf16.msra.mxu0 %v11045
    %11258 = vmatprep.subr.bf16.mxu0 %v11050
    %11259 = vmatpush1.bf16.msra.mxu0 %v11049
    %11260 = vmatprep.subr.bf16.mxu0 %v11054
    %11261 = vmatpush1.bf16.msra.mxu0 %v11053
    %11262 = vmatprep.subr.bf16.mxu0 %v11058
    %11263 = vmatpush1.bf16.msra.mxu0 %v11057
    %11264 = vmatprep.subr.bf16.mxu0 %v11062
    %11265 = vmatpush1.bf16.msra.mxu0 %v11061
    %11266 = vmatprep.mubr.bf16.mxu0 %v10402
    %11267 = vmatmul.mubr.bf16.gmra.mrb[0].mxu0 %v10401
    %v11268 = vpop.f32.mrb[0].mxu0
    %v11269 = vadd.f32 %v11228, %v11268
    %v11270 = vpop.f32.mrb[0].mxu0
    %v11271 = vadd.f32 %v11230, %v11270
    %v11272 = vpop.f32.mrb[0].mxu0
    %v11273 = vpop.f32.mrb[0].mxu0
    %11274 = vdwg.mxu0
    %11275 = vmatprep.subr.bf16.mxu0 %v10940
    %11276 = vmatpush1.bf16.msra.mxu0 %v10939
    %11277 = vmatprep.subr.bf16.mxu0 %v10944
    %11278 = vmatpush1.bf16.msra.mxu0 %v10943
    %11279 = vmatprep.subr.bf16.mxu0 %v10948
    %11280 = vmatpush1.bf16.msra.mxu0 %v10947
    %11281 = vmatprep.subr.bf16.mxu0 %v10952
    %11282 = vmatpush1.bf16.msra.mxu0 %v10951
    %11283 = vmatprep.subr.bf16.mxu0 %v10956
    %11284 = vmatpush1.bf16.msra.mxu0 %v10955
    %11285 = vmatprep.subr.bf16.mxu0 %v10960
    %11286 = vmatpush1.bf16.msra.mxu0 %v10959
    %11287 = vmatprep.subr.bf16.mxu0 %v10964
    %11288 = vmatpush1.bf16.msra.mxu0 %v10963
    %11289 = vmatprep.subr.bf16.mxu0 %v10968
    %11290 = vmatpush1.bf16.msra.mxu0 %v10967
    %11291 = vmatprep.subr.bf16.mxu0 %v10972
    %11292 = vmatpush1.bf16.msra.mxu0 %v10971
    %11293 = vmatprep.subr.bf16.mxu0 %v10976
    %11294 = vmatpush1.bf16.msra.mxu0 %v10975
    %11295 = vmatprep.subr.bf16.mxu0 %v10980
    %11296 = vmatpush1.bf16.msra.mxu0 %v10979
    %11297 = vmatprep.subr.bf16.mxu0 %v10984
    %11298 = vmatpush1.bf16.msra.mxu0 %v10983
    %11299 = vmatprep.subr.bf16.mxu0 %v10988
    %11300 = vmatpush1.bf16.msra.mxu0 %v10987
    %11301 = vmatprep.subr.bf16.mxu0 %v10992
    %11302 = vmatpush1.bf16.msra.mxu0 %v10991
    %11303 = vmatprep.subr.bf16.mxu0 %v10996
    %11304 = vmatpush1.bf16.msra.mxu0 %v10995
    %11305 = vmatprep.subr.bf16.mxu0 %v11000
    %11306 = vmatpush1.bf16.msra.mxu0 %v10999
    %11307 = vmatprep.mubr.bf16.mxu0 %v10400
    %11308 = vmatmul.mubr.bf16.gmra.mrb[0].mxu0 %v10399
    %v11309 = vpop.f32.mrb[0].mxu0
    %v11310 = vadd.f32 %v10544, %v11309
    %v11311 = vpop.f32.mrb[0].mxu0
    %v11312 = vadd.f32 %v10548, %v11311
    %v11313 = vpop.f32.mrb[0].mxu0
    %v11314 = vpop.f32.mrb[0].mxu0
    %11315 = vdwg.mxu0
    %11316 = vmatprep.subr.bf16.mxu0 %v11004
    %11317 = vmatpush1.bf16.msra.mxu0 %v11003
    %11318 = vmatprep.subr.bf16.mxu0 %v11008
    %11319 = vmatpush1.bf16.msra.mxu0 %v11007
    %11320 = vmatprep.subr.bf16.mxu0 %v11012
    %11321 = vmatpush1.bf16.msra.mxu0 %v11011
    %11322 = vmatprep.subr.bf16.mxu0 %v11016
    %11323 = vmatpush1.bf16.msra.mxu0 %v11015
    %11324 = vmatprep.subr.bf16.mxu0 %v11020
    %11325 = vmatpush1.bf16.msra.mxu0 %v11019
    %11326 = vmatprep.subr.bf16.mxu0 %v11024
    %11327 = vmatpush1.bf16.msra.mxu0 %v11023
    %11328 = vmatprep.subr.bf16.mxu0 %v11028
    %11329 = vmatpush1.bf16.msra.mxu0 %v11027
    %11330 = vmatprep.subr.bf16.mxu0 %v11032
    %11331 = vmatpush1.bf16.msra.mxu0 %v11031
    %11332 = vmatprep.subr.bf16.mxu0 %v11036
    %11333 = vmatpush1.bf16.msra.mxu0 %v11035
    %11334 = vmatprep.subr.bf16.mxu0 %v11040
    %11335 = vmatpush1.bf16.msra.mxu0 %v11039
    %11336 = vmatprep.subr.bf16.mxu0 %v11044
    %11337 = vmatpush1.bf16.msra.mxu0 %v11043
    %11338 = vmatprep.subr.bf16.mxu0 %v11048
    %11339 = vmatpush1.bf16.msra.mxu0 %v11047
    %11340 = vmatprep.subr.bf16.mxu0 %v11052
    %11341 = vmatpush1.bf16.msra.mxu0 %v11051
    %11342 = vmatprep.subr.bf16.mxu0 %v11056
    %11343 = vmatpush1.bf16.msra.mxu0 %v11055
    %11344 = vmatprep.subr.bf16.mxu0 %v11060
    %11345 = vmatpush1.bf16.msra.mxu0 %v11059
    %11346 = vmatprep.subr.bf16.mxu0 %v11064
    %11347 = vmatpush1.bf16.msra.mxu0 %v11063
    %11348 = vmatprep.mubr.bf16.mxu0 %v10402
    %11349 = vmatmul.mubr.bf16.gmra.mrb[0].mxu0 %v10401
    %v11350 = vpop.f32.mrb[0].mxu0
    %v11351 = vadd.f32 %v11310, %v11350
    %v11352 = vpop.f32.mrb[0].mxu0
    %v11353 = vadd.f32 %v11312, %v11352
    %v11354 = vpop.f32.mrb[0].mxu0
    %v11355 = vpop.f32.mrb[0].mxu0
    %11356 = vdwg.mxu0
    %v11361 = vcombine.low %v11269, %v11271
    %v11362 = vcombine.low %v11351, %v11353
    %v11364 = vunpack.c.l.s4 1983009808
    %v11365 = vunpack.c.0.s8 %v11364
    %v11366 = vlaneseq
    %v11367 = vshrl.u32 %v11366, 7
    %v11368 = vsub.s32 %v11365, %v11367
    %v11369 = vrot.slane %v11361, %v11368
    %v11371 = vunpack.c.l.s4 1983009808
    %v11372 = vunpack.c.0.s8 %v11371
    %v11373 = vlaneseq
    %v11374 = vshrl.u32 %v11373, 7
    %v11375 = vsub.s32 %v11372, %v11374
    %v11376 = vrot.slane %v11362, %v11375
    %v11377 = vcombine.low %v11369, %v11376
    %11379 = vst [vmem:[#allocation16] sm:$0xff] %v11377
    // Predicated region
    $region86: #{_lambda_.3} parent=1 // pred_check
      _
    $region87: #{_lambda_.3} parent=1 // pred_check_branch
      %11381 = sbr.rel (0) target = $region89
    $region88: #{_lambda_.3} parent=1 // pred_region
      %s11383 = ssub.s32 128, 128
      %11384 = vsyncadd [#allocation4], %s11383
      %s11386 = sshll.u32 [#allocation13], 4
      %s11387 = int_to_ptr.vmem [resolvable:$true] %s11386
      %11389 = dma.vmem_to_hbm [thread:$0]  %s11387, 128, %s15, [#allocation4]
    $region89: #{_lambda_.3} parent=1 // pred_fallthru
      _
    // Predicated region
    $region90: #{_lambda_.3} parent=1 // pred_check
      _
    $region91: #{_lambda_.3} parent=1 // pred_check_branch
      %11391 = sbr.rel (0) target = $region93
    $region92: #{_lambda_.3} parent=1 // pred_region
      %s11393 = ssub.s32 32, 32
      %11394 = vsyncadd [#allocation15], %s11393
      %s11396 = sshll.u32 [#allocation14], 4
      %s11397 = int_to_ptr.vmem [resolvable:$true] %s11396
      %11399 = dma.vmem_to_hbm [thread:$0]  %s11397, 32, %s16, [#allocation15]
    $region93: #{_lambda_.3} parent=1 // pred_fallthru
      _
    // Predicated region
    $region94: #{_lambda_.3} parent=1 // pred_check
      _
    $region95: #{_lambda_.3} parent=1 // pred_check_branch
      %11401 = sbr.rel (0) target = $region97
    $region96: #{_lambda_.3} parent=1 // pred_region
      %s11403 = ssub.s32 128, 128
      %11404 = vsyncadd [#allocation15], %s11403
      %s11406 = sshll.u32 [#allocation16], 4
      %s11407 = int_to_ptr.vmem [resolvable:$true] %s11406
      %11409 = dma.vmem_to_hbm [thread:$0]  %s11407, 128, %s17, [#allocation15]
    $region97: #{_lambda_.3} parent=1 // pred_fallthru
      _
    // Predicated region
    $region98: #{_lambda_.3} parent=1 // pred_check
      _
    $region99: #{_lambda_.3} parent=1 // pred_check_branch
      %11411 = sbr.rel (0) target = $region101
    $region100: #{_lambda_.3} parent=1 // pred_region
      %11412 = dma.done [#allocation4], 128
    $region101: #{_lambda_.3} parent=1 // pred_fallthru
      _
    // Predicated region
    $region102: #{_lambda_.3} parent=1 // pred_check
      _
    $region103: #{_lambda_.3} parent=1 // pred_check_branch
      %11414 = sbr.rel (0) target = $region105
    $region104: #{_lambda_.3} parent=1 // pred_region
      %11415 = dma.done [#allocation15], 32
    $region105: #{_lambda_.3} parent=1 // pred_fallthru
      _
    // Predicated region
    $region106: #{_lambda_.3} parent=1 // pred_check
      _
    $region107: #{_lambda_.3} parent=1 // pred_check_branch
      %11417 = sbr.rel (0) target = $region109
    $region108: #{_lambda_.3} parent=1 // pred_region
      %11418 = dma.done [#allocation15], 128
    $region109: #{_lambda_.3} parent=1 // pred_fallthru
      _
    %11419 = vsyncpa [#allocation3], 1
    %11420 = vsyncpa [#allocation6], 1
    %11421 = vsyncpa [#allocation9], 1
    %11422 = vsyncpa [#allocation12], 1
    %11423 = vsyncpa [#allocation4], 1
    %11424 = vsyncpa [#allocation15], 1

</llo_original>
